<compile_context>
chip_gen: v7x
topology: tpu7x:2x2x1
jax: 0.10.0
libtpu: 0.0.40
codegen_flags: <defaults>
</compile_context>

<pallas_src>
import functools

import numpy as np
import jax
import jax.numpy as jnp
from jax.experimental import pallas as pl
from jax.experimental.pallas import tpu as pltpu


# ----------------------------------------------------------------------------
# SPF layout helpers
# ----------------------------------------------------------------------------

def _spf_layout(N, H, W):
    Wp = W + 2                       # padded row pitch
    L = (H + 3) * Wp                 # rows per image (1 top + 2 bottom halo)
    NL = N * L                       # stacked rows (batch folded into M)
    G = ((Wp + 1 + 7) // 8) * 8      # zero guard rows (sublane aligned)
    T = G + NL + G                   # total stored rows
    return Wp, L, NL, G, T


def to_spf(x):
    """(N, H, W, C) -> SPF (T, C) bf16.  Used once for the network input."""
    N, H, W, C = x.shape
    _, _, NL, G, _ = _spf_layout(N, H, W)
    xp = jnp.pad(x.astype(jnp.bfloat16), ((0, 0), (1, 2), (1, 1), (0, 0)))
    return jnp.pad(xp.reshape(NL, C), ((G, G), (0, 0)))


def from_spf(y, N, H, W):
    """SPF (T, C) -> (N, H, W, C).  Used once for the network output."""
    Wp, _, NL, G, _ = _spf_layout(N, H, W)
    v = y[G:G + NL].reshape(N, H + 3, Wp, y.shape[-1])
    return v[:, 1:H + 1, 1:W + 1, :]


@functools.lru_cache(maxsize=None)
def _valid_mask(N, H, W):
    """(NL, 1) f32 constant: 1 on real pixels, 0 on halo rows / junk columns."""
    Wp, L, NL, _, _ = _spf_layout(N, H, W)
    r = np.arange(NL, dtype=np.int64) % L
    rr, c = r // Wp, r % Wp
    m = ((rr >= 1) & (rr <= H) & (c >= 1) & (c <= W)).astype(np.float32)
    return m.reshape(NL, 1)


def _tap_offsets(n_taps, Wp):
    if n_taps == 9:                                   # 3x3, cross-correlation
        return tuple(dy * Wp + dx for dy in range(3) for dx in range(3))
    assert n_taps == 1                                # fused 1x1 shortcut
    return (Wp + 1,)


_VMEM_LIMIT_CACHE = None


def _vmem_limit():
    """Generation-aware VMEM budget (~3/4 of physical per-core VMEM)."""
    global _VMEM_LIMIT_CACHE
    if _VMEM_LIMIT_CACHE is None:
        try:
            cap = int(pltpu.get_tpu_info().vmem_capacity_bytes)
        except Exception:
            cap = 64 << 20                            # v7x-safe fallback
        _VMEM_LIMIT_CACHE = max(32 << 20, (cap * 3) // 4)
    return _VMEM_LIMIT_CACHE


# ----------------------------------------------------------------------------
# Fused multi-segment conv kernel (streams every operand over the ci axis)
# ----------------------------------------------------------------------------

def _make_conv_kernel(NL, G, Wp, seg_taps, seg_starts, seg_counts,
                      has_res, relu):
    n_seg = len(seg_taps)
    base = G - (Wp + 1)              # first tap row for accumulator row 0

    def kernel(*refs):
        i = 0
        xs, ws = [], []
        for _ in range(n_seg):
            xs.append(refs[i])
            ws.append(refs[i + 1])
            i += 2
        b_ref, m_ref = refs[i], refs[i + 1]
        i += 2
        r_ref = None
        if has_res:
            r_ref = refs[i]
            i += 1
        o_ref, acc_ref = refs[i], refs[i + 1]

        ci = pl.program_id(1)
        n_ci = pl.num_programs(1)

        def contrib(x_ref, w_ref, offs):
            acc = None
            for t, off in enumerate(offs):
                part = jnp.dot(x_ref[base + off:base + off + NL, :], w_ref[t],
                               preferred_element_type=jnp.float32)
                acc = part if acc is None else acc + part
            return acc

        for k in range(n_seg):
            s, cnt = seg_starts[k], seg_counts[k]

            def seg_body(k=k):
                c = contrib(xs[k], ws[k], seg_taps[k])
                if k == 0:
                    # Skip the accumulator zero-fill: assign on the first step.
                    @pl.when(ci == 0)
                    def _():
                        acc_ref[...] = c

                    @pl.when(ci > 0)
                    def _():
                        acc_ref[...] += c
                else:
                    acc_ref[...] += c

            if n_seg == 1:
                seg_body()
            else:
                pl.when(jnp.logical_and(ci >= s, ci < s + cnt))(seg_body)

        # Epilogue: bias (+ identity residual) (+ ReLU), mask halos/junk to 0,
        # store directly in SPF layout (guard rows zeroed too).
        @pl.when(ci == n_ci - 1)
        def _epilogue():
            out = acc_ref[...] + b_ref[...]
            if has_res:
                out = out + r_ref[G:G + NL, :].astype(jnp.float32)
            if relu:
                out = jnp.maximum(out, 0.0)
            out = out * m_ref[...]
            cw = o_ref.shape[1]
            o_ref[:G, :] = jnp.zeros((G, cw), o_ref.dtype)
            o_ref[G:G + NL, :] = out.astype(o_ref.dtype)
            tail = o_ref.shape[0] - (G + NL)
            o_ref[G + NL:, :] = jnp.zeros((tail, cw), o_ref.dtype)

    return kernel


def conv_spf(segments, bias, *, N, H, W, relu=False, residual=None):
    """Fused conv on SPF activations.

    segments : list of (x_spf (T, C_k) bf16, w (taps, C_k, Cout) bf16).
               The channel concat of the segments is the logical conv input;
               taps == 9 -> 3x3 conv taps, taps == 1 -> fused 1x1 shortcut.
               Every segment's channels are streamed tile-by-tile over the
               single "arbitrary" reduction grid axis.
    bias     : (Cout,) f32, already including any folded BN / shortcut bias.
    residual : optional SPF tensor (Cout channels) added in the epilogue.
    Returns the conv output in SPF layout (bf16), bias/shortcut/ReLU fused.
    """
    Wp, _, NL, G, T = _spf_layout(N, H, W)
    Cout = segments[0][1].shape[-1]

    co_t = Cout if Cout <= 128 else (128 if Cout <= 256 else 256)
    n_co = Cout // co_t

    ins, in_specs = [], []
    seg_taps, seg_starts, seg_counts = [], [], []
    start = 0
    for x_spf, w in segments:
        assert x_spf.shape[0] == T and w.shape[1] == x_spf.shape[1]
        C_k, taps = x_spf.shape[1], w.shape[0]
        ci_t = C_k if C_k <= 128 else (256 if C_k % 256 == 0 else 128)
        n_k = C_k // ci_t
        seg_taps.append(_tap_offsets(taps, Wp))
        seg_starts.append(start)
        seg_counts.append(n_k)

        def x_map(co, ci, s=start, n=n_k):
            return (0, jnp.clip(ci - s, 0, n - 1))

        def w_map(co, ci, s=start, n=n_k):
            return (0, jnp.clip(ci - s, 0, n - 1), co)

        ins += [x_spf, w]
        in_specs += [pl.BlockSpec((T, ci_t), x_map),
                     pl.BlockSpec((taps, ci_t, co_t), w_map)]
        start += n_k
    n_ci = start

    ins.append(bias.astype(jnp.float32).reshape(1, Cout))
    in_specs.append(pl.BlockSpec((1, co_t), lambda co, ci: (0, co)))

    ins.append(_valid_mask(N, H, W))
    in_specs.append(pl.BlockSpec((NL, 1), lambda co, ci: (0, 0)))

    has_res = residual is not None
    if has_res:
        assert residual.shape == (T, Cout)
        ins.append(residual)
        in_specs.append(pl.BlockSpec((T, co_t), lambda co, ci: (0, co)))

    return pl.pallas_call(
        _make_conv_kernel(NL, G, Wp, tuple(seg_taps), tuple(seg_starts),
                          tuple(seg_counts), has_res, relu),
        out_shape=jax.ShapeDtypeStruct((T, Cout), jnp.bfloat16),
        grid=(n_co, n_ci),
        in_specs=in_specs,
        out_specs=pl.BlockSpec((T, co_t), lambda co, ci: (0, co)),
        scratch_shapes=[pltpu.VMEM((NL, co_t), jnp.float32)],
        compiler_params=pltpu.CompilerParams(
            dimension_semantics=("parallel", "arbitrary"),
            vmem_limit_bytes=_vmem_limit()),
    )(*ins)


# ----------------------------------------------------------------------------
# MaxPool2d(2) and 2x nearest upsample, SPF in -> SPF out
# ----------------------------------------------------------------------------

def _make_pool_kernel(N, H, W, G_in, G_out):
    Ho, Wo = H // 2, W // 2
    Wp_in, Wp_out = W + 2, Wo + 2
    L_in, L_out = (H + 3) * Wp_in, (Ho + 3) * Wp_out

    def kernel(x_ref, o_ref):
        c = x_ref.shape[-1]
        o_ref[...] = jnp.zeros_like(o_ref)
        v = x_ref[G_in:G_in + N * L_in, :]
        v = v.reshape(N, H + 3, Wp_in, c)[:, 1:H + 1, 1:W + 1, :]
        v = v.reshape(N, Ho, 2, Wo, 2, c)
        p = jnp.maximum(jnp.maximum(v[:, :, 0, :, 0, :], v[:, :, 0, :, 1, :]),
                        jnp.maximum(v[:, :, 1, :, 0, :], v[:, :, 1, :, 1, :]))
        zc = jnp.zeros((N, Ho, 1, c), p.dtype)
        p = jnp.concatenate([zc, p, zc], axis=2)           # (N, Ho, Wp_out, c)
        zr1 = jnp.zeros((N, 1, Wp_out, c), p.dtype)
        zr2 = jnp.zeros((N, 2, Wp_out, c), p.dtype)
        p = jnp.concatenate([zr1, p, zr2], axis=1)         # (N, Ho+3, Wp_out, c)
        o_ref[G_out:G_out + N * L_out, :] = p.reshape(N * L_out, c)

    return kernel


def maxpool_spf(x_spf, *, N, H, W):
    C = x_spf.shape[-1]
    _, _, _, G_in, T_in = _spf_layout(N, H, W)
    _, _, _, G_out, T_out = _spf_layout(N, H // 2, W // 2)
    c_t = C if C <= 256 else 256
    return pl.pallas_call(
        _make_pool_kernel(N, H, W, G_in, G_out),
        out_shape=jax.ShapeDtypeStruct((T_out, C), x_spf.dtype),
        grid=(C // c_t,),
        in_specs=[pl.BlockSpec((T_in, c_t), lambda c: (0, c))],
        out_specs=pl.BlockSpec((T_out, c_t), lambda c: (0, c)),
        compiler_params=pltpu.CompilerParams(
            dimension_semantics=("parallel",),
            vmem_limit_bytes=_vmem_limit()),
    )(x_spf)


def _make_upsample_kernel(N, Hb, Wb, G_in, G_out):
    H, W = 2 * Hb, 2 * Wb
    Wp_in, Wp_out = Wb + 2, W + 2
    L_in, L_out = (Hb + 3) * Wp_in, (H + 3) * Wp_out

    def kernel(x_ref, o_ref):
        c = x_ref.shape[-1]
        o_ref[...] = jnp.zeros_like(o_ref)
        v = x_ref[G_in:G_in + N * L_in, :]
        v = v.reshape(N, Hb + 3, Wp_in, c)[:, 1:Hb + 1, 1:Wb + 1, :]
        v = v[:, :, None, :, None, :]
        v = jnp.broadcast_to(v, (N, Hb, 2, Wb, 2, c)).reshape(N, H, W, c)
        zc = jnp.zeros((N, H, 1, c), v.dtype)
        v = jnp.concatenate([zc, v, zc], axis=2)
        zr1 = jnp.zeros((N, 1, Wp_out, c), v.dtype)
        zr2 = jnp.zeros((N, 2, Wp_out, c), v.dtype)
        v = jnp.concatenate([zr1, v, zr2], axis=1)
        o_ref[G_out:G_out + N * L_out, :] = v.reshape(N * L_out, c)

    return kernel


def upsample2x_spf(x_spf, *, N, H, W):
    C = x_spf.shape[-1]
    _, _, _, G_in, T_in = _spf_layout(N, H, W)
    _, _, _, G_out, T_out = _spf_layout(N, 2 * H, 2 * W)
    c_t = C if C <= 256 else 256
    return pl.pallas_call(
        _make_upsample_kernel(N, H, W, G_in, G_out),
        out_shape=jax.ShapeDtypeStruct((T_out, C), x_spf.dtype),
        grid=(C // c_t,),
        in_specs=[pl.BlockSpec((T_in, c_t), lambda c: (0, c))],
        out_specs=pl.BlockSpec((T_out, c_t), lambda c: (0, c)),
        compiler_params=pltpu.CompilerParams(
            dimension_semantics=("parallel",),
            vmem_limit_bytes=_vmem_limit()),
    )(x_spf)


# ----------------------------------------------------------------------------
# UNetRes blocks
# ----------------------------------------------------------------------------

def res_block_spf(x_spf, p, *, N, H, W):
    """conv3x3-BN-ReLU -> conv3x3-BN (+ shortcut) -> ReLU (BN folded, eval)."""
    h = conv_spf([(x_spf, p["w1"])], p["b1"], N=N, H=H, W=W, relu=True)
    if "ws" in p:      # projected shortcut, streamed as an extra 1-tap segment
        return conv_spf([(h, p["w2"]), (x_spf, p["ws"])], p["b2"],
                        N=N, H=H, W=W, relu=True)
    return conv_spf([(h, p["w2"])], p["b2"], N=N, H=H, W=W,
                    residual=x_spf, relu=True)


def down_block_spf(x_spf, p, *, N, H, W):
    return res_block_spf(maxpool_spf(x_spf, N=N, H=H, W=W), p,
                         N=N, H=H // 2, W=W // 2)


def up_block_spf(below_spf, skip_spf, p, *, N, Hb, Wb):
    # TODO(synk): concat order assumed cat([skip, upsampled]); if the real
    # module uses cat([upsampled, skip]) the w1a/w1b (wsa/wsb) splits swap.
    up_s = upsample2x_spf(below_spf, N=N, H=Hb, W=Wb)
    H, W = 2 * Hb, 2 * Wb
    h = conv_spf([(skip_spf, p["w1a"]), (up_s, p["w1b"])], p["b1"],
                 N=N, H=H, W=W, relu=True)
    return conv_spf([(h, p["w2"]), (skip_spf, p["wsa"]), (up_s, p["wsb"])],
                    p["b2"], N=N, H=H, W=W, relu=True)


# ----------------------------------------------------------------------------
# Deterministic parameter init (eval-mode BatchNorm folded into the convs).
# All weight preprocessing (bf16 cast, tap-major reshape, concat splits,
# bias merging) happens here so the jitted forward has no weight-side glue.
# ----------------------------------------------------------------------------

def _init_conv(key, cin, cout, k):
    kw, kb = jax.random.split(key)
    fan_in = cin * k * k
    w = jax.random.normal(kw, (k, k, cin, cout), jnp.float32) / np.sqrt(fan_in)
    b = 0.01 * jax.random.normal(kb, (cout,), jnp.float32)
    return w, b


def _init_bn(key, c):
    k1, k2, k3, k4 = jax.random.split(key, 4)
    gamma = 1.0 + 0.1 * jax.random.normal(k1, (c,), jnp.float32)
    beta = 0.01 * jax.random.normal(k2, (c,), jnp.float32)
    mean = 0.01 * jax.random.normal(k3, (c,), jnp.float32)
    var = 1.0 + 0.1 * jax.random.uniform(k4, (c,), jnp.float32)
    return gamma, beta, mean, var


def _fold_bn(w, b, bn, eps=1e-5):
    gamma, beta, mean, var = bn
    scale = gamma / jnp.sqrt(var + eps)
    return w * scale, (b - mean) * scale + beta


def _prep_res_block(key, cin, cout, split=None):
    k1, k2, k3, k4, k5 = jax.random.split(key, 5)
    w1, b1 = _fold_bn(*_init_conv(k1, cin, cout, 3), _init_bn(k2, cout))
    w2, b2 = _fold_bn(*_init_conv(k3, cout, cout, 3), _init_bn(k4, cout))
    w1 = w1.astype(jnp.bfloat16).reshape(9, cin, cout)
    w2 = w2.astype(jnp.bfloat16).reshape(9, cout, cout)
    p = {"b1": b1, "w2": w2}
    if split is None:
        p["w1"] = w1
    else:
        p["w1a"], p["w1b"] = w1[:, :split, :], w1[:, split:, :]
    if cin != cout:
        ws, bs = _init_conv(k5, cin, cout, 1)
        ws = ws.astype(jnp.bfloat16).reshape(1, cin, cout)
        if split is None:
            p["ws"] = ws
        else:
            p["wsa"], p["wsb"] = ws[:, :split, :], ws[:, split:, :]
        p["b2"] = b2 + bs
    else:
        p["b2"] = b2
    return p


def init_unetres(key, n_channels, n_classes):
    ks = jax.random.split(key, 10)
    wi, bi = _init_conv(ks[0], n_channels, 64, 3)
    wo, bo = _init_conv(ks[9], 64, n_classes, 3)
    pad = (-n_classes) % 128               # lane-dense outc store, sliced after
    wo = jnp.pad(wo, ((0, 0), (0, 0), (0, 0), (0, pad)))
    bo = jnp.pad(bo, ((0, pad),))
    return {
        "inc":   {"w": wi.astype(jnp.bfloat16).reshape(9, n_channels, 64),
                  "b": bi},
        "down1": _prep_res_block(ks[1], 64, 128),
        "down2": _prep_res_block(ks[2], 128, 256),
        "down3": _prep_res_block(ks[3], 256, 512),
        "down4": _prep_res_block(ks[4], 512, 512),
        "up1":   _prep_res_block(ks[5], 1024, 256, split=512),
        "up2":   _prep_res_block(ks[6], 512, 128, split=256),
        "up3":   _prep_res_block(ks[7], 256, 64, split=128),
        "up4":   _prep_res_block(ks[8], 128, 64, split=64),
        "outc":  {"w": wo.astype(jnp.bfloat16).reshape(9, 64, n_classes + pad),
                  "b": bo},
    }


# ----------------------------------------------------------------------------
# Full forward pass
# ----------------------------------------------------------------------------

def unetres_forward(params, x_nchw, n_classes):
    N, _, H, W = x_nchw.shape
    x = jnp.transpose(x_nchw, (0, 2, 3, 1))                      # NCHW -> NHWC

    x1 = conv_spf([(to_spf(x), params["inc"]["w"])], params["inc"]["b"],
                  N=N, H=H, W=W)                                 # inc
    x2 = down_block_spf(x1, params["down1"], N=N, H=H, W=W)
    x3 = down_block_spf(x2, params["down2"], N=N, H=H // 2, W=W // 2)
    x4 = down_block_spf(x3, params["down3"], N=N, H=H // 4, W=W // 4)
    x5 = down_block_spf(x4, params["down4"], N=N, H=H // 8, W=W // 8)

    y = up_block_spf(x5, x4, params["up1"], N=N, Hb=H // 16, Wb=W // 16)
    y = up_block_spf(y, x3, params["up2"], N=N, Hb=H // 8, Wb=W // 8)
    y = up_block_spf(y, x2, params["up3"], N=N, Hb=H // 4, Wb=W // 4)
    y = up_block_spf(y, x1, params["up4"], N=N, Hb=H // 2, Wb=W // 2)

    y = conv_spf([(y, params["outc"]["w"])], params["outc"]["b"],
                 N=N, H=H, W=W)                                  # outc
    y = from_spf(y, N, H, W)[..., :n_classes]
    return jnp.transpose(y.astype(jnp.float32), (0, 3, 1, 2))    # NHWC -> NCHW


if __name__ == "__main__":
    key = jax.random.PRNGKey(0)
    kp, kx = jax.random.split(key)
    n_channels, n_classes = 4, 3
    params = init_unetres(kp, n_channels, n_classes)
    x = jax.random.normal(kx, (2, n_channels, 16, 16), jnp.float32)

    # -- self-check 1: fused SPF conv vs XLA conv on the first layer ---------
    xb = jnp.transpose(x, (0, 2, 3, 1)).astype(jnp.bfloat16)
    wi, bi = params["inc"]["w"], params["inc"]["b"]

    def first_conv(a, w, b):
        return from_spf(conv_spf([(to_spf(a), w)], b, N=2, H=16, W=16),
                        2, 16, 16)

    got = jax.jit(first_conv)(xb, wi, bi).astype(jnp.float32)
    ref = jax.lax.conv_general_dilated(
        xb.astype(jnp.float32),
        wi.reshape(3, 3, n_channels, 64).astype(jnp.float32),
        window_strides=(1, 1), padding="SAME",
        dimension_numbers=("NHWC", "HWIO", "NHWC")) + bi
    assert bool(jnp.allclose(got, ref, atol=3e-2, rtol=3e-2)), float(
        jnp.max(jnp.abs(got - ref)))

    # -- self-check 2: maxpool kernel -----------------------------------------
    a = jax.random.normal(jax.random.PRNGKey(1), (2, 8, 8, 16),
                          jnp.float32).astype(jnp.bfloat16)
    pooled = jax.jit(
        lambda t: from_spf(maxpool_spf(to_spf(t), N=2, H=8, W=8), 2, 4, 4))(a)
    pref = jnp.max(a.reshape(2, 4, 2, 4, 2, 16), axis=(2, 4))
    assert bool(jnp.array_equal(pooled, pref))

    # -- full forward ----------------------------------------------------------
    fwd = jax.jit(lambda p, t: unetres_forward(p, t, n_classes))
    y = fwd(params, x)
    jax.block_until_ready(y)

    assert y.shape == (2, n_classes, 16, 16), y.shape
    assert bool(jnp.all(jnp.isfinite(y)))
    print("KERNEL_OK")
</pallas_src>

<mosaic_0001>
module attributes {stable_mosaic.version = 11 : i64} {
  func.func @kernel(%arg0: i32, %arg1: i32, %arg2: memref<732x4xbf16, #tpu.memory_space<vmem>>, %arg3: memref<9x4x64xbf16, #tpu.memory_space<vmem>>, %arg4: memref<1x64xf32, #tpu.memory_space<vmem>>, %arg5: memref<684x1xf32, #tpu.memory_space<vmem>>, %arg6: memref<732x64xbf16, #tpu.memory_space<vmem>>, %arg7: memref<684x64xf32, #tpu.memory_space<vmem>>) attributes {dimension_semantics = [#tpu.dimension_semantics<parallel>, #tpu.dimension_semantics<arbitrary>], iteration_bounds = array<i64: 1, 1>, scalar_prefetch = 0 : i64, scratch_operands = 1 : i64, tpu.core_type = #tpu.core_type<tc>, window_params = [{transform_indices = @transform_0, window_bounds = array<i64: 732, 4>}, {transform_indices = @transform_1, window_bounds = array<i64: 9, 4, 64>}, {transform_indices = @transform_2, window_bounds = array<i64: 1, 64>}, {pipeline_mode = #tpu.pipeline_mode<synchronous>, transform_indices = @transform_3, window_bounds = array<i64: 684, 1>}, {transform_indices = @transform_4, window_bounds = array<i64: 732, 64>}]} {
    %c5 = arith.constant 5 : index
    %c0 = arith.constant 0 : index
    %0 = vector.load %arg2[%c5, %c0] : memref<732x4xbf16, #tpu.memory_space<vmem>>, vector<684x4xbf16>
    %c0_0 = arith.constant 0 : index
    %c0_1 = arith.constant 0 : index
    %c0_2 = arith.constant 0 : index
    %1 = vector.load %arg3[%c0_0, %c0_1, %c0_2] : memref<9x4x64xbf16, #tpu.memory_space<vmem>>, vector<1x4x64xbf16>
    %2 = vector.shape_cast %1 : vector<1x4x64xbf16> to vector<4x64xbf16>
    %cst = arith.constant dense<0.000000e+00> : vector<684x64xf32>
    %3 = tpu.matmul %0, %2, %cst {dimension_numbers = #tpu.dot_dimension_numbers<[1], [0], [0], [1], [0, 0, 1, 1], [], []>} : vector<684x4xbf16>, vector<4x64xbf16>, vector<684x64xf32> -> vector<684x64xf32>
    %c6 = arith.constant 6 : index
    %c0_3 = arith.constant 0 : index
    %4 = vector.load %arg2[%c6, %c0_3] : memref<732x4xbf16, #tpu.memory_space<vmem>>, vector<684x4xbf16>
    %c1 = arith.constant 1 : index
    %c0_4 = arith.constant 0 : index
    %c0_5 = arith.constant 0 : index
    %5 = vector.load %arg3[%c1, %c0_4, %c0_5] : memref<9x4x64xbf16, #tpu.memory_space<vmem>>, vector<1x4x64xbf16>
    %6 = vector.shape_cast %5 : vector<1x4x64xbf16> to vector<4x64xbf16>
    %cst_6 = arith.constant dense<0.000000e+00> : vector<684x64xf32>
    %7 = tpu.matmul %4, %6, %cst_6 {dimension_numbers = #tpu.dot_dimension_numbers<[1], [0], [0], [1], [0, 0, 1, 1], [], []>} : vector<684x4xbf16>, vector<4x64xbf16>, vector<684x64xf32> -> vector<684x64xf32>
    %8 = arith.addf %3, %7 : vector<684x64xf32>
    %c7 = arith.constant 7 : index
    %c0_7 = arith.constant 0 : index
    %9 = vector.load %arg2[%c7, %c0_7] : memref<732x4xbf16, #tpu.memory_space<vmem>>, vector<684x4xbf16>
    %c2 = arith.constant 2 : index
    %c0_8 = arith.constant 0 : index
    %c0_9 = arith.constant 0 : index
    %10 = vector.load %arg3[%c2, %c0_8, %c0_9] : memref<9x4x64xbf16, #tpu.memory_space<vmem>>, vector<1x4x64xbf16>
    %11 = vector.shape_cast %10 : vector<1x4x64xbf16> to vector<4x64xbf16>
    %cst_10 = arith.constant dense<0.000000e+00> : vector<684x64xf32>
    %12 = tpu.matmul %9, %11, %cst_10 {dimension_numbers = #tpu.dot_dimension_numbers<[1], [0], [0], [1], [0, 0, 1, 1], [], []>} : vector<684x4xbf16>, vector<4x64xbf16>, vector<684x64xf32> -> vector<684x64xf32>
    %13 = arith.addf %8, %12 : vector<684x64xf32>
    %c23 = arith.constant 23 : index
    %c0_11 = arith.constant 0 : index
    %14 = vector.load %arg2[%c23, %c0_11] : memref<732x4xbf16, #tpu.memory_space<vmem>>, vector<684x4xbf16>
    %c3 = arith.constant 3 : index
    %c0_12 = arith.constant 0 : index
    %c0_13 = arith.constant 0 : index
    %15 = vector.load %arg3[%c3, %c0_12, %c0_13] : memref<9x4x64xbf16, #tpu.memory_space<vmem>>, vector<1x4x64xbf16>
    %16 = vector.shape_cast %15 : vector<1x4x64xbf16> to vector<4x64xbf16>
    %cst_14 = arith.constant dense<0.000000e+00> : vector<684x64xf32>
    %17 = tpu.matmul %14, %16, %cst_14 {dimension_numbers = #tpu.dot_dimension_numbers<[1], [0], [0], [1], [0, 0, 1, 1], [], []>} : vector<684x4xbf16>, vector<4x64xbf16>, vector<684x64xf32> -> vector<684x64xf32>
    %18 = arith.addf %13, %17 : vector<684x64xf32>
    %c24 = arith.constant 24 : index
    %c0_15 = arith.constant 0 : index
    %19 = vector.load %arg2[%c24, %c0_15] : memref<732x4xbf16, #tpu.memory_space<vmem>>, vector<684x4xbf16>
    %c4 = arith.constant 4 : index
    %c0_16 = arith.constant 0 : index
    %c0_17 = arith.constant 0 : index
    %20 = vector.load %arg3[%c4, %c0_16, %c0_17] : memref<9x4x64xbf16, #tpu.memory_space<vmem>>, vector<1x4x64xbf16>
    %21 = vector.shape_cast %20 : vector<1x4x64xbf16> to vector<4x64xbf16>
    %cst_18 = arith.constant dense<0.000000e+00> : vector<684x64xf32>
    %22 = tpu.matmul %19, %21, %cst_18 {dimension_numbers = #tpu.dot_dimension_numbers<[1], [0], [0], [1], [0, 0, 1, 1], [], []>} : vector<684x4xbf16>, vector<4x64xbf16>, vector<684x64xf32> -> vector<684x64xf32>
    %23 = arith.addf %18, %22 : vector<684x64xf32>
    %c25 = arith.constant 25 : index
    %c0_19 = arith.constant 0 : index
    %24 = vector.load %arg2[%c25, %c0_19] : memref<732x4xbf16, #tpu.memory_space<vmem>>, vector<684x4xbf16>
    %c5_20 = arith.constant 5 : index
    %c0_21 = arith.constant 0 : index
    %c0_22 = arith.constant 0 : index
    %25 = vector.load %arg3[%c5_20, %c0_21, %c0_22] : memref<9x4x64xbf16, #tpu.memory_space<vmem>>, vector<1x4x64xbf16>
    %26 = vector.shape_cast %25 : vector<1x4x64xbf16> to vector<4x64xbf16>
    %cst_23 = arith.constant dense<0.000000e+00> : vector<684x64xf32>
    %27 = tpu.matmul %24, %26, %cst_23 {dimension_numbers = #tpu.dot_dimension_numbers<[1], [0], [0], [1], [0, 0, 1, 1], [], []>} : vector<684x4xbf16>, vector<4x64xbf16>, vector<684x64xf32> -> vector<684x64xf32>
    %28 = arith.addf %23, %27 : vector<684x64xf32>
    %c41 = arith.constant 41 : index
    %c0_24 = arith.constant 0 : index
    %29 = vector.load %arg2[%c41, %c0_24] : memref<732x4xbf16, #tpu.memory_space<vmem>>, vector<684x4xbf16>
    %c6_25 = arith.constant 6 : index
    %c0_26 = arith.constant 0 : index
    %c0_27 = arith.constant 0 : index
    %30 = vector.load %arg3[%c6_25, %c0_26, %c0_27] : memref<9x4x64xbf16, #tpu.memory_space<vmem>>, vector<1x4x64xbf16>
    %31 = vector.shape_cast %30 : vector<1x4x64xbf16> to vector<4x64xbf16>
    %cst_28 = arith.constant dense<0.000000e+00> : vector<684x64xf32>
    %32 = tpu.matmul %29, %31, %cst_28 {dimension_numbers = #tpu.dot_dimension_numbers<[1], [0], [0], [1], [0, 0, 1, 1], [], []>} : vector<684x4xbf16>, vector<4x64xbf16>, vector<684x64xf32> -> vector<684x64xf32>
    %33 = arith.addf %28, %32 : vector<684x64xf32>
    %c42 = arith.constant 42 : index
    %c0_29 = arith.constant 0 : index
    %34 = vector.load %arg2[%c42, %c0_29] : memref<732x4xbf16, #tpu.memory_space<vmem>>, vector<684x4xbf16>
    %c7_30 = arith.constant 7 : index
    %c0_31 = arith.constant 0 : index
    %c0_32 = arith.constant 0 : index
    %35 = vector.load %arg3[%c7_30, %c0_31, %c0_32] : memref<9x4x64xbf16, #tpu.memory_space<vmem>>, vector<1x4x64xbf16>
    %36 = vector.shape_cast %35 : vector<1x4x64xbf16> to vector<4x64xbf16>
    %cst_33 = arith.constant dense<0.000000e+00> : vector<684x64xf32>
    %37 = tpu.matmul %34, %36, %cst_33 {dimension_numbers = #tpu.dot_dimension_numbers<[1], [0], [0], [1], [0, 0, 1, 1], [], []>} : vector<684x4xbf16>, vector<4x64xbf16>, vector<684x64xf32> -> vector<684x64xf32>
    %38 = arith.addf %33, %37 : vector<684x64xf32>
    %c43 = arith.constant 43 : index
    %c0_34 = arith.constant 0 : index
    %39 = vector.load %arg2[%c43, %c0_34] : memref<732x4xbf16, #tpu.memory_space<vmem>>, vector<684x4xbf16>
    %c8 = arith.constant 8 : index
    %c0_35 = arith.constant 0 : index
    %c0_36 = arith.constant 0 : index
    %40 = vector.load %arg3[%c8, %c0_35, %c0_36] : memref<9x4x64xbf16, #tpu.memory_space<vmem>>, vector<1x4x64xbf16>
    %41 = vector.shape_cast %40 : vector<1x4x64xbf16> to vector<4x64xbf16>
    %cst_37 = arith.constant dense<0.000000e+00> : vector<684x64xf32>
    %42 = tpu.matmul %39, %41, %cst_37 {dimension_numbers = #tpu.dot_dimension_numbers<[1], [0], [0], [1], [0, 0, 1, 1], [], []>} : vector<684x4xbf16>, vector<4x64xbf16>, vector<684x64xf32> -> vector<684x64xf32>
    %43 = arith.addf %38, %42 : vector<684x64xf32>
    %c0_i32 = arith.constant 0 : i32
    %44 = arith.cmpi eq, %arg1, %c0_i32 : i32
    %45 = arith.extui %44 : i1 to i32
    %c0_i32_38 = arith.constant 0 : i32
    %46 = arith.cmpi ne, %45, %c0_i32_38 : i32
    scf.if %46 {
      %c0_43 = arith.constant 0 : index
      %c0_44 = arith.constant 0 : index
      %53 = vector.load %arg7[%c0_43, %c0_44] : memref<684x64xf32, #tpu.memory_space<vmem>>, vector<684x64xf32>
      tpu.vector_store %arg7[%c0_43, %c0_44], %43 {strides = array<i32>} : memref<684x64xf32, #tpu.memory_space<vmem>>, vector<684x64xf32>,
    } else {
    }
    %c0_i32_39 = arith.constant 0 : i32
    %47 = arith.cmpi sgt, %arg1, %c0_i32_39 : i32
    %48 = arith.extui %47 : i1 to i32
    %c0_i32_40 = arith.constant 0 : i32
    %49 = arith.cmpi ne, %48, %c0_i32_40 : i32
    scf.if %49 {
      %c0_43 = arith.constant 0 : index
      %c0_44 = arith.constant 0 : index
      %53 = vector.load %arg7[%c0_43, %c0_44] : memref<684x64xf32, #tpu.memory_space<vmem>>, vector<684x64xf32>
      %54 = arith.addf %53, %43 : vector<684x64xf32>
      %c0_45 = arith.constant 0 : index
      %c0_46 = arith.constant 0 : index
      %55 = vector.load %arg7[%c0_45, %c0_46] : memref<684x64xf32, #tpu.memory_space<vmem>>, vector<684x64xf32>
      tpu.vector_store %arg7[%c0_45, %c0_46], %54 {strides = array<i32>} : memref<684x64xf32, #tpu.memory_space<vmem>>, vector<684x64xf32>,
    } else {
    }
    %c0_i32_41 = arith.constant 0 : i32
    %50 = arith.cmpi eq, %arg1, %c0_i32_41 : i32
    %51 = arith.extui %50 : i1 to i32
    %c0_i32_42 = arith.constant 0 : i32
    %52 = arith.cmpi ne, %51, %c0_i32_42 : i32
    scf.if %52 {
      %c0_43 = arith.constant 0 : index
      %c0_44 = arith.constant 0 : index
      %53 = vector.load %arg7[%c0_43, %c0_44] : memref<684x64xf32, #tpu.memory_space<vmem>>, vector<684x64xf32>
      %c0_45 = arith.constant 0 : index
      %c0_46 = arith.constant 0 : index
      %54 = vector.load %arg4[%c0_45, %c0_46] : memref<1x64xf32, #tpu.memory_space<vmem>>, vector<1x64xf32>
      %55 = vector.broadcast %54 : vector<1x64xf32> to vector<684x64xf32>
      %56 = arith.addf %53, %55 : vector<684x64xf32>
      %c0_47 = arith.constant 0 : index
      %c0_48 = arith.constant 0 : index
      %57 = vector.load %arg5[%c0_47, %c0_48] : memref<684x1xf32, #tpu.memory_space<vmem>>, vector<684x1xf32>
      %58 = vector.broadcast %57 : vector<684x1xf32> to vector<684x64xf32>
      %59 = arith.mulf %56, %58 : vector<684x64xf32>
      %cst_49 = arith.constant 0.000000e+00 : bf16
      %60 = vector.broadcast %cst_49 : bf16 to vector<24x64xbf16>
      %c0_50 = arith.constant 0 : index
      %c0_51 = arith.constant 0 : index
      %61 = vector.load %arg6[%c0_50, %c0_51] : memref<732x64xbf16, #tpu.memory_space<vmem>>, vector<24x64xbf16>
      tpu.vector_store %arg6[%c0_50, %c0_51], %60 {strides = array<i32>} : memref<732x64xbf16, #tpu.memory_space<vmem>>, vector<24x64xbf16>,
      %62 = arith.truncf %59 : vector<684x64xf32> to vector<684x64xbf16>
      %c24_52 = arith.constant 24 : index
      %c0_53 = arith.constant 0 : index
      %63 = vector.load %arg6[%c24_52, %c0_53] : memref<732x64xbf16, #tpu.memory_space<vmem>>, vector<684x64xbf16>
      tpu.vector_store %arg6[%c24_52, %c0_53], %62 {strides = array<i32>} : memref<732x64xbf16, #tpu.memory_space<vmem>>, vector<684x64xbf16>,
      %cst_54 = arith.constant 0.000000e+00 : bf16
      %64 = vector.broadcast %cst_54 : bf16 to vector<24x64xbf16>
      %c708 = arith.constant 708 : index
      %c0_55 = arith.constant 0 : index
      %65 = vector.load %arg6[%c708, %c0_55] : memref<732x64xbf16, #tpu.memory_space<vmem>>, vector<24x64xbf16>
      tpu.vector_store %arg6[%c708, %c0_55], %64 {strides = array<i32>} : memref<732x64xbf16, #tpu.memory_space<vmem>>, vector<24x64xbf16>,
    } else {
    }
    return
  }
  func.func @transform_0(%arg0: i32, %arg1: i32) -> (i32, i32) {
    %c0_i32 = arith.constant 0 : i32
    %0 = arith.subi %arg1, %c0_i32 : i32
    %c0_i32_0 = arith.constant 0 : i32
    %c0_i32_1 = arith.constant 0 : i32
    %1 = arith.maxsi %c0_i32_0, %0 : i32
    %2 = arith.minsi %c0_i32_1, %1 : i32
    %c0_i32_2 = arith.constant 0 : i32
    %c0_i32_3 = arith.constant 0 : i32
    return %c0_i32_2, %2 : i32, i32
  }
  func.func @transform_1(%arg0: i32, %arg1: i32) -> (i32, i32, i32) {
    %c0_i32 = arith.constant 0 : i32
    %0 = arith.subi %arg1, %c0_i32 : i32
    %c0_i32_0 = arith.constant 0 : i32
    %c0_i32_1 = arith.constant 0 : i32
    %1 = arith.maxsi %c0_i32_0, %0 : i32
    %2 = arith.minsi %c0_i32_1, %1 : i32
    %c0_i32_2 = arith.constant 0 : i32
    %c0_i32_3 = arith.constant 0 : i32
    return %c0_i32_2, %2, %arg0 : i32, i32, i32
  }
  func.func @transform_2(%arg0: i32, %arg1: i32) -> (i32, i32) {
    %c0_i32 = arith.constant 0 : i32
    %c0_i32_0 = arith.constant 0 : i32
    return %c0_i32, %arg0 : i32, i32
  }
  func.func @transform_3(%arg0: i32, %arg1: i32) -> (i32, i32) {
    %c0_i32 = arith.constant 0 : i32
    %c0_i32_0 = arith.constant 0 : i32
    %c0_i32_1 = arith.constant 0 : i32
    return %c0_i32, %c0_i32_0 : i32, i32
  }
  func.func @transform_4(%arg0: i32, %arg1: i32) -> (i32, i32) {
    %c0_i32 = arith.constant 0 : i32
    %c0_i32_0 = arith.constant 0 : i32
    return %c0_i32, %arg0 : i32, i32
  }
}

</mosaic_0001>

<llo_original>
// kernel: first_conv.1
$region0: #{first_conv.1}
  #allocation0 [shape = 'u32[]', space=smem, size = 0x4, offset = 0x4, fixed_abs, tag = 'smem constant byte address 0x4 - core index']
  #allocation1 [shape = 'u32[144,128]{1,0:T(1,128)}', space=vmem, size = 0x12000, scoped, tag = 'internal scratch']
  #allocation2 [shape = 'f32[684,64]{1,0:T(8,128)}', space=vmem, size = 0x56000, scoped, tag = 'scratch operand']
  %s0 = inlined_call_operand.vmem [shape: bf16[732,4], index: 0, kind: input, shape index: {}]
  %s1 = inlined_call_operand.vmem [shape: bf16[9,4,64], index: 1, kind: input, shape index: {}]
  %s2 = inlined_call_operand.vmem [shape: f32[1,64], index: 2, kind: input, shape index: {}]
  %s3 = inlined_call_operand.vmem [shape: f32[684,1], index: 3, kind: input, shape index: {}]
  %s4 = inlined_call_operand.vmem [shape: bf16[732,64], index: 4, kind: output, shape index: {}]
  %s5 = sld [smem:[#allocation0]]
  $region38: #{first_conv.1} parent=0
    _
  %s7 = ssub.s32 1, %s5
  %s8 = scalar_select 0, %s7, %s5
  // Predicated region
  $region2: #{first_conv.1} parent=0 // pred_check
    _
  $region3: #{first_conv.1} parent=0 // pred_check_branch
    %10 = sbr.rel (0) target = $region5
  $region4: #{first_conv.1} parent=0 // pred_region
    _
  $region5: #{first_conv.1} parent=0 // pred_fallthru
    _
  // Predicated region
  $region6: #{first_conv.1} parent=0 // pred_check
    _
  $region7: #{first_conv.1} parent=0 // pred_check_branch
    %12 = sbr.rel (0) target = $region9
  $region8: #{first_conv.1} parent=0 // pred_region
    _
  $region9: #{first_conv.1} parent=0 // pred_fallthru
    _
  // Predicated region
  $region10: #{first_conv.1} parent=0 // pred_check
    _
  $region11: #{first_conv.1} parent=0 // pred_check_branch
    %14 = sbr.rel (0) target = $region13
  $region12: #{first_conv.1} parent=0 // pred_region
    _
  $region13: #{first_conv.1} parent=0 // pred_fallthru
    _
  // Predicated region
  $region14: #{first_conv.1} parent=0 // pred_check
    _
  $region15: #{first_conv.1} parent=0 // pred_check_branch
    %16 = sbr.rel (0) target = $region17
  $region16: #{first_conv.1} parent=0 // pred_region
    _
  $region17: #{first_conv.1} parent=0 // pred_fallthru
    _
  %v18 = vld [vmem:[%s0] sm:$0xc]
  %v19 = vld [vmem:[%s0 + $0x4] sm:$0xf]
  %v20 = vld [vmem:[%s0 + $0x8] sm:$0xf]
  %v21 = vld [vmem:[%s0 + $0xc] sm:$0xf]
  %v22 = vld [vmem:[%s0 + $0x10] sm:$0xf]
  %v23 = vld [vmem:[%s0 + $0x14] sm:$0xf]
  %v24 = vld [vmem:[%s0 + $0x18] sm:$0xf]
  %v25 = vld [vmem:[%s0 + $0x1c] sm:$0xf]
  %v26 = vld [vmem:[%s0 + $0x20] sm:$0xf]
  %v27 = vld [vmem:[%s0 + $0x24] sm:$0xf]
  %v28 = vld [vmem:[%s0 + $0x28] sm:$0xf]
  %v29 = vld [vmem:[%s0 + $0x2c] sm:$0xf]
  %v30 = vld [vmem:[%s0 + $0x30] sm:$0xf]
  %v31 = vld [vmem:[%s0 + $0x34] sm:$0xf]
  %v32 = vld [vmem:[%s0 + $0x38] sm:$0xf]
  %v33 = vld [vmem:[%s0 + $0x3c] sm:$0xf]
  %v34 = vld [vmem:[%s0 + $0x40] sm:$0xf]
  %v35 = vld [vmem:[%s0 + $0x44] sm:$0xf]
  %v36 = vld [vmem:[%s0 + $0x48] sm:$0xf]
  %v37 = vld [vmem:[%s0 + $0x4c] sm:$0xf]
  %v38 = vld [vmem:[%s0 + $0x50] sm:$0xf]
  %v39 = vld [vmem:[%s0 + $0x54] sm:$0xf]
  %v40 = vld [vmem:[%s0 + $0x58] sm:$0xf]
  %v41 = vld [vmem:[%s0 + $0x5c] sm:$0xf]
  %v42 = vld [vmem:[%s0 + $0x60] sm:$0xf]
  %v43 = vld [vmem:[%s0 + $0x64] sm:$0xf]
  %v44 = vld [vmem:[%s0 + $0x68] sm:$0xf]
  %v45 = vld [vmem:[%s0 + $0x6c] sm:$0xf]
  %v46 = vld [vmem:[%s0 + $0x70] sm:$0xf]
  %v47 = vld [vmem:[%s0 + $0x74] sm:$0xf]
  %v48 = vld [vmem:[%s0 + $0x78] sm:$0xf]
  %v49 = vld [vmem:[%s0 + $0x7c] sm:$0xf]
  %v50 = vld [vmem:[%s0 + $0x80] sm:$0xf]
  %v51 = vld [vmem:[%s0 + $0x84] sm:$0xf]
  %v52 = vld [vmem:[%s0 + $0x88] sm:$0xf]
  %v53 = vld [vmem:[%s0 + $0x8c] sm:$0xf]
  %v54 = vld [vmem:[%s0 + $0x90] sm:$0xf]
  %v55 = vld [vmem:[%s0 + $0x94] sm:$0xf]
  %v56 = vld [vmem:[%s0 + $0x98] sm:$0xf]
  %v57 = vld [vmem:[%s0 + $0x9c] sm:$0xf]
  %v58 = vld [vmem:[%s0 + $0xa0] sm:$0xf]
  %v59 = vld [vmem:[%s0 + $0xa4] sm:$0xf]
  %v60 = vld [vmem:[%s0 + $0xa8] sm:$0xf]
  %v61 = vld [vmem:[%s0 + $0xac] sm:$0xf]
  %v62 = vld [vmem:[%s0 + $0xb0] sm:$0xf]
  %v63 = vld [vmem:[%s0 + $0xb4] sm:$0xf]
  %v64 = vld [vmem:[%s0 + $0xb8] sm:$0xf]
  %v65 = vld [vmem:[%s0 + $0xbc] sm:$0xf]
  %v66 = vld [vmem:[%s0 + $0xc0] sm:$0xf]
  %v67 = vld [vmem:[%s0 + $0xc4] sm:$0xf]
  %v68 = vld [vmem:[%s0 + $0xc8] sm:$0xf]
  %v69 = vld [vmem:[%s0 + $0xcc] sm:$0xf]
  %v70 = vld [vmem:[%s0 + $0xd0] sm:$0xf]
  %v71 = vld [vmem:[%s0 + $0xd4] sm:$0xf]
  %v72 = vld [vmem:[%s0 + $0xd8] sm:$0xf]
  %v73 = vld [vmem:[%s0 + $0xdc] sm:$0xf]
  %v74 = vld [vmem:[%s0 + $0xe0] sm:$0xf]
  %v75 = vld [vmem:[%s0 + $0xe4] sm:$0xf]
  %v76 = vld [vmem:[%s0 + $0xe8] sm:$0xf]
  %v77 = vld [vmem:[%s0 + $0xec] sm:$0xf]
  %v78 = vld [vmem:[%s0 + $0xf0] sm:$0xf]
  %v79 = vld [vmem:[%s0 + $0xf4] sm:$0xf]
  %v80 = vld [vmem:[%s0 + $0xf8] sm:$0xf]
  %v81 = vld [vmem:[%s0 + $0xfc] sm:$0xf]
  %v82 = vld [vmem:[%s0 + $0x100] sm:$0xf]
  %v83 = vld [vmem:[%s0 + $0x104] sm:$0xf]
  %v84 = vld [vmem:[%s0 + $0x108] sm:$0xf]
  %v85 = vld [vmem:[%s0 + $0x10c] sm:$0xf]
  %v86 = vld [vmem:[%s0 + $0x110] sm:$0xf]
  %v87 = vld [vmem:[%s0 + $0x114] sm:$0xf]
  %v88 = vld [vmem:[%s0 + $0x118] sm:$0xf]
  %v89 = vld [vmem:[%s0 + $0x11c] sm:$0xf]
  %v90 = vld [vmem:[%s0 + $0x120] sm:$0xf]
  %v91 = vld [vmem:[%s0 + $0x124] sm:$0xf]
  %v92 = vld [vmem:[%s0 + $0x128] sm:$0xf]
  %v93 = vld [vmem:[%s0 + $0x12c] sm:$0xf]
  %v94 = vld [vmem:[%s0 + $0x130] sm:$0xf]
  %v95 = vld [vmem:[%s0 + $0x134] sm:$0xf]
  %v96 = vld [vmem:[%s0 + $0x138] sm:$0xf]
  %v97 = vld [vmem:[%s0 + $0x13c] sm:$0xf]
  %v98 = vld [vmem:[%s0 + $0x140] sm:$0xf]
  %v99 = vld [vmem:[%s0 + $0x144] sm:$0xf]
  %v100 = vld [vmem:[%s0 + $0x148] sm:$0xf]
  %v101 = vld [vmem:[%s0 + $0x14c] sm:$0xf]
  %v102 = vld [vmem:[%s0 + $0x150] sm:$0xf]
  %v103 = vld [vmem:[%s0 + $0x154] sm:$0xf]
  %v104 = vld [vmem:[%s0 + $0x158] sm:$0x1]
  %v105 = vld [vmem:[%s1] sm:$0x3]
  %v106 = vld [vmem:[%s0] sm:$0x8]
  %s107 = scalar_lea.vmem %s1, 2
  %v108 = vld [vmem:[%s107] sm:$0x3]
  %v196 = vunpack.c.l.b16 %v106
  %v197 = vunpack.c.l.b16 %v19
  %v198 = vunpack.c.l.b16 %v20
  %v199 = vunpack.c.l.b16 %v21
  %v200 = vunpack.c.l.b16 %v22
  %v201 = vunpack.c.l.b16 %v23
  %v202 = vunpack.c.l.b16 %v24
  %v203 = vunpack.c.l.b16 %v25
  %v204 = vunpack.c.l.b16 %v26
  %v205 = vunpack.c.l.b16 %v27
  %v206 = vunpack.c.l.b16 %v28
  %v207 = vunpack.c.l.b16 %v29
  %v208 = vunpack.c.l.b16 %v30
  %v209 = vunpack.c.l.b16 %v31
  %v210 = vunpack.c.l.b16 %v32
  %v211 = vunpack.c.l.b16 %v33
  %v212 = vunpack.c.l.b16 %v34
  %v213 = vunpack.c.l.b16 %v35
  %v214 = vunpack.c.l.b16 %v36
  %v215 = vunpack.c.l.b16 %v37
  %v216 = vunpack.c.l.b16 %v38
  %v217 = vunpack.c.l.b16 %v39
  %v218 = vunpack.c.l.b16 %v40
  %v219 = vunpack.c.l.b16 %v41
  %v220 = vunpack.c.l.b16 %v42
  %v221 = vunpack.c.l.b16 %v43
  %v222 = vunpack.c.l.b16 %v44
  %v223 = vunpack.c.l.b16 %v45
  %v224 = vunpack.c.l.b16 %v46
  %v225 = vunpack.c.l.b16 %v47
  %v226 = vunpack.c.l.b16 %v48
  %v227 = vunpack.c.l.b16 %v49
  %v228 = vunpack.c.l.b16 %v50
  %v229 = vunpack.c.l.b16 %v51
  %v230 = vunpack.c.l.b16 %v52
  %v231 = vunpack.c.l.b16 %v53
  %v232 = vunpack.c.l.b16 %v54
  %v233 = vunpack.c.l.b16 %v55
  %v234 = vunpack.c.l.b16 %v56
  %v235 = vunpack.c.l.b16 %v57
  %v236 = vunpack.c.l.b16 %v58
  %v237 = vunpack.c.l.b16 %v59
  %v238 = vunpack.c.l.b16 %v60
  %v239 = vunpack.c.l.b16 %v61
  %v240 = vunpack.c.l.b16 %v62
  %v241 = vunpack.c.l.b16 %v63
  %v242 = vunpack.c.l.b16 %v64
  %v243 = vunpack.c.l.b16 %v65
  %v244 = vunpack.c.l.b16 %v66
  %v245 = vunpack.c.l.b16 %v67
  %v246 = vunpack.c.l.b16 %v68
  %v247 = vunpack.c.l.b16 %v69
  %v248 = vunpack.c.l.b16 %v70
  %v249 = vunpack.c.l.b16 %v71
  %v250 = vunpack.c.l.b16 %v72
  %v251 = vunpack.c.l.b16 %v73
  %v252 = vunpack.c.l.b16 %v74
  %v253 = vunpack.c.l.b16 %v75
  %v254 = vunpack.c.l.b16 %v76
  %v255 = vunpack.c.l.b16 %v77
  %v256 = vunpack.c.l.b16 %v78
  %v257 = vunpack.c.l.b16 %v79
  %v258 = vunpack.c.l.b16 %v80
  %v259 = vunpack.c.l.b16 %v81
  %v260 = vunpack.c.l.b16 %v82
  %v261 = vunpack.c.l.b16 %v83
  %v262 = vunpack.c.l.b16 %v84
  %v263 = vunpack.c.l.b16 %v85
  %v264 = vunpack.c.l.b16 %v86
  %v265 = vunpack.c.l.b16 %v87
  %v266 = vunpack.c.l.b16 %v88
  %v267 = vunpack.c.l.b16 %v89
  %v268 = vunpack.c.l.b16 %v90
  %v269 = vunpack.c.l.b16 %v91
  %v270 = vunpack.c.l.b16 %v92
  %v271 = vunpack.c.l.b16 %v93
  %v272 = vunpack.c.l.b16 %v94
  %v273 = vunpack.c.l.b16 %v95
  %v274 = vunpack.c.l.b16 %v96
  %v275 = vunpack.c.l.b16 %v97
  %v276 = vunpack.c.l.b16 %v98
  %v277 = vunpack.c.l.b16 %v99
  %v278 = vunpack.c.l.b16 %v100
  %v279 = vunpack.c.l.b16 %v101
  %v280 = vunpack.c.l.b16 %v102
  %v281 = vunpack.c.l.b16 %v103
  %v282 = vunpack.c.l.b16 %v104
  %v283 = vpack.c.b16 %v197, %v196
  %v284 = vpack.c.b16 %v199, %v198
  %v285 = vpack.c.b16 %v201, %v200
  %v286 = vpack.c.b16 %v203, %v202
  %v287 = vpack.c.b16 %v205, %v204
  %v288 = vpack.c.b16 %v207, %v206
  %v289 = vpack.c.b16 %v209, %v208
  %v290 = vpack.c.b16 %v211, %v210
  %v291 = vpack.c.b16 %v213, %v212
  %v292 = vpack.c.b16 %v215, %v214
  %v293 = vpack.c.b16 %v217, %v216
  %v294 = vpack.c.b16 %v219, %v218
  %v295 = vpack.c.b16 %v221, %v220
  %v296 = vpack.c.b16 %v223, %v222
  %v297 = vpack.c.b16 %v225, %v224
  %v298 = vpack.c.b16 %v227, %v226
  %v299 = vpack.c.b16 %v229, %v228
  %v300 = vpack.c.b16 %v231, %v230
  %v301 = vpack.c.b16 %v233, %v232
  %v302 = vpack.c.b16 %v235, %v234
  %v303 = vpack.c.b16 %v237, %v236
  %v304 = vpack.c.b16 %v239, %v238
  %v305 = vpack.c.b16 %v241, %v240
  %v306 = vpack.c.b16 %v243, %v242
  %v307 = vpack.c.b16 %v245, %v244
  %v308 = vpack.c.b16 %v247, %v246
  %v309 = vpack.c.b16 %v249, %v248
  %v310 = vpack.c.b16 %v251, %v250
  %v311 = vpack.c.b16 %v253, %v252
  %v312 = vpack.c.b16 %v255, %v254
  %v313 = vpack.c.b16 %v257, %v256
  %v314 = vpack.c.b16 %v259, %v258
  %v315 = vpack.c.b16 %v261, %v260
  %v316 = vpack.c.b16 %v263, %v262
  %v317 = vpack.c.b16 %v265, %v264
  %v318 = vpack.c.b16 %v267, %v266
  %v319 = vpack.c.b16 %v269, %v268
  %v320 = vpack.c.b16 %v271, %v270
  %v321 = vpack.c.b16 %v273, %v272
  %v322 = vpack.c.b16 %v275, %v274
  %v323 = vpack.c.b16 %v277, %v276
  %v324 = vpack.c.b16 %v279, %v278
  %v325 = vpack.c.b16 %v281, %v280
  %v326 = vpack.c.b16 %v282, %v282
  %vm327 = vcmask 1044480
  %v328 = vrot.slane %v283, 3
  %v329 = vrot.slane %v284, 3
  %v330 = vsel %vm327, %v328, %v329
  %v331 = vrot.slane %v285, 3
  %v332 = vsel %vm327, %v329, %v331
  %v333 = vrot.slane %v286, 3
  %v334 = vsel %vm327, %v331, %v333
  %v335 = vrot.slane %v287, 3
  %v336 = vsel %vm327, %v333, %v335
  %v337 = vrot.slane %v288, 3
  %v338 = vsel %vm327, %v335, %v337
  %v339 = vrot.slane %v289, 3
  %v340 = vsel %vm327, %v337, %v339
  %v341 = vrot.slane %v290, 3
  %v342 = vsel %vm327, %v339, %v341
  %v343 = vrot.slane %v291, 3
  %v344 = vsel %vm327, %v341, %v343
  %v345 = vrot.slane %v292, 3
  %v346 = vsel %vm327, %v343, %v345
  %v347 = vrot.slane %v293, 3
  %v348 = vsel %vm327, %v345, %v347
  %v349 = vrot.slane %v294, 3
  %v350 = vsel %vm327, %v347, %v349
  %v351 = vrot.slane %v295, 3
  %v352 = vsel %vm327, %v349, %v351
  %v353 = vrot.slane %v296, 3
  %v354 = vsel %vm327, %v351, %v353
  %v355 = vrot.slane %v297, 3
  %v356 = vsel %vm327, %v353, %v355
  %v357 = vrot.slane %v298, 3
  %v358 = vsel %vm327, %v355, %v357
  %v359 = vrot.slane %v299, 3
  %v360 = vsel %vm327, %v357, %v359
  %v361 = vrot.slane %v300, 3
  %v362 = vsel %vm327, %v359, %v361
  %v363 = vrot.slane %v301, 3
  %v364 = vsel %vm327, %v361, %v363
  %v365 = vrot.slane %v302, 3
  %v366 = vsel %vm327, %v363, %v365
  %v367 = vrot.slane %v303, 3
  %v368 = vsel %vm327, %v365, %v367
  %v369 = vrot.slane %v304, 3
  %v370 = vsel %vm327, %v367, %v369
  %v371 = vrot.slane %v305, 3
  %v372 = vsel %vm327, %v369, %v371
  %v373 = vrot.slane %v306, 3
  %v374 = vsel %vm327, %v371, %v373
  %v375 = vrot.slane %v307, 3
  %v376 = vsel %vm327, %v373, %v375
  %v377 = vrot.slane %v308, 3
  %v378 = vsel %vm327, %v375, %v377
  %v379 = vrot.slane %v309, 3
  %v380 = vsel %vm327, %v377, %v379
  %v381 = vrot.slane %v310, 3
  %v382 = vsel %vm327, %v379, %v381
  %v383 = vrot.slane %v311, 3
  %v384 = vsel %vm327, %v381, %v383
  %v385 = vrot.slane %v312, 3
  %v386 = vsel %vm327, %v383, %v385
  %v387 = vrot.slane %v313, 3
  %v388 = vsel %vm327, %v385, %v387
  %v389 = vrot.slane %v314, 3
  %v390 = vsel %vm327, %v387, %v389
  %v391 = vrot.slane %v315, 3
  %v392 = vsel %vm327, %v389, %v391
  %v393 = vrot.slane %v316, 3
  %v394 = vsel %vm327, %v391, %v393
  %v395 = vrot.slane %v317, 3
  %v396 = vsel %vm327, %v393, %v395
  %v397 = vrot.slane %v318, 3
  %v398 = vsel %vm327, %v395, %v397
  %v399 = vrot.slane %v319, 3
  %v400 = vsel %vm327, %v397, %v399
  %v401 = vrot.slane %v320, 3
  %v402 = vsel %vm327, %v399, %v401
  %v403 = vrot.slane %v321, 3
  %v404 = vsel %vm327, %v401, %v403
  %v405 = vrot.slane %v322, 3
  %v406 = vsel %vm327, %v403, %v405
  %v407 = vrot.slane %v323, 3
  %v408 = vsel %vm327, %v405, %v407
  %v409 = vrot.slane %v324, 3
  %v410 = vsel %vm327, %v407, %v409
  %v411 = vrot.slane %v325, 3
  %v412 = vsel %vm327, %v409, %v411
  %v413 = vrot.slane %v326, 3
  %v414 = vsel %vm327, %v411, %v413
  %vm415 = vcmask 31744
  %v417 = vsel %vm415, %v330, 0
  %v420 = vsel %vm415, %v332, 0
  %v423 = vsel %vm415, %v334, 0
  %v426 = vsel %vm415, %v336, 0
  %v429 = vsel %vm415, %v338, 0
  %v432 = vsel %vm415, %v340, 0
  %v435 = vsel %vm415, %v342, 0
  %v438 = vsel %vm415, %v344, 0
  %v441 = vsel %vm415, %v346, 0
  %v444 = vsel %vm415, %v348, 0
  %v447 = vsel %vm415, %v350, 0
  %v450 = vsel %vm415, %v352, 0
  %v453 = vsel %vm415, %v354, 0
  %v456 = vsel %vm415, %v356, 0
  %v459 = vsel %vm415, %v358, 0
  %v462 = vsel %vm415, %v360, 0
  %v465 = vsel %vm415, %v362, 0
  %v468 = vsel %vm415, %v364, 0
  %v471 = vsel %vm415, %v366, 0
  %v474 = vsel %vm415, %v368, 0
  %v477 = vsel %vm415, %v370, 0
  %v480 = vsel %vm415, %v372, 0
  %v483 = vsel %vm415, %v374, 0
  %v486 = vsel %vm415, %v376, 0
  %v489 = vsel %vm415, %v378, 0
  %v492 = vsel %vm415, %v380, 0
  %v495 = vsel %vm415, %v382, 0
  %v498 = vsel %vm415, %v384, 0
  %v501 = vsel %vm415, %v386, 0
  %v504 = vsel %vm415, %v388, 0
  %v507 = vsel %vm415, %v390, 0
  %v510 = vsel %vm415, %v392, 0
  %v513 = vsel %vm415, %v394, 0
  %v516 = vsel %vm415, %v396, 0
  %v519 = vsel %vm415, %v398, 0
  %v522 = vsel %vm415, %v400, 0
  %v525 = vsel %vm415, %v402, 0
  %v528 = vsel %vm415, %v404, 0
  %v531 = vsel %vm415, %v406, 0
  %v534 = vsel %vm415, %v408, 0
  %v537 = vsel %vm415, %v410, 0
  %v540 = vsel %vm415, %v412, 0
  %v543 = vsel %vm415, %v414, 0
  %vm545 = vcmask 1041408
  %v547 = vsel %vm545, %v108, 0
  %549 = vmatprep.subr.bf16.mxu0 0
  %550 = vmatpush1.bf16.msra.mxu0 %v547
  %551 = vmatprep.subr.bf16.mxu0 0
  %552 = vmatpush1.bf16.msra.mxu0 0
  %553 = vmatprep.subr.bf16.mxu0 0
  %554 = vmatpush1.bf16.msra.mxu0 0
  %555 = vmatprep.subr.bf16.mxu0 0
  %556 = vmatpush1.bf16.msra.mxu0 0
  %557 = vmatprep.subr.bf16.mxu0 0
  %558 = vmatpush1.bf16.msra.mxu0 0
  %559 = vmatprep.subr.bf16.mxu0 0
  %560 = vmatpush1.bf16.msra.mxu0 0
  %561 = vmatprep.subr.bf16.mxu0 0
  %562 = vmatpush1.bf16.msra.mxu0 0
  %563 = vmatprep.subr.bf16.mxu0 0
  %564 = vmatpush1.bf16.msra.mxu0 0
  %565 = vmatprep.subr.bf16.mxu0 0
  %566 = vmatpush1.bf16.msra.mxu0 0
  %567 = vmatprep.subr.bf16.mxu0 0
  %568 = vmatpush1.bf16.msra.mxu0 0
  %569 = vmatprep.subr.bf16.mxu0 0
  %570 = vmatpush1.bf16.msra.mxu0 0
  %571 = vmatprep.subr.bf16.mxu0 0
  %572 = vmatpush1.bf16.msra.mxu0 0
  %573 = vmatprep.subr.bf16.mxu0 0
  %574 = vmatpush1.bf16.msra.mxu0 0
  %575 = vmatprep.subr.bf16.mxu0 0
  %576 = vmatpush1.bf16.msra.mxu0 0
  %577 = vmatprep.subr.bf16.mxu0 0
  %578 = vmatpush1.bf16.msra.mxu0 0
  %579 = vmatprep.subr.bf16.mxu0 0
  %580 = vmatpush1.bf16.msra.mxu0 0
  %581 = vmatprep.mubr.bf16.mxu0 0
  %582 = vmatmul.mubr.bf16.gmra.mrb[0].mxu0 %v417
  %v583 = vpop.f32.mrb[0].mxu0
  %v584 = vadd.f32 0.0, %v583
  %v585 = vpop.f32.mrb[0].mxu0
  %v586 = vpop.f32.mrb[0].mxu0
  %v587 = vadd.f32 0.0, %v586
  %v588 = vpop.f32.mrb[0].mxu0
  %589 = vmatprep.mubr.bf16.mxu0 0
  %590 = vmatmul.mubr.bf16.gmra.mrb[0].mxu0 %v420
  %v591 = vpop.f32.mrb[0].mxu0
  %v592 = vadd.f32 0.0, %v591
  %v593 = vpop.f32.mrb[0].mxu0
  %v594 = vpop.f32.mrb[0].mxu0
  %v595 = vadd.f32 0.0, %v594
  %v596 = vpop.f32.mrb[0].mxu0
  %597 = vmatprep.mubr.bf16.mxu0 0
  %598 = vmatmul.mubr.bf16.gmra.mrb[0].mxu0 %v423
  %v599 = vpop.f32.mrb[0].mxu0
  %v600 = vadd.f32 0.0, %v599
  %v601 = vpop.f32.mrb[0].mxu0
  %v602 = vpop.f32.mrb[0].mxu0
  %v603 = vadd.f32 0.0, %v602
  %v604 = vpop.f32.mrb[0].mxu0
  %605 = vmatprep.mubr.bf16.mxu0 0
  %606 = vmatmul.mubr.bf16.gmra.mrb[0].mxu0 %v426
  %v607 = vpop.f32.mrb[0].mxu0
  %v608 = vadd.f32 0.0, %v607
  %v609 = vpop.f32.mrb[0].mxu0
  %v610 = vpop.f32.mrb[0].mxu0
  %v611 = vadd.f32 0.0, %v610
  %v612 = vpop.f32.mrb[0].mxu0
  %613 = vmatprep.mubr.bf16.mxu0 0
  %614 = vmatmul.mubr.bf16.gmra.mrb[0].mxu0 %v429
  %v615 = vpop.f32.mrb[0].mxu0
  %v616 = vadd.f32 0.0, %v615
  %v617 = vpop.f32.mrb[0].mxu0
  %v618 = vpop.f32.mrb[0].mxu0
  %v619 = vadd.f32 0.0, %v618
  %v620 = vpop.f32.mrb[0].mxu0
  %621 = vmatprep.mubr.bf16.mxu0 0
  %622 = vmatmul.mubr.bf16.gmra.mrb[0].mxu0 %v432
  %v623 = vpop.f32.mrb[0].mxu0
  %v624 = vadd.f32 0.0, %v623
  %v625 = vpop.f32.mrb[0].mxu0
  %v626 = vpop.f32.mrb[0].mxu0
  %v627 = vadd.f32 0.0, %v626
  %v628 = vpop.f32.mrb[0].mxu0
  %629 = vmatprep.mubr.bf16.mxu0 0
  %630 = vmatmul.mubr.bf16.gmra.mrb[0].mxu0 %v435
  %v631 = vpop.f32.mrb[0].mxu0
  %v632 = vadd.f32 0.0, %v631
  %v633 = vpop.f32.mrb[0].mxu0
  %v634 = vpop.f32.mrb[0].mxu0
  %v635 = vadd.f32 0.0, %v634
  %v636 = vpop.f32.mrb[0].mxu0
  %637 = vmatprep.mubr.bf16.mxu0 0
  %638 = vmatmul.mubr.bf16.gmra.mrb[0].mxu0 %v438
  %v639 = vpop.f32.mrb[0].mxu0
  %v640 = vadd.f32 0.0, %v639
  %v641 = vpop.f32.mrb[0].mxu0
  %v642 = vpop.f32.mrb[0].mxu0
  %v643 = vadd.f32 0.0, %v642
  %v644 = vpop.f32.mrb[0].mxu0
  %645 = vmatprep.mubr.bf16.mxu0 0
  %646 = vmatmul.mubr.bf16.gmra.mrb[0].mxu0 %v441
  %v647 = vpop.f32.mrb[0].mxu0
  %v648 = vadd.f32 0.0, %v647
  %v649 = vpop.f32.mrb[0].mxu0
  %v650 = vpop.f32.mrb[0].mxu0
  %v651 = vadd.f32 0.0, %v650
  %v652 = vpop.f32.mrb[0].mxu0
  %653 = vmatprep.mubr.bf16.mxu0 0
  %654 = vmatmul.mubr.bf16.gmra.mrb[0].mxu0 %v444
  %v655 = vpop.f32.mrb[0].mxu0
  %v656 = vadd.f32 0.0, %v655
  %v657 = vpop.f32.mrb[0].mxu0
  %v658 = vpop.f32.mrb[0].mxu0
  %v659 = vadd.f32 0.0, %v658
  %v660 = vpop.f32.mrb[0].mxu0
  %661 = vmatprep.mubr.bf16.mxu0 0
  %662 = vmatmul.mubr.bf16.gmra.mrb[0].mxu0 %v447
  %v663 = vpop.f32.mrb[0].mxu0
  %v664 = vadd.f32 0.0, %v663
  %v665 = vpop.f32.mrb[0].mxu0
  %v666 = vpop.f32.mrb[0].mxu0
  %v667 = vadd.f32 0.0, %v666
  %v668 = vpop.f32.mrb[0].mxu0
  %669 = vmatprep.mubr.bf16.mxu0 0
  %670 = vmatmul.mubr.bf16.gmra.mrb[0].mxu0 %v450
  %v671 = vpop.f32.mrb[0].mxu0
  %v672 = vadd.f32 0.0, %v671
  %v673 = vpop.f32.mrb[0].mxu0
  %v674 = vpop.f32.mrb[0].mxu0
  %v675 = vadd.f32 0.0, %v674
  %v676 = vpop.f32.mrb[0].mxu0
  %677 = vmatprep.mubr.bf16.mxu0 0
  %678 = vmatmul.mubr.bf16.gmra.mrb[0].mxu0 %v453
  %v679 = vpop.f32.mrb[0].mxu0
  %v680 = vadd.f32 0.0, %v679
  %v681 = vpop.f32.mrb[0].mxu0
  %v682 = vpop.f32.mrb[0].mxu0
  %v683 = vadd.f32 0.0, %v682
  %v684 = vpop.f32.mrb[0].mxu0
  %685 = vmatprep.mubr.bf16.mxu0 0
  %686 = vmatmul.mubr.bf16.gmra.mrb[0].mxu0 %v456
  %v687 = vpop.f32.mrb[0].mxu0
  %v688 = vadd.f32 0.0, %v687
  %v689 = vpop.f32.mrb[0].mxu0
  %v690 = vpop.f32.mrb[0].mxu0
  %v691 = vadd.f32 0.0, %v690
  %v692 = vpop.f32.mrb[0].mxu0
  %693 = vmatprep.mubr.bf16.mxu0 0
  %694 = vmatmul.mubr.bf16.gmra.mrb[0].mxu0 %v459
  %v695 = vpop.f32.mrb[0].mxu0
  %v696 = vadd.f32 0.0, %v695
  %v697 = vpop.f32.mrb[0].mxu0
  %v698 = vpop.f32.mrb[0].mxu0
  %v699 = vadd.f32 0.0, %v698
  %v700 = vpop.f32.mrb[0].mxu0
  %701 = vmatprep.mubr.bf16.mxu0 0
  %702 = vmatmul.mubr.bf16.gmra.mrb[0].mxu0 %v462
  %v703 = vpop.f32.mrb[0].mxu0
  %v704 = vadd.f32 0.0, %v703
  %v705 = vpop.f32.mrb[0].mxu0
  %v706 = vpop.f32.mrb[0].mxu0
  %v707 = vadd.f32 0.0, %v706
  %v708 = vpop.f32.mrb[0].mxu0
  %709 = vmatprep.mubr.bf16.mxu0 0
  %710 = vmatmul.mubr.bf16.gmra.mrb[0].mxu0 %v465
  %v711 = vpop.f32.mrb[0].mxu0
  %v712 = vadd.f32 0.0, %v711
  %v713 = vpop.f32.mrb[0].mxu0
  %v714 = vpop.f32.mrb[0].mxu0
  %v715 = vadd.f32 0.0, %v714
  %v716 = vpop.f32.mrb[0].mxu0
  %717 = vmatprep.mubr.bf16.mxu0 0
  %718 = vmatmul.mubr.bf16.gmra.mrb[0].mxu0 %v468
  %v719 = vpop.f32.mrb[0].mxu0
  %v720 = vadd.f32 0.0, %v719
  %v721 = vpop.f32.mrb[0].mxu0
  %v722 = vpop.f32.mrb[0].mxu0
  %v723 = vadd.f32 0.0, %v722
  %v724 = vpop.f32.mrb[0].mxu0
  %725 = vmatprep.mubr.bf16.mxu0 0
  %726 = vmatmul.mubr.bf16.gmra.mrb[0].mxu0 %v471
  %v727 = vpop.f32.mrb[0].mxu0
  %v728 = vadd.f32 0.0, %v727
  %v729 = vpop.f32.mrb[0].mxu0
  %v730 = vpop.f32.mrb[0].mxu0
  %v731 = vadd.f32 0.0, %v730
  %v732 = vpop.f32.mrb[0].mxu0
  %733 = vmatprep.mubr.bf16.mxu0 0
  %734 = vmatmul.mubr.bf16.gmra.mrb[0].mxu0 %v474
  %v735 = vpop.f32.mrb[0].mxu0
  %v736 = vadd.f32 0.0, %v735
  %v737 = vpop.f32.mrb[0].mxu0
  %v738 = vpop.f32.mrb[0].mxu0
  %v739 = vadd.f32 0.0, %v738
  %v740 = vpop.f32.mrb[0].mxu0
  %741 = vmatprep.mubr.bf16.mxu0 0
  %742 = vmatmul.mubr.bf16.gmra.mrb[0].mxu0 %v477
  %v743 = vpop.f32.mrb[0].mxu0
  %v744 = vadd.f32 0.0, %v743
  %v745 = vpop.f32.mrb[0].mxu0
  %v746 = vpop.f32.mrb[0].mxu0
  %v747 = vadd.f32 0.0, %v746
  %v748 = vpop.f32.mrb[0].mxu0
  %749 = vmatprep.mubr.bf16.mxu0 0
  %750 = vmatmul.mubr.bf16.gmra.mrb[0].mxu0 %v480
  %v751 = vpop.f32.mrb[0].mxu0
  %v752 = vadd.f32 0.0, %v751
  %v753 = vpop.f32.mrb[0].mxu0
  %v754 = vpop.f32.mrb[0].mxu0
  %v755 = vadd.f32 0.0, %v754
  %v756 = vpop.f32.mrb[0].mxu0
  %757 = vmatprep.mubr.bf16.mxu0 0
  %758 = vmatmul.mubr.bf16.gmra.mrb[0].mxu0 %v483
  %v759 = vpop.f32.mrb[0].mxu0
  %v760 = vadd.f32 0.0, %v759
  %v761 = vpop.f32.mrb[0].mxu0
  %v762 = vpop.f32.mrb[0].mxu0
  %v763 = vadd.f32 0.0, %v762
  %v764 = vpop.f32.mrb[0].mxu0
  %765 = vmatprep.mubr.bf16.mxu0 0
  %766 = vmatmul.mubr.bf16.gmra.mrb[0].mxu0 %v486
  %v767 = vpop.f32.mrb[0].mxu0
  %v768 = vadd.f32 0.0, %v767
  %v769 = vpop.f32.mrb[0].mxu0
  %v770 = vpop.f32.mrb[0].mxu0
  %v771 = vadd.f32 0.0, %v770
  %v772 = vpop.f32.mrb[0].mxu0
  %773 = vmatprep.mubr.bf16.mxu0 0
  %774 = vmatmul.mubr.bf16.gmra.mrb[0].mxu0 %v489
  %v775 = vpop.f32.mrb[0].mxu0
  %v776 = vadd.f32 0.0, %v775
  %v777 = vpop.f32.mrb[0].mxu0
  %v778 = vpop.f32.mrb[0].mxu0
  %v779 = vadd.f32 0.0, %v778
  %v780 = vpop.f32.mrb[0].mxu0
  %781 = vmatprep.mubr.bf16.mxu0 0
  %782 = vmatmul.mubr.bf16.gmra.mrb[0].mxu0 %v492
  %v783 = vpop.f32.mrb[0].mxu0
  %v784 = vadd.f32 0.0, %v783
  %v785 = vpop.f32.mrb[0].mxu0
  %v786 = vpop.f32.mrb[0].mxu0
  %v787 = vadd.f32 0.0, %v786
  %v788 = vpop.f32.mrb[0].mxu0
  %789 = vmatprep.mubr.bf16.mxu0 0
  %790 = vmatmul.mubr.bf16.gmra.mrb[0].mxu0 %v495
  %v791 = vpop.f32.mrb[0].mxu0
  %v792 = vadd.f32 0.0, %v791
  %v793 = vpop.f32.mrb[0].mxu0
  %v794 = vpop.f32.mrb[0].mxu0
  %v795 = vadd.f32 0.0, %v794
  %v796 = vpop.f32.mrb[0].mxu0
  %797 = vmatprep.mubr.bf16.mxu0 0
  %798 = vmatmul.mubr.bf16.gmra.mrb[0].mxu0 %v498
  %v799 = vpop.f32.mrb[0].mxu0
  %v800 = vadd.f32 0.0, %v799
  %v801 = vpop.f32.mrb[0].mxu0
  %v802 = vpop.f32.mrb[0].mxu0
  %v803 = vadd.f32 0.0, %v802
  %v804 = vpop.f32.mrb[0].mxu0
  %805 = vmatprep.mubr.bf16.mxu0 0
  %806 = vmatmul.mubr.bf16.gmra.mrb[0].mxu0 %v501
  %v807 = vpop.f32.mrb[0].mxu0
  %v808 = vadd.f32 0.0, %v807
  %v809 = vpop.f32.mrb[0].mxu0
  %v810 = vpop.f32.mrb[0].mxu0
  %v811 = vadd.f32 0.0, %v810
  %v812 = vpop.f32.mrb[0].mxu0
  %813 = vmatprep.mubr.bf16.mxu0 0
  %814 = vmatmul.mubr.bf16.gmra.mrb[0].mxu0 %v504
  %v815 = vpop.f32.mrb[0].mxu0
  %v816 = vadd.f32 0.0, %v815
  %v817 = vpop.f32.mrb[0].mxu0
  %v818 = vpop.f32.mrb[0].mxu0
  %v819 = vadd.f32 0.0, %v818
  %v820 = vpop.f32.mrb[0].mxu0
  %821 = vmatprep.mubr.bf16.mxu0 0
  %822 = vmatmul.mubr.bf16.gmra.mrb[0].mxu0 %v507
  %v823 = vpop.f32.mrb[0].mxu0
  %v824 = vadd.f32 0.0, %v823
  %v825 = vpop.f32.mrb[0].mxu0
  %v826 = vpop.f32.mrb[0].mxu0
  %v827 = vadd.f32 0.0, %v826
  %v828 = vpop.f32.mrb[0].mxu0
  %829 = vmatprep.mubr.bf16.mxu0 0
  %830 = vmatmul.mubr.bf16.gmra.mrb[0].mxu0 %v510
  %v831 = vpop.f32.mrb[0].mxu0
  %v832 = vadd.f32 0.0, %v831
  %v833 = vpop.f32.mrb[0].mxu0
  %v834 = vpop.f32.mrb[0].mxu0
  %v835 = vadd.f32 0.0, %v834
  %v836 = vpop.f32.mrb[0].mxu0
  %837 = vmatprep.mubr.bf16.mxu0 0
  %838 = vmatmul.mubr.bf16.gmra.mrb[0].mxu0 %v513
  %v839 = vpop.f32.mrb[0].mxu0
  %v840 = vadd.f32 0.0, %v839
  %v841 = vpop.f32.mrb[0].mxu0
  %v842 = vpop.f32.mrb[0].mxu0
  %v843 = vadd.f32 0.0, %v842
  %v844 = vpop.f32.mrb[0].mxu0
  %845 = vmatprep.mubr.bf16.mxu0 0
  %846 = vmatmul.mubr.bf16.gmra.mrb[0].mxu0 %v516
  %v847 = vpop.f32.mrb[0].mxu0
  %v848 = vadd.f32 0.0, %v847
  %v849 = vpop.f32.mrb[0].mxu0
  %v850 = vpop.f32.mrb[0].mxu0
  %v851 = vadd.f32 0.0, %v850
  %v852 = vpop.f32.mrb[0].mxu0
  %853 = vmatprep.mubr.bf16.mxu0 0
  %854 = vmatmul.mubr.bf16.gmra.mrb[0].mxu0 %v519
  %v855 = vpop.f32.mrb[0].mxu0
  %v856 = vadd.f32 0.0, %v855
  %v857 = vpop.f32.mrb[0].mxu0
  %v858 = vpop.f32.mrb[0].mxu0
  %v859 = vadd.f32 0.0, %v858
  %v860 = vpop.f32.mrb[0].mxu0
  %861 = vmatprep.mubr.bf16.mxu0 0
  %862 = vmatmul.mubr.bf16.gmra.mrb[0].mxu0 %v522
  %v863 = vpop.f32.mrb[0].mxu0
  %v864 = vadd.f32 0.0, %v863
  %v865 = vpop.f32.mrb[0].mxu0
  %v866 = vpop.f32.mrb[0].mxu0
  %v867 = vadd.f32 0.0, %v866
  %v868 = vpop.f32.mrb[0].mxu0
  %869 = vmatprep.mubr.bf16.mxu0 0
  %870 = vmatmul.mubr.bf16.gmra.mrb[0].mxu0 %v525
  %v871 = vpop.f32.mrb[0].mxu0
  %v872 = vadd.f32 0.0, %v871
  %v873 = vpop.f32.mrb[0].mxu0
  %v874 = vpop.f32.mrb[0].mxu0
  %v875 = vadd.f32 0.0, %v874
  %v876 = vpop.f32.mrb[0].mxu0
  %877 = vmatprep.mubr.bf16.mxu0 0
  %878 = vmatmul.mubr.bf16.gmra.mrb[0].mxu0 %v528
  %v879 = vpop.f32.mrb[0].mxu0
  %v880 = vadd.f32 0.0, %v879
  %v881 = vpop.f32.mrb[0].mxu0
  %v882 = vpop.f32.mrb[0].mxu0
  %v883 = vadd.f32 0.0, %v882
  %v884 = vpop.f32.mrb[0].mxu0
  %885 = vmatprep.mubr.bf16.mxu0 0
  %886 = vmatmul.mubr.bf16.gmra.mrb[0].mxu0 %v531
  %v887 = vpop.f32.mrb[0].mxu0
  %v888 = vadd.f32 0.0, %v887
  %v889 = vpop.f32.mrb[0].mxu0
  %v890 = vpop.f32.mrb[0].mxu0
  %v891 = vadd.f32 0.0, %v890
  %v892 = vpop.f32.mrb[0].mxu0
  %893 = vmatprep.mubr.bf16.mxu0 0
  %894 = vmatmul.mubr.bf16.gmra.mrb[0].mxu0 %v534
  %v895 = vpop.f32.mrb[0].mxu0
  %v896 = vadd.f32 0.0, %v895
  %v897 = vpop.f32.mrb[0].mxu0
  %v898 = vpop.f32.mrb[0].mxu0
  %v899 = vadd.f32 0.0, %v898
  %v900 = vpop.f32.mrb[0].mxu0
  %901 = vmatprep.mubr.bf16.mxu0 0
  %902 = vmatmul.mubr.bf16.gmra.mrb[0].mxu0 %v537
  %v903 = vpop.f32.mrb[0].mxu0
  %v904 = vadd.f32 0.0, %v903
  %v905 = vpop.f32.mrb[0].mxu0
  %v906 = vpop.f32.mrb[0].mxu0
  %v907 = vadd.f32 0.0, %v906
  %v908 = vpop.f32.mrb[0].mxu0
  %909 = vmatprep.mubr.bf16.mxu0 0
  %910 = vmatmul.mubr.bf16.gmra.mrb[0].mxu0 %v540
  %v911 = vpop.f32.mrb[0].mxu0
  %v912 = vadd.f32 0.0, %v911
  %v913 = vpop.f32.mrb[0].mxu0
  %v914 = vpop.f32.mrb[0].mxu0
  %v915 = vadd.f32 0.0, %v914
  %v916 = vpop.f32.mrb[0].mxu0
  %917 = vmatprep.mubr.bf16.mxu0 0
  %918 = vmatmul.mubr.bf16.gmra.mrb[0].mxu0 %v543
  %v919 = vpop.f32.mrb[0].mxu0
  %v920 = vadd.f32 0.0, %v919
  %v921 = vpop.f32.mrb[0].mxu0
  %v922 = vpop.f32.mrb[0].mxu0
  %v923 = vadd.f32 0.0, %v922
  %v924 = vpop.f32.mrb[0].mxu0
  %925 = vdwg.mxu0
  %v927 = vunpack.c.l.b16 %v18
  %v928 = vpack.c.b16 %v197, %v927
  %vm929 = vsmask.f32 5376
  %v931 = vshrl.u32 %v928, 16
  %v933 = vrot.slane %v931, 2
  %v934 = vshll.u32 %v928, 16
  %v936 = vrot.slane %v934, 3
  %v937 = vor.u32 %v933, %v936
  %v939 = vshrl.u32 %v284, 16
  %v941 = vrot.slane %v939, 2
  %v942 = vshll.u32 %v284, 16
  %v944 = vrot.slane %v942, 3
  %v945 = vor.u32 %v941, %v944
  %v946 = vsel %vm929, %v937, %v945
  %v948 = vshrl.u32 %v285, 16
  %v950 = vrot.slane %v948, 2
  %v951 = vshll.u32 %v285, 16
  %v953 = vrot.slane %v951, 3
  %v954 = vor.u32 %v950, %v953
  %v955 = vsel %vm929, %v945, %v954
  %v957 = vshrl.u32 %v286, 16
  %v959 = vrot.slane %v957, 2
  %v960 = vshll.u32 %v286, 16
  %v962 = vrot.slane %v960, 3
  %v963 = vor.u32 %v959, %v962
  %v964 = vsel %vm929, %v954, %v963
  %v966 = vshrl.u32 %v287, 16
  %v968 = vrot.slane %v966, 2
  %v969 = vshll.u32 %v287, 16
  %v971 = vrot.slane %v969, 3
  %v972 = vor.u32 %v968, %v971
  %v973 = vsel %vm929, %v963, %v972
  %v975 = vshrl.u32 %v288, 16
  %v977 = vrot.slane %v975, 2
  %v978 = vshll.u32 %v288, 16
  %v980 = vrot.slane %v978, 3
  %v981 = vor.u32 %v977, %v980
  %v982 = vsel %vm929, %v972, %v981
  %v984 = vshrl.u32 %v289, 16
  %v986 = vrot.slane %v984, 2
  %v987 = vshll.u32 %v289, 16
  %v989 = vrot.slane %v987, 3
  %v990 = vor.u32 %v986, %v989
  %v991 = vsel %vm929, %v981, %v990
  %v993 = vshrl.u32 %v290, 16
  %v995 = vrot.slane %v993, 2
  %v996 = vshll.u32 %v290, 16
  %v998 = vrot.slane %v996, 3
  %v999 = vor.u32 %v995, %v998
  %v1000 = vsel %vm929, %v990, %v999
  %v1002 = vshrl.u32 %v291, 16
  %v1004 = vrot.slane %v1002, 2
  %v1005 = vshll.u32 %v291, 16
  %v1007 = vrot.slane %v1005, 3
  %v1008 = vor.u32 %v1004, %v1007
  %v1009 = vsel %vm929, %v999, %v1008
  %v1011 = vshrl.u32 %v292, 16
  %v1013 = vrot.slane %v1011, 2
  %v1014 = vshll.u32 %v292, 16
  %v1016 = vrot.slane %v1014, 3
  %v1017 = vor.u32 %v1013, %v1016
  %v1018 = vsel %vm929, %v1008, %v1017
  %v1020 = vshrl.u32 %v293, 16
  %v1022 = vrot.slane %v1020, 2
  %v1023 = vshll.u32 %v293, 16
  %v1025 = vrot.slane %v1023, 3
  %v1026 = vor.u32 %v1022, %v1025
  %v1027 = vsel %vm929, %v1017, %v1026
  %v1029 = vshrl.u32 %v294, 16
  %v1031 = vrot.slane %v1029, 2
  %v1032 = vshll.u32 %v294, 16
  %v1034 = vrot.slane %v1032, 3
  %v1035 = vor.u32 %v1031, %v1034
  %v1036 = vsel %vm929, %v1026, %v1035
  %v1038 = vshrl.u32 %v295, 16
  %v1040 = vrot.slane %v1038, 2
  %v1041 = vshll.u32 %v295, 16
  %v1043 = vrot.slane %v1041, 3
  %v1044 = vor.u32 %v1040, %v1043
  %v1045 = vsel %vm929, %v1035, %v1044
  %v1047 = vshrl.u32 %v296, 16
  %v1049 = vrot.slane %v1047, 2
  %v1050 = vshll.u32 %v296, 16
  %v1052 = vrot.slane %v1050, 3
  %v1053 = vor.u32 %v1049, %v1052
  %v1054 = vsel %vm929, %v1044, %v1053
  %v1056 = vshrl.u32 %v297, 16
  %v1058 = vrot.slane %v1056, 2
  %v1059 = vshll.u32 %v297, 16
  %v1061 = vrot.slane %v1059, 3
  %v1062 = vor.u32 %v1058, %v1061
  %v1063 = vsel %vm929, %v1053, %v1062
  %v1065 = vshrl.u32 %v298, 16
  %v1067 = vrot.slane %v1065, 2
  %v1068 = vshll.u32 %v298, 16
  %v1070 = vrot.slane %v1068, 3
  %v1071 = vor.u32 %v1067, %v1070
  %v1072 = vsel %vm929, %v1062, %v1071
  %v1074 = vshrl.u32 %v299, 16
  %v1076 = vrot.slane %v1074, 2
  %v1077 = vshll.u32 %v299, 16
  %v1079 = vrot.slane %v1077, 3
  %v1080 = vor.u32 %v1076, %v1079
  %v1081 = vsel %vm929, %v1071, %v1080
  %v1083 = vshrl.u32 %v300, 16
  %v1085 = vrot.slane %v1083, 2
  %v1086 = vshll.u32 %v300, 16
  %v1088 = vrot.slane %v1086, 3
  %v1089 = vor.u32 %v1085, %v1088
  %v1090 = vsel %vm929, %v1080, %v1089
  %v1092 = vshrl.u32 %v301, 16
  %v1094 = vrot.slane %v1092, 2
  %v1095 = vshll.u32 %v301, 16
  %v1097 = vrot.slane %v1095, 3
  %v1098 = vor.u32 %v1094, %v1097
  %v1099 = vsel %vm929, %v1089, %v1098
  %v1101 = vshrl.u32 %v302, 16
  %v1103 = vrot.slane %v1101, 2
  %v1104 = vshll.u32 %v302, 16
  %v1106 = vrot.slane %v1104, 3
  %v1107 = vor.u32 %v1103, %v1106
  %v1108 = vsel %vm929, %v1098, %v1107
  %v1110 = vshrl.u32 %v303, 16
  %v1112 = vrot.slane %v1110, 2
  %v1113 = vshll.u32 %v303, 16
  %v1115 = vrot.slane %v1113, 3
  %v1116 = vor.u32 %v1112, %v1115
  %v1117 = vsel %vm929, %v1107, %v1116
  %v1119 = vshrl.u32 %v304, 16
  %v1121 = vrot.slane %v1119, 2
  %v1122 = vshll.u32 %v304, 16
  %v1124 = vrot.slane %v1122, 3
  %v1125 = vor.u32 %v1121, %v1124
  %v1126 = vsel %vm929, %v1116, %v1125
  %v1128 = vshrl.u32 %v305, 16
  %v1130 = vrot.slane %v1128, 2
  %v1131 = vshll.u32 %v305, 16
  %v1133 = vrot.slane %v1131, 3
  %v1134 = vor.u32 %v1130, %v1133
  %v1135 = vsel %vm929, %v1125, %v1134
  %v1137 = vshrl.u32 %v306, 16
  %v1139 = vrot.slane %v1137, 2
  %v1140 = vshll.u32 %v306, 16
  %v1142 = vrot.slane %v1140, 3
  %v1143 = vor.u32 %v1139, %v1142
  %v1144 = vsel %vm929, %v1134, %v1143
  %v1146 = vshrl.u32 %v307, 16
  %v1148 = vrot.slane %v1146, 2
  %v1149 = vshll.u32 %v307, 16
  %v1151 = vrot.slane %v1149, 3
  %v1152 = vor.u32 %v1148, %v1151
  %v1153 = vsel %vm929, %v1143, %v1152
  %v1155 = vshrl.u32 %v308, 16
  %v1157 = vrot.slane %v1155, 2
  %v1158 = vshll.u32 %v308, 16
  %v1160 = vrot.slane %v1158, 3
  %v1161 = vor.u32 %v1157, %v1160
  %v1162 = vsel %vm929, %v1152, %v1161
  %v1164 = vshrl.u32 %v309, 16
  %v1166 = vrot.slane %v1164, 2
  %v1167 = vshll.u32 %v309, 16
  %v1169 = vrot.slane %v1167, 3
  %v1170 = vor.u32 %v1166, %v1169
  %v1171 = vsel %vm929, %v1161, %v1170
  %v1173 = vshrl.u32 %v310, 16
  %v1175 = vrot.slane %v1173, 2
  %v1176 = vshll.u32 %v310, 16
  %v1178 = vrot.slane %v1176, 3
  %v1179 = vor.u32 %v1175, %v1178
  %v1180 = vsel %vm929, %v1170, %v1179
  %v1182 = vshrl.u32 %v311, 16
  %v1184 = vrot.slane %v1182, 2
  %v1185 = vshll.u32 %v311, 16
  %v1187 = vrot.slane %v1185, 3
  %v1188 = vor.u32 %v1184, %v1187
  %v1189 = vsel %vm929, %v1179, %v1188
  %v1191 = vshrl.u32 %v312, 16
  %v1193 = vrot.slane %v1191, 2
  %v1194 = vshll.u32 %v312, 16
  %v1196 = vrot.slane %v1194, 3
  %v1197 = vor.u32 %v1193, %v1196
  %v1198 = vsel %vm929, %v1188, %v1197
  %v1200 = vshrl.u32 %v313, 16
  %v1202 = vrot.slane %v1200, 2
  %v1203 = vshll.u32 %v313, 16
  %v1205 = vrot.slane %v1203, 3
  %v1206 = vor.u32 %v1202, %v1205
  %v1207 = vsel %vm929, %v1197, %v1206
  %v1209 = vshrl.u32 %v314, 16
  %v1211 = vrot.slane %v1209, 2
  %v1212 = vshll.u32 %v314, 16
  %v1214 = vrot.slane %v1212, 3
  %v1215 = vor.u32 %v1211, %v1214
  %v1216 = vsel %vm929, %v1206, %v1215
  %v1218 = vshrl.u32 %v315, 16
  %v1220 = vrot.slane %v1218, 2
  %v1221 = vshll.u32 %v315, 16
  %v1223 = vrot.slane %v1221, 3
  %v1224 = vor.u32 %v1220, %v1223
  %v1225 = vsel %vm929, %v1215, %v1224
  %v1227 = vshrl.u32 %v316, 16
  %v1229 = vrot.slane %v1227, 2
  %v1230 = vshll.u32 %v316, 16
  %v1232 = vrot.slane %v1230, 3
  %v1233 = vor.u32 %v1229, %v1232
  %v1234 = vsel %vm929, %v1224, %v1233
  %v1236 = vshrl.u32 %v317, 16
  %v1238 = vrot.slane %v1236, 2
  %v1239 = vshll.u32 %v317, 16
  %v1241 = vrot.slane %v1239, 3
  %v1242 = vor.u32 %v1238, %v1241
  %v1243 = vsel %vm929, %v1233, %v1242
  %v1245 = vshrl.u32 %v318, 16
  %v1247 = vrot.slane %v1245, 2
  %v1248 = vshll.u32 %v318, 16
  %v1250 = vrot.slane %v1248, 3
  %v1251 = vor.u32 %v1247, %v1250
  %v1252 = vsel %vm929, %v1242, %v1251
  %v1254 = vshrl.u32 %v319, 16
  %v1256 = vrot.slane %v1254, 2
  %v1257 = vshll.u32 %v319, 16
  %v1259 = vrot.slane %v1257, 3
  %v1260 = vor.u32 %v1256, %v1259
  %v1261 = vsel %vm929, %v1251, %v1260
  %v1263 = vshrl.u32 %v320, 16
  %v1265 = vrot.slane %v1263, 2
  %v1266 = vshll.u32 %v320, 16
  %v1268 = vrot.slane %v1266, 3
  %v1269 = vor.u32 %v1265, %v1268
  %v1270 = vsel %vm929, %v1260, %v1269
  %v1272 = vshrl.u32 %v321, 16
  %v1274 = vrot.slane %v1272, 2
  %v1275 = vshll.u32 %v321, 16
  %v1277 = vrot.slane %v1275, 3
  %v1278 = vor.u32 %v1274, %v1277
  %v1279 = vsel %vm929, %v1269, %v1278
  %v1281 = vshrl.u32 %v322, 16
  %v1283 = vrot.slane %v1281, 2
  %v1284 = vshll.u32 %v322, 16
  %v1286 = vrot.slane %v1284, 3
  %v1287 = vor.u32 %v1283, %v1286
  %v1288 = vsel %vm929, %v1278, %v1287
  %v1290 = vshrl.u32 %v323, 16
  %v1292 = vrot.slane %v1290, 2
  %v1293 = vshll.u32 %v323, 16
  %v1295 = vrot.slane %v1293, 3
  %v1296 = vor.u32 %v1292, %v1295
  %v1297 = vsel %vm929, %v1287, %v1296
  %v1299 = vshrl.u32 %v324, 16
  %v1301 = vrot.slane %v1299, 2
  %v1302 = vshll.u32 %v324, 16
  %v1304 = vrot.slane %v1302, 3
  %v1305 = vor.u32 %v1301, %v1304
  %v1306 = vsel %vm929, %v1296, %v1305
  %v1308 = vshrl.u32 %v325, 16
  %v1310 = vrot.slane %v1308, 2
  %v1311 = vshll.u32 %v325, 16
  %v1313 = vrot.slane %v1311, 3
  %v1314 = vor.u32 %v1310, %v1313
  %v1315 = vsel %vm929, %v1305, %v1314
  %v1317 = vshll.u32 %v326, 16
  %v1319 = vrot.slane %v1317, 3
  %v1320 = vsel %vm929, %v1314, %v1319
  %v1322 = vsel %vm415, %v946, 0
  %v1325 = vsel %vm415, %v955, 0
  %v1328 = vsel %vm415, %v964, 0
  %v1331 = vsel %vm415, %v973, 0
  %v1334 = vsel %vm415, %v982, 0
  %v1337 = vsel %vm415, %v991, 0
  %v1340 = vsel %vm415, %v1000, 0
  %v1343 = vsel %vm415, %v1009, 0
  %v1346 = vsel %vm415, %v1018, 0
  %v1349 = vsel %vm415, %v1027, 0
  %v1352 = vsel %vm415, %v1036, 0
  %v1355 = vsel %vm415, %v1045, 0
  %v1358 = vsel %vm415, %v1054, 0
  %v1361 = vsel %vm415, %v1063, 0
  %v1364 = vsel %vm415, %v1072, 0
  %v1367 = vsel %vm415, %v1081, 0
  %v1370 = vsel %vm415, %v1090, 0
  %v1373 = vsel %vm415, %v1099, 0
  %v1376 = vsel %vm415, %v1108, 0
  %v1379 = vsel %vm415, %v1117, 0
  %v1382 = vsel %vm415, %v1126, 0
  %v1385 = vsel %vm415, %v1135, 0
  %v1388 = vsel %vm415, %v1144, 0
  %v1391 = vsel %vm415, %v1153, 0
  %v1394 = vsel %vm415, %v1162, 0
  %v1397 = vsel %vm415, %v1171, 0
  %v1400 = vsel %vm415, %v1180, 0
  %v1403 = vsel %vm415, %v1189, 0
  %v1406 = vsel %vm415, %v1198, 0
  %v1409 = vsel %vm415, %v1207, 0
  %v1412 = vsel %vm415, %v1216, 0
  %v1415 = vsel %vm415, %v1225, 0
  %v1418 = vsel %vm415, %v1234, 0
  %v1421 = vsel %vm415, %v1243, 0
  %v1424 = vsel %vm415, %v1252, 0
  %v1427 = vsel %vm415, %v1261, 0
  %v1430 = vsel %vm415, %v1270, 0
  %v1433 = vsel %vm415, %v1279, 0
  %v1436 = vsel %vm415, %v1288, 0
  %v1439 = vsel %vm415, %v1297, 0
  %v1442 = vsel %vm415, %v1306, 0
  %v1445 = vsel %vm415, %v1315, 0
  %v1448 = vsel %vm415, %v1320, 0
  %v1451 = vsel %vm545, %v105, 0
  %1453 = vmatprep.subr.bf16.mxu0 0
  %1454 = vmatpush1.bf16.msra.mxu0 %v1451
  %1455 = vmatprep.subr.bf16.mxu0 0
  %1456 = vmatpush1.bf16.msra.mxu0 0
  %1457 = vmatprep.subr.bf16.mxu0 0
  %1458 = vmatpush1.bf16.msra.mxu0 0
  %1459 = vmatprep.subr.bf16.mxu0 0
  %1460 = vmatpush1.bf16.msra.mxu0 0
  %1461 = vmatprep.subr.bf16.mxu0 0
  %1462 = vmatpush1.bf16.msra.mxu0 0
  %1463 = vmatprep.subr.bf16.mxu0 0
  %1464 = vmatpush1.bf16.msra.mxu0 0
  %1465 = vmatprep.subr.bf16.mxu0 0
  %1466 = vmatpush1.bf16.msra.mxu0 0
  %1467 = vmatprep.subr.bf16.mxu0 0
  %1468 = vmatpush1.bf16.msra.mxu0 0
  %1469 = vmatprep.subr.bf16.mxu0 0
  %1470 = vmatpush1.bf16.msra.mxu0 0
  %1471 = vmatprep.subr.bf16.mxu0 0
  %1472 = vmatpush1.bf16.msra.mxu0 0
  %1473 = vmatprep.subr.bf16.mxu0 0
  %1474 = vmatpush1.bf16.msra.mxu0 0
  %1475 = vmatprep.subr.bf16.mxu0 0
  %1476 = vmatpush1.bf16.msra.mxu0 0
  %1477 = vmatprep.subr.bf16.mxu0 0
  %1478 = vmatpush1.bf16.msra.mxu0 0
  %1479 = vmatprep.subr.bf16.mxu0 0
  %1480 = vmatpush1.bf16.msra.mxu0 0
  %1481 = vmatprep.subr.bf16.mxu0 0
  %1482 = vmatpush1.bf16.msra.mxu0 0
  %1483 = vmatprep.subr.bf16.mxu0 0
  %1484 = vmatpush1.bf16.msra.mxu0 0
  %1485 = vmatprep.mubr.bf16.mxu0 0
  %1486 = vmatmul.mubr.bf16.gmra.mrb[0].mxu0 %v1322
  %v1487 = vpop.f32.mrb[0].mxu0
  %v1488 = vadd.f32 %v584, %v1487
  %v1489 = vpop.f32.mrb[0].mxu0
  %v1490 = vpop.f32.mrb[0].mxu0
  %v1491 = vadd.f32 %v587, %v1490
  %v1492 = vpop.f32.mrb[0].mxu0
  %1493 = vmatprep.mubr.bf16.mxu0 0
  %1494 = vmatmul.mubr.bf16.gmra.mrb[0].mxu0 %v1325
  %v1495 = vpop.f32.mrb[0].mxu0
  %v1496 = vadd.f32 %v592, %v1495
  %v1497 = vpop.f32.mrb[0].mxu0
  %v1498 = vpop.f32.mrb[0].mxu0
  %v1499 = vadd.f32 %v595, %v1498
  %v1500 = vpop.f32.mrb[0].mxu0
  %1501 = vmatprep.mubr.bf16.mxu0 0
  %1502 = vmatmul.mubr.bf16.gmra.mrb[0].mxu0 %v1328
  %v1503 = vpop.f32.mrb[0].mxu0
  %v1504 = vadd.f32 %v600, %v1503
  %v1505 = vpop.f32.mrb[0].mxu0
  %v1506 = vpop.f32.mrb[0].mxu0
  %v1507 = vadd.f32 %v603, %v1506
  %v1508 = vpop.f32.mrb[0].mxu0
  %1509 = vmatprep.mubr.bf16.mxu0 0
  %1510 = vmatmul.mubr.bf16.gmra.mrb[0].mxu0 %v1331
  %v1511 = vpop.f32.mrb[0].mxu0
  %v1512 = vadd.f32 %v608, %v1511
  %v1513 = vpop.f32.mrb[0].mxu0
  %v1514 = vpop.f32.mrb[0].mxu0
  %v1515 = vadd.f32 %v611, %v1514
  %v1516 = vpop.f32.mrb[0].mxu0
  %1517 = vmatprep.mubr.bf16.mxu0 0
  %1518 = vmatmul.mubr.bf16.gmra.mrb[0].mxu0 %v1334
  %v1519 = vpop.f32.mrb[0].mxu0
  %v1520 = vadd.f32 %v616, %v1519
  %v1521 = vpop.f32.mrb[0].mxu0
  %v1522 = vpop.f32.mrb[0].mxu0
  %v1523 = vadd.f32 %v619, %v1522
  %v1524 = vpop.f32.mrb[0].mxu0
  %1525 = vmatprep.mubr.bf16.mxu0 0
  %1526 = vmatmul.mubr.bf16.gmra.mrb[0].mxu0 %v1337
  %v1527 = vpop.f32.mrb[0].mxu0
  %v1528 = vadd.f32 %v624, %v1527
  %v1529 = vpop.f32.mrb[0].mxu0
  %v1530 = vpop.f32.mrb[0].mxu0
  %v1531 = vadd.f32 %v627, %v1530
  %v1532 = vpop.f32.mrb[0].mxu0
  %1533 = vmatprep.mubr.bf16.mxu0 0
  %1534 = vmatmul.mubr.bf16.gmra.mrb[0].mxu0 %v1340
  %v1535 = vpop.f32.mrb[0].mxu0
  %v1536 = vadd.f32 %v632, %v1535
  %v1537 = vpop.f32.mrb[0].mxu0
  %v1538 = vpop.f32.mrb[0].mxu0
  %v1539 = vadd.f32 %v635, %v1538
  %v1540 = vpop.f32.mrb[0].mxu0
  %1541 = vmatprep.mubr.bf16.mxu0 0
  %1542 = vmatmul.mubr.bf16.gmra.mrb[0].mxu0 %v1343
  %v1543 = vpop.f32.mrb[0].mxu0
  %v1544 = vadd.f32 %v640, %v1543
  %v1545 = vpop.f32.mrb[0].mxu0
  %v1546 = vpop.f32.mrb[0].mxu0
  %v1547 = vadd.f32 %v643, %v1546
  %v1548 = vpop.f32.mrb[0].mxu0
  %1549 = vmatprep.mubr.bf16.mxu0 0
  %1550 = vmatmul.mubr.bf16.gmra.mrb[0].mxu0 %v1346
  %v1551 = vpop.f32.mrb[0].mxu0
  %v1552 = vadd.f32 %v648, %v1551
  %v1553 = vpop.f32.mrb[0].mxu0
  %v1554 = vpop.f32.mrb[0].mxu0
  %v1555 = vadd.f32 %v651, %v1554
  %v1556 = vpop.f32.mrb[0].mxu0
  %1557 = vmatprep.mubr.bf16.mxu0 0
  %1558 = vmatmul.mubr.bf16.gmra.mrb[0].mxu0 %v1349
  %v1559 = vpop.f32.mrb[0].mxu0
  %v1560 = vadd.f32 %v656, %v1559
  %v1561 = vpop.f32.mrb[0].mxu0
  %v1562 = vpop.f32.mrb[0].mxu0
  %v1563 = vadd.f32 %v659, %v1562
  %v1564 = vpop.f32.mrb[0].mxu0
  %1565 = vmatprep.mubr.bf16.mxu0 0
  %1566 = vmatmul.mubr.bf16.gmra.mrb[0].mxu0 %v1352
  %v1567 = vpop.f32.mrb[0].mxu0
  %v1568 = vadd.f32 %v664, %v1567
  %v1569 = vpop.f32.mrb[0].mxu0
  %v1570 = vpop.f32.mrb[0].mxu0
  %v1571 = vadd.f32 %v667, %v1570
  %v1572 = vpop.f32.mrb[0].mxu0
  %1573 = vmatprep.mubr.bf16.mxu0 0
  %1574 = vmatmul.mubr.bf16.gmra.mrb[0].mxu0 %v1355
  %v1575 = vpop.f32.mrb[0].mxu0
  %v1576 = vadd.f32 %v672, %v1575
  %v1577 = vpop.f32.mrb[0].mxu0
  %v1578 = vpop.f32.mrb[0].mxu0
  %v1579 = vadd.f32 %v675, %v1578
  %v1580 = vpop.f32.mrb[0].mxu0
  %1581 = vmatprep.mubr.bf16.mxu0 0
  %1582 = vmatmul.mubr.bf16.gmra.mrb[0].mxu0 %v1358
  %v1583 = vpop.f32.mrb[0].mxu0
  %v1584 = vadd.f32 %v680, %v1583
  %v1585 = vpop.f32.mrb[0].mxu0
  %v1586 = vpop.f32.mrb[0].mxu0
  %v1587 = vadd.f32 %v683, %v1586
  %v1588 = vpop.f32.mrb[0].mxu0
  %1589 = vmatprep.mubr.bf16.mxu0 0
  %1590 = vmatmul.mubr.bf16.gmra.mrb[0].mxu0 %v1361
  %v1591 = vpop.f32.mrb[0].mxu0
  %v1592 = vadd.f32 %v688, %v1591
  %v1593 = vpop.f32.mrb[0].mxu0
  %v1594 = vpop.f32.mrb[0].mxu0
  %v1595 = vadd.f32 %v691, %v1594
  %v1596 = vpop.f32.mrb[0].mxu0
  %1597 = vmatprep.mubr.bf16.mxu0 0
  %1598 = vmatmul.mubr.bf16.gmra.mrb[0].mxu0 %v1364
  %v1599 = vpop.f32.mrb[0].mxu0
  %v1600 = vadd.f32 %v696, %v1599
  %v1601 = vpop.f32.mrb[0].mxu0
  %v1602 = vpop.f32.mrb[0].mxu0
  %v1603 = vadd.f32 %v699, %v1602
  %v1604 = vpop.f32.mrb[0].mxu0
  %1605 = vmatprep.mubr.bf16.mxu0 0
  %1606 = vmatmul.mubr.bf16.gmra.mrb[0].mxu0 %v1367
  %v1607 = vpop.f32.mrb[0].mxu0
  %v1608 = vadd.f32 %v704, %v1607
  %v1609 = vpop.f32.mrb[0].mxu0
  %v1610 = vpop.f32.mrb[0].mxu0
  %v1611 = vadd.f32 %v707, %v1610
  %v1612 = vpop.f32.mrb[0].mxu0
  %1613 = vmatprep.mubr.bf16.mxu0 0
  %1614 = vmatmul.mubr.bf16.gmra.mrb[0].mxu0 %v1370
  %v1615 = vpop.f32.mrb[0].mxu0
  %v1616 = vadd.f32 %v712, %v1615
  %v1617 = vpop.f32.mrb[0].mxu0
  %v1618 = vpop.f32.mrb[0].mxu0
  %v1619 = vadd.f32 %v715, %v1618
  %v1620 = vpop.f32.mrb[0].mxu0
  %1621 = vmatprep.mubr.bf16.mxu0 0
  %1622 = vmatmul.mubr.bf16.gmra.mrb[0].mxu0 %v1373
  %v1623 = vpop.f32.mrb[0].mxu0
  %v1624 = vadd.f32 %v720, %v1623
  %v1625 = vpop.f32.mrb[0].mxu0
  %v1626 = vpop.f32.mrb[0].mxu0
  %v1627 = vadd.f32 %v723, %v1626
  %v1628 = vpop.f32.mrb[0].mxu0
  %1629 = vmatprep.mubr.bf16.mxu0 0
  %1630 = vmatmul.mubr.bf16.gmra.mrb[0].mxu0 %v1376
  %v1631 = vpop.f32.mrb[0].mxu0
  %v1632 = vadd.f32 %v728, %v1631
  %v1633 = vpop.f32.mrb[0].mxu0
  %v1634 = vpop.f32.mrb[0].mxu0
  %v1635 = vadd.f32 %v731, %v1634
  %v1636 = vpop.f32.mrb[0].mxu0
  %1637 = vmatprep.mubr.bf16.mxu0 0
  %1638 = vmatmul.mubr.bf16.gmra.mrb[0].mxu0 %v1379
  %v1639 = vpop.f32.mrb[0].mxu0
  %v1640 = vadd.f32 %v736, %v1639
  %v1641 = vpop.f32.mrb[0].mxu0
  %v1642 = vpop.f32.mrb[0].mxu0
  %v1643 = vadd.f32 %v739, %v1642
  %v1644 = vpop.f32.mrb[0].mxu0
  %1645 = vmatprep.mubr.bf16.mxu0 0
  %1646 = vmatmul.mubr.bf16.gmra.mrb[0].mxu0 %v1382
  %v1647 = vpop.f32.mrb[0].mxu0
  %v1648 = vadd.f32 %v744, %v1647
  %v1649 = vpop.f32.mrb[0].mxu0
  %v1650 = vpop.f32.mrb[0].mxu0
  %v1651 = vadd.f32 %v747, %v1650
  %v1652 = vpop.f32.mrb[0].mxu0
  %1653 = vmatprep.mubr.bf16.mxu0 0
  %1654 = vmatmul.mubr.bf16.gmra.mrb[0].mxu0 %v1385
  %v1655 = vpop.f32.mrb[0].mxu0
  %v1656 = vadd.f32 %v752, %v1655
  %v1657 = vpop.f32.mrb[0].mxu0
  %v1658 = vpop.f32.mrb[0].mxu0
  %v1659 = vadd.f32 %v755, %v1658
  %v1660 = vpop.f32.mrb[0].mxu0
  %1661 = vmatprep.mubr.bf16.mxu0 0
  %1662 = vmatmul.mubr.bf16.gmra.mrb[0].mxu0 %v1388
  %v1663 = vpop.f32.mrb[0].mxu0
  %v1664 = vadd.f32 %v760, %v1663
  %v1665 = vpop.f32.mrb[0].mxu0
  %v1666 = vpop.f32.mrb[0].mxu0
  %v1667 = vadd.f32 %v763, %v1666
  %v1668 = vpop.f32.mrb[0].mxu0
  %1669 = vmatprep.mubr.bf16.mxu0 0
  %1670 = vmatmul.mubr.bf16.gmra.mrb[0].mxu0 %v1391
  %v1671 = vpop.f32.mrb[0].mxu0
  %v1672 = vadd.f32 %v768, %v1671
  %v1673 = vpop.f32.mrb[0].mxu0
  %v1674 = vpop.f32.mrb[0].mxu0
  %v1675 = vadd.f32 %v771, %v1674
  %v1676 = vpop.f32.mrb[0].mxu0
  %1677 = vmatprep.mubr.bf16.mxu0 0
  %1678 = vmatmul.mubr.bf16.gmra.mrb[0].mxu0 %v1394
  %v1679 = vpop.f32.mrb[0].mxu0
  %v1680 = vadd.f32 %v776, %v1679
  %v1681 = vpop.f32.mrb[0].mxu0
  %v1682 = vpop.f32.mrb[0].mxu0
  %v1683 = vadd.f32 %v779, %v1682
  %v1684 = vpop.f32.mrb[0].mxu0
  %1685 = vmatprep.mubr.bf16.mxu0 0
  %1686 = vmatmul.mubr.bf16.gmra.mrb[0].mxu0 %v1397
  %v1687 = vpop.f32.mrb[0].mxu0
  %v1688 = vadd.f32 %v784, %v1687
  %v1689 = vpop.f32.mrb[0].mxu0
  %v1690 = vpop.f32.mrb[0].mxu0
  %v1691 = vadd.f32 %v787, %v1690
  %v1692 = vpop.f32.mrb[0].mxu0
  %1693 = vmatprep.mubr.bf16.mxu0 0
  %1694 = vmatmul.mubr.bf16.gmra.mrb[0].mxu0 %v1400
  %v1695 = vpop.f32.mrb[0].mxu0
  %v1696 = vadd.f32 %v792, %v1695
  %v1697 = vpop.f32.mrb[0].mxu0
  %v1698 = vpop.f32.mrb[0].mxu0
  %v1699 = vadd.f32 %v795, %v1698
  %v1700 = vpop.f32.mrb[0].mxu0
  %1701 = vmatprep.mubr.bf16.mxu0 0
  %1702 = vmatmul.mubr.bf16.gmra.mrb[0].mxu0 %v1403
  %v1703 = vpop.f32.mrb[0].mxu0
  %v1704 = vadd.f32 %v800, %v1703
  %v1705 = vpop.f32.mrb[0].mxu0
  %v1706 = vpop.f32.mrb[0].mxu0
  %v1707 = vadd.f32 %v803, %v1706
  %v1708 = vpop.f32.mrb[0].mxu0
  %1709 = vmatprep.mubr.bf16.mxu0 0
  %1710 = vmatmul.mubr.bf16.gmra.mrb[0].mxu0 %v1406
  %v1711 = vpop.f32.mrb[0].mxu0
  %v1712 = vadd.f32 %v808, %v1711
  %v1713 = vpop.f32.mrb[0].mxu0
  %v1714 = vpop.f32.mrb[0].mxu0
  %v1715 = vadd.f32 %v811, %v1714
  %v1716 = vpop.f32.mrb[0].mxu0
  %1717 = vmatprep.mubr.bf16.mxu0 0
  %1718 = vmatmul.mubr.bf16.gmra.mrb[0].mxu0 %v1409
  %v1719 = vpop.f32.mrb[0].mxu0
  %v1720 = vadd.f32 %v816, %v1719
  %v1721 = vpop.f32.mrb[0].mxu0
  %v1722 = vpop.f32.mrb[0].mxu0
  %v1723 = vadd.f32 %v819, %v1722
  %v1724 = vpop.f32.mrb[0].mxu0
  %1725 = vmatprep.mubr.bf16.mxu0 0
  %1726 = vmatmul.mubr.bf16.gmra.mrb[0].mxu0 %v1412
  %v1727 = vpop.f32.mrb[0].mxu0
  %v1728 = vadd.f32 %v824, %v1727
  %v1729 = vpop.f32.mrb[0].mxu0
  %v1730 = vpop.f32.mrb[0].mxu0
  %v1731 = vadd.f32 %v827, %v1730
  %v1732 = vpop.f32.mrb[0].mxu0
  %1733 = vmatprep.mubr.bf16.mxu0 0
  %1734 = vmatmul.mubr.bf16.gmra.mrb[0].mxu0 %v1415
  %v1735 = vpop.f32.mrb[0].mxu0
  %v1736 = vadd.f32 %v832, %v1735
  %v1737 = vpop.f32.mrb[0].mxu0
  %v1738 = vpop.f32.mrb[0].mxu0
  %v1739 = vadd.f32 %v835, %v1738
  %v1740 = vpop.f32.mrb[0].mxu0
  %1741 = vmatprep.mubr.bf16.mxu0 0
  %1742 = vmatmul.mubr.bf16.gmra.mrb[0].mxu0 %v1418
  %v1743 = vpop.f32.mrb[0].mxu0
  %v1744 = vadd.f32 %v840, %v1743
  %v1745 = vpop.f32.mrb[0].mxu0
  %v1746 = vpop.f32.mrb[0].mxu0
  %v1747 = vadd.f32 %v843, %v1746
  %v1748 = vpop.f32.mrb[0].mxu0
  %1749 = vmatprep.mubr.bf16.mxu0 0
  %1750 = vmatmul.mubr.bf16.gmra.mrb[0].mxu0 %v1421
  %v1751 = vpop.f32.mrb[0].mxu0
  %v1752 = vadd.f32 %v848, %v1751
  %v1753 = vpop.f32.mrb[0].mxu0
  %v1754 = vpop.f32.mrb[0].mxu0
  %v1755 = vadd.f32 %v851, %v1754
  %v1756 = vpop.f32.mrb[0].mxu0
  %1757 = vmatprep.mubr.bf16.mxu0 0
  %1758 = vmatmul.mubr.bf16.gmra.mrb[0].mxu0 %v1424
  %v1759 = vpop.f32.mrb[0].mxu0
  %v1760 = vadd.f32 %v856, %v1759
  %v1761 = vpop.f32.mrb[0].mxu0
  %v1762 = vpop.f32.mrb[0].mxu0
  %v1763 = vadd.f32 %v859, %v1762
  %v1764 = vpop.f32.mrb[0].mxu0
  %1765 = vmatprep.mubr.bf16.mxu0 0
  %1766 = vmatmul.mubr.bf16.gmra.mrb[0].mxu0 %v1427
  %v1767 = vpop.f32.mrb[0].mxu0
  %v1768 = vadd.f32 %v864, %v1767
  %v1769 = vpop.f32.mrb[0].mxu0
  %v1770 = vpop.f32.mrb[0].mxu0
  %v1771 = vadd.f32 %v867, %v1770
  %v1772 = vpop.f32.mrb[0].mxu0
  %1773 = vmatprep.mubr.bf16.mxu0 0
  %1774 = vmatmul.mubr.bf16.gmra.mrb[0].mxu0 %v1430
  %v1775 = vpop.f32.mrb[0].mxu0
  %v1776 = vadd.f32 %v872, %v1775
  %v1777 = vpop.f32.mrb[0].mxu0
  %v1778 = vpop.f32.mrb[0].mxu0
  %v1779 = vadd.f32 %v875, %v1778
  %v1780 = vpop.f32.mrb[0].mxu0
  %1781 = vmatprep.mubr.bf16.mxu0 0
  %1782 = vmatmul.mubr.bf16.gmra.mrb[0].mxu0 %v1433
  %v1783 = vpop.f32.mrb[0].mxu0
  %v1784 = vadd.f32 %v880, %v1783
  %v1785 = vpop.f32.mrb[0].mxu0
  %v1786 = vpop.f32.mrb[0].mxu0
  %v1787 = vadd.f32 %v883, %v1786
  %v1788 = vpop.f32.mrb[0].mxu0
  %1789 = vmatprep.mubr.bf16.mxu0 0
  %1790 = vmatmul.mubr.bf16.gmra.mrb[0].mxu0 %v1436
  %v1791 = vpop.f32.mrb[0].mxu0
  %v1792 = vadd.f32 %v888, %v1791
  %v1793 = vpop.f32.mrb[0].mxu0
  %v1794 = vpop.f32.mrb[0].mxu0
  %v1795 = vadd.f32 %v891, %v1794
  %v1796 = vpop.f32.mrb[0].mxu0
  %1797 = vmatprep.mubr.bf16.mxu0 0
  %1798 = vmatmul.mubr.bf16.gmra.mrb[0].mxu0 %v1439
  %v1799 = vpop.f32.mrb[0].mxu0
  %v1800 = vadd.f32 %v896, %v1799
  %v1801 = vpop.f32.mrb[0].mxu0
  %v1802 = vpop.f32.mrb[0].mxu0
  %v1803 = vadd.f32 %v899, %v1802
  %v1804 = vpop.f32.mrb[0].mxu0
  %1805 = vmatprep.mubr.bf16.mxu0 0
  %1806 = vmatmul.mubr.bf16.gmra.mrb[0].mxu0 %v1442
  %v1807 = vpop.f32.mrb[0].mxu0
  %v1808 = vadd.f32 %v904, %v1807
  %v1809 = vpop.f32.mrb[0].mxu0
  %v1810 = vpop.f32.mrb[0].mxu0
  %v1811 = vadd.f32 %v907, %v1810
  %v1812 = vpop.f32.mrb[0].mxu0
  %1813 = vmatprep.mubr.bf16.mxu0 0
  %1814 = vmatmul.mubr.bf16.gmra.mrb[0].mxu0 %v1445
  %v1815 = vpop.f32.mrb[0].mxu0
  %v1816 = vadd.f32 %v912, %v1815
  %v1817 = vpop.f32.mrb[0].mxu0
  %v1818 = vpop.f32.mrb[0].mxu0
  %v1819 = vadd.f32 %v915, %v1818
  %v1820 = vpop.f32.mrb[0].mxu0
  %1821 = vmatprep.mubr.bf16.mxu0 0
  %1822 = vmatmul.mubr.bf16.gmra.mrb[0].mxu0 %v1448
  %v1823 = vpop.f32.mrb[0].mxu0
  %v1824 = vadd.f32 %v920, %v1823
  %v1825 = vpop.f32.mrb[0].mxu0
  %v1826 = vpop.f32.mrb[0].mxu0
  %v1827 = vadd.f32 %v923, %v1826
  %v1828 = vpop.f32.mrb[0].mxu0
  %1829 = vdwg.mxu0
  %v1830 = vld [vmem:[%s0 + $0x158] sm:$0x3]
  %s1831 = scalar_lea.vmem %s1, 4
  %v1832 = vld [vmem:[%s1831] sm:$0x3]
  %v1834 = vunpack.c.l.b16 %v1830
  %v1835 = vpack.c.b16 %v1834, %v1834
  %vm1836 = vsmask.f32 4352
  %v1838 = vshrl.u32 %v283, 16
  %v1840 = vrot.slane %v1838, 3
  %v1841 = vshll.u32 %v283, 16
  %v1843 = vrot.slane %v1841, 4
  %v1844 = vor.u32 %v1840, %v1843
  %v1845 = vrot.slane %v939, 3
  %v1846 = vrot.slane %v942, 4
  %v1847 = vor.u32 %v1845, %v1846
  %v1848 = vsel %vm1836, %v1844, %v1847
  %v1849 = vrot.slane %v948, 3
  %v1850 = vrot.slane %v951, 4
  %v1851 = vor.u32 %v1849, %v1850
  %v1852 = vsel %vm1836, %v1847, %v1851
  %v1853 = vrot.slane %v957, 3
  %v1854 = vrot.slane %v960, 4
  %v1855 = vor.u32 %v1853, %v1854
  %v1856 = vsel %vm1836, %v1851, %v1855
  %v1857 = vrot.slane %v966, 3
  %v1858 = vrot.slane %v969, 4
  %v1859 = vor.u32 %v1857, %v1858
  %v1860 = vsel %vm1836, %v1855, %v1859
  %v1861 = vrot.slane %v975, 3
  %v1862 = vrot.slane %v978, 4
  %v1863 = vor.u32 %v1861, %v1862
  %v1864 = vsel %vm1836, %v1859, %v1863
  %v1865 = vrot.slane %v984, 3
  %v1866 = vrot.slane %v987, 4
  %v1867 = vor.u32 %v1865, %v1866
  %v1868 = vsel %vm1836, %v1863, %v1867
  %v1869 = vrot.slane %v993, 3
  %v1870 = vrot.slane %v996, 4
  %v1871 = vor.u32 %v1869, %v1870
  %v1872 = vsel %vm1836, %v1867, %v1871
  %v1873 = vrot.slane %v1002, 3
  %v1874 = vrot.slane %v1005, 4
  %v1875 = vor.u32 %v1873, %v1874
  %v1876 = vsel %vm1836, %v1871, %v1875
  %v1877 = vrot.slane %v1011, 3
  %v1878 = vrot.slane %v1014, 4
  %v1879 = vor.u32 %v1877, %v1878
  %v1880 = vsel %vm1836, %v1875, %v1879
  %v1881 = vrot.slane %v1020, 3
  %v1882 = vrot.slane %v1023, 4
  %v1883 = vor.u32 %v1881, %v1882
  %v1884 = vsel %vm1836, %v1879, %v1883
  %v1885 = vrot.slane %v1029, 3
  %v1886 = vrot.slane %v1032, 4
  %v1887 = vor.u32 %v1885, %v1886
  %v1888 = vsel %vm1836, %v1883, %v1887
  %v1889 = vrot.slane %v1038, 3
  %v1890 = vrot.slane %v1041, 4
  %v1891 = vor.u32 %v1889, %v1890
  %v1892 = vsel %vm1836, %v1887, %v1891
  %v1893 = vrot.slane %v1047, 3
  %v1894 = vrot.slane %v1050, 4
  %v1895 = vor.u32 %v1893, %v1894
  %v1896 = vsel %vm1836, %v1891, %v1895
  %v1897 = vrot.slane %v1056, 3
  %v1898 = vrot.slane %v1059, 4
  %v1899 = vor.u32 %v1897, %v1898
  %v1900 = vsel %vm1836, %v1895, %v1899
  %v1901 = vrot.slane %v1065, 3
  %v1902 = vrot.slane %v1068, 4
  %v1903 = vor.u32 %v1901, %v1902
  %v1904 = vsel %vm1836, %v1899, %v1903
  %v1905 = vrot.slane %v1074, 3
  %v1906 = vrot.slane %v1077, 4
  %v1907 = vor.u32 %v1905, %v1906
  %v1908 = vsel %vm1836, %v1903, %v1907
  %v1909 = vrot.slane %v1083, 3
  %v1910 = vrot.slane %v1086, 4
  %v1911 = vor.u32 %v1909, %v1910
  %v1912 = vsel %vm1836, %v1907, %v1911
  %v1913 = vrot.slane %v1092, 3
  %v1914 = vrot.slane %v1095, 4
  %v1915 = vor.u32 %v1913, %v1914
  %v1916 = vsel %vm1836, %v1911, %v1915
  %v1917 = vrot.slane %v1101, 3
  %v1918 = vrot.slane %v1104, 4
  %v1919 = vor.u32 %v1917, %v1918
  %v1920 = vsel %vm1836, %v1915, %v1919
  %v1921 = vrot.slane %v1110, 3
  %v1922 = vrot.slane %v1113, 4
  %v1923 = vor.u32 %v1921, %v1922
  %v1924 = vsel %vm1836, %v1919, %v1923
  %v1925 = vrot.slane %v1119, 3
  %v1926 = vrot.slane %v1122, 4
  %v1927 = vor.u32 %v1925, %v1926
  %v1928 = vsel %vm1836, %v1923, %v1927
  %v1929 = vrot.slane %v1128, 3
  %v1930 = vrot.slane %v1131, 4
  %v1931 = vor.u32 %v1929, %v1930
  %v1932 = vsel %vm1836, %v1927, %v1931
  %v1933 = vrot.slane %v1137, 3
  %v1934 = vrot.slane %v1140, 4
  %v1935 = vor.u32 %v1933, %v1934
  %v1936 = vsel %vm1836, %v1931, %v1935
  %v1937 = vrot.slane %v1146, 3
  %v1938 = vrot.slane %v1149, 4
  %v1939 = vor.u32 %v1937, %v1938
  %v1940 = vsel %vm1836, %v1935, %v1939
  %v1941 = vrot.slane %v1155, 3
  %v1942 = vrot.slane %v1158, 4
  %v1943 = vor.u32 %v1941, %v1942
  %v1944 = vsel %vm1836, %v1939, %v1943
  %v1945 = vrot.slane %v1164, 3
  %v1946 = vrot.slane %v1167, 4
  %v1947 = vor.u32 %v1945, %v1946
  %v1948 = vsel %vm1836, %v1943, %v1947
  %v1949 = vrot.slane %v1173, 3
  %v1950 = vrot.slane %v1176, 4
  %v1951 = vor.u32 %v1949, %v1950
  %v1952 = vsel %vm1836, %v1947, %v1951
  %v1953 = vrot.slane %v1182, 3
  %v1954 = vrot.slane %v1185, 4
  %v1955 = vor.u32 %v1953, %v1954
  %v1956 = vsel %vm1836, %v1951, %v1955
  %v1957 = vrot.slane %v1191, 3
  %v1958 = vrot.slane %v1194, 4
  %v1959 = vor.u32 %v1957, %v1958
  %v1960 = vsel %vm1836, %v1955, %v1959
  %v1961 = vrot.slane %v1200, 3
  %v1962 = vrot.slane %v1203, 4
  %v1963 = vor.u32 %v1961, %v1962
  %v1964 = vsel %vm1836, %v1959, %v1963
  %v1965 = vrot.slane %v1209, 3
  %v1966 = vrot.slane %v1212, 4
  %v1967 = vor.u32 %v1965, %v1966
  %v1968 = vsel %vm1836, %v1963, %v1967
  %v1969 = vrot.slane %v1218, 3
  %v1970 = vrot.slane %v1221, 4
  %v1971 = vor.u32 %v1969, %v1970
  %v1972 = vsel %vm1836, %v1967, %v1971
  %v1973 = vrot.slane %v1227, 3
  %v1974 = vrot.slane %v1230, 4
  %v1975 = vor.u32 %v1973, %v1974
  %v1976 = vsel %vm1836, %v1971, %v1975
  %v1977 = vrot.slane %v1236, 3
  %v1978 = vrot.slane %v1239, 4
  %v1979 = vor.u32 %v1977, %v1978
  %v1980 = vsel %vm1836, %v1975, %v1979
  %v1981 = vrot.slane %v1245, 3
  %v1982 = vrot.slane %v1248, 4
  %v1983 = vor.u32 %v1981, %v1982
  %v1984 = vsel %vm1836, %v1979, %v1983
  %v1985 = vrot.slane %v1254, 3
  %v1986 = vrot.slane %v1257, 4
  %v1987 = vor.u32 %v1985, %v1986
  %v1988 = vsel %vm1836, %v1983, %v1987
  %v1989 = vrot.slane %v1263, 3
  %v1990 = vrot.slane %v1266, 4
  %v1991 = vor.u32 %v1989, %v1990
  %v1992 = vsel %vm1836, %v1987, %v1991
  %v1993 = vrot.slane %v1272, 3
  %v1994 = vrot.slane %v1275, 4
  %v1995 = vor.u32 %v1993, %v1994
  %v1996 = vsel %vm1836, %v1991, %v1995
  %v1997 = vrot.slane %v1281, 3
  %v1998 = vrot.slane %v1284, 4
  %v1999 = vor.u32 %v1997, %v1998
  %v2000 = vsel %vm1836, %v1995, %v1999
  %v2001 = vrot.slane %v1290, 3
  %v2002 = vrot.slane %v1293, 4
  %v2003 = vor.u32 %v2001, %v2002
  %v2004 = vsel %vm1836, %v1999, %v2003
  %v2005 = vrot.slane %v1299, 3
  %v2006 = vrot.slane %v1302, 4
  %v2007 = vor.u32 %v2005, %v2006
  %v2008 = vsel %vm1836, %v2003, %v2007
  %v2009 = vrot.slane %v1308, 3
  %v2010 = vrot.slane %v1311, 4
  %v2011 = vor.u32 %v2009, %v2010
  %v2012 = vsel %vm1836, %v2007, %v2011
  %v2014 = vshrl.u32 %v1835, 16
  %v2016 = vrot.slane %v2014, 3
  %v2017 = vshll.u32 %v1835, 16
  %v2019 = vrot.slane %v2017, 4
  %v2020 = vor.u32 %v2016, %v2019
  %v2021 = vsel %vm1836, %v2011, %v2020
  %v2023 = vsel %vm415, %v1848, 0
  %v2026 = vsel %vm415, %v1852, 0
  %v2029 = vsel %vm415, %v1856, 0
  %v2032 = vsel %vm415, %v1860, 0
  %v2035 = vsel %vm415, %v1864, 0
  %v2038 = vsel %vm415, %v1868, 0
  %v2041 = vsel %vm415, %v1872, 0
  %v2044 = vsel %vm415, %v1876, 0
  %v2047 = vsel %vm415, %v1880, 0
  %v2050 = vsel %vm415, %v1884, 0
  %v2053 = vsel %vm415, %v1888, 0
  %v2056 = vsel %vm415, %v1892, 0
  %v2059 = vsel %vm415, %v1896, 0
  %v2062 = vsel %vm415, %v1900, 0
  %v2065 = vsel %vm415, %v1904, 0
  %v2068 = vsel %vm415, %v1908, 0
  %v2071 = vsel %vm415, %v1912, 0
  %v2074 = vsel %vm415, %v1916, 0
  %v2077 = vsel %vm415, %v1920, 0
  %v2080 = vsel %vm415, %v1924, 0
  %v2083 = vsel %vm415, %v1928, 0
  %v2086 = vsel %vm415, %v1932, 0
  %v2089 = vsel %vm415, %v1936, 0
  %v2092 = vsel %vm415, %v1940, 0
  %v2095 = vsel %vm415, %v1944, 0
  %v2098 = vsel %vm415, %v1948, 0
  %v2101 = vsel %vm415, %v1952, 0
  %v2104 = vsel %vm415, %v1956, 0
  %v2107 = vsel %vm415, %v1960, 0
  %v2110 = vsel %vm415, %v1964, 0
  %v2113 = vsel %vm415, %v1968, 0
  %v2116 = vsel %vm415, %v1972, 0
  %v2119 = vsel %vm415, %v1976, 0
  %v2122 = vsel %vm415, %v1980, 0
  %v2125 = vsel %vm415, %v1984, 0
  %v2128 = vsel %vm415, %v1988, 0
  %v2131 = vsel %vm415, %v1992, 0
  %v2134 = vsel %vm415, %v1996, 0
  %v2137 = vsel %vm415, %v2000, 0
  %v2140 = vsel %vm415, %v2004, 0
  %v2143 = vsel %vm415, %v2008, 0
  %v2146 = vsel %vm415, %v2012, 0
  %v2149 = vsel %vm415, %v2021, 0
  %v2152 = vsel %vm545, %v1832, 0
  %2154 = vmatprep.subr.bf16.mxu0 0
  %2155 = vmatpush1.bf16.msra.mxu0 %v2152
  %2156 = vmatprep.subr.bf16.mxu0 0
  %2157 = vmatpush1.bf16.msra.mxu0 0
  %2158 = vmatprep.subr.bf16.mxu0 0
  %2159 = vmatpush1.bf16.msra.mxu0 0
  %2160 = vmatprep.subr.bf16.mxu0 0
  %2161 = vmatpush1.bf16.msra.mxu0 0
  %2162 = vmatprep.subr.bf16.mxu0 0
  %2163 = vmatpush1.bf16.msra.mxu0 0
  %2164 = vmatprep.subr.bf16.mxu0 0
  %2165 = vmatpush1.bf16.msra.mxu0 0
  %2166 = vmatprep.subr.bf16.mxu0 0
  %2167 = vmatpush1.bf16.msra.mxu0 0
  %2168 = vmatprep.subr.bf16.mxu0 0
  %2169 = vmatpush1.bf16.msra.mxu0 0
  %2170 = vmatprep.subr.bf16.mxu0 0
  %2171 = vmatpush1.bf16.msra.mxu0 0
  %2172 = vmatprep.subr.bf16.mxu0 0
  %2173 = vmatpush1.bf16.msra.mxu0 0
  %2174 = vmatprep.subr.bf16.mxu0 0
  %2175 = vmatpush1.bf16.msra.mxu0 0
  %2176 = vmatprep.subr.bf16.mxu0 0
  %2177 = vmatpush1.bf16.msra.mxu0 0
  %2178 = vmatprep.subr.bf16.mxu0 0
  %2179 = vmatpush1.bf16.msra.mxu0 0
  %2180 = vmatprep.subr.bf16.mxu0 0
  %2181 = vmatpush1.bf16.msra.mxu0 0
  %2182 = vmatprep.subr.bf16.mxu0 0
  %2183 = vmatpush1.bf16.msra.mxu0 0
  %2184 = vmatprep.subr.bf16.mxu0 0
  %2185 = vmatpush1.bf16.msra.mxu0 0
  %2186 = vmatprep.mubr.bf16.mxu0 0
  %2187 = vmatmul.mubr.bf16.gmra.mrb[0].mxu0 %v2023
  %v2188 = vpop.f32.mrb[0].mxu0
  %v2189 = vadd.f32 0.0, %v2188
  %v2190 = vpop.f32.mrb[0].mxu0
  %v2191 = vpop.f32.mrb[0].mxu0
  %v2192 = vadd.f32 0.0, %v2191
  %v2193 = vpop.f32.mrb[0].mxu0
  %2194 = vmatprep.mubr.bf16.mxu0 0
  %2195 = vmatmul.mubr.bf16.gmra.mrb[0].mxu0 %v2026
  %v2196 = vpop.f32.mrb[0].mxu0
  %v2197 = vadd.f32 0.0, %v2196
  %v2198 = vpop.f32.mrb[0].mxu0
  %v2199 = vpop.f32.mrb[0].mxu0
  %v2200 = vadd.f32 0.0, %v2199
  %v2201 = vpop.f32.mrb[0].mxu0
  %2202 = vmatprep.mubr.bf16.mxu0 0
  %2203 = vmatmul.mubr.bf16.gmra.mrb[0].mxu0 %v2029
  %v2204 = vpop.f32.mrb[0].mxu0
  %v2205 = vadd.f32 0.0, %v2204
  %v2206 = vpop.f32.mrb[0].mxu0
  %v2207 = vpop.f32.mrb[0].mxu0
  %v2208 = vadd.f32 0.0, %v2207
  %v2209 = vpop.f32.mrb[0].mxu0
  %2210 = vmatprep.mubr.bf16.mxu0 0
  %2211 = vmatmul.mubr.bf16.gmra.mrb[0].mxu0 %v2032
  %v2212 = vpop.f32.mrb[0].mxu0
  %v2213 = vadd.f32 0.0, %v2212
  %v2214 = vpop.f32.mrb[0].mxu0
  %v2215 = vpop.f32.mrb[0].mxu0
  %v2216 = vadd.f32 0.0, %v2215
  %v2217 = vpop.f32.mrb[0].mxu0
  %2218 = vmatprep.mubr.bf16.mxu0 0
  %2219 = vmatmul.mubr.bf16.gmra.mrb[0].mxu0 %v2035
  %v2220 = vpop.f32.mrb[0].mxu0
  %v2221 = vadd.f32 0.0, %v2220
  %v2222 = vpop.f32.mrb[0].mxu0
  %v2223 = vpop.f32.mrb[0].mxu0
  %v2224 = vadd.f32 0.0, %v2223
  %v2225 = vpop.f32.mrb[0].mxu0
  %2226 = vmatprep.mubr.bf16.mxu0 0
  %2227 = vmatmul.mubr.bf16.gmra.mrb[0].mxu0 %v2038
  %v2228 = vpop.f32.mrb[0].mxu0
  %v2229 = vadd.f32 0.0, %v2228
  %v2230 = vpop.f32.mrb[0].mxu0
  %v2231 = vpop.f32.mrb[0].mxu0
  %v2232 = vadd.f32 0.0, %v2231
  %v2233 = vpop.f32.mrb[0].mxu0
  %2234 = vmatprep.mubr.bf16.mxu0 0
  %2235 = vmatmul.mubr.bf16.gmra.mrb[0].mxu0 %v2041
  %v2236 = vpop.f32.mrb[0].mxu0
  %v2237 = vadd.f32 0.0, %v2236
  %v2238 = vpop.f32.mrb[0].mxu0
  %v2239 = vpop.f32.mrb[0].mxu0
  %v2240 = vadd.f32 0.0, %v2239
  %v2241 = vpop.f32.mrb[0].mxu0
  %2242 = vmatprep.mubr.bf16.mxu0 0
  %2243 = vmatmul.mubr.bf16.gmra.mrb[0].mxu0 %v2044
  %v2244 = vpop.f32.mrb[0].mxu0
  %v2245 = vadd.f32 0.0, %v2244
  %v2246 = vpop.f32.mrb[0].mxu0
  %v2247 = vpop.f32.mrb[0].mxu0
  %v2248 = vadd.f32 0.0, %v2247
  %v2249 = vpop.f32.mrb[0].mxu0
  %2250 = vmatprep.mubr.bf16.mxu0 0
  %2251 = vmatmul.mubr.bf16.gmra.mrb[0].mxu0 %v2047
  %v2252 = vpop.f32.mrb[0].mxu0
  %v2253 = vadd.f32 0.0, %v2252
  %v2254 = vpop.f32.mrb[0].mxu0
  %v2255 = vpop.f32.mrb[0].mxu0
  %v2256 = vadd.f32 0.0, %v2255
  %v2257 = vpop.f32.mrb[0].mxu0
  %2258 = vmatprep.mubr.bf16.mxu0 0
  %2259 = vmatmul.mubr.bf16.gmra.mrb[0].mxu0 %v2050
  %v2260 = vpop.f32.mrb[0].mxu0
  %v2261 = vadd.f32 0.0, %v2260
  %v2262 = vpop.f32.mrb[0].mxu0
  %v2263 = vpop.f32.mrb[0].mxu0
  %v2264 = vadd.f32 0.0, %v2263
  %v2265 = vpop.f32.mrb[0].mxu0
  %2266 = vmatprep.mubr.bf16.mxu0 0
  %2267 = vmatmul.mubr.bf16.gmra.mrb[0].mxu0 %v2053
  %v2268 = vpop.f32.mrb[0].mxu0
  %v2269 = vadd.f32 0.0, %v2268
  %v2270 = vpop.f32.mrb[0].mxu0
  %v2271 = vpop.f32.mrb[0].mxu0
  %v2272 = vadd.f32 0.0, %v2271
  %v2273 = vpop.f32.mrb[0].mxu0
  %2274 = vmatprep.mubr.bf16.mxu0 0
  %2275 = vmatmul.mubr.bf16.gmra.mrb[0].mxu0 %v2056
  %v2276 = vpop.f32.mrb[0].mxu0
  %v2277 = vadd.f32 0.0, %v2276
  %v2278 = vpop.f32.mrb[0].mxu0
  %v2279 = vpop.f32.mrb[0].mxu0
  %v2280 = vadd.f32 0.0, %v2279
  %v2281 = vpop.f32.mrb[0].mxu0
  %2282 = vmatprep.mubr.bf16.mxu0 0
  %2283 = vmatmul.mubr.bf16.gmra.mrb[0].mxu0 %v2059
  %v2284 = vpop.f32.mrb[0].mxu0
  %v2285 = vadd.f32 0.0, %v2284
  %v2286 = vpop.f32.mrb[0].mxu0
  %v2287 = vpop.f32.mrb[0].mxu0
  %v2288 = vadd.f32 0.0, %v2287
  %v2289 = vpop.f32.mrb[0].mxu0
  %2290 = vmatprep.mubr.bf16.mxu0 0
  %2291 = vmatmul.mubr.bf16.gmra.mrb[0].mxu0 %v2062
  %v2292 = vpop.f32.mrb[0].mxu0
  %v2293 = vadd.f32 0.0, %v2292
  %v2294 = vpop.f32.mrb[0].mxu0
  %v2295 = vpop.f32.mrb[0].mxu0
  %v2296 = vadd.f32 0.0, %v2295
  %v2297 = vpop.f32.mrb[0].mxu0
  %2298 = vmatprep.mubr.bf16.mxu0 0
  %2299 = vmatmul.mubr.bf16.gmra.mrb[0].mxu0 %v2065
  %v2300 = vpop.f32.mrb[0].mxu0
  %v2301 = vadd.f32 0.0, %v2300
  %v2302 = vpop.f32.mrb[0].mxu0
  %v2303 = vpop.f32.mrb[0].mxu0
  %v2304 = vadd.f32 0.0, %v2303
  %v2305 = vpop.f32.mrb[0].mxu0
  %2306 = vmatprep.mubr.bf16.mxu0 0
  %2307 = vmatmul.mubr.bf16.gmra.mrb[0].mxu0 %v2068
  %v2308 = vpop.f32.mrb[0].mxu0
  %v2309 = vadd.f32 0.0, %v2308
  %v2310 = vpop.f32.mrb[0].mxu0
  %v2311 = vpop.f32.mrb[0].mxu0
  %v2312 = vadd.f32 0.0, %v2311
  %v2313 = vpop.f32.mrb[0].mxu0
  %2314 = vmatprep.mubr.bf16.mxu0 0
  %2315 = vmatmul.mubr.bf16.gmra.mrb[0].mxu0 %v2071
  %v2316 = vpop.f32.mrb[0].mxu0
  %v2317 = vadd.f32 0.0, %v2316
  %v2318 = vpop.f32.mrb[0].mxu0
  %v2319 = vpop.f32.mrb[0].mxu0
  %v2320 = vadd.f32 0.0, %v2319
  %v2321 = vpop.f32.mrb[0].mxu0
  %2322 = vmatprep.mubr.bf16.mxu0 0
  %2323 = vmatmul.mubr.bf16.gmra.mrb[0].mxu0 %v2074
  %v2324 = vpop.f32.mrb[0].mxu0
  %v2325 = vadd.f32 0.0, %v2324
  %v2326 = vpop.f32.mrb[0].mxu0
  %v2327 = vpop.f32.mrb[0].mxu0
  %v2328 = vadd.f32 0.0, %v2327
  %v2329 = vpop.f32.mrb[0].mxu0
  %2330 = vmatprep.mubr.bf16.mxu0 0
  %2331 = vmatmul.mubr.bf16.gmra.mrb[0].mxu0 %v2077
  %v2332 = vpop.f32.mrb[0].mxu0
  %v2333 = vadd.f32 0.0, %v2332
  %v2334 = vpop.f32.mrb[0].mxu0
  %v2335 = vpop.f32.mrb[0].mxu0
  %v2336 = vadd.f32 0.0, %v2335
  %v2337 = vpop.f32.mrb[0].mxu0
  %2338 = vmatprep.mubr.bf16.mxu0 0
  %2339 = vmatmul.mubr.bf16.gmra.mrb[0].mxu0 %v2080
  %v2340 = vpop.f32.mrb[0].mxu0
  %v2341 = vadd.f32 0.0, %v2340
  %v2342 = vpop.f32.mrb[0].mxu0
  %v2343 = vpop.f32.mrb[0].mxu0
  %v2344 = vadd.f32 0.0, %v2343
  %v2345 = vpop.f32.mrb[0].mxu0
  %2346 = vmatprep.mubr.bf16.mxu0 0
  %2347 = vmatmul.mubr.bf16.gmra.mrb[0].mxu0 %v2083
  %v2348 = vpop.f32.mrb[0].mxu0
  %v2349 = vadd.f32 0.0, %v2348
  %v2350 = vpop.f32.mrb[0].mxu0
  %v2351 = vpop.f32.mrb[0].mxu0
  %v2352 = vadd.f32 0.0, %v2351
  %v2353 = vpop.f32.mrb[0].mxu0
  %2354 = vmatprep.mubr.bf16.mxu0 0
  %2355 = vmatmul.mubr.bf16.gmra.mrb[0].mxu0 %v2086
  %v2356 = vpop.f32.mrb[0].mxu0
  %v2357 = vadd.f32 0.0, %v2356
  %v2358 = vpop.f32.mrb[0].mxu0
  %v2359 = vpop.f32.mrb[0].mxu0
  %v2360 = vadd.f32 0.0, %v2359
  %v2361 = vpop.f32.mrb[0].mxu0
  %2362 = vmatprep.mubr.bf16.mxu0 0
  %2363 = vmatmul.mubr.bf16.gmra.mrb[0].mxu0 %v2089
  %v2364 = vpop.f32.mrb[0].mxu0
  %v2365 = vadd.f32 0.0, %v2364
  %v2366 = vpop.f32.mrb[0].mxu0
  %v2367 = vpop.f32.mrb[0].mxu0
  %v2368 = vadd.f32 0.0, %v2367
  %v2369 = vpop.f32.mrb[0].mxu0
  %2370 = vmatprep.mubr.bf16.mxu0 0
  %2371 = vmatmul.mubr.bf16.gmra.mrb[0].mxu0 %v2092
  %v2372 = vpop.f32.mrb[0].mxu0
  %v2373 = vadd.f32 0.0, %v2372
  %v2374 = vpop.f32.mrb[0].mxu0
  %v2375 = vpop.f32.mrb[0].mxu0
  %v2376 = vadd.f32 0.0, %v2375
  %v2377 = vpop.f32.mrb[0].mxu0
  %2378 = vmatprep.mubr.bf16.mxu0 0
  %2379 = vmatmul.mubr.bf16.gmra.mrb[0].mxu0 %v2095
  %v2380 = vpop.f32.mrb[0].mxu0
  %v2381 = vadd.f32 0.0, %v2380
  %v2382 = vpop.f32.mrb[0].mxu0
  %v2383 = vpop.f32.mrb[0].mxu0
  %v2384 = vadd.f32 0.0, %v2383
  %v2385 = vpop.f32.mrb[0].mxu0
  %2386 = vmatprep.mubr.bf16.mxu0 0
  %2387 = vmatmul.mubr.bf16.gmra.mrb[0].mxu0 %v2098
  %v2388 = vpop.f32.mrb[0].mxu0
  %v2389 = vadd.f32 0.0, %v2388
  %v2390 = vpop.f32.mrb[0].mxu0
  %v2391 = vpop.f32.mrb[0].mxu0
  %v2392 = vadd.f32 0.0, %v2391
  %v2393 = vpop.f32.mrb[0].mxu0
  %2394 = vmatprep.mubr.bf16.mxu0 0
  %2395 = vmatmul.mubr.bf16.gmra.mrb[0].mxu0 %v2101
  %v2396 = vpop.f32.mrb[0].mxu0
  %v2397 = vadd.f32 0.0, %v2396
  %v2398 = vpop.f32.mrb[0].mxu0
  %v2399 = vpop.f32.mrb[0].mxu0
  %v2400 = vadd.f32 0.0, %v2399
  %v2401 = vpop.f32.mrb[0].mxu0
  %2402 = vmatprep.mubr.bf16.mxu0 0
  %2403 = vmatmul.mubr.bf16.gmra.mrb[0].mxu0 %v2104
  %v2404 = vpop.f32.mrb[0].mxu0
  %v2405 = vadd.f32 0.0, %v2404
  %v2406 = vpop.f32.mrb[0].mxu0
  %v2407 = vpop.f32.mrb[0].mxu0
  %v2408 = vadd.f32 0.0, %v2407
  %v2409 = vpop.f32.mrb[0].mxu0
  %2410 = vmatprep.mubr.bf16.mxu0 0
  %2411 = vmatmul.mubr.bf16.gmra.mrb[0].mxu0 %v2107
  %v2412 = vpop.f32.mrb[0].mxu0
  %v2413 = vadd.f32 0.0, %v2412
  %v2414 = vpop.f32.mrb[0].mxu0
  %v2415 = vpop.f32.mrb[0].mxu0
  %v2416 = vadd.f32 0.0, %v2415
  %v2417 = vpop.f32.mrb[0].mxu0
  %2418 = vmatprep.mubr.bf16.mxu0 0
  %2419 = vmatmul.mubr.bf16.gmra.mrb[0].mxu0 %v2110
  %v2420 = vpop.f32.mrb[0].mxu0
  %v2421 = vadd.f32 0.0, %v2420
  %v2422 = vpop.f32.mrb[0].mxu0
  %v2423 = vpop.f32.mrb[0].mxu0
  %v2424 = vadd.f32 0.0, %v2423
  %v2425 = vpop.f32.mrb[0].mxu0
  %2426 = vmatprep.mubr.bf16.mxu0 0
  %2427 = vmatmul.mubr.bf16.gmra.mrb[0].mxu0 %v2113
  %v2428 = vpop.f32.mrb[0].mxu0
  %v2429 = vadd.f32 0.0, %v2428
  %v2430 = vpop.f32.mrb[0].mxu0
  %v2431 = vpop.f32.mrb[0].mxu0
  %v2432 = vadd.f32 0.0, %v2431
  %v2433 = vpop.f32.mrb[0].mxu0
  %2434 = vmatprep.mubr.bf16.mxu0 0
  %2435 = vmatmul.mubr.bf16.gmra.mrb[0].mxu0 %v2116
  %v2436 = vpop.f32.mrb[0].mxu0
  %v2437 = vadd.f32 0.0, %v2436
  %v2438 = vpop.f32.mrb[0].mxu0
  %v2439 = vpop.f32.mrb[0].mxu0
  %v2440 = vadd.f32 0.0, %v2439
  %v2441 = vpop.f32.mrb[0].mxu0
  %2442 = vmatprep.mubr.bf16.mxu0 0
  %2443 = vmatmul.mubr.bf16.gmra.mrb[0].mxu0 %v2119
  %v2444 = vpop.f32.mrb[0].mxu0
  %v2445 = vadd.f32 0.0, %v2444
  %v2446 = vpop.f32.mrb[0].mxu0
  %v2447 = vpop.f32.mrb[0].mxu0
  %v2448 = vadd.f32 0.0, %v2447
  %v2449 = vpop.f32.mrb[0].mxu0
  %2450 = vmatprep.mubr.bf16.mxu0 0
  %2451 = vmatmul.mubr.bf16.gmra.mrb[0].mxu0 %v2122
  %v2452 = vpop.f32.mrb[0].mxu0
  %v2453 = vadd.f32 0.0, %v2452
  %v2454 = vpop.f32.mrb[0].mxu0
  %v2455 = vpop.f32.mrb[0].mxu0
  %v2456 = vadd.f32 0.0, %v2455
  %v2457 = vpop.f32.mrb[0].mxu0
  %2458 = vmatprep.mubr.bf16.mxu0 0
  %2459 = vmatmul.mubr.bf16.gmra.mrb[0].mxu0 %v2125
  %v2460 = vpop.f32.mrb[0].mxu0
  %v2461 = vadd.f32 0.0, %v2460
  %v2462 = vpop.f32.mrb[0].mxu0
  %v2463 = vpop.f32.mrb[0].mxu0
  %v2464 = vadd.f32 0.0, %v2463
  %v2465 = vpop.f32.mrb[0].mxu0
  %2466 = vmatprep.mubr.bf16.mxu0 0
  %2467 = vmatmul.mubr.bf16.gmra.mrb[0].mxu0 %v2128
  %v2468 = vpop.f32.mrb[0].mxu0
  %v2469 = vadd.f32 0.0, %v2468
  %v2470 = vpop.f32.mrb[0].mxu0
  %v2471 = vpop.f32.mrb[0].mxu0
  %v2472 = vadd.f32 0.0, %v2471
  %v2473 = vpop.f32.mrb[0].mxu0
  %2474 = vmatprep.mubr.bf16.mxu0 0
  %2475 = vmatmul.mubr.bf16.gmra.mrb[0].mxu0 %v2131
  %v2476 = vpop.f32.mrb[0].mxu0
  %v2477 = vadd.f32 0.0, %v2476
  %v2478 = vpop.f32.mrb[0].mxu0
  %v2479 = vpop.f32.mrb[0].mxu0
  %v2480 = vadd.f32 0.0, %v2479
  %v2481 = vpop.f32.mrb[0].mxu0
  %2482 = vmatprep.mubr.bf16.mxu0 0
  %2483 = vmatmul.mubr.bf16.gmra.mrb[0].mxu0 %v2134
  %v2484 = vpop.f32.mrb[0].mxu0
  %v2485 = vadd.f32 0.0, %v2484
  %v2486 = vpop.f32.mrb[0].mxu0
  %v2487 = vpop.f32.mrb[0].mxu0
  %v2488 = vadd.f32 0.0, %v2487
  %v2489 = vpop.f32.mrb[0].mxu0
  %2490 = vmatprep.mubr.bf16.mxu0 0
  %2491 = vmatmul.mubr.bf16.gmra.mrb[0].mxu0 %v2137
  %v2492 = vpop.f32.mrb[0].mxu0
  %v2493 = vadd.f32 0.0, %v2492
  %v2494 = vpop.f32.mrb[0].mxu0
  %v2495 = vpop.f32.mrb[0].mxu0
  %v2496 = vadd.f32 0.0, %v2495
  %v2497 = vpop.f32.mrb[0].mxu0
  %2498 = vmatprep.mubr.bf16.mxu0 0
  %2499 = vmatmul.mubr.bf16.gmra.mrb[0].mxu0 %v2140
  %v2500 = vpop.f32.mrb[0].mxu0
  %v2501 = vadd.f32 0.0, %v2500
  %v2502 = vpop.f32.mrb[0].mxu0
  %v2503 = vpop.f32.mrb[0].mxu0
  %v2504 = vadd.f32 0.0, %v2503
  %v2505 = vpop.f32.mrb[0].mxu0
  %2506 = vmatprep.mubr.bf16.mxu0 0
  %2507 = vmatmul.mubr.bf16.gmra.mrb[0].mxu0 %v2143
  %v2508 = vpop.f32.mrb[0].mxu0
  %v2509 = vadd.f32 0.0, %v2508
  %v2510 = vpop.f32.mrb[0].mxu0
  %v2511 = vpop.f32.mrb[0].mxu0
  %v2512 = vadd.f32 0.0, %v2511
  %v2513 = vpop.f32.mrb[0].mxu0
  %2514 = vmatprep.mubr.bf16.mxu0 0
  %2515 = vmatmul.mubr.bf16.gmra.mrb[0].mxu0 %v2146
  %v2516 = vpop.f32.mrb[0].mxu0
  %v2517 = vadd.f32 0.0, %v2516
  %v2518 = vpop.f32.mrb[0].mxu0
  %v2519 = vpop.f32.mrb[0].mxu0
  %v2520 = vadd.f32 0.0, %v2519
  %v2521 = vpop.f32.mrb[0].mxu0
  %2522 = vmatprep.mubr.bf16.mxu0 0
  %2523 = vmatmul.mubr.bf16.gmra.mrb[0].mxu0 %v2149
  %v2524 = vpop.f32.mrb[0].mxu0
  %v2525 = vadd.f32 0.0, %v2524
  %v2526 = vpop.f32.mrb[0].mxu0
  %v2527 = vpop.f32.mrb[0].mxu0
  %v2528 = vadd.f32 0.0, %v2527
  %v2529 = vpop.f32.mrb[0].mxu0
  %2530 = vdwg.mxu0
  %v2531 = vadd.f32 %v1488, %v2189
  %v2532 = vadd.f32 %v1491, %v2192
  %v2533 = vadd.f32 %v1496, %v2197
  %v2534 = vadd.f32 %v1499, %v2200
  %v2535 = vadd.f32 %v1504, %v2205
  %v2536 = vadd.f32 %v1507, %v2208
  %v2537 = vadd.f32 %v1512, %v2213
  %v2538 = vadd.f32 %v1515, %v2216
  %v2539 = vadd.f32 %v1520, %v2221
  %v2540 = vadd.f32 %v1523, %v2224
  %v2541 = vadd.f32 %v1528, %v2229
  %v2542 = vadd.f32 %v1531, %v2232
  %v2543 = vadd.f32 %v1536, %v2237
  %v2544 = vadd.f32 %v1539, %v2240
  %v2545 = vadd.f32 %v1544, %v2245
  %v2546 = vadd.f32 %v1547, %v2248
  %v2547 = vadd.f32 %v1552, %v2253
  %v2548 = vadd.f32 %v1555, %v2256
  %v2549 = vadd.f32 %v1560, %v2261
  %v2550 = vadd.f32 %v1563, %v2264
  %v2551 = vadd.f32 %v1568, %v2269
  %v2552 = vadd.f32 %v1571, %v2272
  %v2553 = vadd.f32 %v1576, %v2277
  %v2554 = vadd.f32 %v1579, %v2280
  %v2555 = vadd.f32 %v1584, %v2285
  %v2556 = vadd.f32 %v1587, %v2288
  %v2557 = vadd.f32 %v1592, %v2293
  %v2558 = vadd.f32 %v1595, %v2296
  %v2559 = vadd.f32 %v1600, %v2301
  %v2560 = vadd.f32 %v1603, %v2304
  %v2561 = vadd.f32 %v1608, %v2309
  %v2562 = vadd.f32 %v1611, %v2312
  %v2563 = vadd.f32 %v1616, %v2317
  %v2564 = vadd.f32 %v1619, %v2320
  %v2565 = vadd.f32 %v1624, %v2325
  %v2566 = vadd.f32 %v1627, %v2328
  %v2567 = vadd.f32 %v1632, %v2333
  %v2568 = vadd.f32 %v1635, %v2336
  %v2569 = vadd.f32 %v1640, %v2341
  %v2570 = vadd.f32 %v1643, %v2344
  %v2571 = vadd.f32 %v1648, %v2349
  %v2572 = vadd.f32 %v1651, %v2352
  %v2573 = vadd.f32 %v1656, %v2357
  %v2574 = vadd.f32 %v1659, %v2360
  %v2575 = vadd.f32 %v1664, %v2365
  %v2576 = vadd.f32 %v1667, %v2368
  %v2577 = vadd.f32 %v1672, %v2373
  %v2578 = vadd.f32 %v1675, %v2376
  %v2579 = vadd.f32 %v1680, %v2381
  %v2580 = vadd.f32 %v1683, %v2384
  %v2581 = vadd.f32 %v1688, %v2389
  %v2582 = vadd.f32 %v1691, %v2392
  %v2583 = vadd.f32 %v1696, %v2397
  %v2584 = vadd.f32 %v1699, %v2400
  %v2585 = vadd.f32 %v1704, %v2405
  %v2586 = vadd.f32 %v1707, %v2408
  %v2587 = vadd.f32 %v1712, %v2413
  %v2588 = vadd.f32 %v1715, %v2416
  %v2589 = vadd.f32 %v1720, %v2421
  %v2590 = vadd.f32 %v1723, %v2424
  %v2591 = vadd.f32 %v1728, %v2429
  %v2592 = vadd.f32 %v1731, %v2432
  %v2593 = vadd.f32 %v1736, %v2437
  %v2594 = vadd.f32 %v1739, %v2440
  %v2595 = vadd.f32 %v1744, %v2445
  %v2596 = vadd.f32 %v1747, %v2448
  %v2597 = vadd.f32 %v1752, %v2453
  %v2598 = vadd.f32 %v1755, %v2456
  %v2599 = vadd.f32 %v1760, %v2461
  %v2600 = vadd.f32 %v1763, %v2464
  %v2601 = vadd.f32 %v1768, %v2469
  %v2602 = vadd.f32 %v1771, %v2472
  %v2603 = vadd.f32 %v1776, %v2477
  %v2604 = vadd.f32 %v1779, %v2480
  %v2605 = vadd.f32 %v1784, %v2485
  %v2606 = vadd.f32 %v1787, %v2488
  %v2607 = vadd.f32 %v1792, %v2493
  %v2608 = vadd.f32 %v1795, %v2496
  %v2609 = vadd.f32 %v1800, %v2501
  %v2610 = vadd.f32 %v1803, %v2504
  %v2611 = vadd.f32 %v1808, %v2509
  %v2612 = vadd.f32 %v1811, %v2512
  %v2613 = vadd.f32 %v1816, %v2517
  %v2614 = vadd.f32 %v1819, %v2520
  %v2615 = vadd.f32 %v1824, %v2525
  %v2616 = vadd.f32 %v1827, %v2528
  %v2617 = vld [vmem:[%s0 + $0x8] sm:$0x8]
  %v2618 = vld [vmem:[%s0 + $0xc] sm:$0xf]
  %v2619 = vld [vmem:[%s0 + $0x10] sm:$0xf]
  %v2620 = vld [vmem:[%s0 + $0x14] sm:$0xf]
  %v2621 = vld [vmem:[%s0 + $0x18] sm:$0xf]
  %v2622 = vld [vmem:[%s0 + $0x1c] sm:$0xf]
  %v2623 = vld [vmem:[%s0 + $0x20] sm:$0xf]
  %v2624 = vld [vmem:[%s0 + $0x24] sm:$0xf]
  %v2625 = vld [vmem:[%s0 + $0x28] sm:$0xf]
  %v2626 = vld [vmem:[%s0 + $0x2c] sm:$0xf]
  %v2627 = vld [vmem:[%s0 + $0x30] sm:$0xf]
  %v2628 = vld [vmem:[%s0 + $0x34] sm:$0xf]
  %v2629 = vld [vmem:[%s0 + $0x38] sm:$0xf]
  %v2630 = vld [vmem:[%s0 + $0x3c] sm:$0xf]
  %v2631 = vld [vmem:[%s0 + $0x40] sm:$0xf]
  %v2632 = vld [vmem:[%s0 + $0x44] sm:$0xf]
  %v2633 = vld [vmem:[%s0 + $0x48] sm:$0xf]
  %v2634 = vld [vmem:[%s0 + $0x4c] sm:$0xf]
  %v2635 = vld [vmem:[%s0 + $0x50] sm:$0xf]
  %v2636 = vld [vmem:[%s0 + $0x54] sm:$0xf]
  %v2637 = vld [vmem:[%s0 + $0x58] sm:$0xf]
  %v2638 = vld [vmem:[%s0 + $0x5c] sm:$0xf]
  %v2639 = vld [vmem:[%s0 + $0x60] sm:$0xf]
  %v2640 = vld [vmem:[%s0 + $0x64] sm:$0xf]
  %v2641 = vld [vmem:[%s0 + $0x68] sm:$0xf]
  %v2642 = vld [vmem:[%s0 + $0x6c] sm:$0xf]
  %v2643 = vld [vmem:[%s0 + $0x70] sm:$0xf]
  %v2644 = vld [vmem:[%s0 + $0x74] sm:$0xf]
  %v2645 = vld [vmem:[%s0 + $0x78] sm:$0xf]
  %v2646 = vld [vmem:[%s0 + $0x7c] sm:$0xf]
  %v2647 = vld [vmem:[%s0 + $0x80] sm:$0xf]
  %v2648 = vld [vmem:[%s0 + $0x84] sm:$0xf]
  %v2649 = vld [vmem:[%s0 + $0x88] sm:$0xf]
  %v2650 = vld [vmem:[%s0 + $0x8c] sm:$0xf]
  %v2651 = vld [vmem:[%s0 + $0x90] sm:$0xf]
  %v2652 = vld [vmem:[%s0 + $0x94] sm:$0xf]
  %v2653 = vld [vmem:[%s0 + $0x98] sm:$0xf]
  %v2654 = vld [vmem:[%s0 + $0x9c] sm:$0xf]
  %v2655 = vld [vmem:[%s0 + $0xa0] sm:$0xf]
  %v2656 = vld [vmem:[%s0 + $0xa4] sm:$0xf]
  %v2657 = vld [vmem:[%s0 + $0xa8] sm:$0xf]
  %v2658 = vld [vmem:[%s0 + $0xac] sm:$0xf]
  %v2659 = vld [vmem:[%s0 + $0xb0] sm:$0xf]
  %v2660 = vld [vmem:[%s0 + $0xb4] sm:$0xf]
  %v2661 = vld [vmem:[%s0 + $0xb8] sm:$0xf]
  %v2662 = vld [vmem:[%s0 + $0xbc] sm:$0xf]
  %v2663 = vld [vmem:[%s0 + $0xc0] sm:$0xf]
  %v2664 = vld [vmem:[%s0 + $0xc4] sm:$0xf]
  %v2665 = vld [vmem:[%s0 + $0xc8] sm:$0xf]
  %v2666 = vld [vmem:[%s0 + $0xcc] sm:$0xf]
  %v2667 = vld [vmem:[%s0 + $0xd0] sm:$0xf]
  %v2668 = vld [vmem:[%s0 + $0xd4] sm:$0xf]
  %v2669 = vld [vmem:[%s0 + $0xd8] sm:$0xf]
  %v2670 = vld [vmem:[%s0 + $0xdc] sm:$0xf]
  %v2671 = vld [vmem:[%s0 + $0xe0] sm:$0xf]
  %v2672 = vld [vmem:[%s0 + $0xe4] sm:$0xf]
  %v2673 = vld [vmem:[%s0 + $0xe8] sm:$0xf]
  %v2674 = vld [vmem:[%s0 + $0xec] sm:$0xf]
  %v2675 = vld [vmem:[%s0 + $0xf0] sm:$0xf]
  %v2676 = vld [vmem:[%s0 + $0xf4] sm:$0xf]
  %v2677 = vld [vmem:[%s0 + $0xf8] sm:$0xf]
  %v2678 = vld [vmem:[%s0 + $0xfc] sm:$0xf]
  %v2679 = vld [vmem:[%s0 + $0x100] sm:$0xf]
  %v2680 = vld [vmem:[%s0 + $0x104] sm:$0xf]
  %v2681 = vld [vmem:[%s0 + $0x108] sm:$0xf]
  %v2682 = vld [vmem:[%s0 + $0x10c] sm:$0xf]
  %v2683 = vld [vmem:[%s0 + $0x110] sm:$0xf]
  %v2684 = vld [vmem:[%s0 + $0x114] sm:$0xf]
  %v2685 = vld [vmem:[%s0 + $0x118] sm:$0xf]
  %v2686 = vld [vmem:[%s0 + $0x11c] sm:$0xf]
  %v2687 = vld [vmem:[%s0 + $0x120] sm:$0xf]
  %v2688 = vld [vmem:[%s0 + $0x124] sm:$0xf]
  %v2689 = vld [vmem:[%s0 + $0x128] sm:$0xf]
  %v2690 = vld [vmem:[%s0 + $0x12c] sm:$0xf]
  %v2691 = vld [vmem:[%s0 + $0x130] sm:$0xf]
  %v2692 = vld [vmem:[%s0 + $0x134] sm:$0xf]
  %v2693 = vld [vmem:[%s0 + $0x138] sm:$0xf]
  %v2694 = vld [vmem:[%s0 + $0x13c] sm:$0xf]
  %v2695 = vld [vmem:[%s0 + $0x140] sm:$0xf]
  %v2696 = vld [vmem:[%s0 + $0x144] sm:$0xf]
  %v2697 = vld [vmem:[%s0 + $0x148] sm:$0xf]
  %v2698 = vld [vmem:[%s0 + $0x14c] sm:$0xf]
  %v2699 = vld [vmem:[%s0 + $0x150] sm:$0xf]
  %v2700 = vld [vmem:[%s0 + $0x154] sm:$0xf]
  %v2701 = vld [vmem:[%s0 + $0x158] sm:$0xf]
  %v2702 = vld [vmem:[%s0 + $0x15c] sm:$0xf]
  %v2703 = vld [vmem:[%s0 + $0x160] sm:$0x3]
  %s2704 = scalar_lea.vmem %s1, 6
  %v2705 = vld [vmem:[%s2704] sm:$0x3]
  %v2793 = vunpack.c.l.b16 %v2617
  %v2794 = vunpack.c.l.b16 %v2618
  %v2795 = vunpack.c.l.b16 %v2619
  %v2796 = vunpack.c.l.b16 %v2620
  %v2797 = vunpack.c.l.b16 %v2621
  %v2798 = vunpack.c.l.b16 %v2622
  %v2799 = vunpack.c.l.b16 %v2623
  %v2800 = vunpack.c.l.b16 %v2624
  %v2801 = vunpack.c.l.b16 %v2625
  %v2802 = vunpack.c.l.b16 %v2626
  %v2803 = vunpack.c.l.b16 %v2627
  %v2804 = vunpack.c.l.b16 %v2628
  %v2805 = vunpack.c.l.b16 %v2629
  %v2806 = vunpack.c.l.b16 %v2630
  %v2807 = vunpack.c.l.b16 %v2631
  %v2808 = vunpack.c.l.b16 %v2632
  %v2809 = vunpack.c.l.b16 %v2633
  %v2810 = vunpack.c.l.b16 %v2634
  %v2811 = vunpack.c.l.b16 %v2635
  %v2812 = vunpack.c.l.b16 %v2636
  %v2813 = vunpack.c.l.b16 %v2637
  %v2814 = vunpack.c.l.b16 %v2638
  %v2815 = vunpack.c.l.b16 %v2639
  %v2816 = vunpack.c.l.b16 %v2640
  %v2817 = vunpack.c.l.b16 %v2641
  %v2818 = vunpack.c.l.b16 %v2642
  %v2819 = vunpack.c.l.b16 %v2643
  %v2820 = vunpack.c.l.b16 %v2644
  %v2821 = vunpack.c.l.b16 %v2645
  %v2822 = vunpack.c.l.b16 %v2646
  %v2823 = vunpack.c.l.b16 %v2647
  %v2824 = vunpack.c.l.b16 %v2648
  %v2825 = vunpack.c.l.b16 %v2649
  %v2826 = vunpack.c.l.b16 %v2650
  %v2827 = vunpack.c.l.b16 %v2651
  %v2828 = vunpack.c.l.b16 %v2652
  %v2829 = vunpack.c.l.b16 %v2653
  %v2830 = vunpack.c.l.b16 %v2654
  %v2831 = vunpack.c.l.b16 %v2655
  %v2832 = vunpack.c.l.b16 %v2656
  %v2833 = vunpack.c.l.b16 %v2657
  %v2834 = vunpack.c.l.b16 %v2658
  %v2835 = vunpack.c.l.b16 %v2659
  %v2836 = vunpack.c.l.b16 %v2660
  %v2837 = vunpack.c.l.b16 %v2661
  %v2838 = vunpack.c.l.b16 %v2662
  %v2839 = vunpack.c.l.b16 %v2663
  %v2840 = vunpack.c.l.b16 %v2664
  %v2841 = vunpack.c.l.b16 %v2665
  %v2842 = vunpack.c.l.b16 %v2666
  %v2843 = vunpack.c.l.b16 %v2667
  %v2844 = vunpack.c.l.b16 %v2668
  %v2845 = vunpack.c.l.b16 %v2669
  %v2846 = vunpack.c.l.b16 %v2670
  %v2847 = vunpack.c.l.b16 %v2671
  %v2848 = vunpack.c.l.b16 %v2672
  %v2849 = vunpack.c.l.b16 %v2673
  %v2850 = vunpack.c.l.b16 %v2674
  %v2851 = vunpack.c.l.b16 %v2675
  %v2852 = vunpack.c.l.b16 %v2676
  %v2853 = vunpack.c.l.b16 %v2677
  %v2854 = vunpack.c.l.b16 %v2678
  %v2855 = vunpack.c.l.b16 %v2679
  %v2856 = vunpack.c.l.b16 %v2680
  %v2857 = vunpack.c.l.b16 %v2681
  %v2858 = vunpack.c.l.b16 %v2682
  %v2859 = vunpack.c.l.b16 %v2683
  %v2860 = vunpack.c.l.b16 %v2684
  %v2861 = vunpack.c.l.b16 %v2685
  %v2862 = vunpack.c.l.b16 %v2686
  %v2863 = vunpack.c.l.b16 %v2687
  %v2864 = vunpack.c.l.b16 %v2688
  %v2865 = vunpack.c.l.b16 %v2689
  %v2866 = vunpack.c.l.b16 %v2690
  %v2867 = vunpack.c.l.b16 %v2691
  %v2868 = vunpack.c.l.b16 %v2692
  %v2869 = vunpack.c.l.b16 %v2693
  %v2870 = vunpack.c.l.b16 %v2694
  %v2871 = vunpack.c.l.b16 %v2695
  %v2872 = vunpack.c.l.b16 %v2696
  %v2873 = vunpack.c.l.b16 %v2697
  %v2874 = vunpack.c.l.b16 %v2698
  %v2875 = vunpack.c.l.b16 %v2699
  %v2876 = vunpack.c.l.b16 %v2700
  %v2877 = vunpack.c.l.b16 %v2701
  %v2878 = vunpack.c.l.b16 %v2702
  %v2879 = vunpack.c.l.b16 %v2703
  %v2880 = vpack.c.b16 %v2794, %v2793
  %v2881 = vpack.c.b16 %v2796, %v2795
  %v2882 = vpack.c.b16 %v2798, %v2797
  %v2883 = vpack.c.b16 %v2800, %v2799
  %v2884 = vpack.c.b16 %v2802, %v2801
  %v2885 = vpack.c.b16 %v2804, %v2803
  %v2886 = vpack.c.b16 %v2806, %v2805
  %v2887 = vpack.c.b16 %v2808, %v2807
  %v2888 = vpack.c.b16 %v2810, %v2809
  %v2889 = vpack.c.b16 %v2812, %v2811
  %v2890 = vpack.c.b16 %v2814, %v2813
  %v2891 = vpack.c.b16 %v2816, %v2815
  %v2892 = vpack.c.b16 %v2818, %v2817
  %v2893 = vpack.c.b16 %v2820, %v2819
  %v2894 = vpack.c.b16 %v2822, %v2821
  %v2895 = vpack.c.b16 %v2824, %v2823
  %v2896 = vpack.c.b16 %v2826, %v2825
  %v2897 = vpack.c.b16 %v2828, %v2827
  %v2898 = vpack.c.b16 %v2830, %v2829
  %v2899 = vpack.c.b16 %v2832, %v2831
  %v2900 = vpack.c.b16 %v2834, %v2833
  %v2901 = vpack.c.b16 %v2836, %v2835
  %v2902 = vpack.c.b16 %v2838, %v2837
  %v2903 = vpack.c.b16 %v2840, %v2839
  %v2904 = vpack.c.b16 %v2842, %v2841
  %v2905 = vpack.c.b16 %v2844, %v2843
  %v2906 = vpack.c.b16 %v2846, %v2845
  %v2907 = vpack.c.b16 %v2848, %v2847
  %v2908 = vpack.c.b16 %v2850, %v2849
  %v2909 = vpack.c.b16 %v2852, %v2851
  %v2910 = vpack.c.b16 %v2854, %v2853
  %v2911 = vpack.c.b16 %v2856, %v2855
  %v2912 = vpack.c.b16 %v2858, %v2857
  %v2913 = vpack.c.b16 %v2860, %v2859
  %v2914 = vpack.c.b16 %v2862, %v2861
  %v2915 = vpack.c.b16 %v2864, %v2863
  %v2916 = vpack.c.b16 %v2866, %v2865
  %v2917 = vpack.c.b16 %v2868, %v2867
  %v2918 = vpack.c.b16 %v2870, %v2869
  %v2919 = vpack.c.b16 %v2872, %v2871
  %v2920 = vpack.c.b16 %v2874, %v2873
  %v2921 = vpack.c.b16 %v2876, %v2875
  %v2922 = vpack.c.b16 %v2878, %v2877
  %v2923 = vpack.c.b16 %v2879, %v2879
  %v2925 = vshrl.u32 %v2880, 16
  %v2927 = vrot.slane %v2925, 3
  %v2928 = vshll.u32 %v2880, 16
  %v2930 = vrot.slane %v2928, 4
  %v2931 = vor.u32 %v2927, %v2930
  %v2933 = vshrl.u32 %v2881, 16
  %v2935 = vrot.slane %v2933, 3
  %v2936 = vshll.u32 %v2881, 16
  %v2938 = vrot.slane %v2936, 4
  %v2939 = vor.u32 %v2935, %v2938
  %v2940 = vsel %vm1836, %v2931, %v2939
  %v2942 = vshrl.u32 %v2882, 16
  %v2944 = vrot.slane %v2942, 3
  %v2945 = vshll.u32 %v2882, 16
  %v2947 = vrot.slane %v2945, 4
  %v2948 = vor.u32 %v2944, %v2947
  %v2949 = vsel %vm1836, %v2939, %v2948
  %v2951 = vshrl.u32 %v2883, 16
  %v2953 = vrot.slane %v2951, 3
  %v2954 = vshll.u32 %v2883, 16
  %v2956 = vrot.slane %v2954, 4
  %v2957 = vor.u32 %v2953, %v2956
  %v2958 = vsel %vm1836, %v2948, %v2957
  %v2960 = vshrl.u32 %v2884, 16
  %v2962 = vrot.slane %v2960, 3
  %v2963 = vshll.u32 %v2884, 16
  %v2965 = vrot.slane %v2963, 4
  %v2966 = vor.u32 %v2962, %v2965
  %v2967 = vsel %vm1836, %v2957, %v2966
  %v2969 = vshrl.u32 %v2885, 16
  %v2971 = vrot.slane %v2969, 3
  %v2972 = vshll.u32 %v2885, 16
  %v2974 = vrot.slane %v2972, 4
  %v2975 = vor.u32 %v2971, %v2974
  %v2976 = vsel %vm1836, %v2966, %v2975
  %v2978 = vshrl.u32 %v2886, 16
  %v2980 = vrot.slane %v2978, 3
  %v2981 = vshll.u32 %v2886, 16
  %v2983 = vrot.slane %v2981, 4
  %v2984 = vor.u32 %v2980, %v2983
  %v2985 = vsel %vm1836, %v2975, %v2984
  %v2987 = vshrl.u32 %v2887, 16
  %v2989 = vrot.slane %v2987, 3
  %v2990 = vshll.u32 %v2887, 16
  %v2992 = vrot.slane %v2990, 4
  %v2993 = vor.u32 %v2989, %v2992
  %v2994 = vsel %vm1836, %v2984, %v2993
  %v2996 = vshrl.u32 %v2888, 16
  %v2998 = vrot.slane %v2996, 3
  %v2999 = vshll.u32 %v2888, 16
  %v3001 = vrot.slane %v2999, 4
  %v3002 = vor.u32 %v2998, %v3001
  %v3003 = vsel %vm1836, %v2993, %v3002
  %v3005 = vshrl.u32 %v2889, 16
  %v3007 = vrot.slane %v3005, 3
  %v3008 = vshll.u32 %v2889, 16
  %v3010 = vrot.slane %v3008, 4
  %v3011 = vor.u32 %v3007, %v3010
  %v3012 = vsel %vm1836, %v3002, %v3011
  %v3014 = vshrl.u32 %v2890, 16
  %v3016 = vrot.slane %v3014, 3
  %v3017 = vshll.u32 %v2890, 16
  %v3019 = vrot.slane %v3017, 4
  %v3020 = vor.u32 %v3016, %v3019
  %v3021 = vsel %vm1836, %v3011, %v3020
  %v3023 = vshrl.u32 %v2891, 16
  %v3025 = vrot.slane %v3023, 3
  %v3026 = vshll.u32 %v2891, 16
  %v3028 = vrot.slane %v3026, 4
  %v3029 = vor.u32 %v3025, %v3028
  %v3030 = vsel %vm1836, %v3020, %v3029
  %v3032 = vshrl.u32 %v2892, 16
  %v3034 = vrot.slane %v3032, 3
  %v3035 = vshll.u32 %v2892, 16
  %v3037 = vrot.slane %v3035, 4
  %v3038 = vor.u32 %v3034, %v3037
  %v3039 = vsel %vm1836, %v3029, %v3038
  %v3041 = vshrl.u32 %v2893, 16
  %v3043 = vrot.slane %v3041, 3
  %v3044 = vshll.u32 %v2893, 16
  %v3046 = vrot.slane %v3044, 4
  %v3047 = vor.u32 %v3043, %v3046
  %v3048 = vsel %vm1836, %v3038, %v3047
  %v3050 = vshrl.u32 %v2894, 16
  %v3052 = vrot.slane %v3050, 3
  %v3053 = vshll.u32 %v2894, 16
  %v3055 = vrot.slane %v3053, 4
  %v3056 = vor.u32 %v3052, %v3055
  %v3057 = vsel %vm1836, %v3047, %v3056
  %v3059 = vshrl.u32 %v2895, 16
  %v3061 = vrot.slane %v3059, 3
  %v3062 = vshll.u32 %v2895, 16
  %v3064 = vrot.slane %v3062, 4
  %v3065 = vor.u32 %v3061, %v3064
  %v3066 = vsel %vm1836, %v3056, %v3065
  %v3068 = vshrl.u32 %v2896, 16
  %v3070 = vrot.slane %v3068, 3
  %v3071 = vshll.u32 %v2896, 16
  %v3073 = vrot.slane %v3071, 4
  %v3074 = vor.u32 %v3070, %v3073
  %v3075 = vsel %vm1836, %v3065, %v3074
  %v3077 = vshrl.u32 %v2897, 16
  %v3079 = vrot.slane %v3077, 3
  %v3080 = vshll.u32 %v2897, 16
  %v3082 = vrot.slane %v3080, 4
  %v3083 = vor.u32 %v3079, %v3082
  %v3084 = vsel %vm1836, %v3074, %v3083
  %v3086 = vshrl.u32 %v2898, 16
  %v3088 = vrot.slane %v3086, 3
  %v3089 = vshll.u32 %v2898, 16
  %v3091 = vrot.slane %v3089, 4
  %v3092 = vor.u32 %v3088, %v3091
  %v3093 = vsel %vm1836, %v3083, %v3092
  %v3095 = vshrl.u32 %v2899, 16
  %v3097 = vrot.slane %v3095, 3
  %v3098 = vshll.u32 %v2899, 16
  %v3100 = vrot.slane %v3098, 4
  %v3101 = vor.u32 %v3097, %v3100
  %v3102 = vsel %vm1836, %v3092, %v3101
  %v3104 = vshrl.u32 %v2900, 16
  %v3106 = vrot.slane %v3104, 3
  %v3107 = vshll.u32 %v2900, 16
  %v3109 = vrot.slane %v3107, 4
  %v3110 = vor.u32 %v3106, %v3109
  %v3111 = vsel %vm1836, %v3101, %v3110
  %v3113 = vshrl.u32 %v2901, 16
  %v3115 = vrot.slane %v3113, 3
  %v3116 = vshll.u32 %v2901, 16
  %v3118 = vrot.slane %v3116, 4
  %v3119 = vor.u32 %v3115, %v3118
  %v3120 = vsel %vm1836, %v3110, %v3119
  %v3122 = vshrl.u32 %v2902, 16
  %v3124 = vrot.slane %v3122, 3
  %v3125 = vshll.u32 %v2902, 16
  %v3127 = vrot.slane %v3125, 4
  %v3128 = vor.u32 %v3124, %v3127
  %v3129 = vsel %vm1836, %v3119, %v3128
  %v3131 = vshrl.u32 %v2903, 16
  %v3133 = vrot.slane %v3131, 3
  %v3134 = vshll.u32 %v2903, 16
  %v3136 = vrot.slane %v3134, 4
  %v3137 = vor.u32 %v3133, %v3136
  %v3138 = vsel %vm1836, %v3128, %v3137
  %v3140 = vshrl.u32 %v2904, 16
  %v3142 = vrot.slane %v3140, 3
  %v3143 = vshll.u32 %v2904, 16
  %v3145 = vrot.slane %v3143, 4
  %v3146 = vor.u32 %v3142, %v3145
  %v3147 = vsel %vm1836, %v3137, %v3146
  %v3149 = vshrl.u32 %v2905, 16
  %v3151 = vrot.slane %v3149, 3
  %v3152 = vshll.u32 %v2905, 16
  %v3154 = vrot.slane %v3152, 4
  %v3155 = vor.u32 %v3151, %v3154
  %v3156 = vsel %vm1836, %v3146, %v3155
  %v3158 = vshrl.u32 %v2906, 16
  %v3160 = vrot.slane %v3158, 3
  %v3161 = vshll.u32 %v2906, 16
  %v3163 = vrot.slane %v3161, 4
  %v3164 = vor.u32 %v3160, %v3163
  %v3165 = vsel %vm1836, %v3155, %v3164
  %v3167 = vshrl.u32 %v2907, 16
  %v3169 = vrot.slane %v3167, 3
  %v3170 = vshll.u32 %v2907, 16
  %v3172 = vrot.slane %v3170, 4
  %v3173 = vor.u32 %v3169, %v3172
  %v3174 = vsel %vm1836, %v3164, %v3173
  %v3176 = vshrl.u32 %v2908, 16
  %v3178 = vrot.slane %v3176, 3
  %v3179 = vshll.u32 %v2908, 16
  %v3181 = vrot.slane %v3179, 4
  %v3182 = vor.u32 %v3178, %v3181
  %v3183 = vsel %vm1836, %v3173, %v3182
  %v3185 = vshrl.u32 %v2909, 16
  %v3187 = vrot.slane %v3185, 3
  %v3188 = vshll.u32 %v2909, 16
  %v3190 = vrot.slane %v3188, 4
  %v3191 = vor.u32 %v3187, %v3190
  %v3192 = vsel %vm1836, %v3182, %v3191
  %v3194 = vshrl.u32 %v2910, 16
  %v3196 = vrot.slane %v3194, 3
  %v3197 = vshll.u32 %v2910, 16
  %v3199 = vrot.slane %v3197, 4
  %v3200 = vor.u32 %v3196, %v3199
  %v3201 = vsel %vm1836, %v3191, %v3200
  %v3203 = vshrl.u32 %v2911, 16
  %v3205 = vrot.slane %v3203, 3
  %v3206 = vshll.u32 %v2911, 16
  %v3208 = vrot.slane %v3206, 4
  %v3209 = vor.u32 %v3205, %v3208
  %v3210 = vsel %vm1836, %v3200, %v3209
  %v3212 = vshrl.u32 %v2912, 16
  %v3214 = vrot.slane %v3212, 3
  %v3215 = vshll.u32 %v2912, 16
  %v3217 = vrot.slane %v3215, 4
  %v3218 = vor.u32 %v3214, %v3217
  %v3219 = vsel %vm1836, %v3209, %v3218
  %v3221 = vshrl.u32 %v2913, 16
  %v3223 = vrot.slane %v3221, 3
  %v3224 = vshll.u32 %v2913, 16
  %v3226 = vrot.slane %v3224, 4
  %v3227 = vor.u32 %v3223, %v3226
  %v3228 = vsel %vm1836, %v3218, %v3227
  %v3230 = vshrl.u32 %v2914, 16
  %v3232 = vrot.slane %v3230, 3
  %v3233 = vshll.u32 %v2914, 16
  %v3235 = vrot.slane %v3233, 4
  %v3236 = vor.u32 %v3232, %v3235
  %v3237 = vsel %vm1836, %v3227, %v3236
  %v3239 = vshrl.u32 %v2915, 16
  %v3241 = vrot.slane %v3239, 3
  %v3242 = vshll.u32 %v2915, 16
  %v3244 = vrot.slane %v3242, 4
  %v3245 = vor.u32 %v3241, %v3244
  %v3246 = vsel %vm1836, %v3236, %v3245
  %v3248 = vshrl.u32 %v2916, 16
  %v3250 = vrot.slane %v3248, 3
  %v3251 = vshll.u32 %v2916, 16
  %v3253 = vrot.slane %v3251, 4
  %v3254 = vor.u32 %v3250, %v3253
  %v3255 = vsel %vm1836, %v3245, %v3254
  %v3257 = vshrl.u32 %v2917, 16
  %v3259 = vrot.slane %v3257, 3
  %v3260 = vshll.u32 %v2917, 16
  %v3262 = vrot.slane %v3260, 4
  %v3263 = vor.u32 %v3259, %v3262
  %v3264 = vsel %vm1836, %v3254, %v3263
  %v3266 = vshrl.u32 %v2918, 16
  %v3268 = vrot.slane %v3266, 3
  %v3269 = vshll.u32 %v2918, 16
  %v3271 = vrot.slane %v3269, 4
  %v3272 = vor.u32 %v3268, %v3271
  %v3273 = vsel %vm1836, %v3263, %v3272
  %v3275 = vshrl.u32 %v2919, 16
  %v3277 = vrot.slane %v3275, 3
  %v3278 = vshll.u32 %v2919, 16
  %v3280 = vrot.slane %v3278, 4
  %v3281 = vor.u32 %v3277, %v3280
  %v3282 = vsel %vm1836, %v3272, %v3281
  %v3284 = vshrl.u32 %v2920, 16
  %v3286 = vrot.slane %v3284, 3
  %v3287 = vshll.u32 %v2920, 16
  %v3289 = vrot.slane %v3287, 4
  %v3290 = vor.u32 %v3286, %v3289
  %v3291 = vsel %vm1836, %v3281, %v3290
  %v3293 = vshrl.u32 %v2921, 16
  %v3295 = vrot.slane %v3293, 3
  %v3296 = vshll.u32 %v2921, 16
  %v3298 = vrot.slane %v3296, 4
  %v3299 = vor.u32 %v3295, %v3298
  %v3300 = vsel %vm1836, %v3290, %v3299
  %v3302 = vshrl.u32 %v2922, 16
  %v3304 = vrot.slane %v3302, 3
  %v3305 = vshll.u32 %v2922, 16
  %v3307 = vrot.slane %v3305, 4
  %v3308 = vor.u32 %v3304, %v3307
  %v3309 = vsel %vm1836, %v3299, %v3308
  %v3311 = vshrl.u32 %v2923, 16
  %v3313 = vrot.slane %v3311, 3
  %v3314 = vshll.u32 %v2923, 16
  %v3316 = vrot.slane %v3314, 4
  %v3317 = vor.u32 %v3313, %v3316
  %v3318 = vsel %vm1836, %v3308, %v3317
  %v3320 = vsel %vm415, %v2940, 0
  %v3323 = vsel %vm415, %v2949, 0
  %v3326 = vsel %vm415, %v2958, 0
  %v3329 = vsel %vm415, %v2967, 0
  %v3332 = vsel %vm415, %v2976, 0
  %v3335 = vsel %vm415, %v2985, 0
  %v3338 = vsel %vm415, %v2994, 0
  %v3341 = vsel %vm415, %v3003, 0
  %v3344 = vsel %vm415, %v3012, 0
  %v3347 = vsel %vm415, %v3021, 0
  %v3350 = vsel %vm415, %v3030, 0
  %v3353 = vsel %vm415, %v3039, 0
  %v3356 = vsel %vm415, %v3048, 0
  %v3359 = vsel %vm415, %v3057, 0
  %v3362 = vsel %vm415, %v3066, 0
  %v3365 = vsel %vm415, %v3075, 0
  %v3368 = vsel %vm415, %v3084, 0
  %v3371 = vsel %vm415, %v3093, 0
  %v3374 = vsel %vm415, %v3102, 0
  %v3377 = vsel %vm415, %v3111, 0
  %v3380 = vsel %vm415, %v3120, 0
  %v3383 = vsel %vm415, %v3129, 0
  %v3386 = vsel %vm415, %v3138, 0
  %v3389 = vsel %vm415, %v3147, 0
  %v3392 = vsel %vm415, %v3156, 0
  %v3395 = vsel %vm415, %v3165, 0
  %v3398 = vsel %vm415, %v3174, 0
  %v3401 = vsel %vm415, %v3183, 0
  %v3404 = vsel %vm415, %v3192, 0
  %v3407 = vsel %vm415, %v3201, 0
  %v3410 = vsel %vm415, %v3210, 0
  %v3413 = vsel %vm415, %v3219, 0
  %v3416 = vsel %vm415, %v3228, 0
  %v3419 = vsel %vm415, %v3237, 0
  %v3422 = vsel %vm415, %v3246, 0
  %v3425 = vsel %vm415, %v3255, 0
  %v3428 = vsel %vm415, %v3264, 0
  %v3431 = vsel %vm415, %v3273, 0
  %v3434 = vsel %vm415, %v3282, 0
  %v3437 = vsel %vm415, %v3291, 0
  %v3440 = vsel %vm415, %v3300, 0
  %v3443 = vsel %vm415, %v3309, 0
  %v3446 = vsel %vm415, %v3318, 0
  %v3449 = vsel %vm545, %v2705, 0
  %3451 = vmatprep.subr.bf16.mxu0 0
  %3452 = vmatpush1.bf16.msra.mxu0 %v3449
  %3453 = vmatprep.subr.bf16.mxu0 0
  %3454 = vmatpush1.bf16.msra.mxu0 0
  %3455 = vmatprep.subr.bf16.mxu0 0
  %3456 = vmatpush1.bf16.msra.mxu0 0
  %3457 = vmatprep.subr.bf16.mxu0 0
  %3458 = vmatpush1.bf16.msra.mxu0 0
  %3459 = vmatprep.subr.bf16.mxu0 0
  %3460 = vmatpush1.bf16.msra.mxu0 0
  %3461 = vmatprep.subr.bf16.mxu0 0
  %3462 = vmatpush1.bf16.msra.mxu0 0
  %3463 = vmatprep.subr.bf16.mxu0 0
  %3464 = vmatpush1.bf16.msra.mxu0 0
  %3465 = vmatprep.subr.bf16.mxu0 0
  %3466 = vmatpush1.bf16.msra.mxu0 0
  %3467 = vmatprep.subr.bf16.mxu0 0
  %3468 = vmatpush1.bf16.msra.mxu0 0
  %3469 = vmatprep.subr.bf16.mxu0 0
  %3470 = vmatpush1.bf16.msra.mxu0 0
  %3471 = vmatprep.subr.bf16.mxu0 0
  %3472 = vmatpush1.bf16.msra.mxu0 0
  %3473 = vmatprep.subr.bf16.mxu0 0
  %3474 = vmatpush1.bf16.msra.mxu0 0
  %3475 = vmatprep.subr.bf16.mxu0 0
  %3476 = vmatpush1.bf16.msra.mxu0 0
  %3477 = vmatprep.subr.bf16.mxu0 0
  %3478 = vmatpush1.bf16.msra.mxu0 0
  %3479 = vmatprep.subr.bf16.mxu0 0
  %3480 = vmatpush1.bf16.msra.mxu0 0
  %3481 = vmatprep.subr.bf16.mxu0 0
  %3482 = vmatpush1.bf16.msra.mxu0 0
  %3483 = vmatprep.mubr.bf16.mxu0 0
  %3484 = vmatmul.mubr.bf16.gmra.mrb[0].mxu0 %v3320
  %v3485 = vpop.f32.mrb[0].mxu0
  %v3486 = vadd.f32 0.0, %v3485
  %v3487 = vpop.f32.mrb[0].mxu0
  %v3488 = vpop.f32.mrb[0].mxu0
  %v3489 = vadd.f32 0.0, %v3488
  %v3490 = vpop.f32.mrb[0].mxu0
  %3491 = vmatprep.mubr.bf16.mxu0 0
  %3492 = vmatmul.mubr.bf16.gmra.mrb[0].mxu0 %v3323
  %v3493 = vpop.f32.mrb[0].mxu0
  %v3494 = vadd.f32 0.0, %v3493
  %v3495 = vpop.f32.mrb[0].mxu0
  %v3496 = vpop.f32.mrb[0].mxu0
  %v3497 = vadd.f32 0.0, %v3496
  %v3498 = vpop.f32.mrb[0].mxu0
  %3499 = vmatprep.mubr.bf16.mxu0 0
  %3500 = vmatmul.mubr.bf16.gmra.mrb[0].mxu0 %v3326
  %v3501 = vpop.f32.mrb[0].mxu0
  %v3502 = vadd.f32 0.0, %v3501
  %v3503 = vpop.f32.mrb[0].mxu0
  %v3504 = vpop.f32.mrb[0].mxu0
  %v3505 = vadd.f32 0.0, %v3504
  %v3506 = vpop.f32.mrb[0].mxu0
  %3507 = vmatprep.mubr.bf16.mxu0 0
  %3508 = vmatmul.mubr.bf16.gmra.mrb[0].mxu0 %v3329
  %v3509 = vpop.f32.mrb[0].mxu0
  %v3510 = vadd.f32 0.0, %v3509
  %v3511 = vpop.f32.mrb[0].mxu0
  %v3512 = vpop.f32.mrb[0].mxu0
  %v3513 = vadd.f32 0.0, %v3512
  %v3514 = vpop.f32.mrb[0].mxu0
  %3515 = vmatprep.mubr.bf16.mxu0 0
  %3516 = vmatmul.mubr.bf16.gmra.mrb[0].mxu0 %v3332
  %v3517 = vpop.f32.mrb[0].mxu0
  %v3518 = vadd.f32 0.0, %v3517
  %v3519 = vpop.f32.mrb[0].mxu0
  %v3520 = vpop.f32.mrb[0].mxu0
  %v3521 = vadd.f32 0.0, %v3520
  %v3522 = vpop.f32.mrb[0].mxu0
  %3523 = vmatprep.mubr.bf16.mxu0 0
  %3524 = vmatmul.mubr.bf16.gmra.mrb[0].mxu0 %v3335
  %v3525 = vpop.f32.mrb[0].mxu0
  %v3526 = vadd.f32 0.0, %v3525
  %v3527 = vpop.f32.mrb[0].mxu0
  %v3528 = vpop.f32.mrb[0].mxu0
  %v3529 = vadd.f32 0.0, %v3528
  %v3530 = vpop.f32.mrb[0].mxu0
  %3531 = vmatprep.mubr.bf16.mxu0 0
  %3532 = vmatmul.mubr.bf16.gmra.mrb[0].mxu0 %v3338
  %v3533 = vpop.f32.mrb[0].mxu0
  %v3534 = vadd.f32 0.0, %v3533
  %v3535 = vpop.f32.mrb[0].mxu0
  %v3536 = vpop.f32.mrb[0].mxu0
  %v3537 = vadd.f32 0.0, %v3536
  %v3538 = vpop.f32.mrb[0].mxu0
  %3539 = vmatprep.mubr.bf16.mxu0 0
  %3540 = vmatmul.mubr.bf16.gmra.mrb[0].mxu0 %v3341
  %v3541 = vpop.f32.mrb[0].mxu0
  %v3542 = vadd.f32 0.0, %v3541
  %v3543 = vpop.f32.mrb[0].mxu0
  %v3544 = vpop.f32.mrb[0].mxu0
  %v3545 = vadd.f32 0.0, %v3544
  %v3546 = vpop.f32.mrb[0].mxu0
  %3547 = vmatprep.mubr.bf16.mxu0 0
  %3548 = vmatmul.mubr.bf16.gmra.mrb[0].mxu0 %v3344
  %v3549 = vpop.f32.mrb[0].mxu0
  %v3550 = vadd.f32 0.0, %v3549
  %v3551 = vpop.f32.mrb[0].mxu0
  %v3552 = vpop.f32.mrb[0].mxu0
  %v3553 = vadd.f32 0.0, %v3552
  %v3554 = vpop.f32.mrb[0].mxu0
  %3555 = vmatprep.mubr.bf16.mxu0 0
  %3556 = vmatmul.mubr.bf16.gmra.mrb[0].mxu0 %v3347
  %v3557 = vpop.f32.mrb[0].mxu0
  %v3558 = vadd.f32 0.0, %v3557
  %v3559 = vpop.f32.mrb[0].mxu0
  %v3560 = vpop.f32.mrb[0].mxu0
  %v3561 = vadd.f32 0.0, %v3560
  %v3562 = vpop.f32.mrb[0].mxu0
  %3563 = vmatprep.mubr.bf16.mxu0 0
  %3564 = vmatmul.mubr.bf16.gmra.mrb[0].mxu0 %v3350
  %v3565 = vpop.f32.mrb[0].mxu0
  %v3566 = vadd.f32 0.0, %v3565
  %v3567 = vpop.f32.mrb[0].mxu0
  %v3568 = vpop.f32.mrb[0].mxu0
  %v3569 = vadd.f32 0.0, %v3568
  %v3570 = vpop.f32.mrb[0].mxu0
  %3571 = vmatprep.mubr.bf16.mxu0 0
  %3572 = vmatmul.mubr.bf16.gmra.mrb[0].mxu0 %v3353
  %v3573 = vpop.f32.mrb[0].mxu0
  %v3574 = vadd.f32 0.0, %v3573
  %v3575 = vpop.f32.mrb[0].mxu0
  %v3576 = vpop.f32.mrb[0].mxu0
  %v3577 = vadd.f32 0.0, %v3576
  %v3578 = vpop.f32.mrb[0].mxu0
  %3579 = vmatprep.mubr.bf16.mxu0 0
  %3580 = vmatmul.mubr.bf16.gmra.mrb[0].mxu0 %v3356
  %v3581 = vpop.f32.mrb[0].mxu0
  %v3582 = vadd.f32 0.0, %v3581
  %v3583 = vpop.f32.mrb[0].mxu0
  %v3584 = vpop.f32.mrb[0].mxu0
  %v3585 = vadd.f32 0.0, %v3584
  %v3586 = vpop.f32.mrb[0].mxu0
  %3587 = vmatprep.mubr.bf16.mxu0 0
  %3588 = vmatmul.mubr.bf16.gmra.mrb[0].mxu0 %v3359
  %v3589 = vpop.f32.mrb[0].mxu0
  %v3590 = vadd.f32 0.0, %v3589
  %v3591 = vpop.f32.mrb[0].mxu0
  %v3592 = vpop.f32.mrb[0].mxu0
  %v3593 = vadd.f32 0.0, %v3592
  %v3594 = vpop.f32.mrb[0].mxu0
  %3595 = vmatprep.mubr.bf16.mxu0 0
  %3596 = vmatmul.mubr.bf16.gmra.mrb[0].mxu0 %v3362
  %v3597 = vpop.f32.mrb[0].mxu0
  %v3598 = vadd.f32 0.0, %v3597
  %v3599 = vpop.f32.mrb[0].mxu0
  %v3600 = vpop.f32.mrb[0].mxu0
  %v3601 = vadd.f32 0.0, %v3600
  %v3602 = vpop.f32.mrb[0].mxu0
  %3603 = vmatprep.mubr.bf16.mxu0 0
  %3604 = vmatmul.mubr.bf16.gmra.mrb[0].mxu0 %v3365
  %v3605 = vpop.f32.mrb[0].mxu0
  %v3606 = vadd.f32 0.0, %v3605
  %v3607 = vpop.f32.mrb[0].mxu0
  %v3608 = vpop.f32.mrb[0].mxu0
  %v3609 = vadd.f32 0.0, %v3608
  %v3610 = vpop.f32.mrb[0].mxu0
  %3611 = vmatprep.mubr.bf16.mxu0 0
  %3612 = vmatmul.mubr.bf16.gmra.mrb[0].mxu0 %v3368
  %v3613 = vpop.f32.mrb[0].mxu0
  %v3614 = vadd.f32 0.0, %v3613
  %v3615 = vpop.f32.mrb[0].mxu0
  %v3616 = vpop.f32.mrb[0].mxu0
  %v3617 = vadd.f32 0.0, %v3616
  %v3618 = vpop.f32.mrb[0].mxu0
  %3619 = vmatprep.mubr.bf16.mxu0 0
  %3620 = vmatmul.mubr.bf16.gmra.mrb[0].mxu0 %v3371
  %v3621 = vpop.f32.mrb[0].mxu0
  %v3622 = vadd.f32 0.0, %v3621
  %v3623 = vpop.f32.mrb[0].mxu0
  %v3624 = vpop.f32.mrb[0].mxu0
  %v3625 = vadd.f32 0.0, %v3624
  %v3626 = vpop.f32.mrb[0].mxu0
  %3627 = vmatprep.mubr.bf16.mxu0 0
  %3628 = vmatmul.mubr.bf16.gmra.mrb[0].mxu0 %v3374
  %v3629 = vpop.f32.mrb[0].mxu0
  %v3630 = vadd.f32 0.0, %v3629
  %v3631 = vpop.f32.mrb[0].mxu0
  %v3632 = vpop.f32.mrb[0].mxu0
  %v3633 = vadd.f32 0.0, %v3632
  %v3634 = vpop.f32.mrb[0].mxu0
  %3635 = vmatprep.mubr.bf16.mxu0 0
  %3636 = vmatmul.mubr.bf16.gmra.mrb[0].mxu0 %v3377
  %v3637 = vpop.f32.mrb[0].mxu0
  %v3638 = vadd.f32 0.0, %v3637
  %v3639 = vpop.f32.mrb[0].mxu0
  %v3640 = vpop.f32.mrb[0].mxu0
  %v3641 = vadd.f32 0.0, %v3640
  %v3642 = vpop.f32.mrb[0].mxu0
  %3643 = vmatprep.mubr.bf16.mxu0 0
  %3644 = vmatmul.mubr.bf16.gmra.mrb[0].mxu0 %v3380
  %v3645 = vpop.f32.mrb[0].mxu0
  %v3646 = vadd.f32 0.0, %v3645
  %v3647 = vpop.f32.mrb[0].mxu0
  %v3648 = vpop.f32.mrb[0].mxu0
  %v3649 = vadd.f32 0.0, %v3648
  %v3650 = vpop.f32.mrb[0].mxu0
  %3651 = vmatprep.mubr.bf16.mxu0 0
  %3652 = vmatmul.mubr.bf16.gmra.mrb[0].mxu0 %v3383
  %v3653 = vpop.f32.mrb[0].mxu0
  %v3654 = vadd.f32 0.0, %v3653
  %v3655 = vpop.f32.mrb[0].mxu0
  %v3656 = vpop.f32.mrb[0].mxu0
  %v3657 = vadd.f32 0.0, %v3656
  %v3658 = vpop.f32.mrb[0].mxu0
  %3659 = vmatprep.mubr.bf16.mxu0 0
  %3660 = vmatmul.mubr.bf16.gmra.mrb[0].mxu0 %v3386
  %v3661 = vpop.f32.mrb[0].mxu0
  %v3662 = vadd.f32 0.0, %v3661
  %v3663 = vpop.f32.mrb[0].mxu0
  %v3664 = vpop.f32.mrb[0].mxu0
  %v3665 = vadd.f32 0.0, %v3664
  %v3666 = vpop.f32.mrb[0].mxu0
  %3667 = vmatprep.mubr.bf16.mxu0 0
  %3668 = vmatmul.mubr.bf16.gmra.mrb[0].mxu0 %v3389
  %v3669 = vpop.f32.mrb[0].mxu0
  %v3670 = vadd.f32 0.0, %v3669
  %v3671 = vpop.f32.mrb[0].mxu0
  %v3672 = vpop.f32.mrb[0].mxu0
  %v3673 = vadd.f32 0.0, %v3672
  %v3674 = vpop.f32.mrb[0].mxu0
  %3675 = vmatprep.mubr.bf16.mxu0 0
  %3676 = vmatmul.mubr.bf16.gmra.mrb[0].mxu0 %v3392
  %v3677 = vpop.f32.mrb[0].mxu0
  %v3678 = vadd.f32 0.0, %v3677
  %v3679 = vpop.f32.mrb[0].mxu0
  %v3680 = vpop.f32.mrb[0].mxu0
  %v3681 = vadd.f32 0.0, %v3680
  %v3682 = vpop.f32.mrb[0].mxu0
  %3683 = vmatprep.mubr.bf16.mxu0 0
  %3684 = vmatmul.mubr.bf16.gmra.mrb[0].mxu0 %v3395
  %v3685 = vpop.f32.mrb[0].mxu0
  %v3686 = vadd.f32 0.0, %v3685
  %v3687 = vpop.f32.mrb[0].mxu0
  %v3688 = vpop.f32.mrb[0].mxu0
  %v3689 = vadd.f32 0.0, %v3688
  %v3690 = vpop.f32.mrb[0].mxu0
  %3691 = vmatprep.mubr.bf16.mxu0 0
  %3692 = vmatmul.mubr.bf16.gmra.mrb[0].mxu0 %v3398
  %v3693 = vpop.f32.mrb[0].mxu0
  %v3694 = vadd.f32 0.0, %v3693
  %v3695 = vpop.f32.mrb[0].mxu0
  %v3696 = vpop.f32.mrb[0].mxu0
  %v3697 = vadd.f32 0.0, %v3696
  %v3698 = vpop.f32.mrb[0].mxu0
  %3699 = vmatprep.mubr.bf16.mxu0 0
  %3700 = vmatmul.mubr.bf16.gmra.mrb[0].mxu0 %v3401
  %v3701 = vpop.f32.mrb[0].mxu0
  %v3702 = vadd.f32 0.0, %v3701
  %v3703 = vpop.f32.mrb[0].mxu0
  %v3704 = vpop.f32.mrb[0].mxu0
  %v3705 = vadd.f32 0.0, %v3704
  %v3706 = vpop.f32.mrb[0].mxu0
  %3707 = vmatprep.mubr.bf16.mxu0 0
  %3708 = vmatmul.mubr.bf16.gmra.mrb[0].mxu0 %v3404
  %v3709 = vpop.f32.mrb[0].mxu0
  %v3710 = vadd.f32 0.0, %v3709
  %v3711 = vpop.f32.mrb[0].mxu0
  %v3712 = vpop.f32.mrb[0].mxu0
  %v3713 = vadd.f32 0.0, %v3712
  %v3714 = vpop.f32.mrb[0].mxu0
  %3715 = vmatprep.mubr.bf16.mxu0 0
  %3716 = vmatmul.mubr.bf16.gmra.mrb[0].mxu0 %v3407
  %v3717 = vpop.f32.mrb[0].mxu0
  %v3718 = vadd.f32 0.0, %v3717
  %v3719 = vpop.f32.mrb[0].mxu0
  %v3720 = vpop.f32.mrb[0].mxu0
  %v3721 = vadd.f32 0.0, %v3720
  %v3722 = vpop.f32.mrb[0].mxu0
  %3723 = vmatprep.mubr.bf16.mxu0 0
  %3724 = vmatmul.mubr.bf16.gmra.mrb[0].mxu0 %v3410
  %v3725 = vpop.f32.mrb[0].mxu0
  %v3726 = vadd.f32 0.0, %v3725
  %v3727 = vpop.f32.mrb[0].mxu0
  %v3728 = vpop.f32.mrb[0].mxu0
  %v3729 = vadd.f32 0.0, %v3728
  %v3730 = vpop.f32.mrb[0].mxu0
  %3731 = vmatprep.mubr.bf16.mxu0 0
  %3732 = vmatmul.mubr.bf16.gmra.mrb[0].mxu0 %v3413
  %v3733 = vpop.f32.mrb[0].mxu0
  %v3734 = vadd.f32 0.0, %v3733
  %v3735 = vpop.f32.mrb[0].mxu0
  %v3736 = vpop.f32.mrb[0].mxu0
  %v3737 = vadd.f32 0.0, %v3736
  %v3738 = vpop.f32.mrb[0].mxu0
  %3739 = vmatprep.mubr.bf16.mxu0 0
  %3740 = vmatmul.mubr.bf16.gmra.mrb[0].mxu0 %v3416
  %v3741 = vpop.f32.mrb[0].mxu0
  %v3742 = vadd.f32 0.0, %v3741
  %v3743 = vpop.f32.mrb[0].mxu0
  %v3744 = vpop.f32.mrb[0].mxu0
  %v3745 = vadd.f32 0.0, %v3744
  %v3746 = vpop.f32.mrb[0].mxu0
  %3747 = vmatprep.mubr.bf16.mxu0 0
  %3748 = vmatmul.mubr.bf16.gmra.mrb[0].mxu0 %v3419
  %v3749 = vpop.f32.mrb[0].mxu0
  %v3750 = vadd.f32 0.0, %v3749
  %v3751 = vpop.f32.mrb[0].mxu0
  %v3752 = vpop.f32.mrb[0].mxu0
  %v3753 = vadd.f32 0.0, %v3752
  %v3754 = vpop.f32.mrb[0].mxu0
  %3755 = vmatprep.mubr.bf16.mxu0 0
  %3756 = vmatmul.mubr.bf16.gmra.mrb[0].mxu0 %v3422
  %v3757 = vpop.f32.mrb[0].mxu0
  %v3758 = vadd.f32 0.0, %v3757
  %v3759 = vpop.f32.mrb[0].mxu0
  %v3760 = vpop.f32.mrb[0].mxu0
  %v3761 = vadd.f32 0.0, %v3760
  %v3762 = vpop.f32.mrb[0].mxu0
  %3763 = vmatprep.mubr.bf16.mxu0 0
  %3764 = vmatmul.mubr.bf16.gmra.mrb[0].mxu0 %v3425
  %v3765 = vpop.f32.mrb[0].mxu0
  %v3766 = vadd.f32 0.0, %v3765
  %v3767 = vpop.f32.mrb[0].mxu0
  %v3768 = vpop.f32.mrb[0].mxu0
  %v3769 = vadd.f32 0.0, %v3768
  %v3770 = vpop.f32.mrb[0].mxu0
  %3771 = vmatprep.mubr.bf16.mxu0 0
  %3772 = vmatmul.mubr.bf16.gmra.mrb[0].mxu0 %v3428
  %v3773 = vpop.f32.mrb[0].mxu0
  %v3774 = vadd.f32 0.0, %v3773
  %v3775 = vpop.f32.mrb[0].mxu0
  %v3776 = vpop.f32.mrb[0].mxu0
  %v3777 = vadd.f32 0.0, %v3776
  %v3778 = vpop.f32.mrb[0].mxu0
  %3779 = vmatprep.mubr.bf16.mxu0 0
  %3780 = vmatmul.mubr.bf16.gmra.mrb[0].mxu0 %v3431
  %v3781 = vpop.f32.mrb[0].mxu0
  %v3782 = vadd.f32 0.0, %v3781
  %v3783 = vpop.f32.mrb[0].mxu0
  %v3784 = vpop.f32.mrb[0].mxu0
  %v3785 = vadd.f32 0.0, %v3784
  %v3786 = vpop.f32.mrb[0].mxu0
  %3787 = vmatprep.mubr.bf16.mxu0 0
  %3788 = vmatmul.mubr.bf16.gmra.mrb[0].mxu0 %v3434
  %v3789 = vpop.f32.mrb[0].mxu0
  %v3790 = vadd.f32 0.0, %v3789
  %v3791 = vpop.f32.mrb[0].mxu0
  %v3792 = vpop.f32.mrb[0].mxu0
  %v3793 = vadd.f32 0.0, %v3792
  %v3794 = vpop.f32.mrb[0].mxu0
  %3795 = vmatprep.mubr.bf16.mxu0 0
  %3796 = vmatmul.mubr.bf16.gmra.mrb[0].mxu0 %v3437
  %v3797 = vpop.f32.mrb[0].mxu0
  %v3798 = vadd.f32 0.0, %v3797
  %v3799 = vpop.f32.mrb[0].mxu0
  %v3800 = vpop.f32.mrb[0].mxu0
  %v3801 = vadd.f32 0.0, %v3800
  %v3802 = vpop.f32.mrb[0].mxu0
  %3803 = vmatprep.mubr.bf16.mxu0 0
  %3804 = vmatmul.mubr.bf16.gmra.mrb[0].mxu0 %v3440
  %v3805 = vpop.f32.mrb[0].mxu0
  %v3806 = vadd.f32 0.0, %v3805
  %v3807 = vpop.f32.mrb[0].mxu0
  %v3808 = vpop.f32.mrb[0].mxu0
  %v3809 = vadd.f32 0.0, %v3808
  %v3810 = vpop.f32.mrb[0].mxu0
  %3811 = vmatprep.mubr.bf16.mxu0 0
  %3812 = vmatmul.mubr.bf16.gmra.mrb[0].mxu0 %v3443
  %v3813 = vpop.f32.mrb[0].mxu0
  %v3814 = vadd.f32 0.0, %v3813
  %v3815 = vpop.f32.mrb[0].mxu0
  %v3816 = vpop.f32.mrb[0].mxu0
  %v3817 = vadd.f32 0.0, %v3816
  %v3818 = vpop.f32.mrb[0].mxu0
  %3819 = vmatprep.mubr.bf16.mxu0 0
  %3820 = vmatmul.mubr.bf16.gmra.mrb[0].mxu0 %v3446
  %v3821 = vpop.f32.mrb[0].mxu0
  %v3822 = vadd.f32 0.0, %v3821
  %v3823 = vpop.f32.mrb[0].mxu0
  %v3824 = vpop.f32.mrb[0].mxu0
  %v3825 = vadd.f32 0.0, %v3824
  %v3826 = vpop.f32.mrb[0].mxu0
  %3827 = vdwg.mxu0
  %v3828 = vadd.f32 %v2531, %v3486
  %v3829 = vadd.f32 %v2532, %v3489
  %v3830 = vadd.f32 %v2533, %v3494
  %v3831 = vadd.f32 %v2534, %v3497
  %v3832 = vadd.f32 %v2535, %v3502
  %v3833 = vadd.f32 %v2536, %v3505
  %v3834 = vadd.f32 %v2537, %v3510
  %v3835 = vadd.f32 %v2538, %v3513
  %v3836 = vadd.f32 %v2539, %v3518
  %v3837 = vadd.f32 %v2540, %v3521
  %v3838 = vadd.f32 %v2541, %v3526
  %v3839 = vadd.f32 %v2542, %v3529
  %v3840 = vadd.f32 %v2543, %v3534
  %v3841 = vadd.f32 %v2544, %v3537
  %v3842 = vadd.f32 %v2545, %v3542
  %v3843 = vadd.f32 %v2546, %v3545
  %v3844 = vadd.f32 %v2547, %v3550
  %v3845 = vadd.f32 %v2548, %v3553
  %v3846 = vadd.f32 %v2549, %v3558
  %v3847 = vadd.f32 %v2550, %v3561
  %v3848 = vadd.f32 %v2551, %v3566
  %v3849 = vadd.f32 %v2552, %v3569
  %v3850 = vadd.f32 %v2553, %v3574
  %v3851 = vadd.f32 %v2554, %v3577
  %v3852 = vadd.f32 %v2555, %v3582
  %v3853 = vadd.f32 %v2556, %v3585
  %v3854 = vadd.f32 %v2557, %v3590
  %v3855 = vadd.f32 %v2558, %v3593
  %v3856 = vadd.f32 %v2559, %v3598
  %v3857 = vadd.f32 %v2560, %v3601
  %v3858 = vadd.f32 %v2561, %v3606
  %v3859 = vadd.f32 %v2562, %v3609
  %v3860 = vadd.f32 %v2563, %v3614
  %v3861 = vadd.f32 %v2564, %v3617
  %v3862 = vadd.f32 %v2565, %v3622
  %v3863 = vadd.f32 %v2566, %v3625
  %v3864 = vadd.f32 %v2567, %v3630
  %v3865 = vadd.f32 %v2568, %v3633
  %v3866 = vadd.f32 %v2569, %v3638
  %v3867 = vadd.f32 %v2570, %v3641
  %v3868 = vadd.f32 %v2571, %v3646
  %v3869 = vadd.f32 %v2572, %v3649
  %v3870 = vadd.f32 %v2573, %v3654
  %v3871 = vadd.f32 %v2574, %v3657
  %v3872 = vadd.f32 %v2575, %v3662
  %v3873 = vadd.f32 %v2576, %v3665
  %v3874 = vadd.f32 %v2577, %v3670
  %v3875 = vadd.f32 %v2578, %v3673
  %v3876 = vadd.f32 %v2579, %v3678
  %v3877 = vadd.f32 %v2580, %v3681
  %v3878 = vadd.f32 %v2581, %v3686
  %v3879 = vadd.f32 %v2582, %v3689
  %v3880 = vadd.f32 %v2583, %v3694
  %v3881 = vadd.f32 %v2584, %v3697
  %v3882 = vadd.f32 %v2585, %v3702
  %v3883 = vadd.f32 %v2586, %v3705
  %v3884 = vadd.f32 %v2587, %v3710
  %v3885 = vadd.f32 %v2588, %v3713
  %v3886 = vadd.f32 %v2589, %v3718
  %v3887 = vadd.f32 %v2590, %v3721
  %v3888 = vadd.f32 %v2591, %v3726
  %v3889 = vadd.f32 %v2592, %v3729
  %v3890 = vadd.f32 %v2593, %v3734
  %v3891 = vadd.f32 %v2594, %v3737
  %v3892 = vadd.f32 %v2595, %v3742
  %v3893 = vadd.f32 %v2596, %v3745
  %v3894 = vadd.f32 %v2597, %v3750
  %v3895 = vadd.f32 %v2598, %v3753
  %v3896 = vadd.f32 %v2599, %v3758
  %v3897 = vadd.f32 %v2600, %v3761
  %v3898 = vadd.f32 %v2601, %v3766
  %v3899 = vadd.f32 %v2602, %v3769
  %v3900 = vadd.f32 %v2603, %v3774
  %v3901 = vadd.f32 %v2604, %v3777
  %v3902 = vadd.f32 %v2605, %v3782
  %v3903 = vadd.f32 %v2606, %v3785
  %v3904 = vadd.f32 %v2607, %v3790
  %v3905 = vadd.f32 %v2608, %v3793
  %v3906 = vadd.f32 %v2609, %v3798
  %v3907 = vadd.f32 %v2610, %v3801
  %v3908 = vadd.f32 %v2611, %v3806
  %v3909 = vadd.f32 %v2612, %v3809
  %v3910 = vadd.f32 %v2613, %v3814
  %v3911 = vadd.f32 %v2614, %v3817
  %v3912 = vadd.f32 %v2615, %v3822
  %v3913 = vadd.f32 %v2616, %v3825
  %s3914 = scalar_lea.vmem %s1, 8
  %v3915 = vld [vmem:[%s3914] sm:$0x3]
  %v3916 = vpack.c.b16 %v2795, %v2794
  %v3917 = vpack.c.b16 %v2797, %v2796
  %v3918 = vpack.c.b16 %v2799, %v2798
  %v3919 = vpack.c.b16 %v2801, %v2800
  %v3920 = vpack.c.b16 %v2803, %v2802
  %v3921 = vpack.c.b16 %v2805, %v2804
  %v3922 = vpack.c.b16 %v2807, %v2806
  %v3923 = vpack.c.b16 %v2809, %v2808
  %v3924 = vpack.c.b16 %v2811, %v2810
  %v3925 = vpack.c.b16 %v2813, %v2812
  %v3926 = vpack.c.b16 %v2815, %v2814
  %v3927 = vpack.c.b16 %v2817, %v2816
  %v3928 = vpack.c.b16 %v2819, %v2818
  %v3929 = vpack.c.b16 %v2821, %v2820
  %v3930 = vpack.c.b16 %v2823, %v2822
  %v3931 = vpack.c.b16 %v2825, %v2824
  %v3932 = vpack.c.b16 %v2827, %v2826
  %v3933 = vpack.c.b16 %v2829, %v2828
  %v3934 = vpack.c.b16 %v2831, %v2830
  %v3935 = vpack.c.b16 %v2833, %v2832
  %v3936 = vpack.c.b16 %v2835, %v2834
  %v3937 = vpack.c.b16 %v2837, %v2836
  %v3938 = vpack.c.b16 %v2839, %v2838
  %v3939 = vpack.c.b16 %v2841, %v2840
  %v3940 = vpack.c.b16 %v2843, %v2842
  %v3941 = vpack.c.b16 %v2845, %v2844
  %v3942 = vpack.c.b16 %v2847, %v2846
  %v3943 = vpack.c.b16 %v2849, %v2848
  %v3944 = vpack.c.b16 %v2851, %v2850
  %v3945 = vpack.c.b16 %v2853, %v2852
  %v3946 = vpack.c.b16 %v2855, %v2854
  %v3947 = vpack.c.b16 %v2857, %v2856
  %v3948 = vpack.c.b16 %v2859, %v2858
  %v3949 = vpack.c.b16 %v2861, %v2860
  %v3950 = vpack.c.b16 %v2863, %v2862
  %v3951 = vpack.c.b16 %v2865, %v2864
  %v3952 = vpack.c.b16 %v2867, %v2866
  %v3953 = vpack.c.b16 %v2869, %v2868
  %v3954 = vpack.c.b16 %v2871, %v2870
  %v3955 = vpack.c.b16 %v2873, %v2872
  %v3956 = vpack.c.b16 %v2875, %v2874
  %v3957 = vpack.c.b16 %v2877, %v2876
  %v3958 = vpack.c.b16 %v2879, %v2878
  %v3960 = vsel %vm415, %v3916, 0
  %v3963 = vsel %vm415, %v3917, 0
  %v3966 = vsel %vm415, %v3918, 0
  %v3969 = vsel %vm415, %v3919, 0
  %v3972 = vsel %vm415, %v3920, 0
  %v3975 = vsel %vm415, %v3921, 0
  %v3978 = vsel %vm415, %v3922, 0
  %v3981 = vsel %vm415, %v3923, 0
  %v3984 = vsel %vm415, %v3924, 0
  %v3987 = vsel %vm415, %v3925, 0
  %v3990 = vsel %vm415, %v3926, 0
  %v3993 = vsel %vm415, %v3927, 0
  %v3996 = vsel %vm415, %v3928, 0
  %v3999 = vsel %vm415, %v3929, 0
  %v4002 = vsel %vm415, %v3930, 0
  %v4005 = vsel %vm415, %v3931, 0
  %v4008 = vsel %vm415, %v3932, 0
  %v4011 = vsel %vm415, %v3933, 0
  %v4014 = vsel %vm415, %v3934, 0
  %v4017 = vsel %vm415, %v3935, 0
  %v4020 = vsel %vm415, %v3936, 0
  %v4023 = vsel %vm415, %v3937, 0
  %v4026 = vsel %vm415, %v3938, 0
  %v4029 = vsel %vm415, %v3939, 0
  %v4032 = vsel %vm415, %v3940, 0
  %v4035 = vsel %vm415, %v3941, 0
  %v4038 = vsel %vm415, %v3942, 0
  %v4041 = vsel %vm415, %v3943, 0
  %v4044 = vsel %vm415, %v3944, 0
  %v4047 = vsel %vm415, %v3945, 0
  %v4050 = vsel %vm415, %v3946, 0
  %v4053 = vsel %vm415, %v3947, 0
  %v4056 = vsel %vm415, %v3948, 0
  %v4059 = vsel %vm415, %v3949, 0
  %v4062 = vsel %vm415, %v3950, 0
  %v4065 = vsel %vm415, %v3951, 0
  %v4068 = vsel %vm415, %v3952, 0
  %v4071 = vsel %vm415, %v3953, 0
  %v4074 = vsel %vm415, %v3954, 0
  %v4077 = vsel %vm415, %v3955, 0
  %v4080 = vsel %vm415, %v3956, 0
  %v4083 = vsel %vm415, %v3957, 0
  %v4086 = vsel %vm415, %v3958, 0
  %v4089 = vsel %vm545, %v3915, 0
  %4091 = vmatprep.subr.bf16.mxu0 0
  %4092 = vmatpush1.bf16.msra.mxu0 %v4089
  %4093 = vmatprep.subr.bf16.mxu0 0
  %4094 = vmatpush1.bf16.msra.mxu0 0
  %4095 = vmatprep.subr.bf16.mxu0 0
  %4096 = vmatpush1.bf16.msra.mxu0 0
  %4097 = vmatprep.subr.bf16.mxu0 0
  %4098 = vmatpush1.bf16.msra.mxu0 0
  %4099 = vmatprep.subr.bf16.mxu0 0
  %4100 = vmatpush1.bf16.msra.mxu0 0
  %4101 = vmatprep.subr.bf16.mxu0 0
  %4102 = vmatpush1.bf16.msra.mxu0 0
  %4103 = vmatprep.subr.bf16.mxu0 0
  %4104 = vmatpush1.bf16.msra.mxu0 0
  %4105 = vmatprep.subr.bf16.mxu0 0
  %4106 = vmatpush1.bf16.msra.mxu0 0
  %4107 = vmatprep.subr.bf16.mxu0 0
  %4108 = vmatpush1.bf16.msra.mxu0 0
  %4109 = vmatprep.subr.bf16.mxu0 0
  %4110 = vmatpush1.bf16.msra.mxu0 0
  %4111 = vmatprep.subr.bf16.mxu0 0
  %4112 = vmatpush1.bf16.msra.mxu0 0
  %4113 = vmatprep.subr.bf16.mxu0 0
  %4114 = vmatpush1.bf16.msra.mxu0 0
  %4115 = vmatprep.subr.bf16.mxu0 0
  %4116 = vmatpush1.bf16.msra.mxu0 0
  %4117 = vmatprep.subr.bf16.mxu0 0
  %4118 = vmatpush1.bf16.msra.mxu0 0
  %4119 = vmatprep.subr.bf16.mxu0 0
  %4120 = vmatpush1.bf16.msra.mxu0 0
  %4121 = vmatprep.subr.bf16.mxu0 0
  %4122 = vmatpush1.bf16.msra.mxu0 0
  %4123 = vmatprep.mubr.bf16.mxu0 0
  %4124 = vmatmul.mubr.bf16.gmra.mrb[0].mxu0 %v3960
  %v4125 = vpop.f32.mrb[0].mxu0
  %v4126 = vadd.f32 0.0, %v4125
  %v4127 = vpop.f32.mrb[0].mxu0
  %v4128 = vpop.f32.mrb[0].mxu0
  %v4129 = vadd.f32 0.0, %v4128
  %v4130 = vpop.f32.mrb[0].mxu0
  %4131 = vmatprep.mubr.bf16.mxu0 0
  %4132 = vmatmul.mubr.bf16.gmra.mrb[0].mxu0 %v3963
  %v4133 = vpop.f32.mrb[0].mxu0
  %v4134 = vadd.f32 0.0, %v4133
  %v4135 = vpop.f32.mrb[0].mxu0
  %v4136 = vpop.f32.mrb[0].mxu0
  %v4137 = vadd.f32 0.0, %v4136
  %v4138 = vpop.f32.mrb[0].mxu0
  %4139 = vmatprep.mubr.bf16.mxu0 0
  %4140 = vmatmul.mubr.bf16.gmra.mrb[0].mxu0 %v3966
  %v4141 = vpop.f32.mrb[0].mxu0
  %v4142 = vadd.f32 0.0, %v4141
  %v4143 = vpop.f32.mrb[0].mxu0
  %v4144 = vpop.f32.mrb[0].mxu0
  %v4145 = vadd.f32 0.0, %v4144
  %v4146 = vpop.f32.mrb[0].mxu0
  %4147 = vmatprep.mubr.bf16.mxu0 0
  %4148 = vmatmul.mubr.bf16.gmra.mrb[0].mxu0 %v3969
  %v4149 = vpop.f32.mrb[0].mxu0
  %v4150 = vadd.f32 0.0, %v4149
  %v4151 = vpop.f32.mrb[0].mxu0
  %v4152 = vpop.f32.mrb[0].mxu0
  %v4153 = vadd.f32 0.0, %v4152
  %v4154 = vpop.f32.mrb[0].mxu0
  %4155 = vmatprep.mubr.bf16.mxu0 0
  %4156 = vmatmul.mubr.bf16.gmra.mrb[0].mxu0 %v3972
  %v4157 = vpop.f32.mrb[0].mxu0
  %v4158 = vadd.f32 0.0, %v4157
  %v4159 = vpop.f32.mrb[0].mxu0
  %v4160 = vpop.f32.mrb[0].mxu0
  %v4161 = vadd.f32 0.0, %v4160
  %v4162 = vpop.f32.mrb[0].mxu0
  %4163 = vmatprep.mubr.bf16.mxu0 0
  %4164 = vmatmul.mubr.bf16.gmra.mrb[0].mxu0 %v3975
  %v4165 = vpop.f32.mrb[0].mxu0
  %v4166 = vadd.f32 0.0, %v4165
  %v4167 = vpop.f32.mrb[0].mxu0
  %v4168 = vpop.f32.mrb[0].mxu0
  %v4169 = vadd.f32 0.0, %v4168
  %v4170 = vpop.f32.mrb[0].mxu0
  %4171 = vmatprep.mubr.bf16.mxu0 0
  %4172 = vmatmul.mubr.bf16.gmra.mrb[0].mxu0 %v3978
  %v4173 = vpop.f32.mrb[0].mxu0
  %v4174 = vadd.f32 0.0, %v4173
  %v4175 = vpop.f32.mrb[0].mxu0
  %v4176 = vpop.f32.mrb[0].mxu0
  %v4177 = vadd.f32 0.0, %v4176
  %v4178 = vpop.f32.mrb[0].mxu0
  %4179 = vmatprep.mubr.bf16.mxu0 0
  %4180 = vmatmul.mubr.bf16.gmra.mrb[0].mxu0 %v3981
  %v4181 = vpop.f32.mrb[0].mxu0
  %v4182 = vadd.f32 0.0, %v4181
  %v4183 = vpop.f32.mrb[0].mxu0
  %v4184 = vpop.f32.mrb[0].mxu0
  %v4185 = vadd.f32 0.0, %v4184
  %v4186 = vpop.f32.mrb[0].mxu0
  %4187 = vmatprep.mubr.bf16.mxu0 0
  %4188 = vmatmul.mubr.bf16.gmra.mrb[0].mxu0 %v3984
  %v4189 = vpop.f32.mrb[0].mxu0
  %v4190 = vadd.f32 0.0, %v4189
  %v4191 = vpop.f32.mrb[0].mxu0
  %v4192 = vpop.f32.mrb[0].mxu0
  %v4193 = vadd.f32 0.0, %v4192
  %v4194 = vpop.f32.mrb[0].mxu0
  %4195 = vmatprep.mubr.bf16.mxu0 0
  %4196 = vmatmul.mubr.bf16.gmra.mrb[0].mxu0 %v3987
  %v4197 = vpop.f32.mrb[0].mxu0
  %v4198 = vadd.f32 0.0, %v4197
  %v4199 = vpop.f32.mrb[0].mxu0
  %v4200 = vpop.f32.mrb[0].mxu0
  %v4201 = vadd.f32 0.0, %v4200
  %v4202 = vpop.f32.mrb[0].mxu0
  %4203 = vmatprep.mubr.bf16.mxu0 0
  %4204 = vmatmul.mubr.bf16.gmra.mrb[0].mxu0 %v3990
  %v4205 = vpop.f32.mrb[0].mxu0
  %v4206 = vadd.f32 0.0, %v4205
  %v4207 = vpop.f32.mrb[0].mxu0
  %v4208 = vpop.f32.mrb[0].mxu0
  %v4209 = vadd.f32 0.0, %v4208
  %v4210 = vpop.f32.mrb[0].mxu0
  %4211 = vmatprep.mubr.bf16.mxu0 0
  %4212 = vmatmul.mubr.bf16.gmra.mrb[0].mxu0 %v3993
  %v4213 = vpop.f32.mrb[0].mxu0
  %v4214 = vadd.f32 0.0, %v4213
  %v4215 = vpop.f32.mrb[0].mxu0
  %v4216 = vpop.f32.mrb[0].mxu0
  %v4217 = vadd.f32 0.0, %v4216
  %v4218 = vpop.f32.mrb[0].mxu0
  %4219 = vmatprep.mubr.bf16.mxu0 0
  %4220 = vmatmul.mubr.bf16.gmra.mrb[0].mxu0 %v3996
  %v4221 = vpop.f32.mrb[0].mxu0
  %v4222 = vadd.f32 0.0, %v4221
  %v4223 = vpop.f32.mrb[0].mxu0
  %v4224 = vpop.f32.mrb[0].mxu0
  %v4225 = vadd.f32 0.0, %v4224
  %v4226 = vpop.f32.mrb[0].mxu0
  %4227 = vmatprep.mubr.bf16.mxu0 0
  %4228 = vmatmul.mubr.bf16.gmra.mrb[0].mxu0 %v3999
  %v4229 = vpop.f32.mrb[0].mxu0
  %v4230 = vadd.f32 0.0, %v4229
  %v4231 = vpop.f32.mrb[0].mxu0
  %v4232 = vpop.f32.mrb[0].mxu0
  %v4233 = vadd.f32 0.0, %v4232
  %v4234 = vpop.f32.mrb[0].mxu0
  %4235 = vmatprep.mubr.bf16.mxu0 0
  %4236 = vmatmul.mubr.bf16.gmra.mrb[0].mxu0 %v4002
  %v4237 = vpop.f32.mrb[0].mxu0
  %v4238 = vadd.f32 0.0, %v4237
  %v4239 = vpop.f32.mrb[0].mxu0
  %v4240 = vpop.f32.mrb[0].mxu0
  %v4241 = vadd.f32 0.0, %v4240
  %v4242 = vpop.f32.mrb[0].mxu0
  %4243 = vmatprep.mubr.bf16.mxu0 0
  %4244 = vmatmul.mubr.bf16.gmra.mrb[0].mxu0 %v4005
  %v4245 = vpop.f32.mrb[0].mxu0
  %v4246 = vadd.f32 0.0, %v4245
  %v4247 = vpop.f32.mrb[0].mxu0
  %v4248 = vpop.f32.mrb[0].mxu0
  %v4249 = vadd.f32 0.0, %v4248
  %v4250 = vpop.f32.mrb[0].mxu0
  %4251 = vmatprep.mubr.bf16.mxu0 0
  %4252 = vmatmul.mubr.bf16.gmra.mrb[0].mxu0 %v4008
  %v4253 = vpop.f32.mrb[0].mxu0
  %v4254 = vadd.f32 0.0, %v4253
  %v4255 = vpop.f32.mrb[0].mxu0
  %v4256 = vpop.f32.mrb[0].mxu0
  %v4257 = vadd.f32 0.0, %v4256
  %v4258 = vpop.f32.mrb[0].mxu0
  %4259 = vmatprep.mubr.bf16.mxu0 0
  %4260 = vmatmul.mubr.bf16.gmra.mrb[0].mxu0 %v4011
  %v4261 = vpop.f32.mrb[0].mxu0
  %v4262 = vadd.f32 0.0, %v4261
  %v4263 = vpop.f32.mrb[0].mxu0
  %v4264 = vpop.f32.mrb[0].mxu0
  %v4265 = vadd.f32 0.0, %v4264
  %v4266 = vpop.f32.mrb[0].mxu0
  %4267 = vmatprep.mubr.bf16.mxu0 0
  %4268 = vmatmul.mubr.bf16.gmra.mrb[0].mxu0 %v4014
  %v4269 = vpop.f32.mrb[0].mxu0
  %v4270 = vadd.f32 0.0, %v4269
  %v4271 = vpop.f32.mrb[0].mxu0
  %v4272 = vpop.f32.mrb[0].mxu0
  %v4273 = vadd.f32 0.0, %v4272
  %v4274 = vpop.f32.mrb[0].mxu0
  %4275 = vmatprep.mubr.bf16.mxu0 0
  %4276 = vmatmul.mubr.bf16.gmra.mrb[0].mxu0 %v4017
  %v4277 = vpop.f32.mrb[0].mxu0
  %v4278 = vadd.f32 0.0, %v4277
  %v4279 = vpop.f32.mrb[0].mxu0
  %v4280 = vpop.f32.mrb[0].mxu0
  %v4281 = vadd.f32 0.0, %v4280
  %v4282 = vpop.f32.mrb[0].mxu0
  %4283 = vmatprep.mubr.bf16.mxu0 0
  %4284 = vmatmul.mubr.bf16.gmra.mrb[0].mxu0 %v4020
  %v4285 = vpop.f32.mrb[0].mxu0
  %v4286 = vadd.f32 0.0, %v4285
  %v4287 = vpop.f32.mrb[0].mxu0
  %v4288 = vpop.f32.mrb[0].mxu0
  %v4289 = vadd.f32 0.0, %v4288
  %v4290 = vpop.f32.mrb[0].mxu0
  %4291 = vmatprep.mubr.bf16.mxu0 0
  %4292 = vmatmul.mubr.bf16.gmra.mrb[0].mxu0 %v4023
  %v4293 = vpop.f32.mrb[0].mxu0
  %v4294 = vadd.f32 0.0, %v4293
  %v4295 = vpop.f32.mrb[0].mxu0
  %v4296 = vpop.f32.mrb[0].mxu0
  %v4297 = vadd.f32 0.0, %v4296
  %v4298 = vpop.f32.mrb[0].mxu0
  %4299 = vmatprep.mubr.bf16.mxu0 0
  %4300 = vmatmul.mubr.bf16.gmra.mrb[0].mxu0 %v4026
  %v4301 = vpop.f32.mrb[0].mxu0
  %v4302 = vadd.f32 0.0, %v4301
  %v4303 = vpop.f32.mrb[0].mxu0
  %v4304 = vpop.f32.mrb[0].mxu0
  %v4305 = vadd.f32 0.0, %v4304
  %v4306 = vpop.f32.mrb[0].mxu0
  %4307 = vmatprep.mubr.bf16.mxu0 0
  %4308 = vmatmul.mubr.bf16.gmra.mrb[0].mxu0 %v4029
  %v4309 = vpop.f32.mrb[0].mxu0
  %v4310 = vadd.f32 0.0, %v4309
  %v4311 = vpop.f32.mrb[0].mxu0
  %v4312 = vpop.f32.mrb[0].mxu0
  %v4313 = vadd.f32 0.0, %v4312
  %v4314 = vpop.f32.mrb[0].mxu0
  %4315 = vmatprep.mubr.bf16.mxu0 0
  %4316 = vmatmul.mubr.bf16.gmra.mrb[0].mxu0 %v4032
  %v4317 = vpop.f32.mrb[0].mxu0
  %v4318 = vadd.f32 0.0, %v4317
  %v4319 = vpop.f32.mrb[0].mxu0
  %v4320 = vpop.f32.mrb[0].mxu0
  %v4321 = vadd.f32 0.0, %v4320
  %v4322 = vpop.f32.mrb[0].mxu0
  %4323 = vmatprep.mubr.bf16.mxu0 0
  %4324 = vmatmul.mubr.bf16.gmra.mrb[0].mxu0 %v4035
  %v4325 = vpop.f32.mrb[0].mxu0
  %v4326 = vadd.f32 0.0, %v4325
  %v4327 = vpop.f32.mrb[0].mxu0
  %v4328 = vpop.f32.mrb[0].mxu0
  %v4329 = vadd.f32 0.0, %v4328
  %v4330 = vpop.f32.mrb[0].mxu0
  %4331 = vmatprep.mubr.bf16.mxu0 0
  %4332 = vmatmul.mubr.bf16.gmra.mrb[0].mxu0 %v4038
  %v4333 = vpop.f32.mrb[0].mxu0
  %v4334 = vadd.f32 0.0, %v4333
  %v4335 = vpop.f32.mrb[0].mxu0
  %v4336 = vpop.f32.mrb[0].mxu0
  %v4337 = vadd.f32 0.0, %v4336
  %v4338 = vpop.f32.mrb[0].mxu0
  %4339 = vmatprep.mubr.bf16.mxu0 0
  %4340 = vmatmul.mubr.bf16.gmra.mrb[0].mxu0 %v4041
  %v4341 = vpop.f32.mrb[0].mxu0
  %v4342 = vadd.f32 0.0, %v4341
  %v4343 = vpop.f32.mrb[0].mxu0
  %v4344 = vpop.f32.mrb[0].mxu0
  %v4345 = vadd.f32 0.0, %v4344
  %v4346 = vpop.f32.mrb[0].mxu0
  %4347 = vmatprep.mubr.bf16.mxu0 0
  %4348 = vmatmul.mubr.bf16.gmra.mrb[0].mxu0 %v4044
  %v4349 = vpop.f32.mrb[0].mxu0
  %v4350 = vadd.f32 0.0, %v4349
  %v4351 = vpop.f32.mrb[0].mxu0
  %v4352 = vpop.f32.mrb[0].mxu0
  %v4353 = vadd.f32 0.0, %v4352
  %v4354 = vpop.f32.mrb[0].mxu0
  %4355 = vmatprep.mubr.bf16.mxu0 0
  %4356 = vmatmul.mubr.bf16.gmra.mrb[0].mxu0 %v4047
  %v4357 = vpop.f32.mrb[0].mxu0
  %v4358 = vadd.f32 0.0, %v4357
  %v4359 = vpop.f32.mrb[0].mxu0
  %v4360 = vpop.f32.mrb[0].mxu0
  %v4361 = vadd.f32 0.0, %v4360
  %v4362 = vpop.f32.mrb[0].mxu0
  %4363 = vmatprep.mubr.bf16.mxu0 0
  %4364 = vmatmul.mubr.bf16.gmra.mrb[0].mxu0 %v4050
  %v4365 = vpop.f32.mrb[0].mxu0
  %v4366 = vadd.f32 0.0, %v4365
  %v4367 = vpop.f32.mrb[0].mxu0
  %v4368 = vpop.f32.mrb[0].mxu0
  %v4369 = vadd.f32 0.0, %v4368
  %v4370 = vpop.f32.mrb[0].mxu0
  %4371 = vmatprep.mubr.bf16.mxu0 0
  %4372 = vmatmul.mubr.bf16.gmra.mrb[0].mxu0 %v4053
  %v4373 = vpop.f32.mrb[0].mxu0
  %v4374 = vadd.f32 0.0, %v4373
  %v4375 = vpop.f32.mrb[0].mxu0
  %v4376 = vpop.f32.mrb[0].mxu0
  %v4377 = vadd.f32 0.0, %v4376
  %v4378 = vpop.f32.mrb[0].mxu0
  %4379 = vmatprep.mubr.bf16.mxu0 0
  %4380 = vmatmul.mubr.bf16.gmra.mrb[0].mxu0 %v4056
  %v4381 = vpop.f32.mrb[0].mxu0
  %v4382 = vadd.f32 0.0, %v4381
  %v4383 = vpop.f32.mrb[0].mxu0
  %v4384 = vpop.f32.mrb[0].mxu0
  %v4385 = vadd.f32 0.0, %v4384
  %v4386 = vpop.f32.mrb[0].mxu0
  %4387 = vmatprep.mubr.bf16.mxu0 0
  %4388 = vmatmul.mubr.bf16.gmra.mrb[0].mxu0 %v4059
  %v4389 = vpop.f32.mrb[0].mxu0
  %v4390 = vadd.f32 0.0, %v4389
  %v4391 = vpop.f32.mrb[0].mxu0
  %v4392 = vpop.f32.mrb[0].mxu0
  %v4393 = vadd.f32 0.0, %v4392
  %v4394 = vpop.f32.mrb[0].mxu0
  %4395 = vmatprep.mubr.bf16.mxu0 0
  %4396 = vmatmul.mubr.bf16.gmra.mrb[0].mxu0 %v4062
  %v4397 = vpop.f32.mrb[0].mxu0
  %v4398 = vadd.f32 0.0, %v4397
  %v4399 = vpop.f32.mrb[0].mxu0
  %v4400 = vpop.f32.mrb[0].mxu0
  %v4401 = vadd.f32 0.0, %v4400
  %v4402 = vpop.f32.mrb[0].mxu0
  %4403 = vmatprep.mubr.bf16.mxu0 0
  %4404 = vmatmul.mubr.bf16.gmra.mrb[0].mxu0 %v4065
  %v4405 = vpop.f32.mrb[0].mxu0
  %v4406 = vadd.f32 0.0, %v4405
  %v4407 = vpop.f32.mrb[0].mxu0
  %v4408 = vpop.f32.mrb[0].mxu0
  %v4409 = vadd.f32 0.0, %v4408
  %v4410 = vpop.f32.mrb[0].mxu0
  %4411 = vmatprep.mubr.bf16.mxu0 0
  %4412 = vmatmul.mubr.bf16.gmra.mrb[0].mxu0 %v4068
  %v4413 = vpop.f32.mrb[0].mxu0
  %v4414 = vadd.f32 0.0, %v4413
  %v4415 = vpop.f32.mrb[0].mxu0
  %v4416 = vpop.f32.mrb[0].mxu0
  %v4417 = vadd.f32 0.0, %v4416
  %v4418 = vpop.f32.mrb[0].mxu0
  %4419 = vmatprep.mubr.bf16.mxu0 0
  %4420 = vmatmul.mubr.bf16.gmra.mrb[0].mxu0 %v4071
  %v4421 = vpop.f32.mrb[0].mxu0
  %v4422 = vadd.f32 0.0, %v4421
  %v4423 = vpop.f32.mrb[0].mxu0
  %v4424 = vpop.f32.mrb[0].mxu0
  %v4425 = vadd.f32 0.0, %v4424
  %v4426 = vpop.f32.mrb[0].mxu0
  %4427 = vmatprep.mubr.bf16.mxu0 0
  %4428 = vmatmul.mubr.bf16.gmra.mrb[0].mxu0 %v4074
  %v4429 = vpop.f32.mrb[0].mxu0
  %v4430 = vadd.f32 0.0, %v4429
  %v4431 = vpop.f32.mrb[0].mxu0
  %v4432 = vpop.f32.mrb[0].mxu0
  %v4433 = vadd.f32 0.0, %v4432
  %v4434 = vpop.f32.mrb[0].mxu0
  %4435 = vmatprep.mubr.bf16.mxu0 0
  %4436 = vmatmul.mubr.bf16.gmra.mrb[0].mxu0 %v4077
  %v4437 = vpop.f32.mrb[0].mxu0
  %v4438 = vadd.f32 0.0, %v4437
  %v4439 = vpop.f32.mrb[0].mxu0
  %v4440 = vpop.f32.mrb[0].mxu0
  %v4441 = vadd.f32 0.0, %v4440
  %v4442 = vpop.f32.mrb[0].mxu0
  %4443 = vmatprep.mubr.bf16.mxu0 0
  %4444 = vmatmul.mubr.bf16.gmra.mrb[0].mxu0 %v4080
  %v4445 = vpop.f32.mrb[0].mxu0
  %v4446 = vadd.f32 0.0, %v4445
  %v4447 = vpop.f32.mrb[0].mxu0
  %v4448 = vpop.f32.mrb[0].mxu0
  %v4449 = vadd.f32 0.0, %v4448
  %v4450 = vpop.f32.mrb[0].mxu0
  %4451 = vmatprep.mubr.bf16.mxu0 0
  %4452 = vmatmul.mubr.bf16.gmra.mrb[0].mxu0 %v4083
  %v4453 = vpop.f32.mrb[0].mxu0
  %v4454 = vadd.f32 0.0, %v4453
  %v4455 = vpop.f32.mrb[0].mxu0
  %v4456 = vpop.f32.mrb[0].mxu0
  %v4457 = vadd.f32 0.0, %v4456
  %v4458 = vpop.f32.mrb[0].mxu0
  %4459 = vmatprep.mubr.bf16.mxu0 0
  %4460 = vmatmul.mubr.bf16.gmra.mrb[0].mxu0 %v4086
  %v4461 = vpop.f32.mrb[0].mxu0
  %v4462 = vadd.f32 0.0, %v4461
  %v4463 = vpop.f32.mrb[0].mxu0
  %v4464 = vpop.f32.mrb[0].mxu0
  %v4465 = vadd.f32 0.0, %v4464
  %v4466 = vpop.f32.mrb[0].mxu0
  %4467 = vdwg.mxu0
  %v4468 = vadd.f32 %v3828, %v4126
  %v4469 = vadd.f32 %v3829, %v4129
  %v4470 = vadd.f32 %v3830, %v4134
  %v4471 = vadd.f32 %v3831, %v4137
  %v4472 = vadd.f32 %v3832, %v4142
  %v4473 = vadd.f32 %v3833, %v4145
  %v4474 = vadd.f32 %v3834, %v4150
  %v4475 = vadd.f32 %v3835, %v4153
  %v4476 = vadd.f32 %v3836, %v4158
  %v4477 = vadd.f32 %v3837, %v4161
  %v4478 = vadd.f32 %v3838, %v4166
  %v4479 = vadd.f32 %v3839, %v4169
  %v4480 = vadd.f32 %v3840, %v4174
  %v4481 = vadd.f32 %v3841, %v4177
  %v4482 = vadd.f32 %v3842, %v4182
  %v4483 = vadd.f32 %v3843, %v4185
  %v4484 = vadd.f32 %v3844, %v4190
  %v4485 = vadd.f32 %v3845, %v4193
  %v4486 = vadd.f32 %v3846, %v4198
  %v4487 = vadd.f32 %v3847, %v4201
  %v4488 = vadd.f32 %v3848, %v4206
  %v4489 = vadd.f32 %v3849, %v4209
  %v4490 = vadd.f32 %v3850, %v4214
  %v4491 = vadd.f32 %v3851, %v4217
  %v4492 = vadd.f32 %v3852, %v4222
  %v4493 = vadd.f32 %v3853, %v4225
  %v4494 = vadd.f32 %v3854, %v4230
  %v4495 = vadd.f32 %v3855, %v4233
  %v4496 = vadd.f32 %v3856, %v4238
  %v4497 = vadd.f32 %v3857, %v4241
  %v4498 = vadd.f32 %v3858, %v4246
  %v4499 = vadd.f32 %v3859, %v4249
  %v4500 = vadd.f32 %v3860, %v4254
  %v4501 = vadd.f32 %v3861, %v4257
  %v4502 = vadd.f32 %v3862, %v4262
  %v4503 = vadd.f32 %v3863, %v4265
  %v4504 = vadd.f32 %v3864, %v4270
  %v4505 = vadd.f32 %v3865, %v4273
  %v4506 = vadd.f32 %v3866, %v4278
  %v4507 = vadd.f32 %v3867, %v4281
  %v4508 = vadd.f32 %v3868, %v4286
  %v4509 = vadd.f32 %v3869, %v4289
  %v4510 = vadd.f32 %v3870, %v4294
  %v4511 = vadd.f32 %v3871, %v4297
  %v4512 = vadd.f32 %v3872, %v4302
  %v4513 = vadd.f32 %v3873, %v4305
  %v4514 = vadd.f32 %v3874, %v4310
  %v4515 = vadd.f32 %v3875, %v4313
  %v4516 = vadd.f32 %v3876, %v4318
  %v4517 = vadd.f32 %v3877, %v4321
  %v4518 = vadd.f32 %v3878, %v4326
  %v4519 = vadd.f32 %v3879, %v4329
  %v4520 = vadd.f32 %v3880, %v4334
  %v4521 = vadd.f32 %v3881, %v4337
  %v4522 = vadd.f32 %v3882, %v4342
  %v4523 = vadd.f32 %v3883, %v4345
  %v4524 = vadd.f32 %v3884, %v4350
  %v4525 = vadd.f32 %v3885, %v4353
  %v4526 = vadd.f32 %v3886, %v4358
  %v4527 = vadd.f32 %v3887, %v4361
  %v4528 = vadd.f32 %v3888, %v4366
  %v4529 = vadd.f32 %v3889, %v4369
  %v4530 = vadd.f32 %v3890, %v4374
  %v4531 = vadd.f32 %v3891, %v4377
  %v4532 = vadd.f32 %v3892, %v4382
  %v4533 = vadd.f32 %v3893, %v4385
  %v4534 = vadd.f32 %v3894, %v4390
  %v4535 = vadd.f32 %v3895, %v4393
  %v4536 = vadd.f32 %v3896, %v4398
  %v4537 = vadd.f32 %v3897, %v4401
  %v4538 = vadd.f32 %v3898, %v4406
  %v4539 = vadd.f32 %v3899, %v4409
  %v4540 = vadd.f32 %v3900, %v4414
  %v4541 = vadd.f32 %v3901, %v4417
  %v4542 = vadd.f32 %v3902, %v4422
  %v4543 = vadd.f32 %v3903, %v4425
  %v4544 = vadd.f32 %v3904, %v4430
  %v4545 = vadd.f32 %v3905, %v4433
  %v4546 = vadd.f32 %v3906, %v4438
  %v4547 = vadd.f32 %v3907, %v4441
  %v4548 = vadd.f32 %v3908, %v4446
  %v4549 = vadd.f32 %v3909, %v4449
  %v4550 = vadd.f32 %v3910, %v4454
  %v4551 = vadd.f32 %v3911, %v4457
  %v4552 = vadd.f32 %v3912, %v4462
  %v4553 = vadd.f32 %v3913, %v4465
  %v4554 = vld [vmem:[%s0 + $0x160] sm:$0x7]
  %s4555 = scalar_lea.vmem %s1, 10
  %v4556 = vld [vmem:[%s4555] sm:$0x3]
  %v4558 = vunpack.c.l.b16 %v4554
  %v4559 = vpack.c.b16 %v4558, %v2878
  %vm4560 = vsmask.f32 7424
  %v4561 = vshrl.u32 %v3916, 16
  %v4563 = vshll.u32 %v3916, 16
  %v4565 = vrot.slane %v4563, 1
  %v4566 = vor.u32 %v4561, %v4565
  %v4567 = vshll.u32 %v3917, 16
  %v4569 = vrot.slane %v4567, 1
  %v4570 = vsel %vm4560, %v4566, %v4569
  %v4571 = vshrl.u32 %v3917, 16
  %v4573 = vor.u32 %v4571, %v4569
  %v4574 = vshll.u32 %v3918, 16
  %v4576 = vrot.slane %v4574, 1
  %v4577 = vsel %vm4560, %v4573, %v4576
  %v4578 = vshrl.u32 %v3918, 16
  %v4580 = vor.u32 %v4578, %v4576
  %v4581 = vshll.u32 %v3919, 16
  %v4583 = vrot.slane %v4581, 1
  %v4584 = vsel %vm4560, %v4580, %v4583
  %v4585 = vshrl.u32 %v3919, 16
  %v4587 = vor.u32 %v4585, %v4583
  %v4588 = vshll.u32 %v3920, 16
  %v4590 = vrot.slane %v4588, 1
  %v4591 = vsel %vm4560, %v4587, %v4590
  %v4592 = vshrl.u32 %v3920, 16
  %v4594 = vor.u32 %v4592, %v4590
  %v4595 = vshll.u32 %v3921, 16
  %v4597 = vrot.slane %v4595, 1
  %v4598 = vsel %vm4560, %v4594, %v4597
  %v4599 = vshrl.u32 %v3921, 16
  %v4601 = vor.u32 %v4599, %v4597
  %v4602 = vshll.u32 %v3922, 16
  %v4604 = vrot.slane %v4602, 1
  %v4605 = vsel %vm4560, %v4601, %v4604
  %v4606 = vshrl.u32 %v3922, 16
  %v4608 = vor.u32 %v4606, %v4604
  %v4609 = vshll.u32 %v3923, 16
  %v4611 = vrot.slane %v4609, 1
  %v4612 = vsel %vm4560, %v4608, %v4611
  %v4613 = vshrl.u32 %v3923, 16
  %v4615 = vor.u32 %v4613, %v4611
  %v4616 = vshll.u32 %v3924, 16
  %v4618 = vrot.slane %v4616, 1
  %v4619 = vsel %vm4560, %v4615, %v4618
  %v4620 = vshrl.u32 %v3924, 16
  %v4622 = vor.u32 %v4620, %v4618
  %v4623 = vshll.u32 %v3925, 16
  %v4625 = vrot.slane %v4623, 1
  %v4626 = vsel %vm4560, %v4622, %v4625
  %v4627 = vshrl.u32 %v3925, 16
  %v4629 = vor.u32 %v4627, %v4625
  %v4630 = vshll.u32 %v3926, 16
  %v4632 = vrot.slane %v4630, 1
  %v4633 = vsel %vm4560, %v4629, %v4632
  %v4634 = vshrl.u32 %v3926, 16
  %v4636 = vor.u32 %v4634, %v4632
  %v4637 = vshll.u32 %v3927, 16
  %v4639 = vrot.slane %v4637, 1
  %v4640 = vsel %vm4560, %v4636, %v4639
  %v4641 = vshrl.u32 %v3927, 16
  %v4643 = vor.u32 %v4641, %v4639
  %v4644 = vshll.u32 %v3928, 16
  %v4646 = vrot.slane %v4644, 1
  %v4647 = vsel %vm4560, %v4643, %v4646
  %v4648 = vshrl.u32 %v3928, 16
  %v4650 = vor.u32 %v4648, %v4646
  %v4651 = vshll.u32 %v3929, 16
  %v4653 = vrot.slane %v4651, 1
  %v4654 = vsel %vm4560, %v4650, %v4653
  %v4655 = vshrl.u32 %v3929, 16
  %v4657 = vor.u32 %v4655, %v4653
  %v4658 = vshll.u32 %v3930, 16
  %v4660 = vrot.slane %v4658, 1
  %v4661 = vsel %vm4560, %v4657, %v4660
  %v4662 = vshrl.u32 %v3930, 16
  %v4664 = vor.u32 %v4662, %v4660
  %v4665 = vshll.u32 %v3931, 16
  %v4667 = vrot.slane %v4665, 1
  %v4668 = vsel %vm4560, %v4664, %v4667
  %v4669 = vshrl.u32 %v3931, 16
  %v4671 = vor.u32 %v4669, %v4667
  %v4672 = vshll.u32 %v3932, 16
  %v4674 = vrot.slane %v4672, 1
  %v4675 = vsel %vm4560, %v4671, %v4674
  %v4676 = vshrl.u32 %v3932, 16
  %v4678 = vor.u32 %v4676, %v4674
  %v4679 = vshll.u32 %v3933, 16
  %v4681 = vrot.slane %v4679, 1
  %v4682 = vsel %vm4560, %v4678, %v4681
  %v4683 = vshrl.u32 %v3933, 16
  %v4685 = vor.u32 %v4683, %v4681
  %v4686 = vshll.u32 %v3934, 16
  %v4688 = vrot.slane %v4686, 1
  %v4689 = vsel %vm4560, %v4685, %v4688
  %v4690 = vshrl.u32 %v3934, 16
  %v4692 = vor.u32 %v4690, %v4688
  %v4693 = vshll.u32 %v3935, 16
  %v4695 = vrot.slane %v4693, 1
  %v4696 = vsel %vm4560, %v4692, %v4695
  %v4697 = vshrl.u32 %v3935, 16
  %v4699 = vor.u32 %v4697, %v4695
  %v4700 = vshll.u32 %v3936, 16
  %v4702 = vrot.slane %v4700, 1
  %v4703 = vsel %vm4560, %v4699, %v4702
  %v4704 = vshrl.u32 %v3936, 16
  %v4706 = vor.u32 %v4704, %v4702
  %v4707 = vshll.u32 %v3937, 16
  %v4709 = vrot.slane %v4707, 1
  %v4710 = vsel %vm4560, %v4706, %v4709
  %v4711 = vshrl.u32 %v3937, 16
  %v4713 = vor.u32 %v4711, %v4709
  %v4714 = vshll.u32 %v3938, 16
  %v4716 = vrot.slane %v4714, 1
  %v4717 = vsel %vm4560, %v4713, %v4716
  %v4718 = vshrl.u32 %v3938, 16
  %v4720 = vor.u32 %v4718, %v4716
  %v4721 = vshll.u32 %v3939, 16
  %v4723 = vrot.slane %v4721, 1
  %v4724 = vsel %vm4560, %v4720, %v4723
  %v4725 = vshrl.u32 %v3939, 16
  %v4727 = vor.u32 %v4725, %v4723
  %v4728 = vshll.u32 %v3940, 16
  %v4730 = vrot.slane %v4728, 1
  %v4731 = vsel %vm4560, %v4727, %v4730
  %v4732 = vshrl.u32 %v3940, 16
  %v4734 = vor.u32 %v4732, %v4730
  %v4735 = vshll.u32 %v3941, 16
  %v4737 = vrot.slane %v4735, 1
  %v4738 = vsel %vm4560, %v4734, %v4737
  %v4739 = vshrl.u32 %v3941, 16
  %v4741 = vor.u32 %v4739, %v4737
  %v4742 = vshll.u32 %v3942, 16
  %v4744 = vrot.slane %v4742, 1
  %v4745 = vsel %vm4560, %v4741, %v4744
  %v4746 = vshrl.u32 %v3942, 16
  %v4748 = vor.u32 %v4746, %v4744
  %v4749 = vshll.u32 %v3943, 16
  %v4751 = vrot.slane %v4749, 1
  %v4752 = vsel %vm4560, %v4748, %v4751
  %v4753 = vshrl.u32 %v3943, 16
  %v4755 = vor.u32 %v4753, %v4751
  %v4756 = vshll.u32 %v3944, 16
  %v4758 = vrot.slane %v4756, 1
  %v4759 = vsel %vm4560, %v4755, %v4758
  %v4760 = vshrl.u32 %v3944, 16
  %v4762 = vor.u32 %v4760, %v4758
  %v4763 = vshll.u32 %v3945, 16
  %v4765 = vrot.slane %v4763, 1
  %v4766 = vsel %vm4560, %v4762, %v4765
  %v4767 = vshrl.u32 %v3945, 16
  %v4769 = vor.u32 %v4767, %v4765
  %v4770 = vshll.u32 %v3946, 16
  %v4772 = vrot.slane %v4770, 1
  %v4773 = vsel %vm4560, %v4769, %v4772
  %v4774 = vshrl.u32 %v3946, 16
  %v4776 = vor.u32 %v4774, %v4772
  %v4777 = vshll.u32 %v3947, 16
  %v4779 = vrot.slane %v4777, 1
  %v4780 = vsel %vm4560, %v4776, %v4779
  %v4781 = vshrl.u32 %v3947, 16
  %v4783 = vor.u32 %v4781, %v4779
  %v4784 = vshll.u32 %v3948, 16
  %v4786 = vrot.slane %v4784, 1
  %v4787 = vsel %vm4560, %v4783, %v4786
  %v4788 = vshrl.u32 %v3948, 16
  %v4790 = vor.u32 %v4788, %v4786
  %v4791 = vshll.u32 %v3949, 16
  %v4793 = vrot.slane %v4791, 1
  %v4794 = vsel %vm4560, %v4790, %v4793
  %v4795 = vshrl.u32 %v3949, 16
  %v4797 = vor.u32 %v4795, %v4793
  %v4798 = vshll.u32 %v3950, 16
  %v4800 = vrot.slane %v4798, 1
  %v4801 = vsel %vm4560, %v4797, %v4800
  %v4802 = vshrl.u32 %v3950, 16
  %v4804 = vor.u32 %v4802, %v4800
  %v4805 = vshll.u32 %v3951, 16
  %v4807 = vrot.slane %v4805, 1
  %v4808 = vsel %vm4560, %v4804, %v4807
  %v4809 = vshrl.u32 %v3951, 16
  %v4811 = vor.u32 %v4809, %v4807
  %v4812 = vshll.u32 %v3952, 16
  %v4814 = vrot.slane %v4812, 1
  %v4815 = vsel %vm4560, %v4811, %v4814
  %v4816 = vshrl.u32 %v3952, 16
  %v4818 = vor.u32 %v4816, %v4814
  %v4819 = vshll.u32 %v3953, 16
  %v4821 = vrot.slane %v4819, 1
  %v4822 = vsel %vm4560, %v4818, %v4821
  %v4823 = vshrl.u32 %v3953, 16
  %v4825 = vor.u32 %v4823, %v4821
  %v4826 = vshll.u32 %v3954, 16
  %v4828 = vrot.slane %v4826, 1
  %v4829 = vsel %vm4560, %v4825, %v4828
  %v4830 = vshrl.u32 %v3954, 16
  %v4832 = vor.u32 %v4830, %v4828
  %v4833 = vshll.u32 %v3955, 16
  %v4835 = vrot.slane %v4833, 1
  %v4836 = vsel %vm4560, %v4832, %v4835
  %v4837 = vshrl.u32 %v3955, 16
  %v4839 = vor.u32 %v4837, %v4835
  %v4840 = vshll.u32 %v3956, 16
  %v4842 = vrot.slane %v4840, 1
  %v4843 = vsel %vm4560, %v4839, %v4842
  %v4844 = vshrl.u32 %v3956, 16
  %v4846 = vor.u32 %v4844, %v4842
  %v4847 = vshll.u32 %v3957, 16
  %v4849 = vrot.slane %v4847, 1
  %v4850 = vsel %vm4560, %v4846, %v4849
  %v4851 = vshrl.u32 %v3957, 16
  %v4853 = vor.u32 %v4851, %v4849
  %v4855 = vshll.u32 %v4559, 16
  %v4857 = vrot.slane %v4855, 1
  %v4858 = vsel %vm4560, %v4853, %v4857
  %v4859 = vshrl.u32 %v4559, 16
  %v4861 = vor.u32 %v4859, %v4857
  %v4863 = vsel %vm415, %v4570, 0
  %v4866 = vsel %vm415, %v4577, 0
  %v4869 = vsel %vm415, %v4584, 0
  %v4872 = vsel %vm415, %v4591, 0
  %v4875 = vsel %vm415, %v4598, 0
  %v4878 = vsel %vm415, %v4605, 0
  %v4881 = vsel %vm415, %v4612, 0
  %v4884 = vsel %vm415, %v4619, 0
  %v4887 = vsel %vm415, %v4626, 0
  %v4890 = vsel %vm415, %v4633, 0
  %v4893 = vsel %vm415, %v4640, 0
  %v4896 = vsel %vm415, %v4647, 0
  %v4899 = vsel %vm415, %v4654, 0
  %v4902 = vsel %vm415, %v4661, 0
  %v4905 = vsel %vm415, %v4668, 0
  %v4908 = vsel %vm415, %v4675, 0
  %v4911 = vsel %vm415, %v4682, 0
  %v4914 = vsel %vm415, %v4689, 0
  %v4917 = vsel %vm415, %v4696, 0
  %v4920 = vsel %vm415, %v4703, 0
  %v4923 = vsel %vm415, %v4710, 0
  %v4926 = vsel %vm415, %v4717, 0
  %v4929 = vsel %vm415, %v4724, 0
  %v4932 = vsel %vm415, %v4731, 0
  %v4935 = vsel %vm415, %v4738, 0
  %v4938 = vsel %vm415, %v4745, 0
  %v4941 = vsel %vm415, %v4752, 0
  %v4944 = vsel %vm415, %v4759, 0
  %v4947 = vsel %vm415, %v4766, 0
  %v4950 = vsel %vm415, %v4773, 0
  %v4953 = vsel %vm415, %v4780, 0
  %v4956 = vsel %vm415, %v4787, 0
  %v4959 = vsel %vm415, %v4794, 0
  %v4962 = vsel %vm415, %v4801, 0
  %v4965 = vsel %vm415, %v4808, 0
  %v4968 = vsel %vm415, %v4815, 0
  %v4971 = vsel %vm415, %v4822, 0
  %v4974 = vsel %vm415, %v4829, 0
  %v4977 = vsel %vm415, %v4836, 0
  %v4980 = vsel %vm415, %v4843, 0
  %v4983 = vsel %vm415, %v4850, 0
  %v4986 = vsel %vm415, %v4858, 0
  %v4989 = vsel %vm415, %v4861, 0
  %v4992 = vsel %vm545, %v4556, 0
  %4994 = vmatprep.subr.bf16.mxu0 0
  %4995 = vmatpush1.bf16.msra.mxu0 %v4992
  %4996 = vmatprep.subr.bf16.mxu0 0
  %4997 = vmatpush1.bf16.msra.mxu0 0
  %4998 = vmatprep.subr.bf16.mxu0 0
  %4999 = vmatpush1.bf16.msra.mxu0 0
  %5000 = vmatprep.subr.bf16.mxu0 0
  %5001 = vmatpush1.bf16.msra.mxu0 0
  %5002 = vmatprep.subr.bf16.mxu0 0
  %5003 = vmatpush1.bf16.msra.mxu0 0
  %5004 = vmatprep.subr.bf16.mxu0 0
  %5005 = vmatpush1.bf16.msra.mxu0 0
  %5006 = vmatprep.subr.bf16.mxu0 0
  %5007 = vmatpush1.bf16.msra.mxu0 0
  %5008 = vmatprep.subr.bf16.mxu0 0
  %5009 = vmatpush1.bf16.msra.mxu0 0
  %5010 = vmatprep.subr.bf16.mxu0 0
  %5011 = vmatpush1.bf16.msra.mxu0 0
  %5012 = vmatprep.subr.bf16.mxu0 0
  %5013 = vmatpush1.bf16.msra.mxu0 0
  %5014 = vmatprep.subr.bf16.mxu0 0
  %5015 = vmatpush1.bf16.msra.mxu0 0
  %5016 = vmatprep.subr.bf16.mxu0 0
  %5017 = vmatpush1.bf16.msra.mxu0 0
  %5018 = vmatprep.subr.bf16.mxu0 0
  %5019 = vmatpush1.bf16.msra.mxu0 0
  %5020 = vmatprep.subr.bf16.mxu0 0
  %5021 = vmatpush1.bf16.msra.mxu0 0
  %5022 = vmatprep.subr.bf16.mxu0 0
  %5023 = vmatpush1.bf16.msra.mxu0 0
  %5024 = vmatprep.subr.bf16.mxu0 0
  %5025 = vmatpush1.bf16.msra.mxu0 0
  %5026 = vmatprep.mubr.bf16.mxu0 0
  %5027 = vmatmul.mubr.bf16.gmra.mrb[0].mxu0 %v4863
  %v5028 = vpop.f32.mrb[0].mxu0
  %v5029 = vadd.f32 0.0, %v5028
  %v5030 = vpop.f32.mrb[0].mxu0
  %v5031 = vpop.f32.mrb[0].mxu0
  %v5032 = vadd.f32 0.0, %v5031
  %v5033 = vpop.f32.mrb[0].mxu0
  %5034 = vmatprep.mubr.bf16.mxu0 0
  %5035 = vmatmul.mubr.bf16.gmra.mrb[0].mxu0 %v4866
  %v5036 = vpop.f32.mrb[0].mxu0
  %v5037 = vadd.f32 0.0, %v5036
  %v5038 = vpop.f32.mrb[0].mxu0
  %v5039 = vpop.f32.mrb[0].mxu0
  %v5040 = vadd.f32 0.0, %v5039
  %v5041 = vpop.f32.mrb[0].mxu0
  %5042 = vmatprep.mubr.bf16.mxu0 0
  %5043 = vmatmul.mubr.bf16.gmra.mrb[0].mxu0 %v4869
  %v5044 = vpop.f32.mrb[0].mxu0
  %v5045 = vadd.f32 0.0, %v5044
  %v5046 = vpop.f32.mrb[0].mxu0
  %v5047 = vpop.f32.mrb[0].mxu0
  %v5048 = vadd.f32 0.0, %v5047
  %v5049 = vpop.f32.mrb[0].mxu0
  %5050 = vmatprep.mubr.bf16.mxu0 0
  %5051 = vmatmul.mubr.bf16.gmra.mrb[0].mxu0 %v4872
  %v5052 = vpop.f32.mrb[0].mxu0
  %v5053 = vadd.f32 0.0, %v5052
  %v5054 = vpop.f32.mrb[0].mxu0
  %v5055 = vpop.f32.mrb[0].mxu0
  %v5056 = vadd.f32 0.0, %v5055
  %v5057 = vpop.f32.mrb[0].mxu0
  %5058 = vmatprep.mubr.bf16.mxu0 0
  %5059 = vmatmul.mubr.bf16.gmra.mrb[0].mxu0 %v4875
  %v5060 = vpop.f32.mrb[0].mxu0
  %v5061 = vadd.f32 0.0, %v5060
  %v5062 = vpop.f32.mrb[0].mxu0
  %v5063 = vpop.f32.mrb[0].mxu0
  %v5064 = vadd.f32 0.0, %v5063
  %v5065 = vpop.f32.mrb[0].mxu0
  %5066 = vmatprep.mubr.bf16.mxu0 0
  %5067 = vmatmul.mubr.bf16.gmra.mrb[0].mxu0 %v4878
  %v5068 = vpop.f32.mrb[0].mxu0
  %v5069 = vadd.f32 0.0, %v5068
  %v5070 = vpop.f32.mrb[0].mxu0
  %v5071 = vpop.f32.mrb[0].mxu0
  %v5072 = vadd.f32 0.0, %v5071
  %v5073 = vpop.f32.mrb[0].mxu0
  %5074 = vmatprep.mubr.bf16.mxu0 0
  %5075 = vmatmul.mubr.bf16.gmra.mrb[0].mxu0 %v4881
  %v5076 = vpop.f32.mrb[0].mxu0
  %v5077 = vadd.f32 0.0, %v5076
  %v5078 = vpop.f32.mrb[0].mxu0
  %v5079 = vpop.f32.mrb[0].mxu0
  %v5080 = vadd.f32 0.0, %v5079
  %v5081 = vpop.f32.mrb[0].mxu0
  %5082 = vmatprep.mubr.bf16.mxu0 0
  %5083 = vmatmul.mubr.bf16.gmra.mrb[0].mxu0 %v4884
  %v5084 = vpop.f32.mrb[0].mxu0
  %v5085 = vadd.f32 0.0, %v5084
  %v5086 = vpop.f32.mrb[0].mxu0
  %v5087 = vpop.f32.mrb[0].mxu0
  %v5088 = vadd.f32 0.0, %v5087
  %v5089 = vpop.f32.mrb[0].mxu0
  %5090 = vmatprep.mubr.bf16.mxu0 0
  %5091 = vmatmul.mubr.bf16.gmra.mrb[0].mxu0 %v4887
  %v5092 = vpop.f32.mrb[0].mxu0
  %v5093 = vadd.f32 0.0, %v5092
  %v5094 = vpop.f32.mrb[0].mxu0
  %v5095 = vpop.f32.mrb[0].mxu0
  %v5096 = vadd.f32 0.0, %v5095
  %v5097 = vpop.f32.mrb[0].mxu0
  %5098 = vmatprep.mubr.bf16.mxu0 0
  %5099 = vmatmul.mubr.bf16.gmra.mrb[0].mxu0 %v4890
  %v5100 = vpop.f32.mrb[0].mxu0
  %v5101 = vadd.f32 0.0, %v5100
  %v5102 = vpop.f32.mrb[0].mxu0
  %v5103 = vpop.f32.mrb[0].mxu0
  %v5104 = vadd.f32 0.0, %v5103
  %v5105 = vpop.f32.mrb[0].mxu0
  %5106 = vmatprep.mubr.bf16.mxu0 0
  %5107 = vmatmul.mubr.bf16.gmra.mrb[0].mxu0 %v4893
  %v5108 = vpop.f32.mrb[0].mxu0
  %v5109 = vadd.f32 0.0, %v5108
  %v5110 = vpop.f32.mrb[0].mxu0
  %v5111 = vpop.f32.mrb[0].mxu0
  %v5112 = vadd.f32 0.0, %v5111
  %v5113 = vpop.f32.mrb[0].mxu0
  %5114 = vmatprep.mubr.bf16.mxu0 0
  %5115 = vmatmul.mubr.bf16.gmra.mrb[0].mxu0 %v4896
  %v5116 = vpop.f32.mrb[0].mxu0
  %v5117 = vadd.f32 0.0, %v5116
  %v5118 = vpop.f32.mrb[0].mxu0
  %v5119 = vpop.f32.mrb[0].mxu0
  %v5120 = vadd.f32 0.0, %v5119
  %v5121 = vpop.f32.mrb[0].mxu0
  %5122 = vmatprep.mubr.bf16.mxu0 0
  %5123 = vmatmul.mubr.bf16.gmra.mrb[0].mxu0 %v4899
  %v5124 = vpop.f32.mrb[0].mxu0
  %v5125 = vadd.f32 0.0, %v5124
  %v5126 = vpop.f32.mrb[0].mxu0
  %v5127 = vpop.f32.mrb[0].mxu0
  %v5128 = vadd.f32 0.0, %v5127
  %v5129 = vpop.f32.mrb[0].mxu0
  %5130 = vmatprep.mubr.bf16.mxu0 0
  %5131 = vmatmul.mubr.bf16.gmra.mrb[0].mxu0 %v4902
  %v5132 = vpop.f32.mrb[0].mxu0
  %v5133 = vadd.f32 0.0, %v5132
  %v5134 = vpop.f32.mrb[0].mxu0
  %v5135 = vpop.f32.mrb[0].mxu0
  %v5136 = vadd.f32 0.0, %v5135
  %v5137 = vpop.f32.mrb[0].mxu0
  %5138 = vmatprep.mubr.bf16.mxu0 0
  %5139 = vmatmul.mubr.bf16.gmra.mrb[0].mxu0 %v4905
  %v5140 = vpop.f32.mrb[0].mxu0
  %v5141 = vadd.f32 0.0, %v5140
  %v5142 = vpop.f32.mrb[0].mxu0
  %v5143 = vpop.f32.mrb[0].mxu0
  %v5144 = vadd.f32 0.0, %v5143
  %v5145 = vpop.f32.mrb[0].mxu0
  %5146 = vmatprep.mubr.bf16.mxu0 0
  %5147 = vmatmul.mubr.bf16.gmra.mrb[0].mxu0 %v4908
  %v5148 = vpop.f32.mrb[0].mxu0
  %v5149 = vadd.f32 0.0, %v5148
  %v5150 = vpop.f32.mrb[0].mxu0
  %v5151 = vpop.f32.mrb[0].mxu0
  %v5152 = vadd.f32 0.0, %v5151
  %v5153 = vpop.f32.mrb[0].mxu0
  %5154 = vmatprep.mubr.bf16.mxu0 0
  %5155 = vmatmul.mubr.bf16.gmra.mrb[0].mxu0 %v4911
  %v5156 = vpop.f32.mrb[0].mxu0
  %v5157 = vadd.f32 0.0, %v5156
  %v5158 = vpop.f32.mrb[0].mxu0
  %v5159 = vpop.f32.mrb[0].mxu0
  %v5160 = vadd.f32 0.0, %v5159
  %v5161 = vpop.f32.mrb[0].mxu0
  %5162 = vmatprep.mubr.bf16.mxu0 0
  %5163 = vmatmul.mubr.bf16.gmra.mrb[0].mxu0 %v4914
  %v5164 = vpop.f32.mrb[0].mxu0
  %v5165 = vadd.f32 0.0, %v5164
  %v5166 = vpop.f32.mrb[0].mxu0
  %v5167 = vpop.f32.mrb[0].mxu0
  %v5168 = vadd.f32 0.0, %v5167
  %v5169 = vpop.f32.mrb[0].mxu0
  %5170 = vmatprep.mubr.bf16.mxu0 0
  %5171 = vmatmul.mubr.bf16.gmra.mrb[0].mxu0 %v4917
  %v5172 = vpop.f32.mrb[0].mxu0
  %v5173 = vadd.f32 0.0, %v5172
  %v5174 = vpop.f32.mrb[0].mxu0
  %v5175 = vpop.f32.mrb[0].mxu0
  %v5176 = vadd.f32 0.0, %v5175
  %v5177 = vpop.f32.mrb[0].mxu0
  %5178 = vmatprep.mubr.bf16.mxu0 0
  %5179 = vmatmul.mubr.bf16.gmra.mrb[0].mxu0 %v4920
  %v5180 = vpop.f32.mrb[0].mxu0
  %v5181 = vadd.f32 0.0, %v5180
  %v5182 = vpop.f32.mrb[0].mxu0
  %v5183 = vpop.f32.mrb[0].mxu0
  %v5184 = vadd.f32 0.0, %v5183
  %v5185 = vpop.f32.mrb[0].mxu0
  %5186 = vmatprep.mubr.bf16.mxu0 0
  %5187 = vmatmul.mubr.bf16.gmra.mrb[0].mxu0 %v4923
  %v5188 = vpop.f32.mrb[0].mxu0
  %v5189 = vadd.f32 0.0, %v5188
  %v5190 = vpop.f32.mrb[0].mxu0
  %v5191 = vpop.f32.mrb[0].mxu0
  %v5192 = vadd.f32 0.0, %v5191
  %v5193 = vpop.f32.mrb[0].mxu0
  %5194 = vmatprep.mubr.bf16.mxu0 0
  %5195 = vmatmul.mubr.bf16.gmra.mrb[0].mxu0 %v4926
  %v5196 = vpop.f32.mrb[0].mxu0
  %v5197 = vadd.f32 0.0, %v5196
  %v5198 = vpop.f32.mrb[0].mxu0
  %v5199 = vpop.f32.mrb[0].mxu0
  %v5200 = vadd.f32 0.0, %v5199
  %v5201 = vpop.f32.mrb[0].mxu0
  %5202 = vmatprep.mubr.bf16.mxu0 0
  %5203 = vmatmul.mubr.bf16.gmra.mrb[0].mxu0 %v4929
  %v5204 = vpop.f32.mrb[0].mxu0
  %v5205 = vadd.f32 0.0, %v5204
  %v5206 = vpop.f32.mrb[0].mxu0
  %v5207 = vpop.f32.mrb[0].mxu0
  %v5208 = vadd.f32 0.0, %v5207
  %v5209 = vpop.f32.mrb[0].mxu0
  %5210 = vmatprep.mubr.bf16.mxu0 0
  %5211 = vmatmul.mubr.bf16.gmra.mrb[0].mxu0 %v4932
  %v5212 = vpop.f32.mrb[0].mxu0
  %v5213 = vadd.f32 0.0, %v5212
  %v5214 = vpop.f32.mrb[0].mxu0
  %v5215 = vpop.f32.mrb[0].mxu0
  %v5216 = vadd.f32 0.0, %v5215
  %v5217 = vpop.f32.mrb[0].mxu0
  %5218 = vmatprep.mubr.bf16.mxu0 0
  %5219 = vmatmul.mubr.bf16.gmra.mrb[0].mxu0 %v4935
  %v5220 = vpop.f32.mrb[0].mxu0
  %v5221 = vadd.f32 0.0, %v5220
  %v5222 = vpop.f32.mrb[0].mxu0
  %v5223 = vpop.f32.mrb[0].mxu0
  %v5224 = vadd.f32 0.0, %v5223
  %v5225 = vpop.f32.mrb[0].mxu0
  %5226 = vmatprep.mubr.bf16.mxu0 0
  %5227 = vmatmul.mubr.bf16.gmra.mrb[0].mxu0 %v4938
  %v5228 = vpop.f32.mrb[0].mxu0
  %v5229 = vadd.f32 0.0, %v5228
  %v5230 = vpop.f32.mrb[0].mxu0
  %v5231 = vpop.f32.mrb[0].mxu0
  %v5232 = vadd.f32 0.0, %v5231
  %v5233 = vpop.f32.mrb[0].mxu0
  %5234 = vmatprep.mubr.bf16.mxu0 0
  %5235 = vmatmul.mubr.bf16.gmra.mrb[0].mxu0 %v4941
  %v5236 = vpop.f32.mrb[0].mxu0
  %v5237 = vadd.f32 0.0, %v5236
  %v5238 = vpop.f32.mrb[0].mxu0
  %v5239 = vpop.f32.mrb[0].mxu0
  %v5240 = vadd.f32 0.0, %v5239
  %v5241 = vpop.f32.mrb[0].mxu0
  %5242 = vmatprep.mubr.bf16.mxu0 0
  %5243 = vmatmul.mubr.bf16.gmra.mrb[0].mxu0 %v4944
  %v5244 = vpop.f32.mrb[0].mxu0
  %v5245 = vadd.f32 0.0, %v5244
  %v5246 = vpop.f32.mrb[0].mxu0
  %v5247 = vpop.f32.mrb[0].mxu0
  %v5248 = vadd.f32 0.0, %v5247
  %v5249 = vpop.f32.mrb[0].mxu0
  %5250 = vmatprep.mubr.bf16.mxu0 0
  %5251 = vmatmul.mubr.bf16.gmra.mrb[0].mxu0 %v4947
  %v5252 = vpop.f32.mrb[0].mxu0
  %v5253 = vadd.f32 0.0, %v5252
  %v5254 = vpop.f32.mrb[0].mxu0
  %v5255 = vpop.f32.mrb[0].mxu0
  %v5256 = vadd.f32 0.0, %v5255
  %v5257 = vpop.f32.mrb[0].mxu0
  %5258 = vmatprep.mubr.bf16.mxu0 0
  %5259 = vmatmul.mubr.bf16.gmra.mrb[0].mxu0 %v4950
  %v5260 = vpop.f32.mrb[0].mxu0
  %v5261 = vadd.f32 0.0, %v5260
  %v5262 = vpop.f32.mrb[0].mxu0
  %v5263 = vpop.f32.mrb[0].mxu0
  %v5264 = vadd.f32 0.0, %v5263
  %v5265 = vpop.f32.mrb[0].mxu0
  %5266 = vmatprep.mubr.bf16.mxu0 0
  %5267 = vmatmul.mubr.bf16.gmra.mrb[0].mxu0 %v4953
  %v5268 = vpop.f32.mrb[0].mxu0
  %v5269 = vadd.f32 0.0, %v5268
  %v5270 = vpop.f32.mrb[0].mxu0
  %v5271 = vpop.f32.mrb[0].mxu0
  %v5272 = vadd.f32 0.0, %v5271
  %v5273 = vpop.f32.mrb[0].mxu0
  %5274 = vmatprep.mubr.bf16.mxu0 0
  %5275 = vmatmul.mubr.bf16.gmra.mrb[0].mxu0 %v4956
  %v5276 = vpop.f32.mrb[0].mxu0
  %v5277 = vadd.f32 0.0, %v5276
  %v5278 = vpop.f32.mrb[0].mxu0
  %v5279 = vpop.f32.mrb[0].mxu0
  %v5280 = vadd.f32 0.0, %v5279
  %v5281 = vpop.f32.mrb[0].mxu0
  %5282 = vmatprep.mubr.bf16.mxu0 0
  %5283 = vmatmul.mubr.bf16.gmra.mrb[0].mxu0 %v4959
  %v5284 = vpop.f32.mrb[0].mxu0
  %v5285 = vadd.f32 0.0, %v5284
  %v5286 = vpop.f32.mrb[0].mxu0
  %v5287 = vpop.f32.mrb[0].mxu0
  %v5288 = vadd.f32 0.0, %v5287
  %v5289 = vpop.f32.mrb[0].mxu0
  %5290 = vmatprep.mubr.bf16.mxu0 0
  %5291 = vmatmul.mubr.bf16.gmra.mrb[0].mxu0 %v4962
  %v5292 = vpop.f32.mrb[0].mxu0
  %v5293 = vadd.f32 0.0, %v5292
  %v5294 = vpop.f32.mrb[0].mxu0
  %v5295 = vpop.f32.mrb[0].mxu0
  %v5296 = vadd.f32 0.0, %v5295
  %v5297 = vpop.f32.mrb[0].mxu0
  %5298 = vmatprep.mubr.bf16.mxu0 0
  %5299 = vmatmul.mubr.bf16.gmra.mrb[0].mxu0 %v4965
  %v5300 = vpop.f32.mrb[0].mxu0
  %v5301 = vadd.f32 0.0, %v5300
  %v5302 = vpop.f32.mrb[0].mxu0
  %v5303 = vpop.f32.mrb[0].mxu0
  %v5304 = vadd.f32 0.0, %v5303
  %v5305 = vpop.f32.mrb[0].mxu0
  %5306 = vmatprep.mubr.bf16.mxu0 0
  %5307 = vmatmul.mubr.bf16.gmra.mrb[0].mxu0 %v4968
  %v5308 = vpop.f32.mrb[0].mxu0
  %v5309 = vadd.f32 0.0, %v5308
  %v5310 = vpop.f32.mrb[0].mxu0
  %v5311 = vpop.f32.mrb[0].mxu0
  %v5312 = vadd.f32 0.0, %v5311
  %v5313 = vpop.f32.mrb[0].mxu0
  %5314 = vmatprep.mubr.bf16.mxu0 0
  %5315 = vmatmul.mubr.bf16.gmra.mrb[0].mxu0 %v4971
  %v5316 = vpop.f32.mrb[0].mxu0
  %v5317 = vadd.f32 0.0, %v5316
  %v5318 = vpop.f32.mrb[0].mxu0
  %v5319 = vpop.f32.mrb[0].mxu0
  %v5320 = vadd.f32 0.0, %v5319
  %v5321 = vpop.f32.mrb[0].mxu0
  %5322 = vmatprep.mubr.bf16.mxu0 0
  %5323 = vmatmul.mubr.bf16.gmra.mrb[0].mxu0 %v4974
  %v5324 = vpop.f32.mrb[0].mxu0
  %v5325 = vadd.f32 0.0, %v5324
  %v5326 = vpop.f32.mrb[0].mxu0
  %v5327 = vpop.f32.mrb[0].mxu0
  %v5328 = vadd.f32 0.0, %v5327
  %v5329 = vpop.f32.mrb[0].mxu0
  %5330 = vmatprep.mubr.bf16.mxu0 0
  %5331 = vmatmul.mubr.bf16.gmra.mrb[0].mxu0 %v4977
  %v5332 = vpop.f32.mrb[0].mxu0
  %v5333 = vadd.f32 0.0, %v5332
  %v5334 = vpop.f32.mrb[0].mxu0
  %v5335 = vpop.f32.mrb[0].mxu0
  %v5336 = vadd.f32 0.0, %v5335
  %v5337 = vpop.f32.mrb[0].mxu0
  %5338 = vmatprep.mubr.bf16.mxu0 0
  %5339 = vmatmul.mubr.bf16.gmra.mrb[0].mxu0 %v4980
  %v5340 = vpop.f32.mrb[0].mxu0
  %v5341 = vadd.f32 0.0, %v5340
  %v5342 = vpop.f32.mrb[0].mxu0
  %v5343 = vpop.f32.mrb[0].mxu0
  %v5344 = vadd.f32 0.0, %v5343
  %v5345 = vpop.f32.mrb[0].mxu0
  %5346 = vmatprep.mubr.bf16.mxu0 0
  %5347 = vmatmul.mubr.bf16.gmra.mrb[0].mxu0 %v4983
  %v5348 = vpop.f32.mrb[0].mxu0
  %v5349 = vadd.f32 0.0, %v5348
  %v5350 = vpop.f32.mrb[0].mxu0
  %v5351 = vpop.f32.mrb[0].mxu0
  %v5352 = vadd.f32 0.0, %v5351
  %v5353 = vpop.f32.mrb[0].mxu0
  %5354 = vmatprep.mubr.bf16.mxu0 0
  %5355 = vmatmul.mubr.bf16.gmra.mrb[0].mxu0 %v4986
  %v5356 = vpop.f32.mrb[0].mxu0
  %v5357 = vadd.f32 0.0, %v5356
  %v5358 = vpop.f32.mrb[0].mxu0
  %v5359 = vpop.f32.mrb[0].mxu0
  %v5360 = vadd.f32 0.0, %v5359
  %v5361 = vpop.f32.mrb[0].mxu0
  %5362 = vmatprep.mubr.bf16.mxu0 0
  %5363 = vmatmul.mubr.bf16.gmra.mrb[0].mxu0 %v4989
  %v5364 = vpop.f32.mrb[0].mxu0
  %v5365 = vadd.f32 0.0, %v5364
  %v5366 = vpop.f32.mrb[0].mxu0
  %v5367 = vpop.f32.mrb[0].mxu0
  %v5368 = vadd.f32 0.0, %v5367
  %v5369 = vpop.f32.mrb[0].mxu0
  %5370 = vdwg.mxu0
  %v5371 = vadd.f32 %v4468, %v5029
  %v5372 = vadd.f32 %v4469, %v5032
  %v5373 = vadd.f32 %v4470, %v5037
  %v5374 = vadd.f32 %v4471, %v5040
  %v5375 = vadd.f32 %v4472, %v5045
  %v5376 = vadd.f32 %v4473, %v5048
  %v5377 = vadd.f32 %v4474, %v5053
  %v5378 = vadd.f32 %v4475, %v5056
  %v5379 = vadd.f32 %v4476, %v5061
  %v5380 = vadd.f32 %v4477, %v5064
  %v5381 = vadd.f32 %v4478, %v5069
  %v5382 = vadd.f32 %v4479, %v5072
  %v5383 = vadd.f32 %v4480, %v5077
  %v5384 = vadd.f32 %v4481, %v5080
  %v5385 = vadd.f32 %v4482, %v5085
  %v5386 = vadd.f32 %v4483, %v5088
  %v5387 = vadd.f32 %v4484, %v5093
  %v5388 = vadd.f32 %v4485, %v5096
  %v5389 = vadd.f32 %v4486, %v5101
  %v5390 = vadd.f32 %v4487, %v5104
  %v5391 = vadd.f32 %v4488, %v5109
  %v5392 = vadd.f32 %v4489, %v5112
  %v5393 = vadd.f32 %v4490, %v5117
  %v5394 = vadd.f32 %v4491, %v5120
  %v5395 = vadd.f32 %v4492, %v5125
  %v5396 = vadd.f32 %v4493, %v5128
  %v5397 = vadd.f32 %v4494, %v5133
  %v5398 = vadd.f32 %v4495, %v5136
  %v5399 = vadd.f32 %v4496, %v5141
  %v5400 = vadd.f32 %v4497, %v5144
  %v5401 = vadd.f32 %v4498, %v5149
  %v5402 = vadd.f32 %v4499, %v5152
  %v5403 = vadd.f32 %v4500, %v5157
  %v5404 = vadd.f32 %v4501, %v5160
  %v5405 = vadd.f32 %v4502, %v5165
  %v5406 = vadd.f32 %v4503, %v5168
  %v5407 = vadd.f32 %v4504, %v5173
  %v5408 = vadd.f32 %v4505, %v5176
  %v5409 = vadd.f32 %v4506, %v5181
  %v5410 = vadd.f32 %v4507, %v5184
  %v5411 = vadd.f32 %v4508, %v5189
  %v5412 = vadd.f32 %v4509, %v5192
  %v5413 = vadd.f32 %v4510, %v5197
  %v5414 = vadd.f32 %v4511, %v5200
  %v5415 = vadd.f32 %v4512, %v5205
  %v5416 = vadd.f32 %v4513, %v5208
  %v5417 = vadd.f32 %v4514, %v5213
  %v5418 = vadd.f32 %v4515, %v5216
  %v5419 = vadd.f32 %v4516, %v5221
  %v5420 = vadd.f32 %v4517, %v5224
  %v5421 = vadd.f32 %v4518, %v5229
  %v5422 = vadd.f32 %v4519, %v5232
  %v5423 = vadd.f32 %v4520, %v5237
  %v5424 = vadd.f32 %v4521, %v5240
  %v5425 = vadd.f32 %v4522, %v5245
  %v5426 = vadd.f32 %v4523, %v5248
  %v5427 = vadd.f32 %v4524, %v5253
  %v5428 = vadd.f32 %v4525, %v5256
  %v5429 = vadd.f32 %v4526, %v5261
  %v5430 = vadd.f32 %v4527, %v5264
  %v5431 = vadd.f32 %v4528, %v5269
  %v5432 = vadd.f32 %v4529, %v5272
  %v5433 = vadd.f32 %v4530, %v5277
  %v5434 = vadd.f32 %v4531, %v5280
  %v5435 = vadd.f32 %v4532, %v5285
  %v5436 = vadd.f32 %v4533, %v5288
  %v5437 = vadd.f32 %v4534, %v5293
  %v5438 = vadd.f32 %v4535, %v5296
  %v5439 = vadd.f32 %v4536, %v5301
  %v5440 = vadd.f32 %v4537, %v5304
  %v5441 = vadd.f32 %v4538, %v5309
  %v5442 = vadd.f32 %v4539, %v5312
  %v5443 = vadd.f32 %v4540, %v5317
  %v5444 = vadd.f32 %v4541, %v5320
  %v5445 = vadd.f32 %v4542, %v5325
  %v5446 = vadd.f32 %v4543, %v5328
  %v5447 = vadd.f32 %v4544, %v5333
  %v5448 = vadd.f32 %v4545, %v5336
  %v5449 = vadd.f32 %v4546, %v5341
  %v5450 = vadd.f32 %v4547, %v5344
  %v5451 = vadd.f32 %v4548, %v5349
  %v5452 = vadd.f32 %v4549, %v5352
  %v5453 = vadd.f32 %v4550, %v5357
  %v5454 = vadd.f32 %v4551, %v5360
  %v5455 = vadd.f32 %v4552, %v5365
  %v5456 = vadd.f32 %v4553, %v5368
  %v5457 = vld [vmem:[%s0 + $0x14] sm:$0xf]
  %v5458 = vld [vmem:[%s0 + $0x18] sm:$0xf]
  %v5459 = vld [vmem:[%s0 + $0x1c] sm:$0xf]
  %v5460 = vld [vmem:[%s0 + $0x20] sm:$0xf]
  %v5461 = vld [vmem:[%s0 + $0x24] sm:$0xf]
  %v5462 = vld [vmem:[%s0 + $0x28] sm:$0xf]
  %v5463 = vld [vmem:[%s0 + $0x2c] sm:$0xf]
  %v5464 = vld [vmem:[%s0 + $0x30] sm:$0xf]
  %v5465 = vld [vmem:[%s0 + $0x34] sm:$0xf]
  %v5466 = vld [vmem:[%s0 + $0x38] sm:$0xf]
  %v5467 = vld [vmem:[%s0 + $0x3c] sm:$0xf]
  %v5468 = vld [vmem:[%s0 + $0x40] sm:$0xf]
  %v5469 = vld [vmem:[%s0 + $0x44] sm:$0xf]
  %v5470 = vld [vmem:[%s0 + $0x48] sm:$0xf]
  %v5471 = vld [vmem:[%s0 + $0x4c] sm:$0xf]
  %v5472 = vld [vmem:[%s0 + $0x50] sm:$0xf]
  %v5473 = vld [vmem:[%s0 + $0x54] sm:$0xf]
  %v5474 = vld [vmem:[%s0 + $0x58] sm:$0xf]
  %v5475 = vld [vmem:[%s0 + $0x5c] sm:$0xf]
  %v5476 = vld [vmem:[%s0 + $0x60] sm:$0xf]
  %v5477 = vld [vmem:[%s0 + $0x64] sm:$0xf]
  %v5478 = vld [vmem:[%s0 + $0x68] sm:$0xf]
  %v5479 = vld [vmem:[%s0 + $0x6c] sm:$0xf]
  %v5480 = vld [vmem:[%s0 + $0x70] sm:$0xf]
  %v5481 = vld [vmem:[%s0 + $0x74] sm:$0xf]
  %v5482 = vld [vmem:[%s0 + $0x78] sm:$0xf]
  %v5483 = vld [vmem:[%s0 + $0x7c] sm:$0xf]
  %v5484 = vld [vmem:[%s0 + $0x80] sm:$0xf]
  %v5485 = vld [vmem:[%s0 + $0x84] sm:$0xf]
  %v5486 = vld [vmem:[%s0 + $0x88] sm:$0xf]
  %v5487 = vld [vmem:[%s0 + $0x8c] sm:$0xf]
  %v5488 = vld [vmem:[%s0 + $0x90] sm:$0xf]
  %v5489 = vld [vmem:[%s0 + $0x94] sm:$0xf]
  %v5490 = vld [vmem:[%s0 + $0x98] sm:$0xf]
  %v5491 = vld [vmem:[%s0 + $0x9c] sm:$0xf]
  %v5492 = vld [vmem:[%s0 + $0xa0] sm:$0xf]
  %v5493 = vld [vmem:[%s0 + $0xa4] sm:$0xf]
  %v5494 = vld [vmem:[%s0 + $0xa8] sm:$0xf]
  %v5495 = vld [vmem:[%s0 + $0xac] sm:$0xf]
  %v5496 = vld [vmem:[%s0 + $0xb0] sm:$0xf]
  %v5497 = vld [vmem:[%s0 + $0xb4] sm:$0xf]
  %v5498 = vld [vmem:[%s0 + $0xb8] sm:$0xf]
  %v5499 = vld [vmem:[%s0 + $0xbc] sm:$0xf]
  %v5500 = vld [vmem:[%s0 + $0xc0] sm:$0xf]
  %v5501 = vld [vmem:[%s0 + $0xc4] sm:$0xf]
  %v5502 = vld [vmem:[%s0 + $0xc8] sm:$0xf]
  %v5503 = vld [vmem:[%s0 + $0xcc] sm:$0xf]
  %v5504 = vld [vmem:[%s0 + $0xd0] sm:$0xf]
  %v5505 = vld [vmem:[%s0 + $0xd4] sm:$0xf]
  %v5506 = vld [vmem:[%s0 + $0xd8] sm:$0xf]
  %v5507 = vld [vmem:[%s0 + $0xdc] sm:$0xf]
  %v5508 = vld [vmem:[%s0 + $0xe0] sm:$0xf]
  %v5509 = vld [vmem:[%s0 + $0xe4] sm:$0xf]
  %v5510 = vld [vmem:[%s0 + $0xe8] sm:$0xf]
  %v5511 = vld [vmem:[%s0 + $0xec] sm:$0xf]
  %v5512 = vld [vmem:[%s0 + $0xf0] sm:$0xf]
  %v5513 = vld [vmem:[%s0 + $0xf4] sm:$0xf]
  %v5514 = vld [vmem:[%s0 + $0xf8] sm:$0xf]
  %v5515 = vld [vmem:[%s0 + $0xfc] sm:$0xf]
  %v5516 = vld [vmem:[%s0 + $0x100] sm:$0xf]
  %v5517 = vld [vmem:[%s0 + $0x104] sm:$0xf]
  %v5518 = vld [vmem:[%s0 + $0x108] sm:$0xf]
  %v5519 = vld [vmem:[%s0 + $0x10c] sm:$0xf]
  %v5520 = vld [vmem:[%s0 + $0x110] sm:$0xf]
  %v5521 = vld [vmem:[%s0 + $0x114] sm:$0xf]
  %v5522 = vld [vmem:[%s0 + $0x118] sm:$0xf]
  %v5523 = vld [vmem:[%s0 + $0x11c] sm:$0xf]
  %v5524 = vld [vmem:[%s0 + $0x120] sm:$0xf]
  %v5525 = vld [vmem:[%s0 + $0x124] sm:$0xf]
  %v5526 = vld [vmem:[%s0 + $0x128] sm:$0xf]
  %v5527 = vld [vmem:[%s0 + $0x12c] sm:$0xf]
  %v5528 = vld [vmem:[%s0 + $0x130] sm:$0xf]
  %v5529 = vld [vmem:[%s0 + $0x134] sm:$0xf]
  %v5530 = vld [vmem:[%s0 + $0x138] sm:$0xf]
  %v5531 = vld [vmem:[%s0 + $0x13c] sm:$0xf]
  %v5532 = vld [vmem:[%s0 + $0x140] sm:$0xf]
  %v5533 = vld [vmem:[%s0 + $0x144] sm:$0xf]
  %v5534 = vld [vmem:[%s0 + $0x148] sm:$0xf]
  %v5535 = vld [vmem:[%s0 + $0x14c] sm:$0xf]
  %v5536 = vld [vmem:[%s0 + $0x150] sm:$0xf]
  %v5537 = vld [vmem:[%s0 + $0x154] sm:$0xf]
  %v5538 = vld [vmem:[%s0 + $0x158] sm:$0xf]
  %v5539 = vld [vmem:[%s0 + $0x15c] sm:$0xf]
  %v5540 = vld [vmem:[%s0 + $0x160] sm:$0xf]
  %v5541 = vld [vmem:[%s0 + $0x164] sm:$0xf]
  %v5542 = vld [vmem:[%s0 + $0x168] sm:$0x7]
  %s5543 = scalar_lea.vmem %s1, 12
  %v5544 = vld [vmem:[%s5543] sm:$0x3]
  %v5631 = vunpack.c.l.b16 %v5457
  %v5632 = vunpack.c.l.b16 %v5458
  %v5633 = vunpack.c.l.b16 %v5459
  %v5634 = vunpack.c.l.b16 %v5460
  %v5635 = vunpack.c.l.b16 %v5461
  %v5636 = vunpack.c.l.b16 %v5462
  %v5637 = vunpack.c.l.b16 %v5463
  %v5638 = vunpack.c.l.b16 %v5464
  %v5639 = vunpack.c.l.b16 %v5465
  %v5640 = vunpack.c.l.b16 %v5466
  %v5641 = vunpack.c.l.b16 %v5467
  %v5642 = vunpack.c.l.b16 %v5468
  %v5643 = vunpack.c.l.b16 %v5469
  %v5644 = vunpack.c.l.b16 %v5470
  %v5645 = vunpack.c.l.b16 %v5471
  %v5646 = vunpack.c.l.b16 %v5472
  %v5647 = vunpack.c.l.b16 %v5473
  %v5648 = vunpack.c.l.b16 %v5474
  %v5649 = vunpack.c.l.b16 %v5475
  %v5650 = vunpack.c.l.b16 %v5476
  %v5651 = vunpack.c.l.b16 %v5477
  %v5652 = vunpack.c.l.b16 %v5478
  %v5653 = vunpack.c.l.b16 %v5479
  %v5654 = vunpack.c.l.b16 %v5480
  %v5655 = vunpack.c.l.b16 %v5481
  %v5656 = vunpack.c.l.b16 %v5482
  %v5657 = vunpack.c.l.b16 %v5483
  %v5658 = vunpack.c.l.b16 %v5484
  %v5659 = vunpack.c.l.b16 %v5485
  %v5660 = vunpack.c.l.b16 %v5486
  %v5661 = vunpack.c.l.b16 %v5487
  %v5662 = vunpack.c.l.b16 %v5488
  %v5663 = vunpack.c.l.b16 %v5489
  %v5664 = vunpack.c.l.b16 %v5490
  %v5665 = vunpack.c.l.b16 %v5491
  %v5666 = vunpack.c.l.b16 %v5492
  %v5667 = vunpack.c.l.b16 %v5493
  %v5668 = vunpack.c.l.b16 %v5494
  %v5669 = vunpack.c.l.b16 %v5495
  %v5670 = vunpack.c.l.b16 %v5496
  %v5671 = vunpack.c.l.b16 %v5497
  %v5672 = vunpack.c.l.b16 %v5498
  %v5673 = vunpack.c.l.b16 %v5499
  %v5674 = vunpack.c.l.b16 %v5500
  %v5675 = vunpack.c.l.b16 %v5501
  %v5676 = vunpack.c.l.b16 %v5502
  %v5677 = vunpack.c.l.b16 %v5503
  %v5678 = vunpack.c.l.b16 %v5504
  %v5679 = vunpack.c.l.b16 %v5505
  %v5680 = vunpack.c.l.b16 %v5506
  %v5681 = vunpack.c.l.b16 %v5507
  %v5682 = vunpack.c.l.b16 %v5508
  %v5683 = vunpack.c.l.b16 %v5509
  %v5684 = vunpack.c.l.b16 %v5510
  %v5685 = vunpack.c.l.b16 %v5511
  %v5686 = vunpack.c.l.b16 %v5512
  %v5687 = vunpack.c.l.b16 %v5513
  %v5688 = vunpack.c.l.b16 %v5514
  %v5689 = vunpack.c.l.b16 %v5515
  %v5690 = vunpack.c.l.b16 %v5516
  %v5691 = vunpack.c.l.b16 %v5517
  %v5692 = vunpack.c.l.b16 %v5518
  %v5693 = vunpack.c.l.b16 %v5519
  %v5694 = vunpack.c.l.b16 %v5520
  %v5695 = vunpack.c.l.b16 %v5521
  %v5696 = vunpack.c.l.b16 %v5522
  %v5697 = vunpack.c.l.b16 %v5523
  %v5698 = vunpack.c.l.b16 %v5524
  %v5699 = vunpack.c.l.b16 %v5525
  %v5700 = vunpack.c.l.b16 %v5526
  %v5701 = vunpack.c.l.b16 %v5527
  %v5702 = vunpack.c.l.b16 %v5528
  %v5703 = vunpack.c.l.b16 %v5529
  %v5704 = vunpack.c.l.b16 %v5530
  %v5705 = vunpack.c.l.b16 %v5531
  %v5706 = vunpack.c.l.b16 %v5532
  %v5707 = vunpack.c.l.b16 %v5533
  %v5708 = vunpack.c.l.b16 %v5534
  %v5709 = vunpack.c.l.b16 %v5535
  %v5710 = vunpack.c.l.b16 %v5536
  %v5711 = vunpack.c.l.b16 %v5537
  %v5712 = vunpack.c.l.b16 %v5538
  %v5713 = vunpack.c.l.b16 %v5539
  %v5714 = vunpack.c.l.b16 %v5540
  %v5715 = vunpack.c.l.b16 %v5541
  %v5716 = vunpack.c.l.b16 %v5542
  %v5717 = vpack.c.b16 %v5632, %v5631
  %v5718 = vpack.c.b16 %v5634, %v5633
  %v5719 = vpack.c.b16 %v5636, %v5635
  %v5720 = vpack.c.b16 %v5638, %v5637
  %v5721 = vpack.c.b16 %v5640, %v5639
  %v5722 = vpack.c.b16 %v5642, %v5641
  %v5723 = vpack.c.b16 %v5644, %v5643
  %v5724 = vpack.c.b16 %v5646, %v5645
  %v5725 = vpack.c.b16 %v5648, %v5647
  %v5726 = vpack.c.b16 %v5650, %v5649
  %v5727 = vpack.c.b16 %v5652, %v5651
  %v5728 = vpack.c.b16 %v5654, %v5653
  %v5729 = vpack.c.b16 %v5656, %v5655
  %v5730 = vpack.c.b16 %v5658, %v5657
  %v5731 = vpack.c.b16 %v5660, %v5659
  %v5732 = vpack.c.b16 %v5662, %v5661
  %v5733 = vpack.c.b16 %v5664, %v5663
  %v5734 = vpack.c.b16 %v5666, %v5665
  %v5735 = vpack.c.b16 %v5668, %v5667
  %v5736 = vpack.c.b16 %v5670, %v5669
  %v5737 = vpack.c.b16 %v5672, %v5671
  %v5738 = vpack.c.b16 %v5674, %v5673
  %v5739 = vpack.c.b16 %v5676, %v5675
  %v5740 = vpack.c.b16 %v5678, %v5677
  %v5741 = vpack.c.b16 %v5680, %v5679
  %v5742 = vpack.c.b16 %v5682, %v5681
  %v5743 = vpack.c.b16 %v5684, %v5683
  %v5744 = vpack.c.b16 %v5686, %v5685
  %v5745 = vpack.c.b16 %v5688, %v5687
  %v5746 = vpack.c.b16 %v5690, %v5689
  %v5747 = vpack.c.b16 %v5692, %v5691
  %v5748 = vpack.c.b16 %v5694, %v5693
  %v5749 = vpack.c.b16 %v5696, %v5695
  %v5750 = vpack.c.b16 %v5698, %v5697
  %v5751 = vpack.c.b16 %v5700, %v5699
  %v5752 = vpack.c.b16 %v5702, %v5701
  %v5753 = vpack.c.b16 %v5704, %v5703
  %v5754 = vpack.c.b16 %v5706, %v5705
  %v5755 = vpack.c.b16 %v5708, %v5707
  %v5756 = vpack.c.b16 %v5710, %v5709
  %v5757 = vpack.c.b16 %v5712, %v5711
  %v5758 = vpack.c.b16 %v5714, %v5713
  %v5759 = vpack.c.b16 %v5716, %v5715
  %v5761 = vshrl.u32 %v5717, 16
  %v5763 = vshll.u32 %v5717, 16
  %v5765 = vrot.slane %v5763, 1
  %v5766 = vor.u32 %v5761, %v5765
  %v5768 = vshll.u32 %v5718, 16
  %v5770 = vrot.slane %v5768, 1
  %v5771 = vsel %vm4560, %v5766, %v5770
  %v5772 = vshrl.u32 %v5718, 16
  %v5774 = vor.u32 %v5772, %v5770
  %v5776 = vshll.u32 %v5719, 16
  %v5778 = vrot.slane %v5776, 1
  %v5779 = vsel %vm4560, %v5774, %v5778
  %v5780 = vshrl.u32 %v5719, 16
  %v5782 = vor.u32 %v5780, %v5778
  %v5784 = vshll.u32 %v5720, 16
  %v5786 = vrot.slane %v5784, 1
  %v5787 = vsel %vm4560, %v5782, %v5786
  %v5788 = vshrl.u32 %v5720, 16
  %v5790 = vor.u32 %v5788, %v5786
  %v5792 = vshll.u32 %v5721, 16
  %v5794 = vrot.slane %v5792, 1
  %v5795 = vsel %vm4560, %v5790, %v5794
  %v5796 = vshrl.u32 %v5721, 16
  %v5798 = vor.u32 %v5796, %v5794
  %v5800 = vshll.u32 %v5722, 16
  %v5802 = vrot.slane %v5800, 1
  %v5803 = vsel %vm4560, %v5798, %v5802
  %v5804 = vshrl.u32 %v5722, 16
  %v5806 = vor.u32 %v5804, %v5802
  %v5808 = vshll.u32 %v5723, 16
  %v5810 = vrot.slane %v5808, 1
  %v5811 = vsel %vm4560, %v5806, %v5810
  %v5812 = vshrl.u32 %v5723, 16
  %v5814 = vor.u32 %v5812, %v5810
  %v5816 = vshll.u32 %v5724, 16
  %v5818 = vrot.slane %v5816, 1
  %v5819 = vsel %vm4560, %v5814, %v5818
  %v5820 = vshrl.u32 %v5724, 16
  %v5822 = vor.u32 %v5820, %v5818
  %v5824 = vshll.u32 %v5725, 16
  %v5826 = vrot.slane %v5824, 1
  %v5827 = vsel %vm4560, %v5822, %v5826
  %v5828 = vshrl.u32 %v5725, 16
  %v5830 = vor.u32 %v5828, %v5826
  %v5832 = vshll.u32 %v5726, 16
  %v5834 = vrot.slane %v5832, 1
  %v5835 = vsel %vm4560, %v5830, %v5834
  %v5836 = vshrl.u32 %v5726, 16
  %v5838 = vor.u32 %v5836, %v5834
  %v5840 = vshll.u32 %v5727, 16
  %v5842 = vrot.slane %v5840, 1
  %v5843 = vsel %vm4560, %v5838, %v5842
  %v5844 = vshrl.u32 %v5727, 16
  %v5846 = vor.u32 %v5844, %v5842
  %v5848 = vshll.u32 %v5728, 16
  %v5850 = vrot.slane %v5848, 1
  %v5851 = vsel %vm4560, %v5846, %v5850
  %v5852 = vshrl.u32 %v5728, 16
  %v5854 = vor.u32 %v5852, %v5850
  %v5856 = vshll.u32 %v5729, 16
  %v5858 = vrot.slane %v5856, 1
  %v5859 = vsel %vm4560, %v5854, %v5858
  %v5860 = vshrl.u32 %v5729, 16
  %v5862 = vor.u32 %v5860, %v5858
  %v5864 = vshll.u32 %v5730, 16
  %v5866 = vrot.slane %v5864, 1
  %v5867 = vsel %vm4560, %v5862, %v5866
  %v5868 = vshrl.u32 %v5730, 16
  %v5870 = vor.u32 %v5868, %v5866
  %v5872 = vshll.u32 %v5731, 16
  %v5874 = vrot.slane %v5872, 1
  %v5875 = vsel %vm4560, %v5870, %v5874
  %v5876 = vshrl.u32 %v5731, 16
  %v5878 = vor.u32 %v5876, %v5874
  %v5880 = vshll.u32 %v5732, 16
  %v5882 = vrot.slane %v5880, 1
  %v5883 = vsel %vm4560, %v5878, %v5882
  %v5884 = vshrl.u32 %v5732, 16
  %v5886 = vor.u32 %v5884, %v5882
  %v5888 = vshll.u32 %v5733, 16
  %v5890 = vrot.slane %v5888, 1
  %v5891 = vsel %vm4560, %v5886, %v5890
  %v5892 = vshrl.u32 %v5733, 16
  %v5894 = vor.u32 %v5892, %v5890
  %v5896 = vshll.u32 %v5734, 16
  %v5898 = vrot.slane %v5896, 1
  %v5899 = vsel %vm4560, %v5894, %v5898
  %v5900 = vshrl.u32 %v5734, 16
  %v5902 = vor.u32 %v5900, %v5898
  %v5904 = vshll.u32 %v5735, 16
  %v5906 = vrot.slane %v5904, 1
  %v5907 = vsel %vm4560, %v5902, %v5906
  %v5908 = vshrl.u32 %v5735, 16
  %v5910 = vor.u32 %v5908, %v5906
  %v5912 = vshll.u32 %v5736, 16
  %v5914 = vrot.slane %v5912, 1
  %v5915 = vsel %vm4560, %v5910, %v5914
  %v5916 = vshrl.u32 %v5736, 16
  %v5918 = vor.u32 %v5916, %v5914
  %v5920 = vshll.u32 %v5737, 16
  %v5922 = vrot.slane %v5920, 1
  %v5923 = vsel %vm4560, %v5918, %v5922
  %v5924 = vshrl.u32 %v5737, 16
  %v5926 = vor.u32 %v5924, %v5922
  %v5928 = vshll.u32 %v5738, 16
  %v5930 = vrot.slane %v5928, 1
  %v5931 = vsel %vm4560, %v5926, %v5930
  %v5932 = vshrl.u32 %v5738, 16
  %v5934 = vor.u32 %v5932, %v5930
  %v5936 = vshll.u32 %v5739, 16
  %v5938 = vrot.slane %v5936, 1
  %v5939 = vsel %vm4560, %v5934, %v5938
  %v5940 = vshrl.u32 %v5739, 16
  %v5942 = vor.u32 %v5940, %v5938
  %v5944 = vshll.u32 %v5740, 16
  %v5946 = vrot.slane %v5944, 1
  %v5947 = vsel %vm4560, %v5942, %v5946
  %v5948 = vshrl.u32 %v5740, 16
  %v5950 = vor.u32 %v5948, %v5946
  %v5952 = vshll.u32 %v5741, 16
  %v5954 = vrot.slane %v5952, 1
  %v5955 = vsel %vm4560, %v5950, %v5954
  %v5956 = vshrl.u32 %v5741, 16
  %v5958 = vor.u32 %v5956, %v5954
  %v5960 = vshll.u32 %v5742, 16
  %v5962 = vrot.slane %v5960, 1
  %v5963 = vsel %vm4560, %v5958, %v5962
  %v5964 = vshrl.u32 %v5742, 16
  %v5966 = vor.u32 %v5964, %v5962
  %v5968 = vshll.u32 %v5743, 16
  %v5970 = vrot.slane %v5968, 1
  %v5971 = vsel %vm4560, %v5966, %v5970
  %v5972 = vshrl.u32 %v5743, 16
  %v5974 = vor.u32 %v5972, %v5970
  %v5976 = vshll.u32 %v5744, 16
  %v5978 = vrot.slane %v5976, 1
  %v5979 = vsel %vm4560, %v5974, %v5978
  %v5980 = vshrl.u32 %v5744, 16
  %v5982 = vor.u32 %v5980, %v5978
  %v5984 = vshll.u32 %v5745, 16
  %v5986 = vrot.slane %v5984, 1
  %v5987 = vsel %vm4560, %v5982, %v5986
  %v5988 = vshrl.u32 %v5745, 16
  %v5990 = vor.u32 %v5988, %v5986
  %v5992 = vshll.u32 %v5746, 16
  %v5994 = vrot.slane %v5992, 1
  %v5995 = vsel %vm4560, %v5990, %v5994
  %v5996 = vshrl.u32 %v5746, 16
  %v5998 = vor.u32 %v5996, %v5994
  %v6000 = vshll.u32 %v5747, 16
  %v6002 = vrot.slane %v6000, 1
  %v6003 = vsel %vm4560, %v5998, %v6002
  %v6004 = vshrl.u32 %v5747, 16
  %v6006 = vor.u32 %v6004, %v6002
  %v6008 = vshll.u32 %v5748, 16
  %v6010 = vrot.slane %v6008, 1
  %v6011 = vsel %vm4560, %v6006, %v6010
  %v6012 = vshrl.u32 %v5748, 16
  %v6014 = vor.u32 %v6012, %v6010
  %v6016 = vshll.u32 %v5749, 16
  %v6018 = vrot.slane %v6016, 1
  %v6019 = vsel %vm4560, %v6014, %v6018
  %v6020 = vshrl.u32 %v5749, 16
  %v6022 = vor.u32 %v6020, %v6018
  %v6024 = vshll.u32 %v5750, 16
  %v6026 = vrot.slane %v6024, 1
  %v6027 = vsel %vm4560, %v6022, %v6026
  %v6028 = vshrl.u32 %v5750, 16
  %v6030 = vor.u32 %v6028, %v6026
  %v6032 = vshll.u32 %v5751, 16
  %v6034 = vrot.slane %v6032, 1
  %v6035 = vsel %vm4560, %v6030, %v6034
  %v6036 = vshrl.u32 %v5751, 16
  %v6038 = vor.u32 %v6036, %v6034
  %v6040 = vshll.u32 %v5752, 16
  %v6042 = vrot.slane %v6040, 1
  %v6043 = vsel %vm4560, %v6038, %v6042
  %v6044 = vshrl.u32 %v5752, 16
  %v6046 = vor.u32 %v6044, %v6042
  %v6048 = vshll.u32 %v5753, 16
  %v6050 = vrot.slane %v6048, 1
  %v6051 = vsel %vm4560, %v6046, %v6050
  %v6052 = vshrl.u32 %v5753, 16
  %v6054 = vor.u32 %v6052, %v6050
  %v6056 = vshll.u32 %v5754, 16
  %v6058 = vrot.slane %v6056, 1
  %v6059 = vsel %vm4560, %v6054, %v6058
  %v6060 = vshrl.u32 %v5754, 16
  %v6062 = vor.u32 %v6060, %v6058
  %v6064 = vshll.u32 %v5755, 16
  %v6066 = vrot.slane %v6064, 1
  %v6067 = vsel %vm4560, %v6062, %v6066
  %v6068 = vshrl.u32 %v5755, 16
  %v6070 = vor.u32 %v6068, %v6066
  %v6072 = vshll.u32 %v5756, 16
  %v6074 = vrot.slane %v6072, 1
  %v6075 = vsel %vm4560, %v6070, %v6074
  %v6076 = vshrl.u32 %v5756, 16
  %v6078 = vor.u32 %v6076, %v6074
  %v6080 = vshll.u32 %v5757, 16
  %v6082 = vrot.slane %v6080, 1
  %v6083 = vsel %vm4560, %v6078, %v6082
  %v6084 = vshrl.u32 %v5757, 16
  %v6086 = vor.u32 %v6084, %v6082
  %v6088 = vshll.u32 %v5758, 16
  %v6090 = vrot.slane %v6088, 1
  %v6091 = vsel %vm4560, %v6086, %v6090
  %v6092 = vshrl.u32 %v5758, 16
  %v6094 = vor.u32 %v6092, %v6090
  %v6096 = vshll.u32 %v5759, 16
  %v6098 = vrot.slane %v6096, 1
  %v6099 = vsel %vm4560, %v6094, %v6098
  %v6100 = vshrl.u32 %v5759, 16
  %v6102 = vor.u32 %v6100, %v6098
  %v6104 = vsel %vm415, %v5771, 0
  %v6107 = vsel %vm415, %v5779, 0
  %v6110 = vsel %vm415, %v5787, 0
  %v6113 = vsel %vm415, %v5795, 0
  %v6116 = vsel %vm415, %v5803, 0
  %v6119 = vsel %vm415, %v5811, 0
  %v6122 = vsel %vm415, %v5819, 0
  %v6125 = vsel %vm415, %v5827, 0
  %v6128 = vsel %vm415, %v5835, 0
  %v6131 = vsel %vm415, %v5843, 0
  %v6134 = vsel %vm415, %v5851, 0
  %v6137 = vsel %vm415, %v5859, 0
  %v6140 = vsel %vm415, %v5867, 0
  %v6143 = vsel %vm415, %v5875, 0
  %v6146 = vsel %vm415, %v5883, 0
  %v6149 = vsel %vm415, %v5891, 0
  %v6152 = vsel %vm415, %v5899, 0
  %v6155 = vsel %vm415, %v5907, 0
  %v6158 = vsel %vm415, %v5915, 0
  %v6161 = vsel %vm415, %v5923, 0
  %v6164 = vsel %vm415, %v5931, 0
  %v6167 = vsel %vm415, %v5939, 0
  %v6170 = vsel %vm415, %v5947, 0
  %v6173 = vsel %vm415, %v5955, 0
  %v6176 = vsel %vm415, %v5963, 0
  %v6179 = vsel %vm415, %v5971, 0
  %v6182 = vsel %vm415, %v5979, 0
  %v6185 = vsel %vm415, %v5987, 0
  %v6188 = vsel %vm415, %v5995, 0
  %v6191 = vsel %vm415, %v6003, 0
  %v6194 = vsel %vm415, %v6011, 0
  %v6197 = vsel %vm415, %v6019, 0
  %v6200 = vsel %vm415, %v6027, 0
  %v6203 = vsel %vm415, %v6035, 0
  %v6206 = vsel %vm415, %v6043, 0
  %v6209 = vsel %vm415, %v6051, 0
  %v6212 = vsel %vm415, %v6059, 0
  %v6215 = vsel %vm415, %v6067, 0
  %v6218 = vsel %vm415, %v6075, 0
  %v6221 = vsel %vm415, %v6083, 0
  %v6224 = vsel %vm415, %v6091, 0
  %v6227 = vsel %vm415, %v6099, 0
  %v6230 = vsel %vm415, %v6102, 0
  %v6233 = vsel %vm545, %v5544, 0
  %6235 = vmatprep.subr.bf16.mxu0 0
  %6236 = vmatpush1.bf16.msra.mxu0 %v6233
  %6237 = vmatprep.subr.bf16.mxu0 0
  %6238 = vmatpush1.bf16.msra.mxu0 0
  %6239 = vmatprep.subr.bf16.mxu0 0
  %6240 = vmatpush1.bf16.msra.mxu0 0
  %6241 = vmatprep.subr.bf16.mxu0 0
  %6242 = vmatpush1.bf16.msra.mxu0 0
  %6243 = vmatprep.subr.bf16.mxu0 0
  %6244 = vmatpush1.bf16.msra.mxu0 0
  %6245 = vmatprep.subr.bf16.mxu0 0
  %6246 = vmatpush1.bf16.msra.mxu0 0
  %6247 = vmatprep.subr.bf16.mxu0 0
  %6248 = vmatpush1.bf16.msra.mxu0 0
  %6249 = vmatprep.subr.bf16.mxu0 0
  %6250 = vmatpush1.bf16.msra.mxu0 0
  %6251 = vmatprep.subr.bf16.mxu0 0
  %6252 = vmatpush1.bf16.msra.mxu0 0
  %6253 = vmatprep.subr.bf16.mxu0 0
  %6254 = vmatpush1.bf16.msra.mxu0 0
  %6255 = vmatprep.subr.bf16.mxu0 0
  %6256 = vmatpush1.bf16.msra.mxu0 0
  %6257 = vmatprep.subr.bf16.mxu0 0
  %6258 = vmatpush1.bf16.msra.mxu0 0
  %6259 = vmatprep.subr.bf16.mxu0 0
  %6260 = vmatpush1.bf16.msra.mxu0 0
  %6261 = vmatprep.subr.bf16.mxu0 0
  %6262 = vmatpush1.bf16.msra.mxu0 0
  %6263 = vmatprep.subr.bf16.mxu0 0
  %6264 = vmatpush1.bf16.msra.mxu0 0
  %6265 = vmatprep.subr.bf16.mxu0 0
  %6266 = vmatpush1.bf16.msra.mxu0 0
  %6267 = vmatprep.mubr.bf16.mxu0 0
  %6268 = vmatmul.mubr.bf16.gmra.mrb[0].mxu0 %v6104
  %v6269 = vpop.f32.mrb[0].mxu0
  %v6270 = vadd.f32 0.0, %v6269
  %v6271 = vpop.f32.mrb[0].mxu0
  %v6272 = vpop.f32.mrb[0].mxu0
  %v6273 = vadd.f32 0.0, %v6272
  %v6274 = vpop.f32.mrb[0].mxu0
  %6275 = vmatprep.mubr.bf16.mxu0 0
  %6276 = vmatmul.mubr.bf16.gmra.mrb[0].mxu0 %v6107
  %v6277 = vpop.f32.mrb[0].mxu0
  %v6278 = vadd.f32 0.0, %v6277
  %v6279 = vpop.f32.mrb[0].mxu0
  %v6280 = vpop.f32.mrb[0].mxu0
  %v6281 = vadd.f32 0.0, %v6280
  %v6282 = vpop.f32.mrb[0].mxu0
  %6283 = vmatprep.mubr.bf16.mxu0 0
  %6284 = vmatmul.mubr.bf16.gmra.mrb[0].mxu0 %v6110
  %v6285 = vpop.f32.mrb[0].mxu0
  %v6286 = vadd.f32 0.0, %v6285
  %v6287 = vpop.f32.mrb[0].mxu0
  %v6288 = vpop.f32.mrb[0].mxu0
  %v6289 = vadd.f32 0.0, %v6288
  %v6290 = vpop.f32.mrb[0].mxu0
  %6291 = vmatprep.mubr.bf16.mxu0 0
  %6292 = vmatmul.mubr.bf16.gmra.mrb[0].mxu0 %v6113
  %v6293 = vpop.f32.mrb[0].mxu0
  %v6294 = vadd.f32 0.0, %v6293
  %v6295 = vpop.f32.mrb[0].mxu0
  %v6296 = vpop.f32.mrb[0].mxu0
  %v6297 = vadd.f32 0.0, %v6296
  %v6298 = vpop.f32.mrb[0].mxu0
  %6299 = vmatprep.mubr.bf16.mxu0 0
  %6300 = vmatmul.mubr.bf16.gmra.mrb[0].mxu0 %v6116
  %v6301 = vpop.f32.mrb[0].mxu0
  %v6302 = vadd.f32 0.0, %v6301
  %v6303 = vpop.f32.mrb[0].mxu0
  %v6304 = vpop.f32.mrb[0].mxu0
  %v6305 = vadd.f32 0.0, %v6304
  %v6306 = vpop.f32.mrb[0].mxu0
  %6307 = vmatprep.mubr.bf16.mxu0 0
  %6308 = vmatmul.mubr.bf16.gmra.mrb[0].mxu0 %v6119
  %v6309 = vpop.f32.mrb[0].mxu0
  %v6310 = vadd.f32 0.0, %v6309
  %v6311 = vpop.f32.mrb[0].mxu0
  %v6312 = vpop.f32.mrb[0].mxu0
  %v6313 = vadd.f32 0.0, %v6312
  %v6314 = vpop.f32.mrb[0].mxu0
  %6315 = vmatprep.mubr.bf16.mxu0 0
  %6316 = vmatmul.mubr.bf16.gmra.mrb[0].mxu0 %v6122
  %v6317 = vpop.f32.mrb[0].mxu0
  %v6318 = vadd.f32 0.0, %v6317
  %v6319 = vpop.f32.mrb[0].mxu0
  %v6320 = vpop.f32.mrb[0].mxu0
  %v6321 = vadd.f32 0.0, %v6320
  %v6322 = vpop.f32.mrb[0].mxu0
  %6323 = vmatprep.mubr.bf16.mxu0 0
  %6324 = vmatmul.mubr.bf16.gmra.mrb[0].mxu0 %v6125
  %v6325 = vpop.f32.mrb[0].mxu0
  %v6326 = vadd.f32 0.0, %v6325
  %v6327 = vpop.f32.mrb[0].mxu0
  %v6328 = vpop.f32.mrb[0].mxu0
  %v6329 = vadd.f32 0.0, %v6328
  %v6330 = vpop.f32.mrb[0].mxu0
  %6331 = vmatprep.mubr.bf16.mxu0 0
  %6332 = vmatmul.mubr.bf16.gmra.mrb[0].mxu0 %v6128
  %v6333 = vpop.f32.mrb[0].mxu0
  %v6334 = vadd.f32 0.0, %v6333
  %v6335 = vpop.f32.mrb[0].mxu0
  %v6336 = vpop.f32.mrb[0].mxu0
  %v6337 = vadd.f32 0.0, %v6336
  %v6338 = vpop.f32.mrb[0].mxu0
  %6339 = vmatprep.mubr.bf16.mxu0 0
  %6340 = vmatmul.mubr.bf16.gmra.mrb[0].mxu0 %v6131
  %v6341 = vpop.f32.mrb[0].mxu0
  %v6342 = vadd.f32 0.0, %v6341
  %v6343 = vpop.f32.mrb[0].mxu0
  %v6344 = vpop.f32.mrb[0].mxu0
  %v6345 = vadd.f32 0.0, %v6344
  %v6346 = vpop.f32.mrb[0].mxu0
  %6347 = vmatprep.mubr.bf16.mxu0 0
  %6348 = vmatmul.mubr.bf16.gmra.mrb[0].mxu0 %v6134
  %v6349 = vpop.f32.mrb[0].mxu0
  %v6350 = vadd.f32 0.0, %v6349
  %v6351 = vpop.f32.mrb[0].mxu0
  %v6352 = vpop.f32.mrb[0].mxu0
  %v6353 = vadd.f32 0.0, %v6352
  %v6354 = vpop.f32.mrb[0].mxu0
  %6355 = vmatprep.mubr.bf16.mxu0 0
  %6356 = vmatmul.mubr.bf16.gmra.mrb[0].mxu0 %v6137
  %v6357 = vpop.f32.mrb[0].mxu0
  %v6358 = vadd.f32 0.0, %v6357
  %v6359 = vpop.f32.mrb[0].mxu0
  %v6360 = vpop.f32.mrb[0].mxu0
  %v6361 = vadd.f32 0.0, %v6360
  %v6362 = vpop.f32.mrb[0].mxu0
  %6363 = vmatprep.mubr.bf16.mxu0 0
  %6364 = vmatmul.mubr.bf16.gmra.mrb[0].mxu0 %v6140
  %v6365 = vpop.f32.mrb[0].mxu0
  %v6366 = vadd.f32 0.0, %v6365
  %v6367 = vpop.f32.mrb[0].mxu0
  %v6368 = vpop.f32.mrb[0].mxu0
  %v6369 = vadd.f32 0.0, %v6368
  %v6370 = vpop.f32.mrb[0].mxu0
  %6371 = vmatprep.mubr.bf16.mxu0 0
  %6372 = vmatmul.mubr.bf16.gmra.mrb[0].mxu0 %v6143
  %v6373 = vpop.f32.mrb[0].mxu0
  %v6374 = vadd.f32 0.0, %v6373
  %v6375 = vpop.f32.mrb[0].mxu0
  %v6376 = vpop.f32.mrb[0].mxu0
  %v6377 = vadd.f32 0.0, %v6376
  %v6378 = vpop.f32.mrb[0].mxu0
  %6379 = vmatprep.mubr.bf16.mxu0 0
  %6380 = vmatmul.mubr.bf16.gmra.mrb[0].mxu0 %v6146
  %v6381 = vpop.f32.mrb[0].mxu0
  %v6382 = vadd.f32 0.0, %v6381
  %v6383 = vpop.f32.mrb[0].mxu0
  %v6384 = vpop.f32.mrb[0].mxu0
  %v6385 = vadd.f32 0.0, %v6384
  %v6386 = vpop.f32.mrb[0].mxu0
  %6387 = vmatprep.mubr.bf16.mxu0 0
  %6388 = vmatmul.mubr.bf16.gmra.mrb[0].mxu0 %v6149
  %v6389 = vpop.f32.mrb[0].mxu0
  %v6390 = vadd.f32 0.0, %v6389
  %v6391 = vpop.f32.mrb[0].mxu0
  %v6392 = vpop.f32.mrb[0].mxu0
  %v6393 = vadd.f32 0.0, %v6392
  %v6394 = vpop.f32.mrb[0].mxu0
  %6395 = vmatprep.mubr.bf16.mxu0 0
  %6396 = vmatmul.mubr.bf16.gmra.mrb[0].mxu0 %v6152
  %v6397 = vpop.f32.mrb[0].mxu0
  %v6398 = vadd.f32 0.0, %v6397
  %v6399 = vpop.f32.mrb[0].mxu0
  %v6400 = vpop.f32.mrb[0].mxu0
  %v6401 = vadd.f32 0.0, %v6400
  %v6402 = vpop.f32.mrb[0].mxu0
  %6403 = vmatprep.mubr.bf16.mxu0 0
  %6404 = vmatmul.mubr.bf16.gmra.mrb[0].mxu0 %v6155
  %v6405 = vpop.f32.mrb[0].mxu0
  %v6406 = vadd.f32 0.0, %v6405
  %v6407 = vpop.f32.mrb[0].mxu0
  %v6408 = vpop.f32.mrb[0].mxu0
  %v6409 = vadd.f32 0.0, %v6408
  %v6410 = vpop.f32.mrb[0].mxu0
  %6411 = vmatprep.mubr.bf16.mxu0 0
  %6412 = vmatmul.mubr.bf16.gmra.mrb[0].mxu0 %v6158
  %v6413 = vpop.f32.mrb[0].mxu0
  %v6414 = vadd.f32 0.0, %v6413
  %v6415 = vpop.f32.mrb[0].mxu0
  %v6416 = vpop.f32.mrb[0].mxu0
  %v6417 = vadd.f32 0.0, %v6416
  %v6418 = vpop.f32.mrb[0].mxu0
  %6419 = vmatprep.mubr.bf16.mxu0 0
  %6420 = vmatmul.mubr.bf16.gmra.mrb[0].mxu0 %v6161
  %v6421 = vpop.f32.mrb[0].mxu0
  %v6422 = vadd.f32 0.0, %v6421
  %v6423 = vpop.f32.mrb[0].mxu0
  %v6424 = vpop.f32.mrb[0].mxu0
  %v6425 = vadd.f32 0.0, %v6424
  %v6426 = vpop.f32.mrb[0].mxu0
  %6427 = vmatprep.mubr.bf16.mxu0 0
  %6428 = vmatmul.mubr.bf16.gmra.mrb[0].mxu0 %v6164
  %v6429 = vpop.f32.mrb[0].mxu0
  %v6430 = vadd.f32 0.0, %v6429
  %v6431 = vpop.f32.mrb[0].mxu0
  %v6432 = vpop.f32.mrb[0].mxu0
  %v6433 = vadd.f32 0.0, %v6432
  %v6434 = vpop.f32.mrb[0].mxu0
  %6435 = vmatprep.mubr.bf16.mxu0 0
  %6436 = vmatmul.mubr.bf16.gmra.mrb[0].mxu0 %v6167
  %v6437 = vpop.f32.mrb[0].mxu0
  %v6438 = vadd.f32 0.0, %v6437
  %v6439 = vpop.f32.mrb[0].mxu0
  %v6440 = vpop.f32.mrb[0].mxu0
  %v6441 = vadd.f32 0.0, %v6440
  %v6442 = vpop.f32.mrb[0].mxu0
  %6443 = vmatprep.mubr.bf16.mxu0 0
  %6444 = vmatmul.mubr.bf16.gmra.mrb[0].mxu0 %v6170
  %v6445 = vpop.f32.mrb[0].mxu0
  %v6446 = vadd.f32 0.0, %v6445
  %v6447 = vpop.f32.mrb[0].mxu0
  %v6448 = vpop.f32.mrb[0].mxu0
  %v6449 = vadd.f32 0.0, %v6448
  %v6450 = vpop.f32.mrb[0].mxu0
  %6451 = vmatprep.mubr.bf16.mxu0 0
  %6452 = vmatmul.mubr.bf16.gmra.mrb[0].mxu0 %v6173
  %v6453 = vpop.f32.mrb[0].mxu0
  %v6454 = vadd.f32 0.0, %v6453
  %v6455 = vpop.f32.mrb[0].mxu0
  %v6456 = vpop.f32.mrb[0].mxu0
  %v6457 = vadd.f32 0.0, %v6456
  %v6458 = vpop.f32.mrb[0].mxu0
  %6459 = vmatprep.mubr.bf16.mxu0 0
  %6460 = vmatmul.mubr.bf16.gmra.mrb[0].mxu0 %v6176
  %v6461 = vpop.f32.mrb[0].mxu0
  %v6462 = vadd.f32 0.0, %v6461
  %v6463 = vpop.f32.mrb[0].mxu0
  %v6464 = vpop.f32.mrb[0].mxu0
  %v6465 = vadd.f32 0.0, %v6464
  %v6466 = vpop.f32.mrb[0].mxu0
  %6467 = vmatprep.mubr.bf16.mxu0 0
  %6468 = vmatmul.mubr.bf16.gmra.mrb[0].mxu0 %v6179
  %v6469 = vpop.f32.mrb[0].mxu0
  %v6470 = vadd.f32 0.0, %v6469
  %v6471 = vpop.f32.mrb[0].mxu0
  %v6472 = vpop.f32.mrb[0].mxu0
  %v6473 = vadd.f32 0.0, %v6472
  %v6474 = vpop.f32.mrb[0].mxu0
  %6475 = vmatprep.mubr.bf16.mxu0 0
  %6476 = vmatmul.mubr.bf16.gmra.mrb[0].mxu0 %v6182
  %v6477 = vpop.f32.mrb[0].mxu0
  %v6478 = vadd.f32 0.0, %v6477
  %v6479 = vpop.f32.mrb[0].mxu0
  %v6480 = vpop.f32.mrb[0].mxu0
  %v6481 = vadd.f32 0.0, %v6480
  %v6482 = vpop.f32.mrb[0].mxu0
  %6483 = vmatprep.mubr.bf16.mxu0 0
  %6484 = vmatmul.mubr.bf16.gmra.mrb[0].mxu0 %v6185
  %v6485 = vpop.f32.mrb[0].mxu0
  %v6486 = vadd.f32 0.0, %v6485
  %v6487 = vpop.f32.mrb[0].mxu0
  %v6488 = vpop.f32.mrb[0].mxu0
  %v6489 = vadd.f32 0.0, %v6488
  %v6490 = vpop.f32.mrb[0].mxu0
  %6491 = vmatprep.mubr.bf16.mxu0 0
  %6492 = vmatmul.mubr.bf16.gmra.mrb[0].mxu0 %v6188
  %v6493 = vpop.f32.mrb[0].mxu0
  %v6494 = vadd.f32 0.0, %v6493
  %v6495 = vpop.f32.mrb[0].mxu0
  %v6496 = vpop.f32.mrb[0].mxu0
  %v6497 = vadd.f32 0.0, %v6496
  %v6498 = vpop.f32.mrb[0].mxu0
  %6499 = vmatprep.mubr.bf16.mxu0 0
  %6500 = vmatmul.mubr.bf16.gmra.mrb[0].mxu0 %v6191
  %v6501 = vpop.f32.mrb[0].mxu0
  %v6502 = vadd.f32 0.0, %v6501
  %v6503 = vpop.f32.mrb[0].mxu0
  %v6504 = vpop.f32.mrb[0].mxu0
  %v6505 = vadd.f32 0.0, %v6504
  %v6506 = vpop.f32.mrb[0].mxu0
  %6507 = vmatprep.mubr.bf16.mxu0 0
  %6508 = vmatmul.mubr.bf16.gmra.mrb[0].mxu0 %v6194
  %v6509 = vpop.f32.mrb[0].mxu0
  %v6510 = vadd.f32 0.0, %v6509
  %v6511 = vpop.f32.mrb[0].mxu0
  %v6512 = vpop.f32.mrb[0].mxu0
  %v6513 = vadd.f32 0.0, %v6512
  %v6514 = vpop.f32.mrb[0].mxu0
  %6515 = vmatprep.mubr.bf16.mxu0 0
  %6516 = vmatmul.mubr.bf16.gmra.mrb[0].mxu0 %v6197
  %v6517 = vpop.f32.mrb[0].mxu0
  %v6518 = vadd.f32 0.0, %v6517
  %v6519 = vpop.f32.mrb[0].mxu0
  %v6520 = vpop.f32.mrb[0].mxu0
  %v6521 = vadd.f32 0.0, %v6520
  %v6522 = vpop.f32.mrb[0].mxu0
  %6523 = vmatprep.mubr.bf16.mxu0 0
  %6524 = vmatmul.mubr.bf16.gmra.mrb[0].mxu0 %v6200
  %v6525 = vpop.f32.mrb[0].mxu0
  %v6526 = vadd.f32 0.0, %v6525
  %v6527 = vpop.f32.mrb[0].mxu0
  %v6528 = vpop.f32.mrb[0].mxu0
  %v6529 = vadd.f32 0.0, %v6528
  %v6530 = vpop.f32.mrb[0].mxu0
  %6531 = vmatprep.mubr.bf16.mxu0 0
  %6532 = vmatmul.mubr.bf16.gmra.mrb[0].mxu0 %v6203
  %v6533 = vpop.f32.mrb[0].mxu0
  %v6534 = vadd.f32 0.0, %v6533
  %v6535 = vpop.f32.mrb[0].mxu0
  %v6536 = vpop.f32.mrb[0].mxu0
  %v6537 = vadd.f32 0.0, %v6536
  %v6538 = vpop.f32.mrb[0].mxu0
  %6539 = vmatprep.mubr.bf16.mxu0 0
  %6540 = vmatmul.mubr.bf16.gmra.mrb[0].mxu0 %v6206
  %v6541 = vpop.f32.mrb[0].mxu0
  %v6542 = vadd.f32 0.0, %v6541
  %v6543 = vpop.f32.mrb[0].mxu0
  %v6544 = vpop.f32.mrb[0].mxu0
  %v6545 = vadd.f32 0.0, %v6544
  %v6546 = vpop.f32.mrb[0].mxu0
  %6547 = vmatprep.mubr.bf16.mxu0 0
  %6548 = vmatmul.mubr.bf16.gmra.mrb[0].mxu0 %v6209
  %v6549 = vpop.f32.mrb[0].mxu0
  %v6550 = vadd.f32 0.0, %v6549
  %v6551 = vpop.f32.mrb[0].mxu0
  %v6552 = vpop.f32.mrb[0].mxu0
  %v6553 = vadd.f32 0.0, %v6552
  %v6554 = vpop.f32.mrb[0].mxu0
  %6555 = vmatprep.mubr.bf16.mxu0 0
  %6556 = vmatmul.mubr.bf16.gmra.mrb[0].mxu0 %v6212
  %v6557 = vpop.f32.mrb[0].mxu0
  %v6558 = vadd.f32 0.0, %v6557
  %v6559 = vpop.f32.mrb[0].mxu0
  %v6560 = vpop.f32.mrb[0].mxu0
  %v6561 = vadd.f32 0.0, %v6560
  %v6562 = vpop.f32.mrb[0].mxu0
  %6563 = vmatprep.mubr.bf16.mxu0 0
  %6564 = vmatmul.mubr.bf16.gmra.mrb[0].mxu0 %v6215
  %v6565 = vpop.f32.mrb[0].mxu0
  %v6566 = vadd.f32 0.0, %v6565
  %v6567 = vpop.f32.mrb[0].mxu0
  %v6568 = vpop.f32.mrb[0].mxu0
  %v6569 = vadd.f32 0.0, %v6568
  %v6570 = vpop.f32.mrb[0].mxu0
  %6571 = vmatprep.mubr.bf16.mxu0 0
  %6572 = vmatmul.mubr.bf16.gmra.mrb[0].mxu0 %v6218
  %v6573 = vpop.f32.mrb[0].mxu0
  %v6574 = vadd.f32 0.0, %v6573
  %v6575 = vpop.f32.mrb[0].mxu0
  %v6576 = vpop.f32.mrb[0].mxu0
  %v6577 = vadd.f32 0.0, %v6576
  %v6578 = vpop.f32.mrb[0].mxu0
  %6579 = vmatprep.mubr.bf16.mxu0 0
  %6580 = vmatmul.mubr.bf16.gmra.mrb[0].mxu0 %v6221
  %v6581 = vpop.f32.mrb[0].mxu0
  %v6582 = vadd.f32 0.0, %v6581
  %v6583 = vpop.f32.mrb[0].mxu0
  %v6584 = vpop.f32.mrb[0].mxu0
  %v6585 = vadd.f32 0.0, %v6584
  %v6586 = vpop.f32.mrb[0].mxu0
  %6587 = vmatprep.mubr.bf16.mxu0 0
  %6588 = vmatmul.mubr.bf16.gmra.mrb[0].mxu0 %v6224
  %v6589 = vpop.f32.mrb[0].mxu0
  %v6590 = vadd.f32 0.0, %v6589
  %v6591 = vpop.f32.mrb[0].mxu0
  %v6592 = vpop.f32.mrb[0].mxu0
  %v6593 = vadd.f32 0.0, %v6592
  %v6594 = vpop.f32.mrb[0].mxu0
  %6595 = vmatprep.mubr.bf16.mxu0 0
  %6596 = vmatmul.mubr.bf16.gmra.mrb[0].mxu0 %v6227
  %v6597 = vpop.f32.mrb[0].mxu0
  %v6598 = vadd.f32 0.0, %v6597
  %v6599 = vpop.f32.mrb[0].mxu0
  %v6600 = vpop.f32.mrb[0].mxu0
  %v6601 = vadd.f32 0.0, %v6600
  %v6602 = vpop.f32.mrb[0].mxu0
  %6603 = vmatprep.mubr.bf16.mxu0 0
  %6604 = vmatmul.mubr.bf16.gmra.mrb[0].mxu0 %v6230
  %v6605 = vpop.f32.mrb[0].mxu0
  %v6606 = vadd.f32 0.0, %v6605
  %v6607 = vpop.f32.mrb[0].mxu0
  %v6608 = vpop.f32.mrb[0].mxu0
  %v6609 = vadd.f32 0.0, %v6608
  %v6610 = vpop.f32.mrb[0].mxu0
  %6611 = vdwg.mxu0
  %v6612 = vadd.f32 %v5371, %v6270
  %v6613 = vadd.f32 %v5372, %v6273
  %v6614 = vadd.f32 %v5373, %v6278
  %v6615 = vadd.f32 %v5374, %v6281
  %v6616 = vadd.f32 %v5375, %v6286
  %v6617 = vadd.f32 %v5376, %v6289
  %v6618 = vadd.f32 %v5377, %v6294
  %v6619 = vadd.f32 %v5378, %v6297
  %v6620 = vadd.f32 %v5379, %v6302
  %v6621 = vadd.f32 %v5380, %v6305
  %v6622 = vadd.f32 %v5381, %v6310
  %v6623 = vadd.f32 %v5382, %v6313
  %v6624 = vadd.f32 %v5383, %v6318
  %v6625 = vadd.f32 %v5384, %v6321
  %v6626 = vadd.f32 %v5385, %v6326
  %v6627 = vadd.f32 %v5386, %v6329
  %v6628 = vadd.f32 %v5387, %v6334
  %v6629 = vadd.f32 %v5388, %v6337
  %v6630 = vadd.f32 %v5389, %v6342
  %v6631 = vadd.f32 %v5390, %v6345
  %v6632 = vadd.f32 %v5391, %v6350
  %v6633 = vadd.f32 %v5392, %v6353
  %v6634 = vadd.f32 %v5393, %v6358
  %v6635 = vadd.f32 %v5394, %v6361
  %v6636 = vadd.f32 %v5395, %v6366
  %v6637 = vadd.f32 %v5396, %v6369
  %v6638 = vadd.f32 %v5397, %v6374
  %v6639 = vadd.f32 %v5398, %v6377
  %v6640 = vadd.f32 %v5399, %v6382
  %v6641 = vadd.f32 %v5400, %v6385
  %v6642 = vadd.f32 %v5401, %v6390
  %v6643 = vadd.f32 %v5402, %v6393
  %v6644 = vadd.f32 %v5403, %v6398
  %v6645 = vadd.f32 %v5404, %v6401
  %v6646 = vadd.f32 %v5405, %v6406
  %v6647 = vadd.f32 %v5406, %v6409
  %v6648 = vadd.f32 %v5407, %v6414
  %v6649 = vadd.f32 %v5408, %v6417
  %v6650 = vadd.f32 %v5409, %v6422
  %v6651 = vadd.f32 %v5410, %v6425
  %v6652 = vadd.f32 %v5411, %v6430
  %v6653 = vadd.f32 %v5412, %v6433
  %v6654 = vadd.f32 %v5413, %v6438
  %v6655 = vadd.f32 %v5414, %v6441
  %v6656 = vadd.f32 %v5415, %v6446
  %v6657 = vadd.f32 %v5416, %v6449
  %v6658 = vadd.f32 %v5417, %v6454
  %v6659 = vadd.f32 %v5418, %v6457
  %v6660 = vadd.f32 %v5419, %v6462
  %v6661 = vadd.f32 %v5420, %v6465
  %v6662 = vadd.f32 %v5421, %v6470
  %v6663 = vadd.f32 %v5422, %v6473
  %v6664 = vadd.f32 %v5423, %v6478
  %v6665 = vadd.f32 %v5424, %v6481
  %v6666 = vadd.f32 %v5425, %v6486
  %v6667 = vadd.f32 %v5426, %v6489
  %v6668 = vadd.f32 %v5427, %v6494
  %v6669 = vadd.f32 %v5428, %v6497
  %v6670 = vadd.f32 %v5429, %v6502
  %v6671 = vadd.f32 %v5430, %v6505
  %v6672 = vadd.f32 %v5431, %v6510
  %v6673 = vadd.f32 %v5432, %v6513
  %v6674 = vadd.f32 %v5433, %v6518
  %v6675 = vadd.f32 %v5434, %v6521
  %v6676 = vadd.f32 %v5435, %v6526
  %v6677 = vadd.f32 %v5436, %v6529
  %v6678 = vadd.f32 %v5437, %v6534
  %v6679 = vadd.f32 %v5438, %v6537
  %v6680 = vadd.f32 %v5439, %v6542
  %v6681 = vadd.f32 %v5440, %v6545
  %v6682 = vadd.f32 %v5441, %v6550
  %v6683 = vadd.f32 %v5442, %v6553
  %v6684 = vadd.f32 %v5443, %v6558
  %v6685 = vadd.f32 %v5444, %v6561
  %v6686 = vadd.f32 %v5445, %v6566
  %v6687 = vadd.f32 %v5446, %v6569
  %v6688 = vadd.f32 %v5447, %v6574
  %v6689 = vadd.f32 %v5448, %v6577
  %v6690 = vadd.f32 %v5449, %v6582
  %v6691 = vadd.f32 %v5450, %v6585
  %v6692 = vadd.f32 %v5451, %v6590
  %v6693 = vadd.f32 %v5452, %v6593
  %v6694 = vadd.f32 %v5453, %v6598
  %v6695 = vadd.f32 %v5454, %v6601
  %v6696 = vadd.f32 %v5455, %v6606
  %v6697 = vadd.f32 %v5456, %v6609
  %v6698 = vld [vmem:[%s0 + $0x14] sm:$0xe]
  %s6699 = scalar_lea.vmem %s1, 14
  %v6700 = vld [vmem:[%s6699] sm:$0x3]
  %v6702 = vunpack.c.l.b16 %v6698
  %v6703 = vpack.c.b16 %v5632, %v6702
  %vm6704 = vcmask 1046528
  %v6705 = vrot.slane %v6703, 1
  %v6706 = vrot.slane %v5718, 1
  %v6707 = vsel %vm6704, %v6705, %v6706
  %v6708 = vrot.slane %v5719, 1
  %v6709 = vsel %vm6704, %v6706, %v6708
  %v6710 = vrot.slane %v5720, 1
  %v6711 = vsel %vm6704, %v6708, %v6710
  %v6712 = vrot.slane %v5721, 1
  %v6713 = vsel %vm6704, %v6710, %v6712
  %v6714 = vrot.slane %v5722, 1
  %v6715 = vsel %vm6704, %v6712, %v6714
  %v6716 = vrot.slane %v5723, 1
  %v6717 = vsel %vm6704, %v6714, %v6716
  %v6718 = vrot.slane %v5724, 1
  %v6719 = vsel %vm6704, %v6716, %v6718
  %v6720 = vrot.slane %v5725, 1
  %v6721 = vsel %vm6704, %v6718, %v6720
  %v6722 = vrot.slane %v5726, 1
  %v6723 = vsel %vm6704, %v6720, %v6722
  %v6724 = vrot.slane %v5727, 1
  %v6725 = vsel %vm6704, %v6722, %v6724
  %v6726 = vrot.slane %v5728, 1
  %v6727 = vsel %vm6704, %v6724, %v6726
  %v6728 = vrot.slane %v5729, 1
  %v6729 = vsel %vm6704, %v6726, %v6728
  %v6730 = vrot.slane %v5730, 1
  %v6731 = vsel %vm6704, %v6728, %v6730
  %v6732 = vrot.slane %v5731, 1
  %v6733 = vsel %vm6704, %v6730, %v6732
  %v6734 = vrot.slane %v5732, 1
  %v6735 = vsel %vm6704, %v6732, %v6734
  %v6736 = vrot.slane %v5733, 1
  %v6737 = vsel %vm6704, %v6734, %v6736
  %v6738 = vrot.slane %v5734, 1
  %v6739 = vsel %vm6704, %v6736, %v6738
  %v6740 = vrot.slane %v5735, 1
  %v6741 = vsel %vm6704, %v6738, %v6740
  %v6742 = vrot.slane %v5736, 1
  %v6743 = vsel %vm6704, %v6740, %v6742
  %v6744 = vrot.slane %v5737, 1
  %v6745 = vsel %vm6704, %v6742, %v6744
  %v6746 = vrot.slane %v5738, 1
  %v6747 = vsel %vm6704, %v6744, %v6746
  %v6748 = vrot.slane %v5739, 1
  %v6749 = vsel %vm6704, %v6746, %v6748
  %v6750 = vrot.slane %v5740, 1
  %v6751 = vsel %vm6704, %v6748, %v6750
  %v6752 = vrot.slane %v5741, 1
  %v6753 = vsel %vm6704, %v6750, %v6752
  %v6754 = vrot.slane %v5742, 1
  %v6755 = vsel %vm6704, %v6752, %v6754
  %v6756 = vrot.slane %v5743, 1
  %v6757 = vsel %vm6704, %v6754, %v6756
  %v6758 = vrot.slane %v5744, 1
  %v6759 = vsel %vm6704, %v6756, %v6758
  %v6760 = vrot.slane %v5745, 1
  %v6761 = vsel %vm6704, %v6758, %v6760
  %v6762 = vrot.slane %v5746, 1
  %v6763 = vsel %vm6704, %v6760, %v6762
  %v6764 = vrot.slane %v5747, 1
  %v6765 = vsel %vm6704, %v6762, %v6764
  %v6766 = vrot.slane %v5748, 1
  %v6767 = vsel %vm6704, %v6764, %v6766
  %v6768 = vrot.slane %v5749, 1
  %v6769 = vsel %vm6704, %v6766, %v6768
  %v6770 = vrot.slane %v5750, 1
  %v6771 = vsel %vm6704, %v6768, %v6770
  %v6772 = vrot.slane %v5751, 1
  %v6773 = vsel %vm6704, %v6770, %v6772
  %v6774 = vrot.slane %v5752, 1
  %v6775 = vsel %vm6704, %v6772, %v6774
  %v6776 = vrot.slane %v5753, 1
  %v6777 = vsel %vm6704, %v6774, %v6776
  %v6778 = vrot.slane %v5754, 1
  %v6779 = vsel %vm6704, %v6776, %v6778
  %v6780 = vrot.slane %v5755, 1
  %v6781 = vsel %vm6704, %v6778, %v6780
  %v6782 = vrot.slane %v5756, 1
  %v6783 = vsel %vm6704, %v6780, %v6782
  %v6784 = vrot.slane %v5757, 1
  %v6785 = vsel %vm6704, %v6782, %v6784
  %v6786 = vrot.slane %v5758, 1
  %v6787 = vsel %vm6704, %v6784, %v6786
  %v6788 = vrot.slane %v5759, 1
  %v6789 = vsel %vm6704, %v6786, %v6788
  %v6791 = vsel %vm415, %v6707, 0
  %v6794 = vsel %vm415, %v6709, 0
  %v6797 = vsel %vm415, %v6711, 0
  %v6800 = vsel %vm415, %v6713, 0
  %v6803 = vsel %vm415, %v6715, 0
  %v6806 = vsel %vm415, %v6717, 0
  %v6809 = vsel %vm415, %v6719, 0
  %v6812 = vsel %vm415, %v6721, 0
  %v6815 = vsel %vm415, %v6723, 0
  %v6818 = vsel %vm415, %v6725, 0
  %v6821 = vsel %vm415, %v6727, 0
  %v6824 = vsel %vm415, %v6729, 0
  %v6827 = vsel %vm415, %v6731, 0
  %v6830 = vsel %vm415, %v6733, 0
  %v6833 = vsel %vm415, %v6735, 0
  %v6836 = vsel %vm415, %v6737, 0
  %v6839 = vsel %vm415, %v6739, 0
  %v6842 = vsel %vm415, %v6741, 0
  %v6845 = vsel %vm415, %v6743, 0
  %v6848 = vsel %vm415, %v6745, 0
  %v6851 = vsel %vm415, %v6747, 0
  %v6854 = vsel %vm415, %v6749, 0
  %v6857 = vsel %vm415, %v6751, 0
  %v6860 = vsel %vm415, %v6753, 0
  %v6863 = vsel %vm415, %v6755, 0
  %v6866 = vsel %vm415, %v6757, 0
  %v6869 = vsel %vm415, %v6759, 0
  %v6872 = vsel %vm415, %v6761, 0
  %v6875 = vsel %vm415, %v6763, 0
  %v6878 = vsel %vm415, %v6765, 0
  %v6881 = vsel %vm415, %v6767, 0
  %v6884 = vsel %vm415, %v6769, 0
  %v6887 = vsel %vm415, %v6771, 0
  %v6890 = vsel %vm415, %v6773, 0
  %v6893 = vsel %vm415, %v6775, 0
  %v6896 = vsel %vm415, %v6777, 0
  %v6899 = vsel %vm415, %v6779, 0
  %v6902 = vsel %vm415, %v6781, 0
  %v6905 = vsel %vm415, %v6783, 0
  %v6908 = vsel %vm415, %v6785, 0
  %v6911 = vsel %vm415, %v6787, 0
  %v6914 = vsel %vm415, %v6789, 0
  %v6917 = vsel %vm415, %v6788, 0
  %v6920 = vsel %vm545, %v6700, 0
  %6922 = vmatprep.subr.bf16.mxu0 0
  %6923 = vmatpush1.bf16.msra.mxu0 %v6920
  %6924 = vmatprep.subr.bf16.mxu0 0
  %6925 = vmatpush1.bf16.msra.mxu0 0
  %6926 = vmatprep.subr.bf16.mxu0 0
  %6927 = vmatpush1.bf16.msra.mxu0 0
  %6928 = vmatprep.subr.bf16.mxu0 0
  %6929 = vmatpush1.bf16.msra.mxu0 0
  %6930 = vmatprep.subr.bf16.mxu0 0
  %6931 = vmatpush1.bf16.msra.mxu0 0
  %6932 = vmatprep.subr.bf16.mxu0 0
  %6933 = vmatpush1.bf16.msra.mxu0 0
  %6934 = vmatprep.subr.bf16.mxu0 0
  %6935 = vmatpush1.bf16.msra.mxu0 0
  %6936 = vmatprep.subr.bf16.mxu0 0
  %6937 = vmatpush1.bf16.msra.mxu0 0
  %6938 = vmatprep.subr.bf16.mxu0 0
  %6939 = vmatpush1.bf16.msra.mxu0 0
  %6940 = vmatprep.subr.bf16.mxu0 0
  %6941 = vmatpush1.bf16.msra.mxu0 0
  %6942 = vmatprep.subr.bf16.mxu0 0
  %6943 = vmatpush1.bf16.msra.mxu0 0
  %6944 = vmatprep.subr.bf16.mxu0 0
  %6945 = vmatpush1.bf16.msra.mxu0 0
  %6946 = vmatprep.subr.bf16.mxu0 0
  %6947 = vmatpush1.bf16.msra.mxu0 0
  %6948 = vmatprep.subr.bf16.mxu0 0
  %6949 = vmatpush1.bf16.msra.mxu0 0
  %6950 = vmatprep.subr.bf16.mxu0 0
  %6951 = vmatpush1.bf16.msra.mxu0 0
  %6952 = vmatprep.subr.bf16.mxu0 0
  %6953 = vmatpush1.bf16.msra.mxu0 0
  %6954 = vmatprep.mubr.bf16.mxu0 0
  %6955 = vmatmul.mubr.bf16.gmra.mrb[0].mxu0 %v6791
  %v6956 = vpop.f32.mrb[0].mxu0
  %v6957 = vadd.f32 0.0, %v6956
  %v6958 = vpop.f32.mrb[0].mxu0
  %v6959 = vpop.f32.mrb[0].mxu0
  %v6960 = vadd.f32 0.0, %v6959
  %v6961 = vpop.f32.mrb[0].mxu0
  %6962 = vmatprep.mubr.bf16.mxu0 0
  %6963 = vmatmul.mubr.bf16.gmra.mrb[0].mxu0 %v6794
  %v6964 = vpop.f32.mrb[0].mxu0
  %v6965 = vadd.f32 0.0, %v6964
  %v6966 = vpop.f32.mrb[0].mxu0
  %v6967 = vpop.f32.mrb[0].mxu0
  %v6968 = vadd.f32 0.0, %v6967
  %v6969 = vpop.f32.mrb[0].mxu0
  %6970 = vmatprep.mubr.bf16.mxu0 0
  %6971 = vmatmul.mubr.bf16.gmra.mrb[0].mxu0 %v6797
  %v6972 = vpop.f32.mrb[0].mxu0
  %v6973 = vadd.f32 0.0, %v6972
  %v6974 = vpop.f32.mrb[0].mxu0
  %v6975 = vpop.f32.mrb[0].mxu0
  %v6976 = vadd.f32 0.0, %v6975
  %v6977 = vpop.f32.mrb[0].mxu0
  %6978 = vmatprep.mubr.bf16.mxu0 0
  %6979 = vmatmul.mubr.bf16.gmra.mrb[0].mxu0 %v6800
  %v6980 = vpop.f32.mrb[0].mxu0
  %v6981 = vadd.f32 0.0, %v6980
  %v6982 = vpop.f32.mrb[0].mxu0
  %v6983 = vpop.f32.mrb[0].mxu0
  %v6984 = vadd.f32 0.0, %v6983
  %v6985 = vpop.f32.mrb[0].mxu0
  %6986 = vmatprep.mubr.bf16.mxu0 0
  %6987 = vmatmul.mubr.bf16.gmra.mrb[0].mxu0 %v6803
  %v6988 = vpop.f32.mrb[0].mxu0
  %v6989 = vadd.f32 0.0, %v6988
  %v6990 = vpop.f32.mrb[0].mxu0
  %v6991 = vpop.f32.mrb[0].mxu0
  %v6992 = vadd.f32 0.0, %v6991
  %v6993 = vpop.f32.mrb[0].mxu0
  %6994 = vmatprep.mubr.bf16.mxu0 0
  %6995 = vmatmul.mubr.bf16.gmra.mrb[0].mxu0 %v6806
  %v6996 = vpop.f32.mrb[0].mxu0
  %v6997 = vadd.f32 0.0, %v6996
  %v6998 = vpop.f32.mrb[0].mxu0
  %v6999 = vpop.f32.mrb[0].mxu0
  %v7000 = vadd.f32 0.0, %v6999
  %v7001 = vpop.f32.mrb[0].mxu0
  %7002 = vmatprep.mubr.bf16.mxu0 0
  %7003 = vmatmul.mubr.bf16.gmra.mrb[0].mxu0 %v6809
  %v7004 = vpop.f32.mrb[0].mxu0
  %v7005 = vadd.f32 0.0, %v7004
  %v7006 = vpop.f32.mrb[0].mxu0
  %v7007 = vpop.f32.mrb[0].mxu0
  %v7008 = vadd.f32 0.0, %v7007
  %v7009 = vpop.f32.mrb[0].mxu0
  %7010 = vmatprep.mubr.bf16.mxu0 0
  %7011 = vmatmul.mubr.bf16.gmra.mrb[0].mxu0 %v6812
  %v7012 = vpop.f32.mrb[0].mxu0
  %v7013 = vadd.f32 0.0, %v7012
  %v7014 = vpop.f32.mrb[0].mxu0
  %v7015 = vpop.f32.mrb[0].mxu0
  %v7016 = vadd.f32 0.0, %v7015
  %v7017 = vpop.f32.mrb[0].mxu0
  %7018 = vmatprep.mubr.bf16.mxu0 0
  %7019 = vmatmul.mubr.bf16.gmra.mrb[0].mxu0 %v6815
  %v7020 = vpop.f32.mrb[0].mxu0
  %v7021 = vadd.f32 0.0, %v7020
  %v7022 = vpop.f32.mrb[0].mxu0
  %v7023 = vpop.f32.mrb[0].mxu0
  %v7024 = vadd.f32 0.0, %v7023
  %v7025 = vpop.f32.mrb[0].mxu0
  %7026 = vmatprep.mubr.bf16.mxu0 0
  %7027 = vmatmul.mubr.bf16.gmra.mrb[0].mxu0 %v6818
  %v7028 = vpop.f32.mrb[0].mxu0
  %v7029 = vadd.f32 0.0, %v7028
  %v7030 = vpop.f32.mrb[0].mxu0
  %v7031 = vpop.f32.mrb[0].mxu0
  %v7032 = vadd.f32 0.0, %v7031
  %v7033 = vpop.f32.mrb[0].mxu0
  %7034 = vmatprep.mubr.bf16.mxu0 0
  %7035 = vmatmul.mubr.bf16.gmra.mrb[0].mxu0 %v6821
  %v7036 = vpop.f32.mrb[0].mxu0
  %v7037 = vadd.f32 0.0, %v7036
  %v7038 = vpop.f32.mrb[0].mxu0
  %v7039 = vpop.f32.mrb[0].mxu0
  %v7040 = vadd.f32 0.0, %v7039
  %v7041 = vpop.f32.mrb[0].mxu0
  %7042 = vmatprep.mubr.bf16.mxu0 0
  %7043 = vmatmul.mubr.bf16.gmra.mrb[0].mxu0 %v6824
  %v7044 = vpop.f32.mrb[0].mxu0
  %v7045 = vadd.f32 0.0, %v7044
  %v7046 = vpop.f32.mrb[0].mxu0
  %v7047 = vpop.f32.mrb[0].mxu0
  %v7048 = vadd.f32 0.0, %v7047
  %v7049 = vpop.f32.mrb[0].mxu0
  %7050 = vmatprep.mubr.bf16.mxu0 0
  %7051 = vmatmul.mubr.bf16.gmra.mrb[0].mxu0 %v6827
  %v7052 = vpop.f32.mrb[0].mxu0
  %v7053 = vadd.f32 0.0, %v7052
  %v7054 = vpop.f32.mrb[0].mxu0
  %v7055 = vpop.f32.mrb[0].mxu0
  %v7056 = vadd.f32 0.0, %v7055
  %v7057 = vpop.f32.mrb[0].mxu0
  %7058 = vmatprep.mubr.bf16.mxu0 0
  %7059 = vmatmul.mubr.bf16.gmra.mrb[0].mxu0 %v6830
  %v7060 = vpop.f32.mrb[0].mxu0
  %v7061 = vadd.f32 0.0, %v7060
  %v7062 = vpop.f32.mrb[0].mxu0
  %v7063 = vpop.f32.mrb[0].mxu0
  %v7064 = vadd.f32 0.0, %v7063
  %v7065 = vpop.f32.mrb[0].mxu0
  %7066 = vmatprep.mubr.bf16.mxu0 0
  %7067 = vmatmul.mubr.bf16.gmra.mrb[0].mxu0 %v6833
  %v7068 = vpop.f32.mrb[0].mxu0
  %v7069 = vadd.f32 0.0, %v7068
  %v7070 = vpop.f32.mrb[0].mxu0
  %v7071 = vpop.f32.mrb[0].mxu0
  %v7072 = vadd.f32 0.0, %v7071
  %v7073 = vpop.f32.mrb[0].mxu0
  %7074 = vmatprep.mubr.bf16.mxu0 0
  %7075 = vmatmul.mubr.bf16.gmra.mrb[0].mxu0 %v6836
  %v7076 = vpop.f32.mrb[0].mxu0
  %v7077 = vadd.f32 0.0, %v7076
  %v7078 = vpop.f32.mrb[0].mxu0
  %v7079 = vpop.f32.mrb[0].mxu0
  %v7080 = vadd.f32 0.0, %v7079
  %v7081 = vpop.f32.mrb[0].mxu0
  %7082 = vmatprep.mubr.bf16.mxu0 0
  %7083 = vmatmul.mubr.bf16.gmra.mrb[0].mxu0 %v6839
  %v7084 = vpop.f32.mrb[0].mxu0
  %v7085 = vadd.f32 0.0, %v7084
  %v7086 = vpop.f32.mrb[0].mxu0
  %v7087 = vpop.f32.mrb[0].mxu0
  %v7088 = vadd.f32 0.0, %v7087
  %v7089 = vpop.f32.mrb[0].mxu0
  %7090 = vmatprep.mubr.bf16.mxu0 0
  %7091 = vmatmul.mubr.bf16.gmra.mrb[0].mxu0 %v6842
  %v7092 = vpop.f32.mrb[0].mxu0
  %v7093 = vadd.f32 0.0, %v7092
  %v7094 = vpop.f32.mrb[0].mxu0
  %v7095 = vpop.f32.mrb[0].mxu0
  %v7096 = vadd.f32 0.0, %v7095
  %v7097 = vpop.f32.mrb[0].mxu0
  %7098 = vmatprep.mubr.bf16.mxu0 0
  %7099 = vmatmul.mubr.bf16.gmra.mrb[0].mxu0 %v6845
  %v7100 = vpop.f32.mrb[0].mxu0
  %v7101 = vadd.f32 0.0, %v7100
  %v7102 = vpop.f32.mrb[0].mxu0
  %v7103 = vpop.f32.mrb[0].mxu0
  %v7104 = vadd.f32 0.0, %v7103
  %v7105 = vpop.f32.mrb[0].mxu0
  %7106 = vmatprep.mubr.bf16.mxu0 0
  %7107 = vmatmul.mubr.bf16.gmra.mrb[0].mxu0 %v6848
  %v7108 = vpop.f32.mrb[0].mxu0
  %v7109 = vadd.f32 0.0, %v7108
  %v7110 = vpop.f32.mrb[0].mxu0
  %v7111 = vpop.f32.mrb[0].mxu0
  %v7112 = vadd.f32 0.0, %v7111
  %v7113 = vpop.f32.mrb[0].mxu0
  %7114 = vmatprep.mubr.bf16.mxu0 0
  %7115 = vmatmul.mubr.bf16.gmra.mrb[0].mxu0 %v6851
  %v7116 = vpop.f32.mrb[0].mxu0
  %v7117 = vadd.f32 0.0, %v7116
  %v7118 = vpop.f32.mrb[0].mxu0
  %v7119 = vpop.f32.mrb[0].mxu0
  %v7120 = vadd.f32 0.0, %v7119
  %v7121 = vpop.f32.mrb[0].mxu0
  %7122 = vmatprep.mubr.bf16.mxu0 0
  %7123 = vmatmul.mubr.bf16.gmra.mrb[0].mxu0 %v6854
  %v7124 = vpop.f32.mrb[0].mxu0
  %v7125 = vadd.f32 0.0, %v7124
  %v7126 = vpop.f32.mrb[0].mxu0
  %v7127 = vpop.f32.mrb[0].mxu0
  %v7128 = vadd.f32 0.0, %v7127
  %v7129 = vpop.f32.mrb[0].mxu0
  %7130 = vmatprep.mubr.bf16.mxu0 0
  %7131 = vmatmul.mubr.bf16.gmra.mrb[0].mxu0 %v6857
  %v7132 = vpop.f32.mrb[0].mxu0
  %v7133 = vadd.f32 0.0, %v7132
  %v7134 = vpop.f32.mrb[0].mxu0
  %v7135 = vpop.f32.mrb[0].mxu0
  %v7136 = vadd.f32 0.0, %v7135
  %v7137 = vpop.f32.mrb[0].mxu0
  %7138 = vmatprep.mubr.bf16.mxu0 0
  %7139 = vmatmul.mubr.bf16.gmra.mrb[0].mxu0 %v6860
  %v7140 = vpop.f32.mrb[0].mxu0
  %v7141 = vadd.f32 0.0, %v7140
  %v7142 = vpop.f32.mrb[0].mxu0
  %v7143 = vpop.f32.mrb[0].mxu0
  %v7144 = vadd.f32 0.0, %v7143
  %v7145 = vpop.f32.mrb[0].mxu0
  %7146 = vmatprep.mubr.bf16.mxu0 0
  %7147 = vmatmul.mubr.bf16.gmra.mrb[0].mxu0 %v6863
  %v7148 = vpop.f32.mrb[0].mxu0
  %v7149 = vadd.f32 0.0, %v7148
  %v7150 = vpop.f32.mrb[0].mxu0
  %v7151 = vpop.f32.mrb[0].mxu0
  %v7152 = vadd.f32 0.0, %v7151
  %v7153 = vpop.f32.mrb[0].mxu0
  %7154 = vmatprep.mubr.bf16.mxu0 0
  %7155 = vmatmul.mubr.bf16.gmra.mrb[0].mxu0 %v6866
  %v7156 = vpop.f32.mrb[0].mxu0
  %v7157 = vadd.f32 0.0, %v7156
  %v7158 = vpop.f32.mrb[0].mxu0
  %v7159 = vpop.f32.mrb[0].mxu0
  %v7160 = vadd.f32 0.0, %v7159
  %v7161 = vpop.f32.mrb[0].mxu0
  %7162 = vmatprep.mubr.bf16.mxu0 0
  %7163 = vmatmul.mubr.bf16.gmra.mrb[0].mxu0 %v6869
  %v7164 = vpop.f32.mrb[0].mxu0
  %v7165 = vadd.f32 0.0, %v7164
  %v7166 = vpop.f32.mrb[0].mxu0
  %v7167 = vpop.f32.mrb[0].mxu0
  %v7168 = vadd.f32 0.0, %v7167
  %v7169 = vpop.f32.mrb[0].mxu0
  %7170 = vmatprep.mubr.bf16.mxu0 0
  %7171 = vmatmul.mubr.bf16.gmra.mrb[0].mxu0 %v6872
  %v7172 = vpop.f32.mrb[0].mxu0
  %v7173 = vadd.f32 0.0, %v7172
  %v7174 = vpop.f32.mrb[0].mxu0
  %v7175 = vpop.f32.mrb[0].mxu0
  %v7176 = vadd.f32 0.0, %v7175
  %v7177 = vpop.f32.mrb[0].mxu0
  %7178 = vmatprep.mubr.bf16.mxu0 0
  %7179 = vmatmul.mubr.bf16.gmra.mrb[0].mxu0 %v6875
  %v7180 = vpop.f32.mrb[0].mxu0
  %v7181 = vadd.f32 0.0, %v7180
  %v7182 = vpop.f32.mrb[0].mxu0
  %v7183 = vpop.f32.mrb[0].mxu0
  %v7184 = vadd.f32 0.0, %v7183
  %v7185 = vpop.f32.mrb[0].mxu0
  %7186 = vmatprep.mubr.bf16.mxu0 0
  %7187 = vmatmul.mubr.bf16.gmra.mrb[0].mxu0 %v6878
  %v7188 = vpop.f32.mrb[0].mxu0
  %v7189 = vadd.f32 0.0, %v7188
  %v7190 = vpop.f32.mrb[0].mxu0
  %v7191 = vpop.f32.mrb[0].mxu0
  %v7192 = vadd.f32 0.0, %v7191
  %v7193 = vpop.f32.mrb[0].mxu0
  %7194 = vmatprep.mubr.bf16.mxu0 0
  %7195 = vmatmul.mubr.bf16.gmra.mrb[0].mxu0 %v6881
  %v7196 = vpop.f32.mrb[0].mxu0
  %v7197 = vadd.f32 0.0, %v7196
  %v7198 = vpop.f32.mrb[0].mxu0
  %v7199 = vpop.f32.mrb[0].mxu0
  %v7200 = vadd.f32 0.0, %v7199
  %v7201 = vpop.f32.mrb[0].mxu0
  %7202 = vmatprep.mubr.bf16.mxu0 0
  %7203 = vmatmul.mubr.bf16.gmra.mrb[0].mxu0 %v6884
  %v7204 = vpop.f32.mrb[0].mxu0
  %v7205 = vadd.f32 0.0, %v7204
  %v7206 = vpop.f32.mrb[0].mxu0
  %v7207 = vpop.f32.mrb[0].mxu0
  %v7208 = vadd.f32 0.0, %v7207
  %v7209 = vpop.f32.mrb[0].mxu0
  %7210 = vmatprep.mubr.bf16.mxu0 0
  %7211 = vmatmul.mubr.bf16.gmra.mrb[0].mxu0 %v6887
  %v7212 = vpop.f32.mrb[0].mxu0
  %v7213 = vadd.f32 0.0, %v7212
  %v7214 = vpop.f32.mrb[0].mxu0
  %v7215 = vpop.f32.mrb[0].mxu0
  %v7216 = vadd.f32 0.0, %v7215
  %v7217 = vpop.f32.mrb[0].mxu0
  %7218 = vmatprep.mubr.bf16.mxu0 0
  %7219 = vmatmul.mubr.bf16.gmra.mrb[0].mxu0 %v6890
  %v7220 = vpop.f32.mrb[0].mxu0
  %v7221 = vadd.f32 0.0, %v7220
  %v7222 = vpop.f32.mrb[0].mxu0
  %v7223 = vpop.f32.mrb[0].mxu0
  %v7224 = vadd.f32 0.0, %v7223
  %v7225 = vpop.f32.mrb[0].mxu0
  %7226 = vmatprep.mubr.bf16.mxu0 0
  %7227 = vmatmul.mubr.bf16.gmra.mrb[0].mxu0 %v6893
  %v7228 = vpop.f32.mrb[0].mxu0
  %v7229 = vadd.f32 0.0, %v7228
  %v7230 = vpop.f32.mrb[0].mxu0
  %v7231 = vpop.f32.mrb[0].mxu0
  %v7232 = vadd.f32 0.0, %v7231
  %v7233 = vpop.f32.mrb[0].mxu0
  %7234 = vmatprep.mubr.bf16.mxu0 0
  %7235 = vmatmul.mubr.bf16.gmra.mrb[0].mxu0 %v6896
  %v7236 = vpop.f32.mrb[0].mxu0
  %v7237 = vadd.f32 0.0, %v7236
  %v7238 = vpop.f32.mrb[0].mxu0
  %v7239 = vpop.f32.mrb[0].mxu0
  %v7240 = vadd.f32 0.0, %v7239
  %v7241 = vpop.f32.mrb[0].mxu0
  %7242 = vmatprep.mubr.bf16.mxu0 0
  %7243 = vmatmul.mubr.bf16.gmra.mrb[0].mxu0 %v6899
  %v7244 = vpop.f32.mrb[0].mxu0
  %v7245 = vadd.f32 0.0, %v7244
  %v7246 = vpop.f32.mrb[0].mxu0
  %v7247 = vpop.f32.mrb[0].mxu0
  %v7248 = vadd.f32 0.0, %v7247
  %v7249 = vpop.f32.mrb[0].mxu0
  %7250 = vmatprep.mubr.bf16.mxu0 0
  %7251 = vmatmul.mubr.bf16.gmra.mrb[0].mxu0 %v6902
  %v7252 = vpop.f32.mrb[0].mxu0
  %v7253 = vadd.f32 0.0, %v7252
  %v7254 = vpop.f32.mrb[0].mxu0
  %v7255 = vpop.f32.mrb[0].mxu0
  %v7256 = vadd.f32 0.0, %v7255
  %v7257 = vpop.f32.mrb[0].mxu0
  %7258 = vmatprep.mubr.bf16.mxu0 0
  %7259 = vmatmul.mubr.bf16.gmra.mrb[0].mxu0 %v6905
  %v7260 = vpop.f32.mrb[0].mxu0
  %v7261 = vadd.f32 0.0, %v7260
  %v7262 = vpop.f32.mrb[0].mxu0
  %v7263 = vpop.f32.mrb[0].mxu0
  %v7264 = vadd.f32 0.0, %v7263
  %v7265 = vpop.f32.mrb[0].mxu0
  %7266 = vmatprep.mubr.bf16.mxu0 0
  %7267 = vmatmul.mubr.bf16.gmra.mrb[0].mxu0 %v6908
  %v7268 = vpop.f32.mrb[0].mxu0
  %v7269 = vadd.f32 0.0, %v7268
  %v7270 = vpop.f32.mrb[0].mxu0
  %v7271 = vpop.f32.mrb[0].mxu0
  %v7272 = vadd.f32 0.0, %v7271
  %v7273 = vpop.f32.mrb[0].mxu0
  %7274 = vmatprep.mubr.bf16.mxu0 0
  %7275 = vmatmul.mubr.bf16.gmra.mrb[0].mxu0 %v6911
  %v7276 = vpop.f32.mrb[0].mxu0
  %v7277 = vadd.f32 0.0, %v7276
  %v7278 = vpop.f32.mrb[0].mxu0
  %v7279 = vpop.f32.mrb[0].mxu0
  %v7280 = vadd.f32 0.0, %v7279
  %v7281 = vpop.f32.mrb[0].mxu0
  %7282 = vmatprep.mubr.bf16.mxu0 0
  %7283 = vmatmul.mubr.bf16.gmra.mrb[0].mxu0 %v6914
  %v7284 = vpop.f32.mrb[0].mxu0
  %v7285 = vadd.f32 0.0, %v7284
  %v7286 = vpop.f32.mrb[0].mxu0
  %v7287 = vpop.f32.mrb[0].mxu0
  %v7288 = vadd.f32 0.0, %v7287
  %v7289 = vpop.f32.mrb[0].mxu0
  %7290 = vmatprep.mubr.bf16.mxu0 0
  %7291 = vmatmul.mubr.bf16.gmra.mrb[0].mxu0 %v6917
  %v7292 = vpop.f32.mrb[0].mxu0
  %v7293 = vadd.f32 0.0, %v7292
  %v7294 = vpop.f32.mrb[0].mxu0
  %v7295 = vpop.f32.mrb[0].mxu0
  %v7296 = vadd.f32 0.0, %v7295
  %v7297 = vpop.f32.mrb[0].mxu0
  %7298 = vdwg.mxu0
  %v7299 = vadd.f32 %v6612, %v6957
  %v7300 = vadd.f32 %v6613, %v6960
  %v7301 = vadd.f32 %v6614, %v6965
  %v7302 = vadd.f32 %v6615, %v6968
  %v7303 = vadd.f32 %v6616, %v6973
  %v7304 = vadd.f32 %v6617, %v6976
  %v7305 = vadd.f32 %v6618, %v6981
  %v7306 = vadd.f32 %v6619, %v6984
  %v7307 = vadd.f32 %v6620, %v6989
  %v7308 = vadd.f32 %v6621, %v6992
  %v7309 = vadd.f32 %v6622, %v6997
  %v7310 = vadd.f32 %v6623, %v7000
  %v7311 = vadd.f32 %v6624, %v7005
  %v7312 = vadd.f32 %v6625, %v7008
  %v7313 = vadd.f32 %v6626, %v7013
  %v7314 = vadd.f32 %v6627, %v7016
  %v7315 = vadd.f32 %v6628, %v7021
  %v7316 = vadd.f32 %v6629, %v7024
  %v7317 = vadd.f32 %v6630, %v7029
  %v7318 = vadd.f32 %v6631, %v7032
  %v7319 = vadd.f32 %v6632, %v7037
  %v7320 = vadd.f32 %v6633, %v7040
  %v7321 = vadd.f32 %v6634, %v7045
  %v7322 = vadd.f32 %v6635, %v7048
  %v7323 = vadd.f32 %v6636, %v7053
  %v7324 = vadd.f32 %v6637, %v7056
  %v7325 = vadd.f32 %v6638, %v7061
  %v7326 = vadd.f32 %v6639, %v7064
  %v7327 = vadd.f32 %v6640, %v7069
  %v7328 = vadd.f32 %v6641, %v7072
  %v7329 = vadd.f32 %v6642, %v7077
  %v7330 = vadd.f32 %v6643, %v7080
  %v7331 = vadd.f32 %v6644, %v7085
  %v7332 = vadd.f32 %v6645, %v7088
  %v7333 = vadd.f32 %v6646, %v7093
  %v7334 = vadd.f32 %v6647, %v7096
  %v7335 = vadd.f32 %v6648, %v7101
  %v7336 = vadd.f32 %v6649, %v7104
  %v7337 = vadd.f32 %v6650, %v7109
  %v7338 = vadd.f32 %v6651, %v7112
  %v7339 = vadd.f32 %v6652, %v7117
  %v7340 = vadd.f32 %v6653, %v7120
  %v7341 = vadd.f32 %v6654, %v7125
  %v7342 = vadd.f32 %v6655, %v7128
  %v7343 = vadd.f32 %v6656, %v7133
  %v7344 = vadd.f32 %v6657, %v7136
  %v7345 = vadd.f32 %v6658, %v7141
  %v7346 = vadd.f32 %v6659, %v7144
  %v7347 = vadd.f32 %v6660, %v7149
  %v7348 = vadd.f32 %v6661, %v7152
  %v7349 = vadd.f32 %v6662, %v7157
  %v7350 = vadd.f32 %v6663, %v7160
  %v7351 = vadd.f32 %v6664, %v7165
  %v7352 = vadd.f32 %v6665, %v7168
  %v7353 = vadd.f32 %v6666, %v7173
  %v7354 = vadd.f32 %v6667, %v7176
  %v7355 = vadd.f32 %v6668, %v7181
  %v7356 = vadd.f32 %v6669, %v7184
  %v7357 = vadd.f32 %v6670, %v7189
  %v7358 = vadd.f32 %v6671, %v7192
  %v7359 = vadd.f32 %v6672, %v7197
  %v7360 = vadd.f32 %v6673, %v7200
  %v7361 = vadd.f32 %v6674, %v7205
  %v7362 = vadd.f32 %v6675, %v7208
  %v7363 = vadd.f32 %v6676, %v7213
  %v7364 = vadd.f32 %v6677, %v7216
  %v7365 = vadd.f32 %v6678, %v7221
  %v7366 = vadd.f32 %v6679, %v7224
  %v7367 = vadd.f32 %v6680, %v7229
  %v7368 = vadd.f32 %v6681, %v7232
  %v7369 = vadd.f32 %v6682, %v7237
  %v7370 = vadd.f32 %v6683, %v7240
  %v7371 = vadd.f32 %v6684, %v7245
  %v7372 = vadd.f32 %v6685, %v7248
  %v7373 = vadd.f32 %v6686, %v7253
  %v7374 = vadd.f32 %v6687, %v7256
  %v7375 = vadd.f32 %v6688, %v7261
  %v7376 = vadd.f32 %v6689, %v7264
  %v7377 = vadd.f32 %v6690, %v7269
  %v7378 = vadd.f32 %v6691, %v7272
  %v7379 = vadd.f32 %v6692, %v7277
  %v7380 = vadd.f32 %v6693, %v7280
  %v7381 = vadd.f32 %v6694, %v7285
  %v7382 = vadd.f32 %v6695, %v7288
  %v7383 = vadd.f32 %v6696, %v7293
  %v7384 = vadd.f32 %v6697, %v7296
  %v7385 = vld [vmem:[%s0 + $0x168] sm:$0xf]
  %s7386 = scalar_lea.vmem %s1, 16
  %v7387 = vld [vmem:[%s7386] sm:$0x3]
  %v7389 = vunpack.c.l.b16 %v7385
  %v7390 = vpack.c.b16 %v7389, %v5715
  %vm7391 = vsmask.f32 6400
  %v7393 = vshrl.u32 %v6703, 16
  %v7395 = vrot.slane %v7393, 1
  %v7396 = vshll.u32 %v6703, 16
  %v7398 = vrot.slane %v7396, 2
  %v7399 = vor.u32 %v7395, %v7398
  %v7400 = vrot.slane %v5772, 1
  %v7401 = vrot.slane %v5768, 2
  %v7402 = vor.u32 %v7400, %v7401
  %v7403 = vsel %vm7391, %v7399, %v7402
  %v7404 = vrot.slane %v5780, 1
  %v7405 = vrot.slane %v5776, 2
  %v7406 = vor.u32 %v7404, %v7405
  %v7407 = vsel %vm7391, %v7402, %v7406
  %v7408 = vrot.slane %v5788, 1
  %v7409 = vrot.slane %v5784, 2
  %v7410 = vor.u32 %v7408, %v7409
  %v7411 = vsel %vm7391, %v7406, %v7410
  %v7412 = vrot.slane %v5796, 1
  %v7413 = vrot.slane %v5792, 2
  %v7414 = vor.u32 %v7412, %v7413
  %v7415 = vsel %vm7391, %v7410, %v7414
  %v7416 = vrot.slane %v5804, 1
  %v7417 = vrot.slane %v5800, 2
  %v7418 = vor.u32 %v7416, %v7417
  %v7419 = vsel %vm7391, %v7414, %v7418
  %v7420 = vrot.slane %v5812, 1
  %v7421 = vrot.slane %v5808, 2
  %v7422 = vor.u32 %v7420, %v7421
  %v7423 = vsel %vm7391, %v7418, %v7422
  %v7424 = vrot.slane %v5820, 1
  %v7425 = vrot.slane %v5816, 2
  %v7426 = vor.u32 %v7424, %v7425
  %v7427 = vsel %vm7391, %v7422, %v7426
  %v7428 = vrot.slane %v5828, 1
  %v7429 = vrot.slane %v5824, 2
  %v7430 = vor.u32 %v7428, %v7429
  %v7431 = vsel %vm7391, %v7426, %v7430
  %v7432 = vrot.slane %v5836, 1
  %v7433 = vrot.slane %v5832, 2
  %v7434 = vor.u32 %v7432, %v7433
  %v7435 = vsel %vm7391, %v7430, %v7434
  %v7436 = vrot.slane %v5844, 1
  %v7437 = vrot.slane %v5840, 2
  %v7438 = vor.u32 %v7436, %v7437
  %v7439 = vsel %vm7391, %v7434, %v7438
  %v7440 = vrot.slane %v5852, 1
  %v7441 = vrot.slane %v5848, 2
  %v7442 = vor.u32 %v7440, %v7441
  %v7443 = vsel %vm7391, %v7438, %v7442
  %v7444 = vrot.slane %v5860, 1
  %v7445 = vrot.slane %v5856, 2
  %v7446 = vor.u32 %v7444, %v7445
  %v7447 = vsel %vm7391, %v7442, %v7446
  %v7448 = vrot.slane %v5868, 1
  %v7449 = vrot.slane %v5864, 2
  %v7450 = vor.u32 %v7448, %v7449
  %v7451 = vsel %vm7391, %v7446, %v7450
  %v7452 = vrot.slane %v5876, 1
  %v7453 = vrot.slane %v5872, 2
  %v7454 = vor.u32 %v7452, %v7453
  %v7455 = vsel %vm7391, %v7450, %v7454
  %v7456 = vrot.slane %v5884, 1
  %v7457 = vrot.slane %v5880, 2
  %v7458 = vor.u32 %v7456, %v7457
  %v7459 = vsel %vm7391, %v7454, %v7458
  %v7460 = vrot.slane %v5892, 1
  %v7461 = vrot.slane %v5888, 2
  %v7462 = vor.u32 %v7460, %v7461
  %v7463 = vsel %vm7391, %v7458, %v7462
  %v7464 = vrot.slane %v5900, 1
  %v7465 = vrot.slane %v5896, 2
  %v7466 = vor.u32 %v7464, %v7465
  %v7467 = vsel %vm7391, %v7462, %v7466
  %v7468 = vrot.slane %v5908, 1
  %v7469 = vrot.slane %v5904, 2
  %v7470 = vor.u32 %v7468, %v7469
  %v7471 = vsel %vm7391, %v7466, %v7470
  %v7472 = vrot.slane %v5916, 1
  %v7473 = vrot.slane %v5912, 2
  %v7474 = vor.u32 %v7472, %v7473
  %v7475 = vsel %vm7391, %v7470, %v7474
  %v7476 = vrot.slane %v5924, 1
  %v7477 = vrot.slane %v5920, 2
  %v7478 = vor.u32 %v7476, %v7477
  %v7479 = vsel %vm7391, %v7474, %v7478
  %v7480 = vrot.slane %v5932, 1
  %v7481 = vrot.slane %v5928, 2
  %v7482 = vor.u32 %v7480, %v7481
  %v7483 = vsel %vm7391, %v7478, %v7482
  %v7484 = vrot.slane %v5940, 1
  %v7485 = vrot.slane %v5936, 2
  %v7486 = vor.u32 %v7484, %v7485
  %v7487 = vsel %vm7391, %v7482, %v7486
  %v7488 = vrot.slane %v5948, 1
  %v7489 = vrot.slane %v5944, 2
  %v7490 = vor.u32 %v7488, %v7489
  %v7491 = vsel %vm7391, %v7486, %v7490
  %v7492 = vrot.slane %v5956, 1
  %v7493 = vrot.slane %v5952, 2
  %v7494 = vor.u32 %v7492, %v7493
  %v7495 = vsel %vm7391, %v7490, %v7494
  %v7496 = vrot.slane %v5964, 1
  %v7497 = vrot.slane %v5960, 2
  %v7498 = vor.u32 %v7496, %v7497
  %v7499 = vsel %vm7391, %v7494, %v7498
  %v7500 = vrot.slane %v5972, 1
  %v7501 = vrot.slane %v5968, 2
  %v7502 = vor.u32 %v7500, %v7501
  %v7503 = vsel %vm7391, %v7498, %v7502
  %v7504 = vrot.slane %v5980, 1
  %v7505 = vrot.slane %v5976, 2
  %v7506 = vor.u32 %v7504, %v7505
  %v7507 = vsel %vm7391, %v7502, %v7506
  %v7508 = vrot.slane %v5988, 1
  %v7509 = vrot.slane %v5984, 2
  %v7510 = vor.u32 %v7508, %v7509
  %v7511 = vsel %vm7391, %v7506, %v7510
  %v7512 = vrot.slane %v5996, 1
  %v7513 = vrot.slane %v5992, 2
  %v7514 = vor.u32 %v7512, %v7513
  %v7515 = vsel %vm7391, %v7510, %v7514
  %v7516 = vrot.slane %v6004, 1
  %v7517 = vrot.slane %v6000, 2
  %v7518 = vor.u32 %v7516, %v7517
  %v7519 = vsel %vm7391, %v7514, %v7518
  %v7520 = vrot.slane %v6012, 1
  %v7521 = vrot.slane %v6008, 2
  %v7522 = vor.u32 %v7520, %v7521
  %v7523 = vsel %vm7391, %v7518, %v7522
  %v7524 = vrot.slane %v6020, 1
  %v7525 = vrot.slane %v6016, 2
  %v7526 = vor.u32 %v7524, %v7525
  %v7527 = vsel %vm7391, %v7522, %v7526
  %v7528 = vrot.slane %v6028, 1
  %v7529 = vrot.slane %v6024, 2
  %v7530 = vor.u32 %v7528, %v7529
  %v7531 = vsel %vm7391, %v7526, %v7530
  %v7532 = vrot.slane %v6036, 1
  %v7533 = vrot.slane %v6032, 2
  %v7534 = vor.u32 %v7532, %v7533
  %v7535 = vsel %vm7391, %v7530, %v7534
  %v7536 = vrot.slane %v6044, 1
  %v7537 = vrot.slane %v6040, 2
  %v7538 = vor.u32 %v7536, %v7537
  %v7539 = vsel %vm7391, %v7534, %v7538
  %v7540 = vrot.slane %v6052, 1
  %v7541 = vrot.slane %v6048, 2
  %v7542 = vor.u32 %v7540, %v7541
  %v7543 = vsel %vm7391, %v7538, %v7542
  %v7544 = vrot.slane %v6060, 1
  %v7545 = vrot.slane %v6056, 2
  %v7546 = vor.u32 %v7544, %v7545
  %v7547 = vsel %vm7391, %v7542, %v7546
  %v7548 = vrot.slane %v6068, 1
  %v7549 = vrot.slane %v6064, 2
  %v7550 = vor.u32 %v7548, %v7549
  %v7551 = vsel %vm7391, %v7546, %v7550
  %v7552 = vrot.slane %v6076, 1
  %v7553 = vrot.slane %v6072, 2
  %v7554 = vor.u32 %v7552, %v7553
  %v7555 = vsel %vm7391, %v7550, %v7554
  %v7556 = vrot.slane %v6084, 1
  %v7557 = vrot.slane %v6080, 2
  %v7558 = vor.u32 %v7556, %v7557
  %v7559 = vsel %vm7391, %v7554, %v7558
  %v7560 = vrot.slane %v6092, 1
  %v7561 = vrot.slane %v6088, 2
  %v7562 = vor.u32 %v7560, %v7561
  %v7563 = vsel %vm7391, %v7558, %v7562
  %v7565 = vshrl.u32 %v7390, 16
  %v7567 = vrot.slane %v7565, 1
  %v7568 = vshll.u32 %v7390, 16
  %v7570 = vrot.slane %v7568, 2
  %v7571 = vor.u32 %v7567, %v7570
  %v7572 = vsel %vm7391, %v7562, %v7571
  %v7574 = vsel %vm415, %v7403, 0
  %v7577 = vsel %vm415, %v7407, 0
  %v7580 = vsel %vm415, %v7411, 0
  %v7583 = vsel %vm415, %v7415, 0
  %v7586 = vsel %vm415, %v7419, 0
  %v7589 = vsel %vm415, %v7423, 0
  %v7592 = vsel %vm415, %v7427, 0
  %v7595 = vsel %vm415, %v7431, 0
  %v7598 = vsel %vm415, %v7435, 0
  %v7601 = vsel %vm415, %v7439, 0
  %v7604 = vsel %vm415, %v7443, 0
  %v7607 = vsel %vm415, %v7447, 0
  %v7610 = vsel %vm415, %v7451, 0
  %v7613 = vsel %vm415, %v7455, 0
  %v7616 = vsel %vm415, %v7459, 0
  %v7619 = vsel %vm415, %v7463, 0
  %v7622 = vsel %vm415, %v7467, 0
  %v7625 = vsel %vm415, %v7471, 0
  %v7628 = vsel %vm415, %v7475, 0
  %v7631 = vsel %vm415, %v7479, 0
  %v7634 = vsel %vm415, %v7483, 0
  %v7637 = vsel %vm415, %v7487, 0
  %v7640 = vsel %vm415, %v7491, 0
  %v7643 = vsel %vm415, %v7495, 0
  %v7646 = vsel %vm415, %v7499, 0
  %v7649 = vsel %vm415, %v7503, 0
  %v7652 = vsel %vm415, %v7507, 0
  %v7655 = vsel %vm415, %v7511, 0
  %v7658 = vsel %vm415, %v7515, 0
  %v7661 = vsel %vm415, %v7519, 0
  %v7664 = vsel %vm415, %v7523, 0
  %v7667 = vsel %vm415, %v7527, 0
  %v7670 = vsel %vm415, %v7531, 0
  %v7673 = vsel %vm415, %v7535, 0
  %v7676 = vsel %vm415, %v7539, 0
  %v7679 = vsel %vm415, %v7543, 0
  %v7682 = vsel %vm415, %v7547, 0
  %v7685 = vsel %vm415, %v7551, 0
  %v7688 = vsel %vm415, %v7555, 0
  %v7691 = vsel %vm415, %v7559, 0
  %v7694 = vsel %vm415, %v7563, 0
  %v7697 = vsel %vm415, %v7572, 0
  %v7700 = vsel %vm415, %v7571, 0
  %v7703 = vsel %vm545, %v7387, 0
  %7705 = vmatprep.subr.bf16.mxu0 0
  %7706 = vmatpush1.bf16.msra.mxu0 %v7703
  %7707 = vmatprep.subr.bf16.mxu0 0
  %7708 = vmatpush1.bf16.msra.mxu0 0
  %7709 = vmatprep.subr.bf16.mxu0 0
  %7710 = vmatpush1.bf16.msra.mxu0 0
  %7711 = vmatprep.subr.bf16.mxu0 0
  %7712 = vmatpush1.bf16.msra.mxu0 0
  %7713 = vmatprep.subr.bf16.mxu0 0
  %7714 = vmatpush1.bf16.msra.mxu0 0
  %7715 = vmatprep.subr.bf16.mxu0 0
  %7716 = vmatpush1.bf16.msra.mxu0 0
  %7717 = vmatprep.subr.bf16.mxu0 0
  %7718 = vmatpush1.bf16.msra.mxu0 0
  %7719 = vmatprep.subr.bf16.mxu0 0
  %7720 = vmatpush1.bf16.msra.mxu0 0
  %7721 = vmatprep.subr.bf16.mxu0 0
  %7722 = vmatpush1.bf16.msra.mxu0 0
  %7723 = vmatprep.subr.bf16.mxu0 0
  %7724 = vmatpush1.bf16.msra.mxu0 0
  %7725 = vmatprep.subr.bf16.mxu0 0
  %7726 = vmatpush1.bf16.msra.mxu0 0
  %7727 = vmatprep.subr.bf16.mxu0 0
  %7728 = vmatpush1.bf16.msra.mxu0 0
  %7729 = vmatprep.subr.bf16.mxu0 0
  %7730 = vmatpush1.bf16.msra.mxu0 0
  %7731 = vmatprep.subr.bf16.mxu0 0
  %7732 = vmatpush1.bf16.msra.mxu0 0
  %7733 = vmatprep.subr.bf16.mxu0 0
  %7734 = vmatpush1.bf16.msra.mxu0 0
  %7735 = vmatprep.subr.bf16.mxu0 0
  %7736 = vmatpush1.bf16.msra.mxu0 0
  %7737 = vmatprep.mubr.bf16.mxu0 0
  %7738 = vmatmul.mubr.bf16.gmra.mrb[0].mxu0 %v7574
  %v7739 = vpop.f32.mrb[0].mxu0
  %v7740 = vadd.f32 0.0, %v7739
  %v7741 = vpop.f32.mrb[0].mxu0
  %v7742 = vpop.f32.mrb[0].mxu0
  %v7743 = vadd.f32 0.0, %v7742
  %v7744 = vpop.f32.mrb[0].mxu0
  %7745 = vmatprep.mubr.bf16.mxu0 0
  %7746 = vmatmul.mubr.bf16.gmra.mrb[0].mxu0 %v7577
  %v7747 = vpop.f32.mrb[0].mxu0
  %v7748 = vadd.f32 0.0, %v7747
  %v7749 = vpop.f32.mrb[0].mxu0
  %v7750 = vpop.f32.mrb[0].mxu0
  %v7751 = vadd.f32 0.0, %v7750
  %v7752 = vpop.f32.mrb[0].mxu0
  %7753 = vmatprep.mubr.bf16.mxu0 0
  %7754 = vmatmul.mubr.bf16.gmra.mrb[0].mxu0 %v7580
  %v7755 = vpop.f32.mrb[0].mxu0
  %v7756 = vadd.f32 0.0, %v7755
  %v7757 = vpop.f32.mrb[0].mxu0
  %v7758 = vpop.f32.mrb[0].mxu0
  %v7759 = vadd.f32 0.0, %v7758
  %v7760 = vpop.f32.mrb[0].mxu0
  %7761 = vmatprep.mubr.bf16.mxu0 0
  %7762 = vmatmul.mubr.bf16.gmra.mrb[0].mxu0 %v7583
  %v7763 = vpop.f32.mrb[0].mxu0
  %v7764 = vadd.f32 0.0, %v7763
  %v7765 = vpop.f32.mrb[0].mxu0
  %v7766 = vpop.f32.mrb[0].mxu0
  %v7767 = vadd.f32 0.0, %v7766
  %v7768 = vpop.f32.mrb[0].mxu0
  %7769 = vmatprep.mubr.bf16.mxu0 0
  %7770 = vmatmul.mubr.bf16.gmra.mrb[0].mxu0 %v7586
  %v7771 = vpop.f32.mrb[0].mxu0
  %v7772 = vadd.f32 0.0, %v7771
  %v7773 = vpop.f32.mrb[0].mxu0
  %v7774 = vpop.f32.mrb[0].mxu0
  %v7775 = vadd.f32 0.0, %v7774
  %v7776 = vpop.f32.mrb[0].mxu0
  %7777 = vmatprep.mubr.bf16.mxu0 0
  %7778 = vmatmul.mubr.bf16.gmra.mrb[0].mxu0 %v7589
  %v7779 = vpop.f32.mrb[0].mxu0
  %v7780 = vadd.f32 0.0, %v7779
  %v7781 = vpop.f32.mrb[0].mxu0
  %v7782 = vpop.f32.mrb[0].mxu0
  %v7783 = vadd.f32 0.0, %v7782
  %v7784 = vpop.f32.mrb[0].mxu0
  %7785 = vmatprep.mubr.bf16.mxu0 0
  %7786 = vmatmul.mubr.bf16.gmra.mrb[0].mxu0 %v7592
  %v7787 = vpop.f32.mrb[0].mxu0
  %v7788 = vadd.f32 0.0, %v7787
  %v7789 = vpop.f32.mrb[0].mxu0
  %v7790 = vpop.f32.mrb[0].mxu0
  %v7791 = vadd.f32 0.0, %v7790
  %v7792 = vpop.f32.mrb[0].mxu0
  %7793 = vmatprep.mubr.bf16.mxu0 0
  %7794 = vmatmul.mubr.bf16.gmra.mrb[0].mxu0 %v7595
  %v7795 = vpop.f32.mrb[0].mxu0
  %v7796 = vadd.f32 0.0, %v7795
  %v7797 = vpop.f32.mrb[0].mxu0
  %v7798 = vpop.f32.mrb[0].mxu0
  %v7799 = vadd.f32 0.0, %v7798
  %v7800 = vpop.f32.mrb[0].mxu0
  %7801 = vmatprep.mubr.bf16.mxu0 0
  %7802 = vmatmul.mubr.bf16.gmra.mrb[0].mxu0 %v7598
  %v7803 = vpop.f32.mrb[0].mxu0
  %v7804 = vadd.f32 0.0, %v7803
  %v7805 = vpop.f32.mrb[0].mxu0
  %v7806 = vpop.f32.mrb[0].mxu0
  %v7807 = vadd.f32 0.0, %v7806
  %v7808 = vpop.f32.mrb[0].mxu0
  %7809 = vmatprep.mubr.bf16.mxu0 0
  %7810 = vmatmul.mubr.bf16.gmra.mrb[0].mxu0 %v7601
  %v7811 = vpop.f32.mrb[0].mxu0
  %v7812 = vadd.f32 0.0, %v7811
  %v7813 = vpop.f32.mrb[0].mxu0
  %v7814 = vpop.f32.mrb[0].mxu0
  %v7815 = vadd.f32 0.0, %v7814
  %v7816 = vpop.f32.mrb[0].mxu0
  %7817 = vmatprep.mubr.bf16.mxu0 0
  %7818 = vmatmul.mubr.bf16.gmra.mrb[0].mxu0 %v7604
  %v7819 = vpop.f32.mrb[0].mxu0
  %v7820 = vadd.f32 0.0, %v7819
  %v7821 = vpop.f32.mrb[0].mxu0
  %v7822 = vpop.f32.mrb[0].mxu0
  %v7823 = vadd.f32 0.0, %v7822
  %v7824 = vpop.f32.mrb[0].mxu0
  %7825 = vmatprep.mubr.bf16.mxu0 0
  %7826 = vmatmul.mubr.bf16.gmra.mrb[0].mxu0 %v7607
  %v7827 = vpop.f32.mrb[0].mxu0
  %v7828 = vadd.f32 0.0, %v7827
  %v7829 = vpop.f32.mrb[0].mxu0
  %v7830 = vpop.f32.mrb[0].mxu0
  %v7831 = vadd.f32 0.0, %v7830
  %v7832 = vpop.f32.mrb[0].mxu0
  %7833 = vmatprep.mubr.bf16.mxu0 0
  %7834 = vmatmul.mubr.bf16.gmra.mrb[0].mxu0 %v7610
  %v7835 = vpop.f32.mrb[0].mxu0
  %v7836 = vadd.f32 0.0, %v7835
  %v7837 = vpop.f32.mrb[0].mxu0
  %v7838 = vpop.f32.mrb[0].mxu0
  %v7839 = vadd.f32 0.0, %v7838
  %v7840 = vpop.f32.mrb[0].mxu0
  %7841 = vmatprep.mubr.bf16.mxu0 0
  %7842 = vmatmul.mubr.bf16.gmra.mrb[0].mxu0 %v7613
  %v7843 = vpop.f32.mrb[0].mxu0
  %v7844 = vadd.f32 0.0, %v7843
  %v7845 = vpop.f32.mrb[0].mxu0
  %v7846 = vpop.f32.mrb[0].mxu0
  %v7847 = vadd.f32 0.0, %v7846
  %v7848 = vpop.f32.mrb[0].mxu0
  %7849 = vmatprep.mubr.bf16.mxu0 0
  %7850 = vmatmul.mubr.bf16.gmra.mrb[0].mxu0 %v7616
  %v7851 = vpop.f32.mrb[0].mxu0
  %v7852 = vadd.f32 0.0, %v7851
  %v7853 = vpop.f32.mrb[0].mxu0
  %v7854 = vpop.f32.mrb[0].mxu0
  %v7855 = vadd.f32 0.0, %v7854
  %v7856 = vpop.f32.mrb[0].mxu0
  %7857 = vmatprep.mubr.bf16.mxu0 0
  %7858 = vmatmul.mubr.bf16.gmra.mrb[0].mxu0 %v7619
  %v7859 = vpop.f32.mrb[0].mxu0
  %v7860 = vadd.f32 0.0, %v7859
  %v7861 = vpop.f32.mrb[0].mxu0
  %v7862 = vpop.f32.mrb[0].mxu0
  %v7863 = vadd.f32 0.0, %v7862
  %v7864 = vpop.f32.mrb[0].mxu0
  %7865 = vmatprep.mubr.bf16.mxu0 0
  %7866 = vmatmul.mubr.bf16.gmra.mrb[0].mxu0 %v7622
  %v7867 = vpop.f32.mrb[0].mxu0
  %v7868 = vadd.f32 0.0, %v7867
  %v7869 = vpop.f32.mrb[0].mxu0
  %v7870 = vpop.f32.mrb[0].mxu0
  %v7871 = vadd.f32 0.0, %v7870
  %v7872 = vpop.f32.mrb[0].mxu0
  %7873 = vmatprep.mubr.bf16.mxu0 0
  %7874 = vmatmul.mubr.bf16.gmra.mrb[0].mxu0 %v7625
  %v7875 = vpop.f32.mrb[0].mxu0
  %v7876 = vadd.f32 0.0, %v7875
  %v7877 = vpop.f32.mrb[0].mxu0
  %v7878 = vpop.f32.mrb[0].mxu0
  %v7879 = vadd.f32 0.0, %v7878
  %v7880 = vpop.f32.mrb[0].mxu0
  %7881 = vmatprep.mubr.bf16.mxu0 0
  %7882 = vmatmul.mubr.bf16.gmra.mrb[0].mxu0 %v7628
  %v7883 = vpop.f32.mrb[0].mxu0
  %v7884 = vadd.f32 0.0, %v7883
  %v7885 = vpop.f32.mrb[0].mxu0
  %v7886 = vpop.f32.mrb[0].mxu0
  %v7887 = vadd.f32 0.0, %v7886
  %v7888 = vpop.f32.mrb[0].mxu0
  %7889 = vmatprep.mubr.bf16.mxu0 0
  %7890 = vmatmul.mubr.bf16.gmra.mrb[0].mxu0 %v7631
  %v7891 = vpop.f32.mrb[0].mxu0
  %v7892 = vadd.f32 0.0, %v7891
  %v7893 = vpop.f32.mrb[0].mxu0
  %v7894 = vpop.f32.mrb[0].mxu0
  %v7895 = vadd.f32 0.0, %v7894
  %v7896 = vpop.f32.mrb[0].mxu0
  %7897 = vmatprep.mubr.bf16.mxu0 0
  %7898 = vmatmul.mubr.bf16.gmra.mrb[0].mxu0 %v7634
  %v7899 = vpop.f32.mrb[0].mxu0
  %v7900 = vadd.f32 0.0, %v7899
  %v7901 = vpop.f32.mrb[0].mxu0
  %v7902 = vpop.f32.mrb[0].mxu0
  %v7903 = vadd.f32 0.0, %v7902
  %v7904 = vpop.f32.mrb[0].mxu0
  %7905 = vmatprep.mubr.bf16.mxu0 0
  %7906 = vmatmul.mubr.bf16.gmra.mrb[0].mxu0 %v7637
  %v7907 = vpop.f32.mrb[0].mxu0
  %v7908 = vadd.f32 0.0, %v7907
  %v7909 = vpop.f32.mrb[0].mxu0
  %v7910 = vpop.f32.mrb[0].mxu0
  %v7911 = vadd.f32 0.0, %v7910
  %v7912 = vpop.f32.mrb[0].mxu0
  %7913 = vmatprep.mubr.bf16.mxu0 0
  %7914 = vmatmul.mubr.bf16.gmra.mrb[0].mxu0 %v7640
  %v7915 = vpop.f32.mrb[0].mxu0
  %v7916 = vadd.f32 0.0, %v7915
  %v7917 = vpop.f32.mrb[0].mxu0
  %v7918 = vpop.f32.mrb[0].mxu0
  %v7919 = vadd.f32 0.0, %v7918
  %v7920 = vpop.f32.mrb[0].mxu0
  %7921 = vmatprep.mubr.bf16.mxu0 0
  %7922 = vmatmul.mubr.bf16.gmra.mrb[0].mxu0 %v7643
  %v7923 = vpop.f32.mrb[0].mxu0
  %v7924 = vadd.f32 0.0, %v7923
  %v7925 = vpop.f32.mrb[0].mxu0
  %v7926 = vpop.f32.mrb[0].mxu0
  %v7927 = vadd.f32 0.0, %v7926
  %v7928 = vpop.f32.mrb[0].mxu0
  %7929 = vmatprep.mubr.bf16.mxu0 0
  %7930 = vmatmul.mubr.bf16.gmra.mrb[0].mxu0 %v7646
  %v7931 = vpop.f32.mrb[0].mxu0
  %v7932 = vadd.f32 0.0, %v7931
  %v7933 = vpop.f32.mrb[0].mxu0
  %v7934 = vpop.f32.mrb[0].mxu0
  %v7935 = vadd.f32 0.0, %v7934
  %v7936 = vpop.f32.mrb[0].mxu0
  %7937 = vmatprep.mubr.bf16.mxu0 0
  %7938 = vmatmul.mubr.bf16.gmra.mrb[0].mxu0 %v7649
  %v7939 = vpop.f32.mrb[0].mxu0
  %v7940 = vadd.f32 0.0, %v7939
  %v7941 = vpop.f32.mrb[0].mxu0
  %v7942 = vpop.f32.mrb[0].mxu0
  %v7943 = vadd.f32 0.0, %v7942
  %v7944 = vpop.f32.mrb[0].mxu0
  %7945 = vmatprep.mubr.bf16.mxu0 0
  %7946 = vmatmul.mubr.bf16.gmra.mrb[0].mxu0 %v7652
  %v7947 = vpop.f32.mrb[0].mxu0
  %v7948 = vadd.f32 0.0, %v7947
  %v7949 = vpop.f32.mrb[0].mxu0
  %v7950 = vpop.f32.mrb[0].mxu0
  %v7951 = vadd.f32 0.0, %v7950
  %v7952 = vpop.f32.mrb[0].mxu0
  %7953 = vmatprep.mubr.bf16.mxu0 0
  %7954 = vmatmul.mubr.bf16.gmra.mrb[0].mxu0 %v7655
  %v7955 = vpop.f32.mrb[0].mxu0
  %v7956 = vadd.f32 0.0, %v7955
  %v7957 = vpop.f32.mrb[0].mxu0
  %v7958 = vpop.f32.mrb[0].mxu0
  %v7959 = vadd.f32 0.0, %v7958
  %v7960 = vpop.f32.mrb[0].mxu0
  %7961 = vmatprep.mubr.bf16.mxu0 0
  %7962 = vmatmul.mubr.bf16.gmra.mrb[0].mxu0 %v7658
  %v7963 = vpop.f32.mrb[0].mxu0
  %v7964 = vadd.f32 0.0, %v7963
  %v7965 = vpop.f32.mrb[0].mxu0
  %v7966 = vpop.f32.mrb[0].mxu0
  %v7967 = vadd.f32 0.0, %v7966
  %v7968 = vpop.f32.mrb[0].mxu0
  %7969 = vmatprep.mubr.bf16.mxu0 0
  %7970 = vmatmul.mubr.bf16.gmra.mrb[0].mxu0 %v7661
  %v7971 = vpop.f32.mrb[0].mxu0
  %v7972 = vadd.f32 0.0, %v7971
  %v7973 = vpop.f32.mrb[0].mxu0
  %v7974 = vpop.f32.mrb[0].mxu0
  %v7975 = vadd.f32 0.0, %v7974
  %v7976 = vpop.f32.mrb[0].mxu0
  %7977 = vmatprep.mubr.bf16.mxu0 0
  %7978 = vmatmul.mubr.bf16.gmra.mrb[0].mxu0 %v7664
  %v7979 = vpop.f32.mrb[0].mxu0
  %v7980 = vadd.f32 0.0, %v7979
  %v7981 = vpop.f32.mrb[0].mxu0
  %v7982 = vpop.f32.mrb[0].mxu0
  %v7983 = vadd.f32 0.0, %v7982
  %v7984 = vpop.f32.mrb[0].mxu0
  %7985 = vmatprep.mubr.bf16.mxu0 0
  %7986 = vmatmul.mubr.bf16.gmra.mrb[0].mxu0 %v7667
  %v7987 = vpop.f32.mrb[0].mxu0
  %v7988 = vadd.f32 0.0, %v7987
  %v7989 = vpop.f32.mrb[0].mxu0
  %v7990 = vpop.f32.mrb[0].mxu0
  %v7991 = vadd.f32 0.0, %v7990
  %v7992 = vpop.f32.mrb[0].mxu0
  %7993 = vmatprep.mubr.bf16.mxu0 0
  %7994 = vmatmul.mubr.bf16.gmra.mrb[0].mxu0 %v7670
  %v7995 = vpop.f32.mrb[0].mxu0
  %v7996 = vadd.f32 0.0, %v7995
  %v7997 = vpop.f32.mrb[0].mxu0
  %v7998 = vpop.f32.mrb[0].mxu0
  %v7999 = vadd.f32 0.0, %v7998
  %v8000 = vpop.f32.mrb[0].mxu0
  %8001 = vmatprep.mubr.bf16.mxu0 0
  %8002 = vmatmul.mubr.bf16.gmra.mrb[0].mxu0 %v7673
  %v8003 = vpop.f32.mrb[0].mxu0
  %v8004 = vadd.f32 0.0, %v8003
  %v8005 = vpop.f32.mrb[0].mxu0
  %v8006 = vpop.f32.mrb[0].mxu0
  %v8007 = vadd.f32 0.0, %v8006
  %v8008 = vpop.f32.mrb[0].mxu0
  %8009 = vmatprep.mubr.bf16.mxu0 0
  %8010 = vmatmul.mubr.bf16.gmra.mrb[0].mxu0 %v7676
  %v8011 = vpop.f32.mrb[0].mxu0
  %v8012 = vadd.f32 0.0, %v8011
  %v8013 = vpop.f32.mrb[0].mxu0
  %v8014 = vpop.f32.mrb[0].mxu0
  %v8015 = vadd.f32 0.0, %v8014
  %v8016 = vpop.f32.mrb[0].mxu0
  %8017 = vmatprep.mubr.bf16.mxu0 0
  %8018 = vmatmul.mubr.bf16.gmra.mrb[0].mxu0 %v7679
  %v8019 = vpop.f32.mrb[0].mxu0
  %v8020 = vadd.f32 0.0, %v8019
  %v8021 = vpop.f32.mrb[0].mxu0
  %v8022 = vpop.f32.mrb[0].mxu0
  %v8023 = vadd.f32 0.0, %v8022
  %v8024 = vpop.f32.mrb[0].mxu0
  %8025 = vmatprep.mubr.bf16.mxu0 0
  %8026 = vmatmul.mubr.bf16.gmra.mrb[0].mxu0 %v7682
  %v8027 = vpop.f32.mrb[0].mxu0
  %v8028 = vadd.f32 0.0, %v8027
  %v8029 = vpop.f32.mrb[0].mxu0
  %v8030 = vpop.f32.mrb[0].mxu0
  %v8031 = vadd.f32 0.0, %v8030
  %v8032 = vpop.f32.mrb[0].mxu0
  %8033 = vmatprep.mubr.bf16.mxu0 0
  %8034 = vmatmul.mubr.bf16.gmra.mrb[0].mxu0 %v7685
  %v8035 = vpop.f32.mrb[0].mxu0
  %v8036 = vadd.f32 0.0, %v8035
  %v8037 = vpop.f32.mrb[0].mxu0
  %v8038 = vpop.f32.mrb[0].mxu0
  %v8039 = vadd.f32 0.0, %v8038
  %v8040 = vpop.f32.mrb[0].mxu0
  %8041 = vmatprep.mubr.bf16.mxu0 0
  %8042 = vmatmul.mubr.bf16.gmra.mrb[0].mxu0 %v7688
  %v8043 = vpop.f32.mrb[0].mxu0
  %v8044 = vadd.f32 0.0, %v8043
  %v8045 = vpop.f32.mrb[0].mxu0
  %v8046 = vpop.f32.mrb[0].mxu0
  %v8047 = vadd.f32 0.0, %v8046
  %v8048 = vpop.f32.mrb[0].mxu0
  %8049 = vmatprep.mubr.bf16.mxu0 0
  %8050 = vmatmul.mubr.bf16.gmra.mrb[0].mxu0 %v7691
  %v8051 = vpop.f32.mrb[0].mxu0
  %v8052 = vadd.f32 0.0, %v8051
  %v8053 = vpop.f32.mrb[0].mxu0
  %v8054 = vpop.f32.mrb[0].mxu0
  %v8055 = vadd.f32 0.0, %v8054
  %v8056 = vpop.f32.mrb[0].mxu0
  %8057 = vmatprep.mubr.bf16.mxu0 0
  %8058 = vmatmul.mubr.bf16.gmra.mrb[0].mxu0 %v7694
  %v8059 = vpop.f32.mrb[0].mxu0
  %v8060 = vadd.f32 0.0, %v8059
  %v8061 = vpop.f32.mrb[0].mxu0
  %v8062 = vpop.f32.mrb[0].mxu0
  %v8063 = vadd.f32 0.0, %v8062
  %v8064 = vpop.f32.mrb[0].mxu0
  %8065 = vmatprep.mubr.bf16.mxu0 0
  %8066 = vmatmul.mubr.bf16.gmra.mrb[0].mxu0 %v7697
  %v8067 = vpop.f32.mrb[0].mxu0
  %v8068 = vadd.f32 0.0, %v8067
  %v8069 = vpop.f32.mrb[0].mxu0
  %v8070 = vpop.f32.mrb[0].mxu0
  %v8071 = vadd.f32 0.0, %v8070
  %v8072 = vpop.f32.mrb[0].mxu0
  %8073 = vmatprep.mubr.bf16.mxu0 0
  %8074 = vmatmul.mubr.bf16.gmra.mrb[0].mxu0 %v7700
  %v8075 = vpop.f32.mrb[0].mxu0
  %v8076 = vadd.f32 0.0, %v8075
  %v8077 = vpop.f32.mrb[0].mxu0
  %v8078 = vpop.f32.mrb[0].mxu0
  %v8079 = vadd.f32 0.0, %v8078
  %v8080 = vpop.f32.mrb[0].mxu0
  %8081 = vdwg.mxu0
  %v8082 = vadd.f32 %v7299, %v7740
  %v8083 = vadd.f32 %v7300, %v7743
  %v8084 = vadd.f32 %v7301, %v7748
  %v8085 = vadd.f32 %v7302, %v7751
  %v8086 = vadd.f32 %v7303, %v7756
  %v8087 = vadd.f32 %v7304, %v7759
  %v8088 = vadd.f32 %v7305, %v7764
  %v8089 = vadd.f32 %v7306, %v7767
  %v8090 = vadd.f32 %v7307, %v7772
  %v8091 = vadd.f32 %v7308, %v7775
  %v8092 = vadd.f32 %v7309, %v7780
  %v8093 = vadd.f32 %v7310, %v7783
  %v8094 = vadd.f32 %v7311, %v7788
  %v8095 = vadd.f32 %v7312, %v7791
  %v8096 = vadd.f32 %v7313, %v7796
  %v8097 = vadd.f32 %v7314, %v7799
  %v8098 = vadd.f32 %v7315, %v7804
  %v8099 = vadd.f32 %v7316, %v7807
  %v8100 = vadd.f32 %v7317, %v7812
  %v8101 = vadd.f32 %v7318, %v7815
  %v8102 = vadd.f32 %v7319, %v7820
  %v8103 = vadd.f32 %v7320, %v7823
  %v8104 = vadd.f32 %v7321, %v7828
  %v8105 = vadd.f32 %v7322, %v7831
  %v8106 = vadd.f32 %v7323, %v7836
  %v8107 = vadd.f32 %v7324, %v7839
  %v8108 = vadd.f32 %v7325, %v7844
  %v8109 = vadd.f32 %v7326, %v7847
  %v8110 = vadd.f32 %v7327, %v7852
  %v8111 = vadd.f32 %v7328, %v7855
  %v8112 = vadd.f32 %v7329, %v7860
  %v8113 = vadd.f32 %v7330, %v7863
  %v8114 = vadd.f32 %v7331, %v7868
  %v8115 = vadd.f32 %v7332, %v7871
  %v8116 = vadd.f32 %v7333, %v7876
  %v8117 = vadd.f32 %v7334, %v7879
  %v8118 = vadd.f32 %v7335, %v7884
  %v8119 = vadd.f32 %v7336, %v7887
  %v8120 = vadd.f32 %v7337, %v7892
  %v8121 = vadd.f32 %v7338, %v7895
  %v8122 = vadd.f32 %v7339, %v7900
  %v8123 = vadd.f32 %v7340, %v7903
  %v8124 = vadd.f32 %v7341, %v7908
  %v8125 = vadd.f32 %v7342, %v7911
  %v8126 = vadd.f32 %v7343, %v7916
  %v8127 = vadd.f32 %v7344, %v7919
  %v8128 = vadd.f32 %v7345, %v7924
  %v8129 = vadd.f32 %v7346, %v7927
  %v8130 = vadd.f32 %v7347, %v7932
  %v8131 = vadd.f32 %v7348, %v7935
  %v8132 = vadd.f32 %v7349, %v7940
  %v8133 = vadd.f32 %v7350, %v7943
  %v8134 = vadd.f32 %v7351, %v7948
  %v8135 = vadd.f32 %v7352, %v7951
  %v8136 = vadd.f32 %v7353, %v7956
  %v8137 = vadd.f32 %v7354, %v7959
  %v8138 = vadd.f32 %v7355, %v7964
  %v8139 = vadd.f32 %v7356, %v7967
  %v8140 = vadd.f32 %v7357, %v7972
  %v8141 = vadd.f32 %v7358, %v7975
  %v8142 = vadd.f32 %v7359, %v7980
  %v8143 = vadd.f32 %v7360, %v7983
  %v8144 = vadd.f32 %v7361, %v7988
  %v8145 = vadd.f32 %v7362, %v7991
  %v8146 = vadd.f32 %v7363, %v7996
  %v8147 = vadd.f32 %v7364, %v7999
  %v8148 = vadd.f32 %v7365, %v8004
  %v8149 = vadd.f32 %v7366, %v8007
  %v8150 = vadd.f32 %v7367, %v8012
  %v8151 = vadd.f32 %v7368, %v8015
  %v8152 = vadd.f32 %v7369, %v8020
  %v8153 = vadd.f32 %v7370, %v8023
  %v8154 = vadd.f32 %v7371, %v8028
  %v8155 = vadd.f32 %v7372, %v8031
  %v8156 = vadd.f32 %v7373, %v8036
  %v8157 = vadd.f32 %v7374, %v8039
  %v8158 = vadd.f32 %v7375, %v8044
  %v8159 = vadd.f32 %v7376, %v8047
  %v8160 = vadd.f32 %v7377, %v8052
  %v8161 = vadd.f32 %v7378, %v8055
  %v8162 = vadd.f32 %v7379, %v8060
  %v8163 = vadd.f32 %v7380, %v8063
  %v8164 = vadd.f32 %v7381, %v8068
  %v8165 = vadd.f32 %v7382, %v8071
  %v8166 = vadd.f32 %v7383, %v8076
  %v8167 = vadd.f32 %v7384, %v8079
  %p8168 = scmp.eq.s32.totalorder 0, 0
  // Predicated region
  $region18: #{first_conv.1} parent=0 // pred_check
    %p8169 = pneg %p8168
  $region19: #{first_conv.1} parent=0 // pred_check_branch
    %8171 = sbr.rel (%p8169) target = $region21
  $region20: #{first_conv.1} parent=0 // pred_region
    %vm8172 = vcmask 523264
    %8173 = vst.msk [vmem:[#allocation2] sm:$0xff] %vm8172, %v8082
    %8174 = vst.msk [vmem:[#allocation2 + $0x8] sm:$0xff] %vm8172, %v8083
    %8175 = vst.msk [vmem:[#allocation2 + $0x10] sm:$0xff] %vm8172, %v8084
    %8176 = vst.msk [vmem:[#allocation2 + $0x18] sm:$0xff] %vm8172, %v8085
    %8177 = vst.msk [vmem:[#allocation2 + $0x20] sm:$0xff] %vm8172, %v8086
    %8178 = vst.msk [vmem:[#allocation2 + $0x28] sm:$0xff] %vm8172, %v8087
    %8179 = vst.msk [vmem:[#allocation2 + $0x30] sm:$0xff] %vm8172, %v8088
    %8180 = vst.msk [vmem:[#allocation2 + $0x38] sm:$0xff] %vm8172, %v8089
    %8181 = vst.msk [vmem:[#allocation2 + $0x40] sm:$0xff] %vm8172, %v8090
    %8182 = vst.msk [vmem:[#allocation2 + $0x48] sm:$0xff] %vm8172, %v8091
    %8183 = vst.msk [vmem:[#allocation2 + $0x50] sm:$0xff] %vm8172, %v8092
    %8184 = vst.msk [vmem:[#allocation2 + $0x58] sm:$0xff] %vm8172, %v8093
    %8185 = vst.msk [vmem:[#allocation2 + $0x60] sm:$0xff] %vm8172, %v8094
    %8186 = vst.msk [vmem:[#allocation2 + $0x68] sm:$0xff] %vm8172, %v8095
    %8187 = vst.msk [vmem:[#allocation2 + $0x70] sm:$0xff] %vm8172, %v8096
    %8188 = vst.msk [vmem:[#allocation2 + $0x78] sm:$0xff] %vm8172, %v8097
    %8189 = vst.msk [vmem:[#allocation2 + $0x80] sm:$0xff] %vm8172, %v8098
    %8190 = vst.msk [vmem:[#allocation2 + $0x88] sm:$0xff] %vm8172, %v8099
    %8191 = vst.msk [vmem:[#allocation2 + $0x90] sm:$0xff] %vm8172, %v8100
    %8192 = vst.msk [vmem:[#allocation2 + $0x98] sm:$0xff] %vm8172, %v8101
    %8193 = vst.msk [vmem:[#allocation2 + $0xa0] sm:$0xff] %vm8172, %v8102
    %8194 = vst.msk [vmem:[#allocation2 + $0xa8] sm:$0xff] %vm8172, %v8103
    %8195 = vst.msk [vmem:[#allocation2 + $0xb0] sm:$0xff] %vm8172, %v8104
    %8196 = vst.msk [vmem:[#allocation2 + $0xb8] sm:$0xff] %vm8172, %v8105
    %8197 = vst.msk [vmem:[#allocation2 + $0xc0] sm:$0xff] %vm8172, %v8106
    %8198 = vst.msk [vmem:[#allocation2 + $0xc8] sm:$0xff] %vm8172, %v8107
    %8199 = vst.msk [vmem:[#allocation2 + $0xd0] sm:$0xff] %vm8172, %v8108
    %8200 = vst.msk [vmem:[#allocation2 + $0xd8] sm:$0xff] %vm8172, %v8109
    %8201 = vst.msk [vmem:[#allocation2 + $0xe0] sm:$0xff] %vm8172, %v8110
    %8202 = vst.msk [vmem:[#allocation2 + $0xe8] sm:$0xff] %vm8172, %v8111
    %8203 = vst.msk [vmem:[#allocation2 + $0xf0] sm:$0xff] %vm8172, %v8112
    %8204 = vst.msk [vmem:[#allocation2 + $0xf8] sm:$0xff] %vm8172, %v8113
    %8205 = vst.msk [vmem:[#allocation2 + $0x100] sm:$0xff] %vm8172, %v8114
    %8206 = vst.msk [vmem:[#allocation2 + $0x108] sm:$0xff] %vm8172, %v8115
    %8207 = vst.msk [vmem:[#allocation2 + $0x110] sm:$0xff] %vm8172, %v8116
    %8208 = vst.msk [vmem:[#allocation2 + $0x118] sm:$0xff] %vm8172, %v8117
    %8209 = vst.msk [vmem:[#allocation2 + $0x120] sm:$0xff] %vm8172, %v8118
    %8210 = vst.msk [vmem:[#allocation2 + $0x128] sm:$0xff] %vm8172, %v8119
    %8211 = vst.msk [vmem:[#allocation2 + $0x130] sm:$0xff] %vm8172, %v8120
    %8212 = vst.msk [vmem:[#allocation2 + $0x138] sm:$0xff] %vm8172, %v8121
    %8213 = vst.msk [vmem:[#allocation2 + $0x140] sm:$0xff] %vm8172, %v8122
    %8214 = vst.msk [vmem:[#allocation2 + $0x148] sm:$0xff] %vm8172, %v8123
    %8215 = vst.msk [vmem:[#allocation2 + $0x150] sm:$0xff] %vm8172, %v8124
    %8216 = vst.msk [vmem:[#allocation2 + $0x158] sm:$0xff] %vm8172, %v8125
    %8217 = vst.msk [vmem:[#allocation2 + $0x160] sm:$0xff] %vm8172, %v8126
    %8218 = vst.msk [vmem:[#allocation2 + $0x168] sm:$0xff] %vm8172, %v8127
    %8219 = vst.msk [vmem:[#allocation2 + $0x170] sm:$0xff] %vm8172, %v8128
    %8220 = vst.msk [vmem:[#allocation2 + $0x178] sm:$0xff] %vm8172, %v8129
    %8221 = vst.msk [vmem:[#allocation2 + $0x180] sm:$0xff] %vm8172, %v8130
    %8222 = vst.msk [vmem:[#allocation2 + $0x188] sm:$0xff] %vm8172, %v8131
    %8223 = vst.msk [vmem:[#allocation2 + $0x190] sm:$0xff] %vm8172, %v8132
    %8224 = vst.msk [vmem:[#allocation2 + $0x198] sm:$0xff] %vm8172, %v8133
    %8225 = vst.msk [vmem:[#allocation2 + $0x1a0] sm:$0xff] %vm8172, %v8134
    %8226 = vst.msk [vmem:[#allocation2 + $0x1a8] sm:$0xff] %vm8172, %v8135
    %8227 = vst.msk [vmem:[#allocation2 + $0x1b0] sm:$0xff] %vm8172, %v8136
    %8228 = vst.msk [vmem:[#allocation2 + $0x1b8] sm:$0xff] %vm8172, %v8137
    %8229 = vst.msk [vmem:[#allocation2 + $0x1c0] sm:$0xff] %vm8172, %v8138
    %8230 = vst.msk [vmem:[#allocation2 + $0x1c8] sm:$0xff] %vm8172, %v8139
    %8231 = vst.msk [vmem:[#allocation2 + $0x1d0] sm:$0xff] %vm8172, %v8140
    %8232 = vst.msk [vmem:[#allocation2 + $0x1d8] sm:$0xff] %vm8172, %v8141
    %8233 = vst.msk [vmem:[#allocation2 + $0x1e0] sm:$0xff] %vm8172, %v8142
    %8234 = vst.msk [vmem:[#allocation2 + $0x1e8] sm:$0xff] %vm8172, %v8143
    %8235 = vst.msk [vmem:[#allocation2 + $0x1f0] sm:$0xff] %vm8172, %v8144
    %8236 = vst.msk [vmem:[#allocation2 + $0x1f8] sm:$0xff] %vm8172, %v8145
    %8237 = vst.msk [vmem:[#allocation2 + $0x200] sm:$0xff] %vm8172, %v8146
    %8238 = vst.msk [vmem:[#allocation2 + $0x208] sm:$0xff] %vm8172, %v8147
    %8239 = vst.msk [vmem:[#allocation2 + $0x210] sm:$0xff] %vm8172, %v8148
    %8240 = vst.msk [vmem:[#allocation2 + $0x218] sm:$0xff] %vm8172, %v8149
    %8241 = vst.msk [vmem:[#allocation2 + $0x220] sm:$0xff] %vm8172, %v8150
    %8242 = vst.msk [vmem:[#allocation2 + $0x228] sm:$0xff] %vm8172, %v8151
    %8243 = vst.msk [vmem:[#allocation2 + $0x230] sm:$0xff] %vm8172, %v8152
    %8244 = vst.msk [vmem:[#allocation2 + $0x238] sm:$0xff] %vm8172, %v8153
    %8245 = vst.msk [vmem:[#allocation2 + $0x240] sm:$0xff] %vm8172, %v8154
    %8246 = vst.msk [vmem:[#allocation2 + $0x248] sm:$0xff] %vm8172, %v8155
    %8247 = vst.msk [vmem:[#allocation2 + $0x250] sm:$0xff] %vm8172, %v8156
    %8248 = vst.msk [vmem:[#allocation2 + $0x258] sm:$0xff] %vm8172, %v8157
    %8249 = vst.msk [vmem:[#allocation2 + $0x260] sm:$0xff] %vm8172, %v8158
    %8250 = vst.msk [vmem:[#allocation2 + $0x268] sm:$0xff] %vm8172, %v8159
    %8251 = vst.msk [vmem:[#allocation2 + $0x270] sm:$0xff] %vm8172, %v8160
    %8252 = vst.msk [vmem:[#allocation2 + $0x278] sm:$0xff] %vm8172, %v8161
    %8253 = vst.msk [vmem:[#allocation2 + $0x280] sm:$0xff] %vm8172, %v8162
    %8254 = vst.msk [vmem:[#allocation2 + $0x288] sm:$0xff] %vm8172, %v8163
    %8255 = vst.msk [vmem:[#allocation2 + $0x290] sm:$0xff] %vm8172, %v8164
    %8256 = vst.msk [vmem:[#allocation2 + $0x298] sm:$0xff] %vm8172, %v8165
    %8257 = vst.msk [vmem:[#allocation2 + $0x2a0] sm:$0xff] %vm8172, %v8166
    %vm8258 = vcmask 519168
    %8259 = vst.msk [vmem:[#allocation2 + $0x2a8] sm:$0xf] %vm8258, %v8167
  $region21: #{first_conv.1} parent=0 // pred_fallthru
    _
  %p8260 = scmp.gt.s32.totalorder 0, 0
  // Predicated region
  $region22: #{first_conv.1} parent=0 // pred_check
    %p8261 = pneg %p8260
  $region23: #{first_conv.1} parent=0 // pred_check_branch
    %8263 = sbr.rel (%p8261) target = $region25
  $region24: #{first_conv.1} parent=0 // pred_region
    %v8264 = vld [vmem:[#allocation2] sm:$0xff]
    %v8265 = vld [vmem:[#allocation2 + $0x8] sm:$0xff]
    %v8266 = vld [vmem:[#allocation2 + $0x10] sm:$0xff]
    %v8267 = vld [vmem:[#allocation2 + $0x18] sm:$0xff]
    %v8268 = vld [vmem:[#allocation2 + $0x20] sm:$0xff]
    %v8269 = vld [vmem:[#allocation2 + $0x28] sm:$0xff]
    %v8270 = vld [vmem:[#allocation2 + $0x30] sm:$0xff]
    %v8271 = vld [vmem:[#allocation2 + $0x38] sm:$0xff]
    %v8272 = vld [vmem:[#allocation2 + $0x40] sm:$0xff]
    %v8273 = vld [vmem:[#allocation2 + $0x48] sm:$0xff]
    %v8274 = vld [vmem:[#allocation2 + $0x50] sm:$0xff]
    %v8275 = vld [vmem:[#allocation2 + $0x58] sm:$0xff]
    %v8276 = vld [vmem:[#allocation2 + $0x60] sm:$0xff]
    %v8277 = vld [vmem:[#allocation2 + $0x68] sm:$0xff]
    %v8278 = vld [vmem:[#allocation2 + $0x70] sm:$0xff]
    %v8279 = vld [vmem:[#allocation2 + $0x78] sm:$0xff]
    %v8280 = vld [vmem:[#allocation2 + $0x80] sm:$0xff]
    %v8281 = vld [vmem:[#allocation2 + $0x88] sm:$0xff]
    %v8282 = vld [vmem:[#allocation2 + $0x90] sm:$0xff]
    %v8283 = vld [vmem:[#allocation2 + $0x98] sm:$0xff]
    %v8284 = vld [vmem:[#allocation2 + $0xa0] sm:$0xff]
    %v8285 = vld [vmem:[#allocation2 + $0xa8] sm:$0xff]
    %v8286 = vld [vmem:[#allocation2 + $0xb0] sm:$0xff]
    %v8287 = vld [vmem:[#allocation2 + $0xb8] sm:$0xff]
    %v8288 = vld [vmem:[#allocation2 + $0xc0] sm:$0xff]
    %v8289 = vld [vmem:[#allocation2 + $0xc8] sm:$0xff]
    %v8290 = vld [vmem:[#allocation2 + $0xd0] sm:$0xff]
    %v8291 = vld [vmem:[#allocation2 + $0xd8] sm:$0xff]
    %v8292 = vld [vmem:[#allocation2 + $0xe0] sm:$0xff]
    %v8293 = vld [vmem:[#allocation2 + $0xe8] sm:$0xff]
    %v8294 = vld [vmem:[#allocation2 + $0xf0] sm:$0xff]
    %v8295 = vld [vmem:[#allocation2 + $0xf8] sm:$0xff]
    %v8296 = vld [vmem:[#allocation2 + $0x100] sm:$0xff]
    %v8297 = vld [vmem:[#allocation2 + $0x108] sm:$0xff]
    %v8298 = vld [vmem:[#allocation2 + $0x110] sm:$0xff]
    %v8299 = vld [vmem:[#allocation2 + $0x118] sm:$0xff]
    %v8300 = vld [vmem:[#allocation2 + $0x120] sm:$0xff]
    %v8301 = vld [vmem:[#allocation2 + $0x128] sm:$0xff]
    %v8302 = vld [vmem:[#allocation2 + $0x130] sm:$0xff]
    %v8303 = vld [vmem:[#allocation2 + $0x138] sm:$0xff]
    %v8304 = vld [vmem:[#allocation2 + $0x140] sm:$0xff]
    %v8305 = vld [vmem:[#allocation2 + $0x148] sm:$0xff]
    %v8306 = vld [vmem:[#allocation2 + $0x150] sm:$0xff]
    %v8307 = vld [vmem:[#allocation2 + $0x158] sm:$0xff]
    %v8308 = vld [vmem:[#allocation2 + $0x160] sm:$0xff]
    %v8309 = vld [vmem:[#allocation2 + $0x168] sm:$0xff]
    %v8310 = vld [vmem:[#allocation2 + $0x170] sm:$0xff]
    %v8311 = vld [vmem:[#allocation2 + $0x178] sm:$0xff]
    %v8312 = vld [vmem:[#allocation2 + $0x180] sm:$0xff]
    %v8313 = vld [vmem:[#allocation2 + $0x188] sm:$0xff]
    %v8314 = vld [vmem:[#allocation2 + $0x190] sm:$0xff]
    %v8315 = vld [vmem:[#allocation2 + $0x198] sm:$0xff]
    %v8316 = vld [vmem:[#allocation2 + $0x1a0] sm:$0xff]
    %v8317 = vld [vmem:[#allocation2 + $0x1a8] sm:$0xff]
    %v8318 = vld [vmem:[#allocation2 + $0x1b0] sm:$0xff]
    %v8319 = vld [vmem:[#allocation2 + $0x1b8] sm:$0xff]
    %v8320 = vld [vmem:[#allocation2 + $0x1c0] sm:$0xff]
    %v8321 = vld [vmem:[#allocation2 + $0x1c8] sm:$0xff]
    %v8322 = vld [vmem:[#allocation2 + $0x1d0] sm:$0xff]
    %v8323 = vld [vmem:[#allocation2 + $0x1d8] sm:$0xff]
    %v8324 = vld [vmem:[#allocation2 + $0x1e0] sm:$0xff]
    %v8325 = vld [vmem:[#allocation2 + $0x1e8] sm:$0xff]
    %v8326 = vld [vmem:[#allocation2 + $0x1f0] sm:$0xff]
    %v8327 = vld [vmem:[#allocation2 + $0x1f8] sm:$0xff]
    %v8328 = vld [vmem:[#allocation2 + $0x200] sm:$0xff]
    %v8329 = vld [vmem:[#allocation2 + $0x208] sm:$0xff]
    %v8330 = vld [vmem:[#allocation2 + $0x210] sm:$0xff]
    %v8331 = vld [vmem:[#allocation2 + $0x218] sm:$0xff]
    %v8332 = vld [vmem:[#allocation2 + $0x220] sm:$0xff]
    %v8333 = vld [vmem:[#allocation2 + $0x228] sm:$0xff]
    %v8334 = vld [vmem:[#allocation2 + $0x230] sm:$0xff]
    %v8335 = vld [vmem:[#allocation2 + $0x238] sm:$0xff]
    %v8336 = vld [vmem:[#allocation2 + $0x240] sm:$0xff]
    %v8337 = vld [vmem:[#allocation2 + $0x248] sm:$0xff]
    %v8338 = vld [vmem:[#allocation2 + $0x250] sm:$0xff]
    %v8339 = vld [vmem:[#allocation2 + $0x258] sm:$0xff]
    %v8340 = vld [vmem:[#allocation2 + $0x260] sm:$0xff]
    %v8341 = vld [vmem:[#allocation2 + $0x268] sm:$0xff]
    %v8342 = vld [vmem:[#allocation2 + $0x270] sm:$0xff]
    %v8343 = vld [vmem:[#allocation2 + $0x278] sm:$0xff]
    %v8344 = vld [vmem:[#allocation2 + $0x280] sm:$0xff]
    %v8345 = vld [vmem:[#allocation2 + $0x288] sm:$0xff]
    %v8346 = vld [vmem:[#allocation2 + $0x290] sm:$0xff]
    %v8347 = vld [vmem:[#allocation2 + $0x298] sm:$0xff]
    %v8348 = vld [vmem:[#allocation2 + $0x2a0] sm:$0xff]
    %v8349 = vld [vmem:[#allocation2 + $0x2a8] sm:$0xf]
    %v8350 = vadd.f32 %v8264, %v8082
    %v8351 = vadd.f32 %v8265, %v8083
    %v8352 = vadd.f32 %v8266, %v8084
    %v8353 = vadd.f32 %v8267, %v8085
    %v8354 = vadd.f32 %v8268, %v8086
    %v8355 = vadd.f32 %v8269, %v8087
    %v8356 = vadd.f32 %v8270, %v8088
    %v8357 = vadd.f32 %v8271, %v8089
    %v8358 = vadd.f32 %v8272, %v8090
    %v8359 = vadd.f32 %v8273, %v8091
    %v8360 = vadd.f32 %v8274, %v8092
    %v8361 = vadd.f32 %v8275, %v8093
    %v8362 = vadd.f32 %v8276, %v8094
    %v8363 = vadd.f32 %v8277, %v8095
    %v8364 = vadd.f32 %v8278, %v8096
    %v8365 = vadd.f32 %v8279, %v8097
    %v8366 = vadd.f32 %v8280, %v8098
    %v8367 = vadd.f32 %v8281, %v8099
    %v8368 = vadd.f32 %v8282, %v8100
    %v8369 = vadd.f32 %v8283, %v8101
    %v8370 = vadd.f32 %v8284, %v8102
    %v8371 = vadd.f32 %v8285, %v8103
    %v8372 = vadd.f32 %v8286, %v8104
    %v8373 = vadd.f32 %v8287, %v8105
    %v8374 = vadd.f32 %v8288, %v8106
    %v8375 = vadd.f32 %v8289, %v8107
    %v8376 = vadd.f32 %v8290, %v8108
    %v8377 = vadd.f32 %v8291, %v8109
    %v8378 = vadd.f32 %v8292, %v8110
    %v8379 = vadd.f32 %v8293, %v8111
    %v8380 = vadd.f32 %v8294, %v8112
    %v8381 = vadd.f32 %v8295, %v8113
    %v8382 = vadd.f32 %v8296, %v8114
    %v8383 = vadd.f32 %v8297, %v8115
    %v8384 = vadd.f32 %v8298, %v8116
    %v8385 = vadd.f32 %v8299, %v8117
    %v8386 = vadd.f32 %v8300, %v8118
    %v8387 = vadd.f32 %v8301, %v8119
    %v8388 = vadd.f32 %v8302, %v8120
    %v8389 = vadd.f32 %v8303, %v8121
    %v8390 = vadd.f32 %v8304, %v8122
    %v8391 = vadd.f32 %v8305, %v8123
    %v8392 = vadd.f32 %v8306, %v8124
    %v8393 = vadd.f32 %v8307, %v8125
    %v8394 = vadd.f32 %v8308, %v8126
    %v8395 = vadd.f32 %v8309, %v8127
    %v8396 = vadd.f32 %v8310, %v8128
    %v8397 = vadd.f32 %v8311, %v8129
    %v8398 = vadd.f32 %v8312, %v8130
    %v8399 = vadd.f32 %v8313, %v8131
    %v8400 = vadd.f32 %v8314, %v8132
    %v8401 = vadd.f32 %v8315, %v8133
    %v8402 = vadd.f32 %v8316, %v8134
    %v8403 = vadd.f32 %v8317, %v8135
    %v8404 = vadd.f32 %v8318, %v8136
    %v8405 = vadd.f32 %v8319, %v8137
    %v8406 = vadd.f32 %v8320, %v8138
    %v8407 = vadd.f32 %v8321, %v8139
    %v8408 = vadd.f32 %v8322, %v8140
    %v8409 = vadd.f32 %v8323, %v8141
    %v8410 = vadd.f32 %v8324, %v8142
    %v8411 = vadd.f32 %v8325, %v8143
    %v8412 = vadd.f32 %v8326, %v8144
    %v8413 = vadd.f32 %v8327, %v8145
    %v8414 = vadd.f32 %v8328, %v8146
    %v8415 = vadd.f32 %v8329, %v8147
    %v8416 = vadd.f32 %v8330, %v8148
    %v8417 = vadd.f32 %v8331, %v8149
    %v8418 = vadd.f32 %v8332, %v8150
    %v8419 = vadd.f32 %v8333, %v8151
    %v8420 = vadd.f32 %v8334, %v8152
    %v8421 = vadd.f32 %v8335, %v8153
    %v8422 = vadd.f32 %v8336, %v8154
    %v8423 = vadd.f32 %v8337, %v8155
    %v8424 = vadd.f32 %v8338, %v8156
    %v8425 = vadd.f32 %v8339, %v8157
    %v8426 = vadd.f32 %v8340, %v8158
    %v8427 = vadd.f32 %v8341, %v8159
    %v8428 = vadd.f32 %v8342, %v8160
    %v8429 = vadd.f32 %v8343, %v8161
    %v8430 = vadd.f32 %v8344, %v8162
    %v8431 = vadd.f32 %v8345, %v8163
    %v8432 = vadd.f32 %v8346, %v8164
    %v8433 = vadd.f32 %v8347, %v8165
    %v8434 = vadd.f32 %v8348, %v8166
    %v8435 = vadd.f32 %v8349, %v8167
    %vm8436 = vcmask 523264
    %8437 = vst.msk [vmem:[#allocation2] sm:$0xff] %vm8436, %v8350
    %8438 = vst.msk [vmem:[#allocation2 + $0x8] sm:$0xff] %vm8436, %v8351
    %8439 = vst.msk [vmem:[#allocation2 + $0x10] sm:$0xff] %vm8436, %v8352
    %8440 = vst.msk [vmem:[#allocation2 + $0x18] sm:$0xff] %vm8436, %v8353
    %8441 = vst.msk [vmem:[#allocation2 + $0x20] sm:$0xff] %vm8436, %v8354
    %8442 = vst.msk [vmem:[#allocation2 + $0x28] sm:$0xff] %vm8436, %v8355
    %8443 = vst.msk [vmem:[#allocation2 + $0x30] sm:$0xff] %vm8436, %v8356
    %8444 = vst.msk [vmem:[#allocation2 + $0x38] sm:$0xff] %vm8436, %v8357
    %8445 = vst.msk [vmem:[#allocation2 + $0x40] sm:$0xff] %vm8436, %v8358
    %8446 = vst.msk [vmem:[#allocation2 + $0x48] sm:$0xff] %vm8436, %v8359
    %8447 = vst.msk [vmem:[#allocation2 + $0x50] sm:$0xff] %vm8436, %v8360
    %8448 = vst.msk [vmem:[#allocation2 + $0x58] sm:$0xff] %vm8436, %v8361
    %8449 = vst.msk [vmem:[#allocation2 + $0x60] sm:$0xff] %vm8436, %v8362
    %8450 = vst.msk [vmem:[#allocation2 + $0x68] sm:$0xff] %vm8436, %v8363
    %8451 = vst.msk [vmem:[#allocation2 + $0x70] sm:$0xff] %vm8436, %v8364
    %8452 = vst.msk [vmem:[#allocation2 + $0x78] sm:$0xff] %vm8436, %v8365
    %8453 = vst.msk [vmem:[#allocation2 + $0x80] sm:$0xff] %vm8436, %v8366
    %8454 = vst.msk [vmem:[#allocation2 + $0x88] sm:$0xff] %vm8436, %v8367
    %8455 = vst.msk [vmem:[#allocation2 + $0x90] sm:$0xff] %vm8436, %v8368
    %8456 = vst.msk [vmem:[#allocation2 + $0x98] sm:$0xff] %vm8436, %v8369
    %8457 = vst.msk [vmem:[#allocation2 + $0xa0] sm:$0xff] %vm8436, %v8370
    %8458 = vst.msk [vmem:[#allocation2 + $0xa8] sm:$0xff] %vm8436, %v8371
    %8459 = vst.msk [vmem:[#allocation2 + $0xb0] sm:$0xff] %vm8436, %v8372
    %8460 = vst.msk [vmem:[#allocation2 + $0xb8] sm:$0xff] %vm8436, %v8373
    %8461 = vst.msk [vmem:[#allocation2 + $0xc0] sm:$0xff] %vm8436, %v8374
    %8462 = vst.msk [vmem:[#allocation2 + $0xc8] sm:$0xff] %vm8436, %v8375
    %8463 = vst.msk [vmem:[#allocation2 + $0xd0] sm:$0xff] %vm8436, %v8376
    %8464 = vst.msk [vmem:[#allocation2 + $0xd8] sm:$0xff] %vm8436, %v8377
    %8465 = vst.msk [vmem:[#allocation2 + $0xe0] sm:$0xff] %vm8436, %v8378
    %8466 = vst.msk [vmem:[#allocation2 + $0xe8] sm:$0xff] %vm8436, %v8379
    %8467 = vst.msk [vmem:[#allocation2 + $0xf0] sm:$0xff] %vm8436, %v8380
    %8468 = vst.msk [vmem:[#allocation2 + $0xf8] sm:$0xff] %vm8436, %v8381
    %8469 = vst.msk [vmem:[#allocation2 + $0x100] sm:$0xff] %vm8436, %v8382
    %8470 = vst.msk [vmem:[#allocation2 + $0x108] sm:$0xff] %vm8436, %v8383
    %8471 = vst.msk [vmem:[#allocation2 + $0x110] sm:$0xff] %vm8436, %v8384
    %8472 = vst.msk [vmem:[#allocation2 + $0x118] sm:$0xff] %vm8436, %v8385
    %8473 = vst.msk [vmem:[#allocation2 + $0x120] sm:$0xff] %vm8436, %v8386
    %8474 = vst.msk [vmem:[#allocation2 + $0x128] sm:$0xff] %vm8436, %v8387
    %8475 = vst.msk [vmem:[#allocation2 + $0x130] sm:$0xff] %vm8436, %v8388
    %8476 = vst.msk [vmem:[#allocation2 + $0x138] sm:$0xff] %vm8436, %v8389
    %8477 = vst.msk [vmem:[#allocation2 + $0x140] sm:$0xff] %vm8436, %v8390
    %8478 = vst.msk [vmem:[#allocation2 + $0x148] sm:$0xff] %vm8436, %v8391
    %8479 = vst.msk [vmem:[#allocation2 + $0x150] sm:$0xff] %vm8436, %v8392
    %8480 = vst.msk [vmem:[#allocation2 + $0x158] sm:$0xff] %vm8436, %v8393
    %8481 = vst.msk [vmem:[#allocation2 + $0x160] sm:$0xff] %vm8436, %v8394
    %8482 = vst.msk [vmem:[#allocation2 + $0x168] sm:$0xff] %vm8436, %v8395
    %8483 = vst.msk [vmem:[#allocation2 + $0x170] sm:$0xff] %vm8436, %v8396
    %8484 = vst.msk [vmem:[#allocation2 + $0x178] sm:$0xff] %vm8436, %v8397
    %8485 = vst.msk [vmem:[#allocation2 + $0x180] sm:$0xff] %vm8436, %v8398
    %8486 = vst.msk [vmem:[#allocation2 + $0x188] sm:$0xff] %vm8436, %v8399
    %8487 = vst.msk [vmem:[#allocation2 + $0x190] sm:$0xff] %vm8436, %v8400
    %8488 = vst.msk [vmem:[#allocation2 + $0x198] sm:$0xff] %vm8436, %v8401
    %8489 = vst.msk [vmem:[#allocation2 + $0x1a0] sm:$0xff] %vm8436, %v8402
    %8490 = vst.msk [vmem:[#allocation2 + $0x1a8] sm:$0xff] %vm8436, %v8403
    %8491 = vst.msk [vmem:[#allocation2 + $0x1b0] sm:$0xff] %vm8436, %v8404
    %8492 = vst.msk [vmem:[#allocation2 + $0x1b8] sm:$0xff] %vm8436, %v8405
    %8493 = vst.msk [vmem:[#allocation2 + $0x1c0] sm:$0xff] %vm8436, %v8406
    %8494 = vst.msk [vmem:[#allocation2 + $0x1c8] sm:$0xff] %vm8436, %v8407
    %8495 = vst.msk [vmem:[#allocation2 + $0x1d0] sm:$0xff] %vm8436, %v8408
    %8496 = vst.msk [vmem:[#allocation2 + $0x1d8] sm:$0xff] %vm8436, %v8409
    %8497 = vst.msk [vmem:[#allocation2 + $0x1e0] sm:$0xff] %vm8436, %v8410
    %8498 = vst.msk [vmem:[#allocation2 + $0x1e8] sm:$0xff] %vm8436, %v8411
    %8499 = vst.msk [vmem:[#allocation2 + $0x1f0] sm:$0xff] %vm8436, %v8412
    %8500 = vst.msk [vmem:[#allocation2 + $0x1f8] sm:$0xff] %vm8436, %v8413
    %8501 = vst.msk [vmem:[#allocation2 + $0x200] sm:$0xff] %vm8436, %v8414
    %8502 = vst.msk [vmem:[#allocation2 + $0x208] sm:$0xff] %vm8436, %v8415
    %8503 = vst.msk [vmem:[#allocation2 + $0x210] sm:$0xff] %vm8436, %v8416
    %8504 = vst.msk [vmem:[#allocation2 + $0x218] sm:$0xff] %vm8436, %v8417
    %8505 = vst.msk [vmem:[#allocation2 + $0x220] sm:$0xff] %vm8436, %v8418
    %8506 = vst.msk [vmem:[#allocation2 + $0x228] sm:$0xff] %vm8436, %v8419
    %8507 = vst.msk [vmem:[#allocation2 + $0x230] sm:$0xff] %vm8436, %v8420
    %8508 = vst.msk [vmem:[#allocation2 + $0x238] sm:$0xff] %vm8436, %v8421
    %8509 = vst.msk [vmem:[#allocation2 + $0x240] sm:$0xff] %vm8436, %v8422
    %8510 = vst.msk [vmem:[#allocation2 + $0x248] sm:$0xff] %vm8436, %v8423
    %8511 = vst.msk [vmem:[#allocation2 + $0x250] sm:$0xff] %vm8436, %v8424
    %8512 = vst.msk [vmem:[#allocation2 + $0x258] sm:$0xff] %vm8436, %v8425
    %8513 = vst.msk [vmem:[#allocation2 + $0x260] sm:$0xff] %vm8436, %v8426
    %8514 = vst.msk [vmem:[#allocation2 + $0x268] sm:$0xff] %vm8436, %v8427
    %8515 = vst.msk [vmem:[#allocation2 + $0x270] sm:$0xff] %vm8436, %v8428
    %8516 = vst.msk [vmem:[#allocation2 + $0x278] sm:$0xff] %vm8436, %v8429
    %8517 = vst.msk [vmem:[#allocation2 + $0x280] sm:$0xff] %vm8436, %v8430
    %8518 = vst.msk [vmem:[#allocation2 + $0x288] sm:$0xff] %vm8436, %v8431
    %8519 = vst.msk [vmem:[#allocation2 + $0x290] sm:$0xff] %vm8436, %v8432
    %8520 = vst.msk [vmem:[#allocation2 + $0x298] sm:$0xff] %vm8436, %v8433
    %8521 = vst.msk [vmem:[#allocation2 + $0x2a0] sm:$0xff] %vm8436, %v8434
    %vm8522 = vcmask 519168
    %8523 = vst.msk [vmem:[#allocation2 + $0x2a8] sm:$0xf] %vm8522, %v8435
  $region25: #{first_conv.1} parent=0 // pred_fallthru
    _
  // Predicated region
  $region26: #{first_conv.1} parent=0 // pred_check
    %p8524 = pneg %p8168
  $region27: #{first_conv.1} parent=0 // pred_check_branch
    %8526 = sbr.rel (%p8524) target = $region29
  $region28: #{first_conv.1} parent=0 // pred_region
    %v8527 = vld [vmem:[#allocation2] sm:$0xff]
    %v8528 = vld [vmem:[#allocation2 + $0x8] sm:$0xff]
    %v8529 = vld [vmem:[#allocation2 + $0x10] sm:$0xff]
    %v8530 = vld [vmem:[#allocation2 + $0x18] sm:$0xff]
    %v8531 = vld [vmem:[#allocation2 + $0x20] sm:$0xff]
    %v8532 = vld [vmem:[#allocation2 + $0x28] sm:$0xff]
    %v8533 = vld [vmem:[#allocation2 + $0x30] sm:$0xff]
    %v8534 = vld [vmem:[#allocation2 + $0x38] sm:$0xff]
    %v8535 = vld [vmem:[#allocation2 + $0x40] sm:$0xff]
    %v8536 = vld [vmem:[#allocation2 + $0x48] sm:$0xff]
    %v8537 = vld [vmem:[#allocation2 + $0x50] sm:$0xff]
    %v8538 = vld [vmem:[#allocation2 + $0x58] sm:$0xff]
    %v8539 = vld [vmem:[#allocation2 + $0x60] sm:$0xff]
    %v8540 = vld [vmem:[#allocation2 + $0x68] sm:$0xff]
    %v8541 = vld [vmem:[#allocation2 + $0x70] sm:$0xff]
    %v8542 = vld [vmem:[#allocation2 + $0x78] sm:$0xff]
    %v8543 = vld [vmem:[#allocation2 + $0x80] sm:$0xff]
    %v8544 = vld [vmem:[#allocation2 + $0x88] sm:$0xff]
    %v8545 = vld [vmem:[#allocation2 + $0x90] sm:$0xff]
    %v8546 = vld [vmem:[#allocation2 + $0x98] sm:$0xff]
    %v8547 = vld [vmem:[#allocation2 + $0xa0] sm:$0xff]
    %v8548 = vld [vmem:[#allocation2 + $0xa8] sm:$0xff]
    %v8549 = vld [vmem:[#allocation2 + $0xb0] sm:$0xff]
    %v8550 = vld [vmem:[#allocation2 + $0xb8] sm:$0xff]
    %v8551 = vld [vmem:[#allocation2 + $0xc0] sm:$0xff]
    %v8552 = vld [vmem:[#allocation2 + $0xc8] sm:$0xff]
    %v8553 = vld [vmem:[#allocation2 + $0xd0] sm:$0xff]
    %v8554 = vld [vmem:[#allocation2 + $0xd8] sm:$0xff]
    %v8555 = vld [vmem:[#allocation2 + $0xe0] sm:$0xff]
    %v8556 = vld [vmem:[#allocation2 + $0xe8] sm:$0xff]
    %v8557 = vld [vmem:[#allocation2 + $0xf0] sm:$0xff]
    %v8558 = vld [vmem:[#allocation2 + $0xf8] sm:$0xff]
    %v8559 = vld [vmem:[#allocation2 + $0x100] sm:$0xff]
    %v8560 = vld [vmem:[#allocation2 + $0x108] sm:$0xff]
    %v8561 = vld [vmem:[#allocation2 + $0x110] sm:$0xff]
    %v8562 = vld [vmem:[#allocation2 + $0x118] sm:$0xff]
    %v8563 = vld [vmem:[#allocation2 + $0x120] sm:$0xff]
    %v8564 = vld [vmem:[#allocation2 + $0x128] sm:$0xff]
    %v8565 = vld [vmem:[#allocation2 + $0x130] sm:$0xff]
    %v8566 = vld [vmem:[#allocation2 + $0x138] sm:$0xff]
    %v8567 = vld [vmem:[#allocation2 + $0x140] sm:$0xff]
    %v8568 = vld [vmem:[#allocation2 + $0x148] sm:$0xff]
    %v8569 = vld [vmem:[#allocation2 + $0x150] sm:$0xff]
    %v8570 = vld [vmem:[#allocation2 + $0x158] sm:$0xff]
    %v8571 = vld [vmem:[#allocation2 + $0x160] sm:$0xff]
    %v8572 = vld [vmem:[#allocation2 + $0x168] sm:$0xff]
    %v8573 = vld [vmem:[#allocation2 + $0x170] sm:$0xff]
    %v8574 = vld [vmem:[#allocation2 + $0x178] sm:$0xff]
    %v8575 = vld [vmem:[#allocation2 + $0x180] sm:$0xff]
    %v8576 = vld [vmem:[#allocation2 + $0x188] sm:$0xff]
    %v8577 = vld [vmem:[#allocation2 + $0x190] sm:$0xff]
    %v8578 = vld [vmem:[#allocation2 + $0x198] sm:$0xff]
    %v8579 = vld [vmem:[#allocation2 + $0x1a0] sm:$0xff]
    %v8580 = vld [vmem:[#allocation2 + $0x1a8] sm:$0xff]
    %v8581 = vld [vmem:[#allocation2 + $0x1b0] sm:$0xff]
    %v8582 = vld [vmem:[#allocation2 + $0x1b8] sm:$0xff]
    %v8583 = vld [vmem:[#allocation2 + $0x1c0] sm:$0xff]
    %v8584 = vld [vmem:[#allocation2 + $0x1c8] sm:$0xff]
    %v8585 = vld [vmem:[#allocation2 + $0x1d0] sm:$0xff]
    %v8586 = vld [vmem:[#allocation2 + $0x1d8] sm:$0xff]
    %v8587 = vld [vmem:[#allocation2 + $0x1e0] sm:$0xff]
    %v8588 = vld [vmem:[#allocation2 + $0x1e8] sm:$0xff]
    %v8589 = vld [vmem:[#allocation2 + $0x1f0] sm:$0xff]
    %v8590 = vld [vmem:[#allocation2 + $0x1f8] sm:$0xff]
    %v8591 = vld [vmem:[#allocation2 + $0x200] sm:$0xff]
    %v8592 = vld [vmem:[#allocation2 + $0x208] sm:$0xff]
    %v8593 = vld [vmem:[#allocation2 + $0x210] sm:$0xff]
    %v8594 = vld [vmem:[#allocation2 + $0x218] sm:$0xff]
    %v8595 = vld [vmem:[#allocation2 + $0x220] sm:$0xff]
    %v8596 = vld [vmem:[#allocation2 + $0x228] sm:$0xff]
    %v8597 = vld [vmem:[#allocation2 + $0x230] sm:$0xff]
    %v8598 = vld [vmem:[#allocation2 + $0x238] sm:$0xff]
    %v8599 = vld [vmem:[#allocation2 + $0x240] sm:$0xff]
    %v8600 = vld [vmem:[#allocation2 + $0x248] sm:$0xff]
    %v8601 = vld [vmem:[#allocation2 + $0x250] sm:$0xff]
    %v8602 = vld [vmem:[#allocation2 + $0x258] sm:$0xff]
    %v8603 = vld [vmem:[#allocation2 + $0x260] sm:$0xff]
    %v8604 = vld [vmem:[#allocation2 + $0x268] sm:$0xff]
    %v8605 = vld [vmem:[#allocation2 + $0x270] sm:$0xff]
    %v8606 = vld [vmem:[#allocation2 + $0x278] sm:$0xff]
    %v8607 = vld [vmem:[#allocation2 + $0x280] sm:$0xff]
    %v8608 = vld [vmem:[#allocation2 + $0x288] sm:$0xff]
    %v8609 = vld [vmem:[#allocation2 + $0x290] sm:$0xff]
    %v8610 = vld [vmem:[#allocation2 + $0x298] sm:$0xff]
    %v8611 = vld [vmem:[#allocation2 + $0x2a0] sm:$0xff]
    %v8612 = vld [vmem:[#allocation2 + $0x2a8] sm:$0xf]
    %v8613 = vld [vmem:[%s2] sm:$0x1]
    %v8615 = vlaneseq
    %v8616 = vshrl.u32 %v8615, 7
    %v8617 = vsub.s32 0, %v8616
    %v8618 = vrot.slane %v8613, %v8617
    %v8620 = vadd.f32 %v8527, %v8618
    %v8621 = vadd.f32 %v8528, %v8618
    %v8622 = vadd.f32 %v8529, %v8618
    %v8623 = vadd.f32 %v8530, %v8618
    %v8624 = vadd.f32 %v8531, %v8618
    %v8625 = vadd.f32 %v8532, %v8618
    %v8626 = vadd.f32 %v8533, %v8618
    %v8627 = vadd.f32 %v8534, %v8618
    %v8628 = vadd.f32 %v8535, %v8618
    %v8629 = vadd.f32 %v8536, %v8618
    %v8630 = vadd.f32 %v8537, %v8618
    %v8631 = vadd.f32 %v8538, %v8618
    %v8632 = vadd.f32 %v8539, %v8618
    %v8633 = vadd.f32 %v8540, %v8618
    %v8634 = vadd.f32 %v8541, %v8618
    %v8635 = vadd.f32 %v8542, %v8618
    %v8636 = vadd.f32 %v8543, %v8618
    %v8637 = vadd.f32 %v8544, %v8618
    %v8638 = vadd.f32 %v8545, %v8618
    %v8639 = vadd.f32 %v8546, %v8618
    %v8640 = vadd.f32 %v8547, %v8618
    %v8641 = vadd.f32 %v8548, %v8618
    %v8642 = vadd.f32 %v8549, %v8618
    %v8643 = vadd.f32 %v8550, %v8618
    %v8644 = vadd.f32 %v8551, %v8618
    %v8645 = vadd.f32 %v8552, %v8618
    %v8646 = vadd.f32 %v8553, %v8618
    %v8647 = vadd.f32 %v8554, %v8618
    %v8648 = vadd.f32 %v8555, %v8618
    %v8649 = vadd.f32 %v8556, %v8618
    %v8650 = vadd.f32 %v8557, %v8618
    %v8651 = vadd.f32 %v8558, %v8618
    %v8652 = vadd.f32 %v8559, %v8618
    %v8653 = vadd.f32 %v8560, %v8618
    %v8654 = vadd.f32 %v8561, %v8618
    %v8655 = vadd.f32 %v8562, %v8618
    %v8656 = vadd.f32 %v8563, %v8618
    %v8657 = vadd.f32 %v8564, %v8618
    %v8658 = vadd.f32 %v8565, %v8618
    %v8659 = vadd.f32 %v8566, %v8618
    %v8660 = vadd.f32 %v8567, %v8618
    %v8661 = vadd.f32 %v8568, %v8618
    %v8662 = vadd.f32 %v8569, %v8618
    %v8663 = vadd.f32 %v8570, %v8618
    %v8664 = vadd.f32 %v8571, %v8618
    %v8665 = vadd.f32 %v8572, %v8618
    %v8666 = vadd.f32 %v8573, %v8618
    %v8667 = vadd.f32 %v8574, %v8618
    %v8668 = vadd.f32 %v8575, %v8618
    %v8669 = vadd.f32 %v8576, %v8618
    %v8670 = vadd.f32 %v8577, %v8618
    %v8671 = vadd.f32 %v8578, %v8618
    %v8672 = vadd.f32 %v8579, %v8618
    %v8673 = vadd.f32 %v8580, %v8618
    %v8674 = vadd.f32 %v8581, %v8618
    %v8675 = vadd.f32 %v8582, %v8618
    %v8676 = vadd.f32 %v8583, %v8618
    %v8677 = vadd.f32 %v8584, %v8618
    %v8678 = vadd.f32 %v8585, %v8618
    %v8679 = vadd.f32 %v8586, %v8618
    %v8680 = vadd.f32 %v8587, %v8618
    %v8681 = vadd.f32 %v8588, %v8618
    %v8682 = vadd.f32 %v8589, %v8618
    %v8683 = vadd.f32 %v8590, %v8618
    %v8684 = vadd.f32 %v8591, %v8618
    %v8685 = vadd.f32 %v8592, %v8618
    %v8686 = vadd.f32 %v8593, %v8618
    %v8687 = vadd.f32 %v8594, %v8618
    %v8688 = vadd.f32 %v8595, %v8618
    %v8689 = vadd.f32 %v8596, %v8618
    %v8690 = vadd.f32 %v8597, %v8618
    %v8691 = vadd.f32 %v8598, %v8618
    %v8692 = vadd.f32 %v8599, %v8618
    %v8693 = vadd.f32 %v8600, %v8618
    %v8694 = vadd.f32 %v8601, %v8618
    %v8695 = vadd.f32 %v8602, %v8618
    %v8696 = vadd.f32 %v8603, %v8618
    %v8697 = vadd.f32 %v8604, %v8618
    %v8698 = vadd.f32 %v8605, %v8618
    %v8699 = vadd.f32 %v8606, %v8618
    %v8700 = vadd.f32 %v8607, %v8618
    %v8701 = vadd.f32 %v8608, %v8618
    %v8702 = vadd.f32 %v8609, %v8618
    %v8703 = vadd.f32 %v8610, %v8618
    %v8704 = vadd.f32 %v8611, %v8618
    %v8705 = vadd.f32 %v8612, %v8618
    %v8706 = vld [vmem:[%s3] sm:$0xff]
    %v8707 = vld [vmem:[%s3 + $0x8] sm:$0xff]
    %v8708 = vld [vmem:[%s3 + $0x10] sm:$0xff]
    %v8709 = vld [vmem:[%s3 + $0x18] sm:$0xff]
    %v8710 = vld [vmem:[%s3 + $0x20] sm:$0xff]
    %v8711 = vld [vmem:[%s3 + $0x28] sm:$0xff]
    %v8712 = vld [vmem:[%s3 + $0x30] sm:$0xff]
    %v8713 = vld [vmem:[%s3 + $0x38] sm:$0xff]
    %v8714 = vld [vmem:[%s3 + $0x40] sm:$0xff]
    %v8715 = vld [vmem:[%s3 + $0x48] sm:$0xff]
    %v8716 = vld [vmem:[%s3 + $0x50] sm:$0xff]
    %v8717 = vld [vmem:[%s3 + $0x58] sm:$0xff]
    %v8718 = vld [vmem:[%s3 + $0x60] sm:$0xff]
    %v8719 = vld [vmem:[%s3 + $0x68] sm:$0xff]
    %v8720 = vld [vmem:[%s3 + $0x70] sm:$0xff]
    %v8721 = vld [vmem:[%s3 + $0x78] sm:$0xff]
    %v8722 = vld [vmem:[%s3 + $0x80] sm:$0xff]
    %v8723 = vld [vmem:[%s3 + $0x88] sm:$0xff]
    %v8724 = vld [vmem:[%s3 + $0x90] sm:$0xff]
    %v8725 = vld [vmem:[%s3 + $0x98] sm:$0xff]
    %v8726 = vld [vmem:[%s3 + $0xa0] sm:$0xff]
    %v8727 = vld [vmem:[%s3 + $0xa8] sm:$0xff]
    %v8728 = vld [vmem:[%s3 + $0xb0] sm:$0xff]
    %v8729 = vld [vmem:[%s3 + $0xb8] sm:$0xff]
    %v8730 = vld [vmem:[%s3 + $0xc0] sm:$0xff]
    %v8731 = vld [vmem:[%s3 + $0xc8] sm:$0xff]
    %v8732 = vld [vmem:[%s3 + $0xd0] sm:$0xff]
    %v8733 = vld [vmem:[%s3 + $0xd8] sm:$0xff]
    %v8734 = vld [vmem:[%s3 + $0xe0] sm:$0xff]
    %v8735 = vld [vmem:[%s3 + $0xe8] sm:$0xff]
    %v8736 = vld [vmem:[%s3 + $0xf0] sm:$0xff]
    %v8737 = vld [vmem:[%s3 + $0xf8] sm:$0xff]
    %v8738 = vld [vmem:[%s3 + $0x100] sm:$0xff]
    %v8739 = vld [vmem:[%s3 + $0x108] sm:$0xff]
    %v8740 = vld [vmem:[%s3 + $0x110] sm:$0xff]
    %v8741 = vld [vmem:[%s3 + $0x118] sm:$0xff]
    %v8742 = vld [vmem:[%s3 + $0x120] sm:$0xff]
    %v8743 = vld [vmem:[%s3 + $0x128] sm:$0xff]
    %v8744 = vld [vmem:[%s3 + $0x130] sm:$0xff]
    %v8745 = vld [vmem:[%s3 + $0x138] sm:$0xff]
    %v8746 = vld [vmem:[%s3 + $0x140] sm:$0xff]
    %v8747 = vld [vmem:[%s3 + $0x148] sm:$0xff]
    %v8748 = vld [vmem:[%s3 + $0x150] sm:$0xff]
    %v8749 = vld [vmem:[%s3 + $0x158] sm:$0xff]
    %v8750 = vld [vmem:[%s3 + $0x160] sm:$0xff]
    %v8751 = vld [vmem:[%s3 + $0x168] sm:$0xff]
    %v8752 = vld [vmem:[%s3 + $0x170] sm:$0xff]
    %v8753 = vld [vmem:[%s3 + $0x178] sm:$0xff]
    %v8754 = vld [vmem:[%s3 + $0x180] sm:$0xff]
    %v8755 = vld [vmem:[%s3 + $0x188] sm:$0xff]
    %v8756 = vld [vmem:[%s3 + $0x190] sm:$0xff]
    %v8757 = vld [vmem:[%s3 + $0x198] sm:$0xff]
    %v8758 = vld [vmem:[%s3 + $0x1a0] sm:$0xff]
    %v8759 = vld [vmem:[%s3 + $0x1a8] sm:$0xff]
    %v8760 = vld [vmem:[%s3 + $0x1b0] sm:$0xff]
    %v8761 = vld [vmem:[%s3 + $0x1b8] sm:$0xff]
    %v8762 = vld [vmem:[%s3 + $0x1c0] sm:$0xff]
    %v8763 = vld [vmem:[%s3 + $0x1c8] sm:$0xff]
    %v8764 = vld [vmem:[%s3 + $0x1d0] sm:$0xff]
    %v8765 = vld [vmem:[%s3 + $0x1d8] sm:$0xff]
    %v8766 = vld [vmem:[%s3 + $0x1e0] sm:$0xff]
    %v8767 = vld [vmem:[%s3 + $0x1e8] sm:$0xff]
    %v8768 = vld [vmem:[%s3 + $0x1f0] sm:$0xff]
    %v8769 = vld [vmem:[%s3 + $0x1f8] sm:$0xff]
    %v8770 = vld [vmem:[%s3 + $0x200] sm:$0xff]
    %v8771 = vld [vmem:[%s3 + $0x208] sm:$0xff]
    %v8772 = vld [vmem:[%s3 + $0x210] sm:$0xff]
    %v8773 = vld [vmem:[%s3 + $0x218] sm:$0xff]
    %v8774 = vld [vmem:[%s3 + $0x220] sm:$0xff]
    %v8775 = vld [vmem:[%s3 + $0x228] sm:$0xff]
    %v8776 = vld [vmem:[%s3 + $0x230] sm:$0xff]
    %v8777 = vld [vmem:[%s3 + $0x238] sm:$0xff]
    %v8778 = vld [vmem:[%s3 + $0x240] sm:$0xff]
    %v8779 = vld [vmem:[%s3 + $0x248] sm:$0xff]
    %v8780 = vld [vmem:[%s3 + $0x250] sm:$0xff]
    %v8781 = vld [vmem:[%s3 + $0x258] sm:$0xff]
    %v8782 = vld [vmem:[%s3 + $0x260] sm:$0xff]
    %v8783 = vld [vmem:[%s3 + $0x268] sm:$0xff]
    %v8784 = vld [vmem:[%s3 + $0x270] sm:$0xff]
    %v8785 = vld [vmem:[%s3 + $0x278] sm:$0xff]
    %v8786 = vld [vmem:[%s3 + $0x280] sm:$0xff]
    %v8787 = vld [vmem:[%s3 + $0x288] sm:$0xff]
    %v8788 = vld [vmem:[%s3 + $0x290] sm:$0xff]
    %v8789 = vld [vmem:[%s3 + $0x298] sm:$0xff]
    %v8790 = vld [vmem:[%s3 + $0x2a0] sm:$0xff]
    %v8791 = vld [vmem:[%s3 + $0x2a8] sm:$0xf]
    %8793 = vset.pattern.permute.xlu0 0
    %8794 = vperm.xlu0 %8793, %v8706
    %v8795 = vpop.permute.xlu0 %8794
    %8798 = vset.pattern.permute.xlu0 0
    %8799 = vperm.xlu0 %8798, %v8707
    %v8800 = vpop.permute.xlu0 %8799
    %8803 = vset.pattern.permute.xlu0 0
    %8804 = vperm.xlu0 %8803, %v8708
    %v8805 = vpop.permute.xlu0 %8804
    %8808 = vset.pattern.permute.xlu0 0
    %8809 = vperm.xlu0 %8808, %v8709
    %v8810 = vpop.permute.xlu0 %8809
    %8813 = vset.pattern.permute.xlu0 0
    %8814 = vperm.xlu0 %8813, %v8710
    %v8815 = vpop.permute.xlu0 %8814
    %8818 = vset.pattern.permute.xlu0 0
    %8819 = vperm.xlu0 %8818, %v8711
    %v8820 = vpop.permute.xlu0 %8819
    %8823 = vset.pattern.permute.xlu0 0
    %8824 = vperm.xlu0 %8823, %v8712
    %v8825 = vpop.permute.xlu0 %8824
    %8828 = vset.pattern.permute.xlu0 0
    %8829 = vperm.xlu0 %8828, %v8713
    %v8830 = vpop.permute.xlu0 %8829
    %8833 = vset.pattern.permute.xlu0 0
    %8834 = vperm.xlu0 %8833, %v8714
    %v8835 = vpop.permute.xlu0 %8834
    %8838 = vset.pattern.permute.xlu0 0
    %8839 = vperm.xlu0 %8838, %v8715
    %v8840 = vpop.permute.xlu0 %8839
    %8843 = vset.pattern.permute.xlu0 0
    %8844 = vperm.xlu0 %8843, %v8716
    %v8845 = vpop.permute.xlu0 %8844
    %8848 = vset.pattern.permute.xlu0 0
    %8849 = vperm.xlu0 %8848, %v8717
    %v8850 = vpop.permute.xlu0 %8849
    %8853 = vset.pattern.permute.xlu0 0
    %8854 = vperm.xlu0 %8853, %v8718
    %v8855 = vpop.permute.xlu0 %8854
    %8858 = vset.pattern.permute.xlu0 0
    %8859 = vperm.xlu0 %8858, %v8719
    %v8860 = vpop.permute.xlu0 %8859
    %8863 = vset.pattern.permute.xlu0 0
    %8864 = vperm.xlu0 %8863, %v8720
    %v8865 = vpop.permute.xlu0 %8864
    %8868 = vset.pattern.permute.xlu0 0
    %8869 = vperm.xlu0 %8868, %v8721
    %v8870 = vpop.permute.xlu0 %8869
    %8873 = vset.pattern.permute.xlu0 0
    %8874 = vperm.xlu0 %8873, %v8722
    %v8875 = vpop.permute.xlu0 %8874
    %8878 = vset.pattern.permute.xlu0 0
    %8879 = vperm.xlu0 %8878, %v8723
    %v8880 = vpop.permute.xlu0 %8879
    %8883 = vset.pattern.permute.xlu0 0
    %8884 = vperm.xlu0 %8883, %v8724
    %v8885 = vpop.permute.xlu0 %8884
    %8888 = vset.pattern.permute.xlu0 0
    %8889 = vperm.xlu0 %8888, %v8725
    %v8890 = vpop.permute.xlu0 %8889
    %8893 = vset.pattern.permute.xlu0 0
    %8894 = vperm.xlu0 %8893, %v8726
    %v8895 = vpop.permute.xlu0 %8894
    %8898 = vset.pattern.permute.xlu0 0
    %8899 = vperm.xlu0 %8898, %v8727
    %v8900 = vpop.permute.xlu0 %8899
    %8903 = vset.pattern.permute.xlu0 0
    %8904 = vperm.xlu0 %8903, %v8728
    %v8905 = vpop.permute.xlu0 %8904
    %8908 = vset.pattern.permute.xlu0 0
    %8909 = vperm.xlu0 %8908, %v8729
    %v8910 = vpop.permute.xlu0 %8909
    %8913 = vset.pattern.permute.xlu0 0
    %8914 = vperm.xlu0 %8913, %v8730
    %v8915 = vpop.permute.xlu0 %8914
    %8918 = vset.pattern.permute.xlu0 0
    %8919 = vperm.xlu0 %8918, %v8731
    %v8920 = vpop.permute.xlu0 %8919
    %8923 = vset.pattern.permute.xlu0 0
    %8924 = vperm.xlu0 %8923, %v8732
    %v8925 = vpop.permute.xlu0 %8924
    %8928 = vset.pattern.permute.xlu0 0
    %8929 = vperm.xlu0 %8928, %v8733
    %v8930 = vpop.permute.xlu0 %8929
    %8933 = vset.pattern.permute.xlu0 0
    %8934 = vperm.xlu0 %8933, %v8734
    %v8935 = vpop.permute.xlu0 %8934
    %8938 = vset.pattern.permute.xlu0 0
    %8939 = vperm.xlu0 %8938, %v8735
    %v8940 = vpop.permute.xlu0 %8939
    %8943 = vset.pattern.permute.xlu0 0
    %8944 = vperm.xlu0 %8943, %v8736
    %v8945 = vpop.permute.xlu0 %8944
    %8948 = vset.pattern.permute.xlu0 0
    %8949 = vperm.xlu0 %8948, %v8737
    %v8950 = vpop.permute.xlu0 %8949
    %8953 = vset.pattern.permute.xlu0 0
    %8954 = vperm.xlu0 %8953, %v8738
    %v8955 = vpop.permute.xlu0 %8954
    %8958 = vset.pattern.permute.xlu0 0
    %8959 = vperm.xlu0 %8958, %v8739
    %v8960 = vpop.permute.xlu0 %8959
    %8963 = vset.pattern.permute.xlu0 0
    %8964 = vperm.xlu0 %8963, %v8740
    %v8965 = vpop.permute.xlu0 %8964
    %8968 = vset.pattern.permute.xlu0 0
    %8969 = vperm.xlu0 %8968, %v8741
    %v8970 = vpop.permute.xlu0 %8969
    %8973 = vset.pattern.permute.xlu0 0
    %8974 = vperm.xlu0 %8973, %v8742
    %v8975 = vpop.permute.xlu0 %8974
    %8978 = vset.pattern.permute.xlu0 0
    %8979 = vperm.xlu0 %8978, %v8743
    %v8980 = vpop.permute.xlu0 %8979
    %8983 = vset.pattern.permute.xlu0 0
    %8984 = vperm.xlu0 %8983, %v8744
    %v8985 = vpop.permute.xlu0 %8984
    %8988 = vset.pattern.permute.xlu0 0
    %8989 = vperm.xlu0 %8988, %v8745
    %v8990 = vpop.permute.xlu0 %8989
    %8993 = vset.pattern.permute.xlu0 0
    %8994 = vperm.xlu0 %8993, %v8746
    %v8995 = vpop.permute.xlu0 %8994
    %8998 = vset.pattern.permute.xlu0 0
    %8999 = vperm.xlu0 %8998, %v8747
    %v9000 = vpop.permute.xlu0 %8999
    %9003 = vset.pattern.permute.xlu0 0
    %9004 = vperm.xlu0 %9003, %v8748
    %v9005 = vpop.permute.xlu0 %9004
    %9008 = vset.pattern.permute.xlu0 0
    %9009 = vperm.xlu0 %9008, %v8749
    %v9010 = vpop.permute.xlu0 %9009
    %9013 = vset.pattern.permute.xlu0 0
    %9014 = vperm.xlu0 %9013, %v8750
    %v9015 = vpop.permute.xlu0 %9014
    %9018 = vset.pattern.permute.xlu0 0
    %9019 = vperm.xlu0 %9018, %v8751
    %v9020 = vpop.permute.xlu0 %9019
    %9023 = vset.pattern.permute.xlu0 0
    %9024 = vperm.xlu0 %9023, %v8752
    %v9025 = vpop.permute.xlu0 %9024
    %9028 = vset.pattern.permute.xlu0 0
    %9029 = vperm.xlu0 %9028, %v8753
    %v9030 = vpop.permute.xlu0 %9029
    %9033 = vset.pattern.permute.xlu0 0
    %9034 = vperm.xlu0 %9033, %v8754
    %v9035 = vpop.permute.xlu0 %9034
    %9038 = vset.pattern.permute.xlu0 0
    %9039 = vperm.xlu0 %9038, %v8755
    %v9040 = vpop.permute.xlu0 %9039
    %9043 = vset.pattern.permute.xlu0 0
    %9044 = vperm.xlu0 %9043, %v8756
    %v9045 = vpop.permute.xlu0 %9044
    %9048 = vset.pattern.permute.xlu0 0
    %9049 = vperm.xlu0 %9048, %v8757
    %v9050 = vpop.permute.xlu0 %9049
    %9053 = vset.pattern.permute.xlu0 0
    %9054 = vperm.xlu0 %9053, %v8758
    %v9055 = vpop.permute.xlu0 %9054
    %9058 = vset.pattern.permute.xlu0 0
    %9059 = vperm.xlu0 %9058, %v8759
    %v9060 = vpop.permute.xlu0 %9059
    %9063 = vset.pattern.permute.xlu0 0
    %9064 = vperm.xlu0 %9063, %v8760
    %v9065 = vpop.permute.xlu0 %9064
    %9068 = vset.pattern.permute.xlu0 0
    %9069 = vperm.xlu0 %9068, %v8761
    %v9070 = vpop.permute.xlu0 %9069
    %9073 = vset.pattern.permute.xlu0 0
    %9074 = vperm.xlu0 %9073, %v8762
    %v9075 = vpop.permute.xlu0 %9074
    %9078 = vset.pattern.permute.xlu0 0
    %9079 = vperm.xlu0 %9078, %v8763
    %v9080 = vpop.permute.xlu0 %9079
    %9083 = vset.pattern.permute.xlu0 0
    %9084 = vperm.xlu0 %9083, %v8764
    %v9085 = vpop.permute.xlu0 %9084
    %9088 = vset.pattern.permute.xlu0 0
    %9089 = vperm.xlu0 %9088, %v8765
    %v9090 = vpop.permute.xlu0 %9089
    %9093 = vset.pattern.permute.xlu0 0
    %9094 = vperm.xlu0 %9093, %v8766
    %v9095 = vpop.permute.xlu0 %9094
    %9098 = vset.pattern.permute.xlu0 0
    %9099 = vperm.xlu0 %9098, %v8767
    %v9100 = vpop.permute.xlu0 %9099
    %9103 = vset.pattern.permute.xlu0 0
    %9104 = vperm.xlu0 %9103, %v8768
    %v9105 = vpop.permute.xlu0 %9104
    %9108 = vset.pattern.permute.xlu0 0
    %9109 = vperm.xlu0 %9108, %v8769
    %v9110 = vpop.permute.xlu0 %9109
    %9113 = vset.pattern.permute.xlu0 0
    %9114 = vperm.xlu0 %9113, %v8770
    %v9115 = vpop.permute.xlu0 %9114
    %9118 = vset.pattern.permute.xlu0 0
    %9119 = vperm.xlu0 %9118, %v8771
    %v9120 = vpop.permute.xlu0 %9119
    %9123 = vset.pattern.permute.xlu0 0
    %9124 = vperm.xlu0 %9123, %v8772
    %v9125 = vpop.permute.xlu0 %9124
    %9128 = vset.pattern.permute.xlu0 0
    %9129 = vperm.xlu0 %9128, %v8773
    %v9130 = vpop.permute.xlu0 %9129
    %9133 = vset.pattern.permute.xlu0 0
    %9134 = vperm.xlu0 %9133, %v8774
    %v9135 = vpop.permute.xlu0 %9134
    %9138 = vset.pattern.permute.xlu0 0
    %9139 = vperm.xlu0 %9138, %v8775
    %v9140 = vpop.permute.xlu0 %9139
    %9143 = vset.pattern.permute.xlu0 0
    %9144 = vperm.xlu0 %9143, %v8776
    %v9145 = vpop.permute.xlu0 %9144
    %9148 = vset.pattern.permute.xlu0 0
    %9149 = vperm.xlu0 %9148, %v8777
    %v9150 = vpop.permute.xlu0 %9149
    %9153 = vset.pattern.permute.xlu0 0
    %9154 = vperm.xlu0 %9153, %v8778
    %v9155 = vpop.permute.xlu0 %9154
    %9158 = vset.pattern.permute.xlu0 0
    %9159 = vperm.xlu0 %9158, %v8779
    %v9160 = vpop.permute.xlu0 %9159
    %9163 = vset.pattern.permute.xlu0 0
    %9164 = vperm.xlu0 %9163, %v8780
    %v9165 = vpop.permute.xlu0 %9164
    %9168 = vset.pattern.permute.xlu0 0
    %9169 = vperm.xlu0 %9168, %v8781
    %v9170 = vpop.permute.xlu0 %9169
    %9173 = vset.pattern.permute.xlu0 0
    %9174 = vperm.xlu0 %9173, %v8782
    %v9175 = vpop.permute.xlu0 %9174
    %9178 = vset.pattern.permute.xlu0 0
    %9179 = vperm.xlu0 %9178, %v8783
    %v9180 = vpop.permute.xlu0 %9179
    %9183 = vset.pattern.permute.xlu0 0
    %9184 = vperm.xlu0 %9183, %v8784
    %v9185 = vpop.permute.xlu0 %9184
    %9188 = vset.pattern.permute.xlu0 0
    %9189 = vperm.xlu0 %9188, %v8785
    %v9190 = vpop.permute.xlu0 %9189
    %9193 = vset.pattern.permute.xlu0 0
    %9194 = vperm.xlu0 %9193, %v8786
    %v9195 = vpop.permute.xlu0 %9194
    %9198 = vset.pattern.permute.xlu0 0
    %9199 = vperm.xlu0 %9198, %v8787
    %v9200 = vpop.permute.xlu0 %9199
    %9203 = vset.pattern.permute.xlu0 0
    %9204 = vperm.xlu0 %9203, %v8788
    %v9205 = vpop.permute.xlu0 %9204
    %9208 = vset.pattern.permute.xlu0 0
    %9209 = vperm.xlu0 %9208, %v8789
    %v9210 = vpop.permute.xlu0 %9209
    %9213 = vset.pattern.permute.xlu0 0
    %9214 = vperm.xlu0 %9213, %v8790
    %v9215 = vpop.permute.xlu0 %9214
    %9218 = vset.pattern.permute.xlu0 0
    %9219 = vperm.xlu0 %9218, %v8791
    %v9220 = vpop.permute.xlu0 %9219
    %v9222 = vmul.f32 %v8620, %v8795
    %v9223 = vmul.f32 %v8621, %v8800
    %v9224 = vmul.f32 %v8622, %v8805
    %v9225 = vmul.f32 %v8623, %v8810
    %v9226 = vmul.f32 %v8624, %v8815
    %v9227 = vmul.f32 %v8625, %v8820
    %v9228 = vmul.f32 %v8626, %v8825
    %v9229 = vmul.f32 %v8627, %v8830
    %v9230 = vmul.f32 %v8628, %v8835
    %v9231 = vmul.f32 %v8629, %v8840
    %v9232 = vmul.f32 %v8630, %v8845
    %v9233 = vmul.f32 %v8631, %v8850
    %v9234 = vmul.f32 %v8632, %v8855
    %v9235 = vmul.f32 %v8633, %v8860
    %v9236 = vmul.f32 %v8634, %v8865
    %v9237 = vmul.f32 %v8635, %v8870
    %v9238 = vmul.f32 %v8636, %v8875
    %v9239 = vmul.f32 %v8637, %v8880
    %v9240 = vmul.f32 %v8638, %v8885
    %v9241 = vmul.f32 %v8639, %v8890
    %v9242 = vmul.f32 %v8640, %v8895
    %v9243 = vmul.f32 %v8641, %v8900
    %v9244 = vmul.f32 %v8642, %v8905
    %v9245 = vmul.f32 %v8643, %v8910
    %v9246 = vmul.f32 %v8644, %v8915
    %v9247 = vmul.f32 %v8645, %v8920
    %v9248 = vmul.f32 %v8646, %v8925
    %v9249 = vmul.f32 %v8647, %v8930
    %v9250 = vmul.f32 %v8648, %v8935
    %v9251 = vmul.f32 %v8649, %v8940
    %v9252 = vmul.f32 %v8650, %v8945
    %v9253 = vmul.f32 %v8651, %v8950
    %v9254 = vmul.f32 %v8652, %v8955
    %v9255 = vmul.f32 %v8653, %v8960
    %v9256 = vmul.f32 %v8654, %v8965
    %v9257 = vmul.f32 %v8655, %v8970
    %v9258 = vmul.f32 %v8656, %v8975
    %v9259 = vmul.f32 %v8657, %v8980
    %v9260 = vmul.f32 %v8658, %v8985
    %v9261 = vmul.f32 %v8659, %v8990
    %v9262 = vmul.f32 %v8660, %v8995
    %v9263 = vmul.f32 %v8661, %v9000
    %v9264 = vmul.f32 %v8662, %v9005
    %v9265 = vmul.f32 %v8663, %v9010
    %v9266 = vmul.f32 %v8664, %v9015
    %v9267 = vmul.f32 %v8665, %v9020
    %v9268 = vmul.f32 %v8666, %v9025
    %v9269 = vmul.f32 %v8667, %v9030
    %v9270 = vmul.f32 %v8668, %v9035
    %v9271 = vmul.f32 %v8669, %v9040
    %v9272 = vmul.f32 %v8670, %v9045
    %v9273 = vmul.f32 %v8671, %v9050
    %v9274 = vmul.f32 %v8672, %v9055
    %v9275 = vmul.f32 %v8673, %v9060
    %v9276 = vmul.f32 %v8674, %v9065
    %v9277 = vmul.f32 %v8675, %v9070
    %v9278 = vmul.f32 %v8676, %v9075
    %v9279 = vmul.f32 %v8677, %v9080
    %v9280 = vmul.f32 %v8678, %v9085
    %v9281 = vmul.f32 %v8679, %v9090
    %v9282 = vmul.f32 %v8680, %v9095
    %v9283 = vmul.f32 %v8681, %v9100
    %v9284 = vmul.f32 %v8682, %v9105
    %v9285 = vmul.f32 %v8683, %v9110
    %v9286 = vmul.f32 %v8684, %v9115
    %v9287 = vmul.f32 %v8685, %v9120
    %v9288 = vmul.f32 %v8686, %v9125
    %v9289 = vmul.f32 %v8687, %v9130
    %v9290 = vmul.f32 %v8688, %v9135
    %v9291 = vmul.f32 %v8689, %v9140
    %v9292 = vmul.f32 %v8690, %v9145
    %v9293 = vmul.f32 %v8691, %v9150
    %v9294 = vmul.f32 %v8692, %v9155
    %v9295 = vmul.f32 %v8693, %v9160
    %v9296 = vmul.f32 %v8694, %v9165
    %v9297 = vmul.f32 %v8695, %v9170
    %v9298 = vmul.f32 %v8696, %v9175
    %v9299 = vmul.f32 %v8697, %v9180
    %v9300 = vmul.f32 %v8698, %v9185
    %v9301 = vmul.f32 %v8699, %v9190
    %v9302 = vmul.f32 %v8700, %v9195
    %v9303 = vmul.f32 %v8701, %v9200
    %v9304 = vmul.f32 %v8702, %v9205
    %v9305 = vmul.f32 %v8703, %v9210
    %v9306 = vmul.f32 %v8704, %v9215
    %v9307 = vmul.f32 %v8705, %v9220
    %vm9308 = vcmask 519168
    %9309 = vst.msk [vmem:[%s4] sm:$0xf] %vm9308, 0
    %9310 = vst.msk [vmem:[%s4 + $0x4] sm:$0xf] %vm9308, 0
    %9311 = vst.msk [vmem:[%s4 + $0x8] sm:$0xf] %vm9308, 0
    %v9312 = vpack.c.bf16 %v9223, %v9222
    %v9313 = vpack.c.bf16 %v9225, %v9224
    %v9314 = vpack.c.bf16 %v9227, %v9226
    %v9315 = vpack.c.bf16 %v9229, %v9228
    %v9316 = vpack.c.bf16 %v9231, %v9230
    %v9317 = vpack.c.bf16 %v9233, %v9232
    %v9318 = vpack.c.bf16 %v9235, %v9234
    %v9319 = vpack.c.bf16 %v9237, %v9236
    %v9320 = vpack.c.bf16 %v9239, %v9238
    %v9321 = vpack.c.bf16 %v9241, %v9240
    %v9322 = vpack.c.bf16 %v9243, %v9242
    %v9323 = vpack.c.bf16 %v9245, %v9244
    %v9324 = vpack.c.bf16 %v9247, %v9246
    %v9325 = vpack.c.bf16 %v9249, %v9248
    %v9326 = vpack.c.bf16 %v9251, %v9250
    %v9327 = vpack.c.bf16 %v9253, %v9252
    %v9328 = vpack.c.bf16 %v9255, %v9254
    %v9329 = vpack.c.bf16 %v9257, %v9256
    %v9330 = vpack.c.bf16 %v9259, %v9258
    %v9331 = vpack.c.bf16 %v9261, %v9260
    %v9332 = vpack.c.bf16 %v9263, %v9262
    %v9333 = vpack.c.bf16 %v9265, %v9264
    %v9334 = vpack.c.bf16 %v9267, %v9266
    %v9335 = vpack.c.bf16 %v9269, %v9268
    %v9336 = vpack.c.bf16 %v9271, %v9270
    %v9337 = vpack.c.bf16 %v9273, %v9272
    %v9338 = vpack.c.bf16 %v9275, %v9274
    %v9339 = vpack.c.bf16 %v9277, %v9276
    %v9340 = vpack.c.bf16 %v9279, %v9278
    %v9341 = vpack.c.bf16 %v9281, %v9280
    %v9342 = vpack.c.bf16 %v9283, %v9282
    %v9343 = vpack.c.bf16 %v9285, %v9284
    %v9344 = vpack.c.bf16 %v9287, %v9286
    %v9345 = vpack.c.bf16 %v9289, %v9288
    %v9346 = vpack.c.bf16 %v9291, %v9290
    %v9347 = vpack.c.bf16 %v9293, %v9292
    %v9348 = vpack.c.bf16 %v9295, %v9294
    %v9349 = vpack.c.bf16 %v9297, %v9296
    %v9350 = vpack.c.bf16 %v9299, %v9298
    %v9351 = vpack.c.bf16 %v9301, %v9300
    %v9352 = vpack.c.bf16 %v9303, %v9302
    %v9353 = vpack.c.bf16 %v9305, %v9304
    %v9354 = vpack.c.bf16 %v9307, %v9306
    %v9398 = vunpack.c.l.b16 %v9312
    %v9399 = vunpack.c.h.b16 %v9312
    %v9400 = vunpack.c.l.b16 %v9313
    %v9401 = vunpack.c.h.b16 %v9313
    %v9402 = vunpack.c.l.b16 %v9314
    %v9403 = vunpack.c.h.b16 %v9314
    %v9404 = vunpack.c.l.b16 %v9315
    %v9405 = vunpack.c.h.b16 %v9315
    %v9406 = vunpack.c.l.b16 %v9316
    %v9407 = vunpack.c.h.b16 %v9316
    %v9408 = vunpack.c.l.b16 %v9317
    %v9409 = vunpack.c.h.b16 %v9317
    %v9410 = vunpack.c.l.b16 %v9318
    %v9411 = vunpack.c.h.b16 %v9318
    %v9412 = vunpack.c.l.b16 %v9319
    %v9413 = vunpack.c.h.b16 %v9319
    %v9414 = vunpack.c.l.b16 %v9320
    %v9415 = vunpack.c.h.b16 %v9320
    %v9416 = vunpack.c.l.b16 %v9321
    %v9417 = vunpack.c.h.b16 %v9321
    %v9418 = vunpack.c.l.b16 %v9322
    %v9419 = vunpack.c.h.b16 %v9322
    %v9420 = vunpack.c.l.b16 %v9323
    %v9421 = vunpack.c.h.b16 %v9323
    %v9422 = vunpack.c.l.b16 %v9324
    %v9423 = vunpack.c.h.b16 %v9324
    %v9424 = vunpack.c.l.b16 %v9325
    %v9425 = vunpack.c.h.b16 %v9325
    %v9426 = vunpack.c.l.b16 %v9326
    %v9427 = vunpack.c.h.b16 %v9326
    %v9428 = vunpack.c.l.b16 %v9327
    %v9429 = vunpack.c.h.b16 %v9327
    %v9430 = vunpack.c.l.b16 %v9328
    %v9431 = vunpack.c.h.b16 %v9328
    %v9432 = vunpack.c.l.b16 %v9329
    %v9433 = vunpack.c.h.b16 %v9329
    %v9434 = vunpack.c.l.b16 %v9330
    %v9435 = vunpack.c.h.b16 %v9330
    %v9436 = vunpack.c.l.b16 %v9331
    %v9437 = vunpack.c.h.b16 %v9331
    %v9438 = vunpack.c.l.b16 %v9332
    %v9439 = vunpack.c.h.b16 %v9332
    %v9440 = vunpack.c.l.b16 %v9333
    %v9441 = vunpack.c.h.b16 %v9333
    %v9442 = vunpack.c.l.b16 %v9334
    %v9443 = vunpack.c.h.b16 %v9334
    %v9444 = vunpack.c.l.b16 %v9335
    %v9445 = vunpack.c.h.b16 %v9335
    %v9446 = vunpack.c.l.b16 %v9336
    %v9447 = vunpack.c.h.b16 %v9336
    %v9448 = vunpack.c.l.b16 %v9337
    %v9449 = vunpack.c.h.b16 %v9337
    %v9450 = vunpack.c.l.b16 %v9338
    %v9451 = vunpack.c.h.b16 %v9338
    %v9452 = vunpack.c.l.b16 %v9339
    %v9453 = vunpack.c.h.b16 %v9339
    %v9454 = vunpack.c.l.b16 %v9340
    %v9455 = vunpack.c.h.b16 %v9340
    %v9456 = vunpack.c.l.b16 %v9341
    %v9457 = vunpack.c.h.b16 %v9341
    %v9458 = vunpack.c.l.b16 %v9342
    %v9459 = vunpack.c.h.b16 %v9342
    %v9460 = vunpack.c.l.b16 %v9343
    %v9461 = vunpack.c.h.b16 %v9343
    %v9462 = vunpack.c.l.b16 %v9344
    %v9463 = vunpack.c.h.b16 %v9344
    %v9464 = vunpack.c.l.b16 %v9345
    %v9465 = vunpack.c.h.b16 %v9345
    %v9466 = vunpack.c.l.b16 %v9346
    %v9467 = vunpack.c.h.b16 %v9346
    %v9468 = vunpack.c.l.b16 %v9347
    %v9469 = vunpack.c.h.b16 %v9347
    %v9470 = vunpack.c.l.b16 %v9348
    %v9471 = vunpack.c.h.b16 %v9348
    %v9472 = vunpack.c.l.b16 %v9349
    %v9473 = vunpack.c.h.b16 %v9349
    %v9474 = vunpack.c.l.b16 %v9350
    %v9475 = vunpack.c.h.b16 %v9350
    %v9476 = vunpack.c.l.b16 %v9351
    %v9477 = vunpack.c.h.b16 %v9351
    %v9478 = vunpack.c.l.b16 %v9352
    %v9479 = vunpack.c.h.b16 %v9352
    %v9480 = vunpack.c.l.b16 %v9353
    %v9481 = vunpack.c.h.b16 %v9353
    %v9482 = vunpack.c.l.b16 %v9354
    %v9483 = vunpack.c.h.b16 %v9354
    %v9484 = vpack.c.b16 %v9398, %v9398
    %v9485 = vpack.c.b16 %v9399, %v9399
    %v9486 = vpack.c.b16 %v9400, %v9400
    %v9487 = vpack.c.b16 %v9401, %v9401
    %v9488 = vpack.c.b16 %v9402, %v9402
    %v9489 = vpack.c.b16 %v9403, %v9403
    %v9490 = vpack.c.b16 %v9404, %v9404
    %v9491 = vpack.c.b16 %v9405, %v9405
    %v9492 = vpack.c.b16 %v9406, %v9406
    %v9493 = vpack.c.b16 %v9407, %v9407
    %v9494 = vpack.c.b16 %v9408, %v9408
    %v9495 = vpack.c.b16 %v9409, %v9409
    %v9496 = vpack.c.b16 %v9410, %v9410
    %v9497 = vpack.c.b16 %v9411, %v9411
    %v9498 = vpack.c.b16 %v9412, %v9412
    %v9499 = vpack.c.b16 %v9413, %v9413
    %v9500 = vpack.c.b16 %v9414, %v9414
    %v9501 = vpack.c.b16 %v9415, %v9415
    %v9502 = vpack.c.b16 %v9416, %v9416
    %v9503 = vpack.c.b16 %v9417, %v9417
    %v9504 = vpack.c.b16 %v9418, %v9418
    %v9505 = vpack.c.b16 %v9419, %v9419
    %v9506 = vpack.c.b16 %v9420, %v9420
    %v9507 = vpack.c.b16 %v9421, %v9421
    %v9508 = vpack.c.b16 %v9422, %v9422
    %v9509 = vpack.c.b16 %v9423, %v9423
    %v9510 = vpack.c.b16 %v9424, %v9424
    %v9511 = vpack.c.b16 %v9425, %v9425
    %v9512 = vpack.c.b16 %v9426, %v9426
    %v9513 = vpack.c.b16 %v9427, %v9427
    %v9514 = vpack.c.b16 %v9428, %v9428
    %v9515 = vpack.c.b16 %v9429, %v9429
    %v9516 = vpack.c.b16 %v9430, %v9430
    %v9517 = vpack.c.b16 %v9431, %v9431
    %v9518 = vpack.c.b16 %v9432, %v9432
    %v9519 = vpack.c.b16 %v9433, %v9433
    %v9520 = vpack.c.b16 %v9434, %v9434
    %v9521 = vpack.c.b16 %v9435, %v9435
    %v9522 = vpack.c.b16 %v9436, %v9436
    %v9523 = vpack.c.b16 %v9437, %v9437
    %v9524 = vpack.c.b16 %v9438, %v9438
    %v9525 = vpack.c.b16 %v9439, %v9439
    %v9526 = vpack.c.b16 %v9440, %v9440
    %v9527 = vpack.c.b16 %v9441, %v9441
    %v9528 = vpack.c.b16 %v9442, %v9442
    %v9529 = vpack.c.b16 %v9443, %v9443
    %v9530 = vpack.c.b16 %v9444, %v9444
    %v9531 = vpack.c.b16 %v9445, %v9445
    %v9532 = vpack.c.b16 %v9446, %v9446
    %v9533 = vpack.c.b16 %v9447, %v9447
    %v9534 = vpack.c.b16 %v9448, %v9448
    %v9535 = vpack.c.b16 %v9449, %v9449
    %v9536 = vpack.c.b16 %v9450, %v9450
    %v9537 = vpack.c.b16 %v9451, %v9451
    %v9538 = vpack.c.b16 %v9452, %v9452
    %v9539 = vpack.c.b16 %v9453, %v9453
    %v9540 = vpack.c.b16 %v9454, %v9454
    %v9541 = vpack.c.b16 %v9455, %v9455
    %v9542 = vpack.c.b16 %v9456, %v9456
    %v9543 = vpack.c.b16 %v9457, %v9457
    %v9544 = vpack.c.b16 %v9458, %v9458
    %v9545 = vpack.c.b16 %v9459, %v9459
    %v9546 = vpack.c.b16 %v9460, %v9460
    %v9547 = vpack.c.b16 %v9461, %v9461
    %v9548 = vpack.c.b16 %v9462, %v9462
    %v9549 = vpack.c.b16 %v9463, %v9463
    %v9550 = vpack.c.b16 %v9464, %v9464
    %v9551 = vpack.c.b16 %v9465, %v9465
    %v9552 = vpack.c.b16 %v9466, %v9466
    %v9553 = vpack.c.b16 %v9467, %v9467
    %v9554 = vpack.c.b16 %v9468, %v9468
    %v9555 = vpack.c.b16 %v9469, %v9469
    %v9556 = vpack.c.b16 %v9470, %v9470
    %v9557 = vpack.c.b16 %v9471, %v9471
    %v9558 = vpack.c.b16 %v9472, %v9472
    %v9559 = vpack.c.b16 %v9473, %v9473
    %v9560 = vpack.c.b16 %v9474, %v9474
    %v9561 = vpack.c.b16 %v9475, %v9475
    %v9562 = vpack.c.b16 %v9476, %v9476
    %v9563 = vpack.c.b16 %v9477, %v9477
    %v9564 = vpack.c.b16 %v9478, %v9478
    %v9565 = vpack.c.b16 %v9479, %v9479
    %v9566 = vpack.c.b16 %v9480, %v9480
    %v9567 = vpack.c.b16 %v9481, %v9481
    %v9568 = vpack.c.b16 %v9482, %v9482
    %v9569 = vpack.c.b16 %v9483, %v9483
    %9656 = vst.msk [vmem:[%s4 + $0xc] sm:$0xf] %vm9308, %v9484
    %9657 = vst.msk [vmem:[%s4 + $0x10] sm:$0xf] %vm9308, %v9485
    %9658 = vst.msk [vmem:[%s4 + $0x14] sm:$0xf] %vm9308, %v9486
    %9659 = vst.msk [vmem:[%s4 + $0x18] sm:$0xf] %vm9308, %v9487
    %9660 = vst.msk [vmem:[%s4 + $0x1c] sm:$0xf] %vm9308, %v9488
    %9661 = vst.msk [vmem:[%s4 + $0x20] sm:$0xf] %vm9308, %v9489
    %9662 = vst.msk [vmem:[%s4 + $0x24] sm:$0xf] %vm9308, %v9490
    %9663 = vst.msk [vmem:[%s4 + $0x28] sm:$0xf] %vm9308, %v9491
    %9664 = vst.msk [vmem:[%s4 + $0x2c] sm:$0xf] %vm9308, %v9492
    %9665 = vst.msk [vmem:[%s4 + $0x30] sm:$0xf] %vm9308, %v9493
    %9666 = vst.msk [vmem:[%s4 + $0x34] sm:$0xf] %vm9308, %v9494
    %9667 = vst.msk [vmem:[%s4 + $0x38] sm:$0xf] %vm9308, %v9495
    %9668 = vst.msk [vmem:[%s4 + $0x3c] sm:$0xf] %vm9308, %v9496
    %9669 = vst.msk [vmem:[%s4 + $0x40] sm:$0xf] %vm9308, %v9497
    %9670 = vst.msk [vmem:[%s4 + $0x44] sm:$0xf] %vm9308, %v9498
    %9671 = vst.msk [vmem:[%s4 + $0x48] sm:$0xf] %vm9308, %v9499
    %9672 = vst.msk [vmem:[%s4 + $0x4c] sm:$0xf] %vm9308, %v9500
    %9673 = vst.msk [vmem:[%s4 + $0x50] sm:$0xf] %vm9308, %v9501
    %9674 = vst.msk [vmem:[%s4 + $0x54] sm:$0xf] %vm9308, %v9502
    %9675 = vst.msk [vmem:[%s4 + $0x58] sm:$0xf] %vm9308, %v9503
    %9676 = vst.msk [vmem:[%s4 + $0x5c] sm:$0xf] %vm9308, %v9504
    %9677 = vst.msk [vmem:[%s4 + $0x60] sm:$0xf] %vm9308, %v9505
    %9678 = vst.msk [vmem:[%s4 + $0x64] sm:$0xf] %vm9308, %v9506
    %9679 = vst.msk [vmem:[%s4 + $0x68] sm:$0xf] %vm9308, %v9507
    %9680 = vst.msk [vmem:[%s4 + $0x6c] sm:$0xf] %vm9308, %v9508
    %9681 = vst.msk [vmem:[%s4 + $0x70] sm:$0xf] %vm9308, %v9509
    %9682 = vst.msk [vmem:[%s4 + $0x74] sm:$0xf] %vm9308, %v9510
    %9683 = vst.msk [vmem:[%s4 + $0x78] sm:$0xf] %vm9308, %v9511
    %9684 = vst.msk [vmem:[%s4 + $0x7c] sm:$0xf] %vm9308, %v9512
    %9685 = vst.msk [vmem:[%s4 + $0x80] sm:$0xf] %vm9308, %v9513
    %9686 = vst.msk [vmem:[%s4 + $0x84] sm:$0xf] %vm9308, %v9514
    %9687 = vst.msk [vmem:[%s4 + $0x88] sm:$0xf] %vm9308, %v9515
    %9688 = vst.msk [vmem:[%s4 + $0x8c] sm:$0xf] %vm9308, %v9516
    %9689 = vst.msk [vmem:[%s4 + $0x90] sm:$0xf] %vm9308, %v9517
    %9690 = vst.msk [vmem:[%s4 + $0x94] sm:$0xf] %vm9308, %v9518
    %9691 = vst.msk [vmem:[%s4 + $0x98] sm:$0xf] %vm9308, %v9519
    %9692 = vst.msk [vmem:[%s4 + $0x9c] sm:$0xf] %vm9308, %v9520
    %9693 = vst.msk [vmem:[%s4 + $0xa0] sm:$0xf] %vm9308, %v9521
    %9694 = vst.msk [vmem:[%s4 + $0xa4] sm:$0xf] %vm9308, %v9522
    %9695 = vst.msk [vmem:[%s4 + $0xa8] sm:$0xf] %vm9308, %v9523
    %9696 = vst.msk [vmem:[%s4 + $0xac] sm:$0xf] %vm9308, %v9524
    %9697 = vst.msk [vmem:[%s4 + $0xb0] sm:$0xf] %vm9308, %v9525
    %9698 = vst.msk [vmem:[%s4 + $0xb4] sm:$0xf] %vm9308, %v9526
    %9699 = vst.msk [vmem:[%s4 + $0xb8] sm:$0xf] %vm9308, %v9527
    %9700 = vst.msk [vmem:[%s4 + $0xbc] sm:$0xf] %vm9308, %v9528
    %9701 = vst.msk [vmem:[%s4 + $0xc0] sm:$0xf] %vm9308, %v9529
    %9702 = vst.msk [vmem:[%s4 + $0xc4] sm:$0xf] %vm9308, %v9530
    %9703 = vst.msk [vmem:[%s4 + $0xc8] sm:$0xf] %vm9308, %v9531
    %9704 = vst.msk [vmem:[%s4 + $0xcc] sm:$0xf] %vm9308, %v9532
    %9705 = vst.msk [vmem:[%s4 + $0xd0] sm:$0xf] %vm9308, %v9533
    %9706 = vst.msk [vmem:[%s4 + $0xd4] sm:$0xf] %vm9308, %v9534
    %9707 = vst.msk [vmem:[%s4 + $0xd8] sm:$0xf] %vm9308, %v9535
    %9708 = vst.msk [vmem:[%s4 + $0xdc] sm:$0xf] %vm9308, %v9536
    %9709 = vst.msk [vmem:[%s4 + $0xe0] sm:$0xf] %vm9308, %v9537
    %9710 = vst.msk [vmem:[%s4 + $0xe4] sm:$0xf] %vm9308, %v9538
    %9711 = vst.msk [vmem:[%s4 + $0xe8] sm:$0xf] %vm9308, %v9539
    %9712 = vst.msk [vmem:[%s4 + $0xec] sm:$0xf] %vm9308, %v9540
    %9713 = vst.msk [vmem:[%s4 + $0xf0] sm:$0xf] %vm9308, %v9541
    %9714 = vst.msk [vmem:[%s4 + $0xf4] sm:$0xf] %vm9308, %v9542
    %9715 = vst.msk [vmem:[%s4 + $0xf8] sm:$0xf] %vm9308, %v9543
    %9716 = vst.msk [vmem:[%s4 + $0xfc] sm:$0xf] %vm9308, %v9544
    %9717 = vst.msk [vmem:[%s4 + $0x100] sm:$0xf] %vm9308, %v9545
    %9718 = vst.msk [vmem:[%s4 + $0x104] sm:$0xf] %vm9308, %v9546
    %9719 = vst.msk [vmem:[%s4 + $0x108] sm:$0xf] %vm9308, %v9547
    %9720 = vst.msk [vmem:[%s4 + $0x10c] sm:$0xf] %vm9308, %v9548
    %9721 = vst.msk [vmem:[%s4 + $0x110] sm:$0xf] %vm9308, %v9549
    %9722 = vst.msk [vmem:[%s4 + $0x114] sm:$0xf] %vm9308, %v9550
    %9723 = vst.msk [vmem:[%s4 + $0x118] sm:$0xf] %vm9308, %v9551
    %9724 = vst.msk [vmem:[%s4 + $0x11c] sm:$0xf] %vm9308, %v9552
    %9725 = vst.msk [vmem:[%s4 + $0x120] sm:$0xf] %vm9308, %v9553
    %9726 = vst.msk [vmem:[%s4 + $0x124] sm:$0xf] %vm9308, %v9554
    %9727 = vst.msk [vmem:[%s4 + $0x128] sm:$0xf] %vm9308, %v9555
    %9728 = vst.msk [vmem:[%s4 + $0x12c] sm:$0xf] %vm9308, %v9556
    %9729 = vst.msk [vmem:[%s4 + $0x130] sm:$0xf] %vm9308, %v9557
    %9730 = vst.msk [vmem:[%s4 + $0x134] sm:$0xf] %vm9308, %v9558
    %9731 = vst.msk [vmem:[%s4 + $0x138] sm:$0xf] %vm9308, %v9559
    %9732 = vst.msk [vmem:[%s4 + $0x13c] sm:$0xf] %vm9308, %v9560
    %9733 = vst.msk [vmem:[%s4 + $0x140] sm:$0xf] %vm9308, %v9561
    %9734 = vst.msk [vmem:[%s4 + $0x144] sm:$0xf] %vm9308, %v9562
    %9735 = vst.msk [vmem:[%s4 + $0x148] sm:$0xf] %vm9308, %v9563
    %9736 = vst.msk [vmem:[%s4 + $0x14c] sm:$0xf] %vm9308, %v9564
    %9737 = vst.msk [vmem:[%s4 + $0x150] sm:$0xf] %vm9308, %v9565
    %9738 = vst.msk [vmem:[%s4 + $0x154] sm:$0xf] %vm9308, %v9566
    %9739 = vst.msk [vmem:[%s4 + $0x158] sm:$0xf] %vm9308, %v9567
    %9740 = vst.msk [vmem:[%s4 + $0x15c] sm:$0xf] %vm9308, %v9568
    %vm9741 = vcmask 517120
    %9742 = vst.msk [vmem:[%s4 + $0x160] sm:$0x3] %vm9741, %v9569
    %vm9743 = vcmask 519170
    %9744 = vst.msk [vmem:[%s4 + $0x160] sm:$0xc] %vm9743, 0
    %9745 = vst.msk [vmem:[%s4 + $0x164] sm:$0xf] %vm9308, 0
    %9746 = vst.msk [vmem:[%s4 + $0x168] sm:$0xf] %vm9308, 0
    %9747 = vst.msk [vmem:[%s4 + $0x16c] sm:$0x3] %vm9741, 0
  $region29: #{first_conv.1} parent=0 // pred_fallthru
    _
  // Predicated region
  $region30: #{first_conv.1} parent=0 // pred_check
    _
  $region31: #{first_conv.1} parent=0 // pred_check_branch
    %9749 = sbr.rel (0) target = $region33
  $region32: #{first_conv.1} parent=0 // pred_region
    _
  $region33: #{first_conv.1} parent=0 // pred_fallthru
    _
  // Predicated region
  $region34: #{first_conv.1} parent=0 // pred_check
    _
  $region35: #{first_conv.1} parent=0 // pred_check_branch
    %9751 = sbr.rel (0) target = $region37
  $region36: #{first_conv.1} parent=0 // pred_region
    _
  $region37: #{first_conv.1} parent=0 // pred_fallthru
    _

</llo_original>
